<compile_context>
chip_gen: v6e
topology: v6e:2x2x1
jax: 0.10.0
libtpu: 0.0.40
codegen_flags: <defaults>
</compile_context>

<pallas_src>
import jax
import jax.numpy as jnp
from jax.experimental import pallas as pl
from jax.experimental.pallas import tpu as pltpu

C_HIDDEN = 24                 # must be divisible by 6
C6 = C_HIDDEN // 6            # lin_down output width
NUM_TASKS = 1
POOL_TYPE = "mean"            # Literal['sum', 'mean']
TILE_N = 512                  # node-axis tile for the project kernel
_VMEM_LIMIT = 48 * 1024 * 1024  # stays inside v7x's 64 MiB physical VMEM


def _vmem_spec():
    return pl.BlockSpec(memory_space=pltpu.MemorySpace.VMEM)


# --------------------------------------------------------------------------
# Kernel 1: interaction-coef MLP + COM / normed vectors / XTX statistics
# --------------------------------------------------------------------------
def _stats_kernel(feats_ref, coords_ref, bcol_ref, brow_ref, invc_ref,
                  w1_ref, b1_ref, w2_ref, b2_ref,
                  ncv_ref, xtx_ref):
    feats = feats_ref[...]          # (N, C)
    coords = coords_ref[...]        # (N, 3)
    bcol = bcol_ref[...]            # (N, 1) int32 graph index (-1 for padding)
    brow = brow_ref[...]            # (1, N) int32
    invc = invc_ref[...]            # (B, 1) 1 / nodes-per-graph (guarded)
    n = feats.shape[0]
    b = invc.shape[0]

    # One-hots built in VMEM from the int32 batch vector (padded rows have
    # batch == -1 so they never match and contribute nothing).
    onehot = (jax.lax.broadcasted_iota(jnp.int32, (n, b), 1) == bcol).astype(jnp.float32)
    onehot_t = (jax.lax.broadcasted_iota(jnp.int32, (b, n), 0) == brow).astype(jnp.float32)

    # interaction_coefs_mlp: Linear(C->C) -> SiLU -> Linear(C->1).
    # Final C->1 layer as a VPU multiply+reduce (avoids a 1-lane MXU matmul).
    h = jnp.dot(feats, w1_ref[...], preferred_element_type=jnp.float32) + b1_ref[...]
    h = jax.nn.silu(h)
    coefs = jnp.sum(h * w2_ref[...], axis=-1, keepdims=True) + b2_ref[...]   # (N, 1)

    def com_stats(vec):
        seg = jnp.dot(onehot_t, vec, preferred_element_type=jnp.float32)     # (B, 3)
        com = seg * invc
        comv = vec - jnp.dot(onehot, com, preferred_element_type=jnp.float32)
        norm = jnp.sqrt(jnp.sum(comv * comv, axis=-1, keepdims=True))
        ncv = comv / jnp.maximum(norm, 1e-12)                                # eps guard
        # row-major flattened outer product comv[:, a] * comv[:, b] -> (N, 9)
        outer = jnp.concatenate([comv * comv[:, a:a + 1] for a in range(3)], axis=-1)
        return ncv, outer

    ncv_sp, outer_sp = com_stats(coords)
    ncv_in, outer_in = com_stats(coefs * ncv_sp)

    # Both covariance reductions in ONE lane-packed pooling matmul.
    outer_both = jnp.concatenate([outer_sp, outer_in], axis=-1)              # (N, 18)
    xtx_ref[...] = jnp.dot(onehot_t, outer_both,
                           preferred_element_type=jnp.float32) * invc        # (B, 18)
    ncv_ref[...] = jnp.concatenate([ncv_sp, ncv_in], axis=-1)                # (N, 6)


def stats_call(feats, coords, bcol, brow, invc, w1, b1, w2, b2):
    n = feats.shape[0]
    b = invc.shape[0]
    return pl.pallas_call(
        _stats_kernel,
        out_shape=(jax.ShapeDtypeStruct((n, 6), jnp.float32),    # [ncv_sp | ncv_in]
                   jax.ShapeDtypeStruct((b, 18), jnp.float32)),  # [xtx_sp | xtx_in]
        in_specs=[_vmem_spec() for _ in range(9)],
        out_specs=(_vmem_spec(), _vmem_spec()),
        compiler_params=pltpu.CompilerParams(vmem_limit_bytes=_VMEM_LIMIT),
    )(feats, coords, bcol, brow, invc, w1, b1, w2, b2)


# --------------------------------------------------------------------------
# Kernel 2: fused spatial+interaction projection, tiled over nodes
# --------------------------------------------------------------------------
def _project_kernel(feats_ref, ncv_ref, bcol_ref, brow_ref, eig_ref, scale_ref,
                    wblk_ref, out_ref, acc_ref):
    t = pl.program_id(0)

    @pl.when(t == 0)
    def _():
        acc_ref[...] = jnp.zeros_like(acc_ref)

    feats = feats_ref[...]      # (TILE_N, C)
    ncv = ncv_ref[...]          # (TILE_N, 6)   cols 0:3 spatial, 3:6 interaction
    bcol = bcol_ref[...]        # (TILE_N, 1) int32
    brow = brow_ref[...]        # (1, TILE_N) int32
    eig = eig_ref[...]          # (B, 18)       cols 0:9 spatial eig, 9:18 interaction
    tn = feats.shape[0]
    b = eig.shape[0]

    onehot = (jax.lax.broadcasted_iota(jnp.int32, (tn, b), 1) == bcol).astype(jnp.float32)
    onehot_t = (jax.lax.broadcasted_iota(jnp.int32, (b, tn), 0) == brow).astype(jnp.float32)

    # Gather eigenvectors per node: (TILE_N, B) x (B, 18)
    eig_g = jnp.dot(onehot, eig, preferred_element_type=jnp.float32)

    # Pack pos/neg masked sources for {spatial, interaction} x {axis 0,1,2}
    # into one lane-dense (TILE_N, 12*C) operand -> ONE pooling matmul.
    blocks = []
    for s in range(2):
        ncv_s = ncv[:, 3 * s:3 * s + 3]
        for a in range(3):
            ev = eig_g[:, 9 * s + 3 * a: 9 * s + 3 * a + 3]                 # (TILE_N, 3)
            coef = jnp.sum(ncv_s * ev, axis=-1, keepdims=True)              # (TILE_N, 1)
            src = coef * feats                                              # (TILE_N, C)
            blocks.append(jnp.where(coef >= 0, src, jnp.zeros_like(src)))
            blocks.append(jnp.where(coef < 0, src, jnp.zeros_like(src)))
    packed = jnp.concatenate(blocks, axis=-1)                               # (TILE_N, 12*C)
    acc_ref[...] += jnp.dot(onehot_t, packed, preferred_element_type=jnp.float32)

    @pl.when(t == pl.num_programs(0) - 1)
    def _():
        pooled = jnp.abs(acc_ref[...] * scale_ref[...])                     # (B, 12*C)
        # lin_down on all 12 pooled blocks at once (block-diagonal weight).
        down = jnp.dot(pooled, wblk_ref[...],
                       preferred_element_type=jnp.float32)                  # (B, 12*C6)
        outs = []
        for s in range(2):
            base = 6 * C6 * s
            pos = [down[:, base + (2 * a) * C6: base + (2 * a + 1) * C6] for a in range(3)]
            neg = [down[:, base + (2 * a + 1) * C6: base + (2 * a + 2) * C6] for a in range(3)]
            # torch cat order: [sum0, sum1, sum2, prod0, prod1, prod2]
            outs += [pos[0] + neg[0], pos[1] + neg[1], pos[2] + neg[2],
                     pos[0] * neg[0], pos[1] * neg[1], pos[2] * neg[2]]
        out_ref[...] = jnp.concatenate(outs, axis=-1)                       # (B, 12*C6)


def project_call(feats, ncv, bcol, brow, eig_both, pool_scale, w_block):
    n_pad, c = feats.shape
    b = eig_both.shape[0]
    n_tiles = n_pad // TILE_N
    grid_spec = pltpu.PrefetchScalarGridSpec(
        num_scalar_prefetch=0,
        grid=(n_tiles,),
        in_specs=[
            pl.BlockSpec((TILE_N, c), lambda t: (t, 0)),          # feats
            pl.BlockSpec((TILE_N, 6), lambda t: (t, 0)),          # ncv (sp|in)
            pl.BlockSpec((TILE_N, 1), lambda t: (t, 0)),          # batch col
            pl.BlockSpec((1, TILE_N), lambda t: (0, t)),          # batch row
            pl.BlockSpec((b, 18), lambda t: (0, 0)),              # eig (sp|in), resident
            pl.BlockSpec((b, 1), lambda t: (0, 0)),               # pool scale, resident
            pl.BlockSpec((12 * c, 12 * C6), lambda t: (0, 0)),    # block-diag lin_down
        ],
        out_specs=pl.BlockSpec((b, 12 * C6), lambda t: (0, 0)),
        scratch_shapes=[pltpu.VMEM((b, 12 * c), jnp.float32)],
    )
    return pl.pallas_call(
        _project_kernel,
        out_shape=jax.ShapeDtypeStruct((b, 12 * C6), jnp.float32),
        grid_spec=grid_spec,
        compiler_params=pltpu.CompilerParams(
            dimension_semantics=("arbitrary",),    # node axis is a reduction
            vmem_limit_bytes=_VMEM_LIMIT),
    )(feats, ncv, bcol, brow, eig_both, pool_scale, w_block)


# --------------------------------------------------------------------------
# Plain-JAX glue
# --------------------------------------------------------------------------
def _eig_rows(xtx_flat):
    """XTX is symmetric PSD -> eigh gives ascending eigenvalues (same ordering
    as the torch argsort of linalg.eig eigenvalues); rows = eigenvectors.
    Sign ambiguity cancels (pos/neg pooling is sign-symmetric; dots take abs)."""
    # TODO(synk): 3x3 eigendecomposition has no clean Pallas equivalent; plain JAX.
    b = xtx_flat.shape[0]
    xtx = xtx_flat.reshape(b, 3, 3)
    xtx = 0.5 * (xtx + jnp.swapaxes(xtx, -1, -2))
    _, evecs = jnp.linalg.eigh(xtx)
    return jnp.swapaxes(evecs, -1, -2)             # (B, 3, 3)


def _round_up(n, m):
    return ((n + m - 1) // m) * m


def _key_features(params, gd, w_block):
    feats = gd['node_feats'].astype(jnp.float32)       # (N, C)
    coords = gd['coordinates'].astype(jnp.float32)     # (N, 3)
    batch = gd['batch'].astype(jnp.int32)              # (N,)
    num_graphs = int(gd['num_graphs'])
    n = feats.shape[0]
    n_pad = _round_up(max(n, TILE_N), TILE_N)

    counts = jnp.zeros((num_graphs,), jnp.float32).at[batch].add(1.0)
    invc = (1.0 / jnp.maximum(counts, 1.0))[:, None]          # guard empty graphs
    pool_scale = invc if POOL_TYPE == "mean" else jnp.ones_like(invc)

    feats_p = jnp.pad(feats, ((0, n_pad - n), (0, 0)))
    coords_p = jnp.pad(coords, ((0, n_pad - n), (0, 0)))
    batch_p = jnp.pad(batch, (0, n_pad - n), constant_values=-1)  # pad rows match no graph
    bcol = batch_p[:, None]
    brow = batch_p[None, :]

    ncv_both, xtx_both = stats_call(
        feats_p, coords_p, bcol, brow, invc,
        params['phi_w1'], params['phi_b1'], params['phi_w2'], params['phi_b2'])

    sp_eig = _eig_rows(xtx_both[:, :9])                # (B, 3, 3)
    in_eig = _eig_rows(xtx_both[:, 9:])                # (B, 3, 3)
    eig_both = jnp.concatenate(
        [sp_eig.reshape(num_graphs, 9), in_eig.reshape(num_graphs, 9)], axis=-1)

    proj = project_call(feats_p, ncv_both, bcol, brow, eig_both,
                        pool_scale, w_block)           # (B, 12*C6): [spatial | interaction]
    dps = jnp.abs(jnp.einsum('bik,bjk->bij', sp_eig, in_eig)).reshape(num_graphs, 9)
    return jnp.concatenate([proj, dps], axis=-1)       # (B, 12*C6 + 9)


def ligand_pocket_pooling_head_forward(params, data):
    # lin_down applied to all 12 pooled blocks at once -> block-diagonal weight.
    w_block = jnp.kron(jnp.eye(12, dtype=jnp.float32), params['lin_down_w'])  # (12*C, 12*C6)
    feats_list = [_key_features(params, gd, w_block) for gd in data.values()]
    x = jnp.concatenate(feats_list, axis=-1)           # (B, 2*(12*C6 + 9))
    # headMLP2 (tiny): plain JAX, launch-overhead dominated as a custom call.
    h = jax.nn.silu(jnp.dot(x, params['head_w1']) + params['head_b1'])
    return jnp.dot(h, params['head_w2']) + params['head_b2']


def init_params(key):
    c = C_HIDDEN
    f_in = 2 * (12 * C6 + 9)
    ks = jax.random.split(key, 8)
    s = 0.1
    return {
        # interaction_coefs_mlp: Linear(c, c) -> SiLU -> Linear(c, 1)
        'phi_w1': s * jax.random.normal(ks[0], (c, c), jnp.float32),
        'phi_b1': s * jax.random.normal(ks[1], (1, c), jnp.float32),
        'phi_w2': s * jax.random.normal(ks[2], (1, c), jnp.float32),   # row form of (c, 1)
        'phi_b2': s * jax.random.normal(ks[3], (1, 1), jnp.float32),
        # lin_down: Linear(c, c // 6, bias=False)
        'lin_down_w': s * jax.random.normal(ks[4], (c, C6), jnp.float32),
        # headMLP2: Linear(f_in, c) -> SiLU -> Linear(c, num_tasks)
        'head_w1': s * jax.random.normal(ks[5], (f_in, c), jnp.float32),
        'head_b1': s * jax.random.normal(ks[6], (1, c), jnp.float32),
        'head_w2': s * jax.random.normal(ks[7], (c, NUM_TASKS), jnp.float32),
        'head_b2': jnp.zeros((1, NUM_TASKS), jnp.float32),
    }


if __name__ == "__main__":
    key = jax.random.PRNGKey(0)
    pkey, dkey = jax.random.split(key)
    params = init_params(pkey)

    num_graphs = 2
    # ligand graphs: 7 + 9 nodes; pocket graphs: 11 + 13 nodes
    n_lig, n_poc = 16, 24
    k1, k2, k3, k4 = jax.random.split(dkey, 4)
    data = {
        'ligand': {
            'node_feats': jax.random.normal(k1, (n_lig, C_HIDDEN), jnp.float32),
            'coordinates': jax.random.normal(k2, (n_lig, 3), jnp.float32),
            'batch': jnp.concatenate([jnp.zeros(7, jnp.int32), jnp.ones(9, jnp.int32)]),
            'num_graphs': num_graphs,
        },
        'pocket': {
            'node_feats': jax.random.normal(k3, (n_poc, C_HIDDEN), jnp.float32),
            'coordinates': jax.random.normal(k4, (n_poc, 3), jnp.float32),
            'batch': jnp.concatenate([jnp.zeros(11, jnp.int32), jnp.ones(13, jnp.int32)]),
            'num_graphs': num_graphs,
        },
    }

    out = ligand_pocket_pooling_head_forward(params, data)
    out = jax.block_until_ready(out)
    assert out.shape == (num_graphs, NUM_TASKS), out.shape
    assert bool(jnp.all(jnp.isfinite(out)))
    print("KERNEL_OK")
</pallas_src>

<mosaic_0001>
module attributes {stable_mosaic.version = 11 : i64} {
  func.func @_stats_kernel(%arg0: memref<512x24xf32, #tpu.memory_space<vmem>>, %arg1: memref<512x3xf32, #tpu.memory_space<vmem>>, %arg2: memref<512x1xi32, #tpu.memory_space<vmem>>, %arg3: memref<1x512xi32, #tpu.memory_space<vmem>>, %arg4: memref<2x1xf32, #tpu.memory_space<vmem>>, %arg5: memref<24x24xf32, #tpu.memory_space<vmem>>, %arg6: memref<1x24xf32, #tpu.memory_space<vmem>>, %arg7: memref<1x24xf32, #tpu.memory_space<vmem>>, %arg8: memref<1x1xf32, #tpu.memory_space<vmem>>, %arg9: memref<512x6xf32, #tpu.memory_space<vmem>>, %arg10: memref<2x18xf32, #tpu.memory_space<vmem>>) attributes {dimension_semantics = [], scalar_prefetch = 0 : i64, scratch_operands = 0 : i64, tpu.core_type = #tpu.core_type<tc>} {
    %c0 = arith.constant 0 : index
    %c0_0 = arith.constant 0 : index
    %0 = vector.load %arg0[%c0, %c0_0] : memref<512x24xf32, #tpu.memory_space<vmem>>, vector<512x24xf32>
    %c0_1 = arith.constant 0 : index
    %c0_2 = arith.constant 0 : index
    %1 = vector.load %arg1[%c0_1, %c0_2] : memref<512x3xf32, #tpu.memory_space<vmem>>, vector<512x3xf32>
    %c0_3 = arith.constant 0 : index
    %c0_4 = arith.constant 0 : index
    %2 = vector.load %arg2[%c0_3, %c0_4] : memref<512x1xi32, #tpu.memory_space<vmem>>, vector<512x1xi32>
    %c0_5 = arith.constant 0 : index
    %c0_6 = arith.constant 0 : index
    %3 = vector.load %arg3[%c0_5, %c0_6] : memref<1x512xi32, #tpu.memory_space<vmem>>, vector<1x512xi32>
    %c0_7 = arith.constant 0 : index
    %c0_8 = arith.constant 0 : index
    %4 = vector.load %arg4[%c0_7, %c0_8] : memref<2x1xf32, #tpu.memory_space<vmem>>, vector<2x1xf32>
    %5 = tpu.iota {dimensions = array<i32: 1>} : vector<512x2xi32>
    %6 = vector.broadcast %2 : vector<512x1xi32> to vector<512x2xi32>
    %7 = arith.cmpi eq, %5, %6 : vector<512x2xi32>
    %8 = arith.extui %7 : vector<512x2xi1> to vector<512x2xi32>
    %9 = arith.sitofp %8 : vector<512x2xi32> to vector<512x2xf32>
    %10 = tpu.iota {dimensions = array<i32: 0>} : vector<2x512xi32>
    %11 = vector.broadcast %3 : vector<1x512xi32> to vector<2x512xi32>
    %12 = arith.cmpi eq, %10, %11 : vector<2x512xi32>
    %13 = arith.extui %12 : vector<2x512xi1> to vector<2x512xi32>
    %14 = arith.sitofp %13 : vector<2x512xi32> to vector<2x512xf32>
    %c0_9 = arith.constant 0 : index
    %c0_10 = arith.constant 0 : index
    %15 = vector.load %arg5[%c0_9, %c0_10] : memref<24x24xf32, #tpu.memory_space<vmem>>, vector<24x24xf32>
    %cst = arith.constant dense<0.000000e+00> : vector<512x24xf32>
    %16 = tpu.matmul %0, %15, %cst {dimension_numbers = #tpu.dot_dimension_numbers<[1], [0], [0], [1], [0, 0, 1, 1], [], []>} : vector<512x24xf32>, vector<24x24xf32>, vector<512x24xf32> -> vector<512x24xf32>
    %c0_11 = arith.constant 0 : index
    %c0_12 = arith.constant 0 : index
    %17 = vector.load %arg6[%c0_11, %c0_12] : memref<1x24xf32, #tpu.memory_space<vmem>>, vector<1x24xf32>
    %18 = vector.broadcast %17 : vector<1x24xf32> to vector<512x24xf32>
    %19 = arith.addf %16, %18 : vector<512x24xf32>
    %20 = arith.negf %19 : vector<512x24xf32>
    %21 = math.exp %20 : vector<512x24xf32>
    %cst_13 = arith.constant 1.000000e+00 : f32
    %22 = vector.broadcast %cst_13 : f32 to vector<512x24xf32>
    %23 = arith.addf %22, %21 : vector<512x24xf32>
    %24 = arith.divf %22, %23 : vector<512x24xf32>
    %25 = arith.mulf %19, %24 : vector<512x24xf32>
    %c0_14 = arith.constant 0 : index
    %c0_15 = arith.constant 0 : index
    %26 = vector.load %arg7[%c0_14, %c0_15] : memref<1x24xf32, #tpu.memory_space<vmem>>, vector<1x24xf32>
    %27 = vector.broadcast %26 : vector<1x24xf32> to vector<512x24xf32>
    %28 = arith.mulf %25, %27 : vector<512x24xf32>
    %cst_16 = arith.constant dense<0.000000e+00> : vector<512xf32>
    %29 = vector.multi_reduction <add>, %28, %cst_16 [1] : vector<512x24xf32> to vector<512xf32>
    %30 = vector.shape_cast %29 : vector<512xf32> to vector<512x1xf32>
    %c0_17 = arith.constant 0 : index
    %c0_18 = arith.constant 0 : index
    %31 = vector.load %arg8[%c0_17, %c0_18] : memref<1x1xf32, #tpu.memory_space<vmem>>, vector<1x1xf32>
    %32 = vector.broadcast %31 : vector<1x1xf32> to vector<512x1xf32>
    %33 = arith.addf %30, %32 : vector<512x1xf32>
    %cst_19 = arith.constant dense<0.000000e+00> : vector<2x3xf32>
    %34 = tpu.matmul %14, %1, %cst_19 {dimension_numbers = #tpu.dot_dimension_numbers<[1], [0], [0], [1], [0, 0, 1, 1], [], []>} : vector<2x512xf32>, vector<512x3xf32>, vector<2x3xf32> -> vector<2x3xf32>
    %35 = vector.broadcast %4 : vector<2x1xf32> to vector<2x3xf32>
    %36 = arith.mulf %34, %35 : vector<2x3xf32>
    %cst_20 = arith.constant dense<0.000000e+00> : vector<512x3xf32>
    %37 = tpu.matmul %9, %36, %cst_20 {dimension_numbers = #tpu.dot_dimension_numbers<[1], [0], [0], [1], [0, 0, 1, 1], [], []>} : vector<512x2xf32>, vector<2x3xf32>, vector<512x3xf32> -> vector<512x3xf32>
    %38 = arith.subf %1, %37 : vector<512x3xf32>
    %39 = arith.mulf %38, %38 : vector<512x3xf32>
    %cst_21 = arith.constant dense<0.000000e+00> : vector<512xf32>
    %40 = vector.multi_reduction <add>, %39, %cst_21 [1] : vector<512x3xf32> to vector<512xf32>
    %41 = vector.shape_cast %40 : vector<512xf32> to vector<512x1xf32>
    %42 = math.sqrt %41 : vector<512x1xf32>
    %cst_22 = arith.constant 9.99999996E-13 : f32
    %43 = vector.broadcast %cst_22 : f32 to vector<512x1xf32>
    %44 = arith.maximumf %42, %43 : vector<512x1xf32>
    %45 = vector.broadcast %44 : vector<512x1xf32> to vector<512x3xf32>
    %46 = arith.divf %38, %45 : vector<512x3xf32>
    %47 = vector.extract_strided_slice %38 {offsets = [0, 0], sizes = [512, 1], strides = [1, 1]} : vector<512x3xf32> to vector<512x1xf32>
    %48 = vector.broadcast %47 : vector<512x1xf32> to vector<512x3xf32>
    %49 = arith.mulf %38, %48 : vector<512x3xf32>
    %50 = vector.extract_strided_slice %38 {offsets = [0, 1], sizes = [512, 1], strides = [1, 1]} : vector<512x3xf32> to vector<512x1xf32>
    %51 = vector.broadcast %50 : vector<512x1xf32> to vector<512x3xf32>
    %52 = arith.mulf %38, %51 : vector<512x3xf32>
    %53 = vector.extract_strided_slice %38 {offsets = [0, 2], sizes = [512, 1], strides = [1, 1]} : vector<512x3xf32> to vector<512x1xf32>
    %54 = vector.broadcast %53 : vector<512x1xf32> to vector<512x3xf32>
    %55 = arith.mulf %38, %54 : vector<512x3xf32>
    %56 = tpu.concatenate %49, %52, %55 in 1 : vector<512x3xf32>, vector<512x3xf32>, vector<512x3xf32> -> vector<512x9xf32>
    %57 = vector.broadcast %33 : vector<512x1xf32> to vector<512x3xf32>
    %58 = arith.mulf %57, %46 : vector<512x3xf32>
    %cst_23 = arith.constant dense<0.000000e+00> : vector<2x3xf32>
    %59 = tpu.matmul %14, %58, %cst_23 {dimension_numbers = #tpu.dot_dimension_numbers<[1], [0], [0], [1], [0, 0, 1, 1], [], []>} : vector<2x512xf32>, vector<512x3xf32>, vector<2x3xf32> -> vector<2x3xf32>
    %60 = vector.broadcast %4 : vector<2x1xf32> to vector<2x3xf32>
    %61 = arith.mulf %59, %60 : vector<2x3xf32>
    %cst_24 = arith.constant dense<0.000000e+00> : vector<512x3xf32>
    %62 = tpu.matmul %9, %61, %cst_24 {dimension_numbers = #tpu.dot_dimension_numbers<[1], [0], [0], [1], [0, 0, 1, 1], [], []>} : vector<512x2xf32>, vector<2x3xf32>, vector<512x3xf32> -> vector<512x3xf32>
    %63 = arith.subf %58, %62 : vector<512x3xf32>
    %64 = arith.mulf %63, %63 : vector<512x3xf32>
    %cst_25 = arith.constant dense<0.000000e+00> : vector<512xf32>
    %65 = vector.multi_reduction <add>, %64, %cst_25 [1] : vector<512x3xf32> to vector<512xf32>
    %66 = vector.shape_cast %65 : vector<512xf32> to vector<512x1xf32>
    %67 = math.sqrt %66 : vector<512x1xf32>
    %cst_26 = arith.constant 9.99999996E-13 : f32
    %68 = vector.broadcast %cst_26 : f32 to vector<512x1xf32>
    %69 = arith.maximumf %67, %68 : vector<512x1xf32>
    %70 = vector.broadcast %69 : vector<512x1xf32> to vector<512x3xf32>
    %71 = arith.divf %63, %70 : vector<512x3xf32>
    %72 = vector.extract_strided_slice %63 {offsets = [0, 0], sizes = [512, 1], strides = [1, 1]} : vector<512x3xf32> to vector<512x1xf32>
    %73 = vector.broadcast %72 : vector<512x1xf32> to vector<512x3xf32>
    %74 = arith.mulf %63, %73 : vector<512x3xf32>
    %75 = vector.extract_strided_slice %63 {offsets = [0, 1], sizes = [512, 1], strides = [1, 1]} : vector<512x3xf32> to vector<512x1xf32>
    %76 = vector.broadcast %75 : vector<512x1xf32> to vector<512x3xf32>
    %77 = arith.mulf %63, %76 : vector<512x3xf32>
    %78 = vector.extract_strided_slice %63 {offsets = [0, 2], sizes = [512, 1], strides = [1, 1]} : vector<512x3xf32> to vector<512x1xf32>
    %79 = vector.broadcast %78 : vector<512x1xf32> to vector<512x3xf32>
    %80 = arith.mulf %63, %79 : vector<512x3xf32>
    %81 = tpu.concatenate %74, %77, %80 in 1 : vector<512x3xf32>, vector<512x3xf32>, vector<512x3xf32> -> vector<512x9xf32>
    %82 = tpu.concatenate %56, %81 in 1 : vector<512x9xf32>, vector<512x9xf32> -> vector<512x18xf32>
    %cst_27 = arith.constant dense<0.000000e+00> : vector<2x18xf32>
    %83 = tpu.matmul %14, %82, %cst_27 {dimension_numbers = #tpu.dot_dimension_numbers<[1], [0], [0], [1], [0, 0, 1, 1], [], []>} : vector<2x512xf32>, vector<512x18xf32>, vector<2x18xf32> -> vector<2x18xf32>
    %84 = vector.broadcast %4 : vector<2x1xf32> to vector<2x18xf32>
    %85 = arith.mulf %83, %84 : vector<2x18xf32>
    %c0_28 = arith.constant 0 : index
    %c0_29 = arith.constant 0 : index
    %86 = vector.load %arg10[%c0_28, %c0_29] : memref<2x18xf32, #tpu.memory_space<vmem>>, vector<2x18xf32>
    tpu.vector_store %arg10[%c0_28, %c0_29], %85 {strides = array<i32>} : memref<2x18xf32, #tpu.memory_space<vmem>>, vector<2x18xf32>,
    %87 = tpu.concatenate %46, %71 in 1 : vector<512x3xf32>, vector<512x3xf32> -> vector<512x6xf32>
    %c0_30 = arith.constant 0 : index
    %c0_31 = arith.constant 0 : index
    %88 = vector.load %arg9[%c0_30, %c0_31] : memref<512x6xf32, #tpu.memory_space<vmem>>, vector<512x6xf32>
    tpu.vector_store %arg9[%c0_30, %c0_31], %87 {strides = array<i32>} : memref<512x6xf32, #tpu.memory_space<vmem>>, vector<512x6xf32>,
    return
  }
}

</mosaic_0001>

<llo_original>
// kernel: tpu_custom_call.1
$region0: #{tpu_custom_call.1}
  #allocation0 [shape = 'u32[]', space=smem, size = 0x4, offset = 0x4, fixed_abs, tag = 'smem constant byte address 0x4 - core index']
  #allocation1 [shape = 'u32[144,128]{1,0:T(1,128)}', space=vmem, size = 0x12000, scoped, tag = 'internal scratch']
  #allocation2 [shape = 'f32[1,1]{1,0:T(1,128)S(1)}', space=vmem, size = 0x200, scoped, tag = 'scoped memory for tpu_custom_call.1']
  %s0 = inlined_call_operand.vmem [shape: f32[512,24], index: 0, kind: input, shape index: {}]
  %s1 = inlined_call_operand.vmem [shape: f32[512,3], index: 1, kind: input, shape index: {}]
  %s2 = inlined_call_operand.vmem [shape: s32[512,1], index: 2, kind: input, shape index: {}]
  %s3 = inlined_call_operand.vmem [shape: s32[1,512], index: 3, kind: input, shape index: {}]
  %s4 = inlined_call_operand.vmem [shape: f32[2,1], index: 4, kind: input, shape index: {}]
  %s5 = inlined_call_operand.vmem [shape: f32[24,24], index: 5, kind: input, shape index: {}]
  %s6 = inlined_call_operand.vmem [shape: f32[1,24], index: 6, kind: input, shape index: {}]
  %s7 = inlined_call_operand.vmem [shape: f32[1,24], index: 7, kind: input, shape index: {}]
  %s8 = inlined_call_operand.<no memory space> [shape: f32[1,1], index: 8, kind: input, shape index: {}]
  %s9 = inlined_call_operand.vmem [shape: f32[512,6], index: 9, kind: output, shape index: {0}]
  %s10 = inlined_call_operand.hbm [shape: f32[2,18], index: 10, kind: output, shape index: {1}]
  %11 = xla_tuple %s9, %s10
  %s12 = sld [smem:[#allocation0]]
  $region54: #{tpu_custom_call.1} parent=0
    _
  %s14 = ssub.s32 1, %s12
  %s15 = scalar_select 0, %s14, %s12
  %v16 = vstv %s8
  %17 = vst [vmem:[#allocation2] sm:$0x1] %v16
  $region1: #{tpu_custom_call.1} parent=0
    #allocation3 [shape = 'u8[1024]{0}', space=vmem, size = 0x400, scoped, tag = 'output window, operand 1, single buffered']
    #allocation4 [shape = 's32[1]{0}', space=sflag, size = 0x4, scoped, tag = 'scoped memory for tpu_custom_call.1']
    %18 = vsyncpa [#allocation4], 0
    // Predicated region
    $region2: #{tpu_custom_call.1} parent=1 // pred_check
      _
    $region3: #{tpu_custom_call.1} parent=1 // pred_check_branch
      %20 = sbr.rel (0) target = $region5
    $region4: #{tpu_custom_call.1} parent=1 // pred_region
      _
    $region5: #{tpu_custom_call.1} parent=1 // pred_fallthru
      _
    // Predicated region
    $region6: #{tpu_custom_call.1} parent=1 // pred_check
      _
    $region7: #{tpu_custom_call.1} parent=1 // pred_check_branch
      %22 = sbr.rel (0) target = $region9
    $region8: #{tpu_custom_call.1} parent=1 // pred_region
      _
    $region9: #{tpu_custom_call.1} parent=1 // pred_fallthru
      _
    // Predicated region
    $region10: #{tpu_custom_call.1} parent=1 // pred_check
      _
    $region11: #{tpu_custom_call.1} parent=1 // pred_check_branch
      %24 = sbr.rel (0) target = $region13
    $region12: #{tpu_custom_call.1} parent=1 // pred_region
      _
    $region13: #{tpu_custom_call.1} parent=1 // pred_fallthru
      _
    // Predicated region
    $region14: #{tpu_custom_call.1} parent=1 // pred_check
      _
    $region15: #{tpu_custom_call.1} parent=1 // pred_check_branch
      %26 = sbr.rel (0) target = $region17
    $region16: #{tpu_custom_call.1} parent=1 // pred_region
      _
    $region17: #{tpu_custom_call.1} parent=1 // pred_fallthru
      _
    // Predicated region
    $region18: #{tpu_custom_call.1} parent=1 // pred_check
      _
    $region19: #{tpu_custom_call.1} parent=1 // pred_check_branch
      %28 = sbr.rel (0) target = $region21
    $region20: #{tpu_custom_call.1} parent=1 // pred_region
      _
    $region21: #{tpu_custom_call.1} parent=1 // pred_fallthru
      _
    // Predicated region
    $region22: #{tpu_custom_call.1} parent=1 // pred_check
      _
    $region23: #{tpu_custom_call.1} parent=1 // pred_check_branch
      %30 = sbr.rel (0) target = $region25
    $region24: #{tpu_custom_call.1} parent=1 // pred_region
      _
    $region25: #{tpu_custom_call.1} parent=1 // pred_fallthru
      _
    // Predicated region
    $region26: #{tpu_custom_call.1} parent=1 // pred_check
      _
    $region27: #{tpu_custom_call.1} parent=1 // pred_check_branch
      %32 = sbr.rel (0) target = $region29
    $region28: #{tpu_custom_call.1} parent=1 // pred_region
      _
    $region29: #{tpu_custom_call.1} parent=1 // pred_fallthru
      _
    // Predicated region
    $region30: #{tpu_custom_call.1} parent=1 // pred_check
      _
    $region31: #{tpu_custom_call.1} parent=1 // pred_check_branch
      %34 = sbr.rel (0) target = $region33
    $region32: #{tpu_custom_call.1} parent=1 // pred_region
      _
    $region33: #{tpu_custom_call.1} parent=1 // pred_fallthru
      _
    // Predicated region
    $region34: #{tpu_custom_call.1} parent=1 // pred_check
      _
    $region35: #{tpu_custom_call.1} parent=1 // pred_check_branch
      %36 = sbr.rel (0) target = $region37
    $region36: #{tpu_custom_call.1} parent=1 // pred_region
      _
    $region37: #{tpu_custom_call.1} parent=1 // pred_fallthru
      _
    %v37 = vld [vmem:[%s0] sm:$0xff]
    %v38 = vld [vmem:[%s0 + $0x8] sm:$0xff]
    %v39 = vld [vmem:[%s0 + $0x10] sm:$0xff]
    %v40 = vld [vmem:[%s0 + $0x18] sm:$0xff]
    %v41 = vld [vmem:[%s0 + $0x20] sm:$0xff]
    %v42 = vld [vmem:[%s0 + $0x28] sm:$0xff]
    %v43 = vld [vmem:[%s0 + $0x30] sm:$0xff]
    %v44 = vld [vmem:[%s0 + $0x38] sm:$0xff]
    %v45 = vld [vmem:[%s0 + $0x40] sm:$0xff]
    %v46 = vld [vmem:[%s0 + $0x48] sm:$0xff]
    %v47 = vld [vmem:[%s0 + $0x50] sm:$0xff]
    %v48 = vld [vmem:[%s0 + $0x58] sm:$0xff]
    %v49 = vld [vmem:[%s0 + $0x60] sm:$0xff]
    %v50 = vld [vmem:[%s0 + $0x68] sm:$0xff]
    %v51 = vld [vmem:[%s0 + $0x70] sm:$0xff]
    %v52 = vld [vmem:[%s0 + $0x78] sm:$0xff]
    %v53 = vld [vmem:[%s0 + $0x80] sm:$0xff]
    %v54 = vld [vmem:[%s0 + $0x88] sm:$0xff]
    %v55 = vld [vmem:[%s0 + $0x90] sm:$0xff]
    %v56 = vld [vmem:[%s0 + $0x98] sm:$0xff]
    %v57 = vld [vmem:[%s0 + $0xa0] sm:$0xff]
    %v58 = vld [vmem:[%s0 + $0xa8] sm:$0xff]
    %v59 = vld [vmem:[%s0 + $0xb0] sm:$0xff]
    %v60 = vld [vmem:[%s0 + $0xb8] sm:$0xff]
    %v61 = vld [vmem:[%s0 + $0xc0] sm:$0xff]
    %v62 = vld [vmem:[%s0 + $0xc8] sm:$0xff]
    %v63 = vld [vmem:[%s0 + $0xd0] sm:$0xff]
    %v64 = vld [vmem:[%s0 + $0xd8] sm:$0xff]
    %v65 = vld [vmem:[%s0 + $0xe0] sm:$0xff]
    %v66 = vld [vmem:[%s0 + $0xe8] sm:$0xff]
    %v67 = vld [vmem:[%s0 + $0xf0] sm:$0xff]
    %v68 = vld [vmem:[%s0 + $0xf8] sm:$0xff]
    %v69 = vld [vmem:[%s0 + $0x100] sm:$0xff]
    %v70 = vld [vmem:[%s0 + $0x108] sm:$0xff]
    %v71 = vld [vmem:[%s0 + $0x110] sm:$0xff]
    %v72 = vld [vmem:[%s0 + $0x118] sm:$0xff]
    %v73 = vld [vmem:[%s0 + $0x120] sm:$0xff]
    %v74 = vld [vmem:[%s0 + $0x128] sm:$0xff]
    %v75 = vld [vmem:[%s0 + $0x130] sm:$0xff]
    %v76 = vld [vmem:[%s0 + $0x138] sm:$0xff]
    %v77 = vld [vmem:[%s0 + $0x140] sm:$0xff]
    %v78 = vld [vmem:[%s0 + $0x148] sm:$0xff]
    %v79 = vld [vmem:[%s0 + $0x150] sm:$0xff]
    %v80 = vld [vmem:[%s0 + $0x158] sm:$0xff]
    %v81 = vld [vmem:[%s0 + $0x160] sm:$0xff]
    %v82 = vld [vmem:[%s0 + $0x168] sm:$0xff]
    %v83 = vld [vmem:[%s0 + $0x170] sm:$0xff]
    %v84 = vld [vmem:[%s0 + $0x178] sm:$0xff]
    %v85 = vld [vmem:[%s0 + $0x180] sm:$0xff]
    %v86 = vld [vmem:[%s0 + $0x188] sm:$0xff]
    %v87 = vld [vmem:[%s0 + $0x190] sm:$0xff]
    %v88 = vld [vmem:[%s0 + $0x198] sm:$0xff]
    %v89 = vld [vmem:[%s0 + $0x1a0] sm:$0xff]
    %v90 = vld [vmem:[%s0 + $0x1a8] sm:$0xff]
    %v91 = vld [vmem:[%s0 + $0x1b0] sm:$0xff]
    %v92 = vld [vmem:[%s0 + $0x1b8] sm:$0xff]
    %v93 = vld [vmem:[%s0 + $0x1c0] sm:$0xff]
    %v94 = vld [vmem:[%s0 + $0x1c8] sm:$0xff]
    %v95 = vld [vmem:[%s0 + $0x1d0] sm:$0xff]
    %v96 = vld [vmem:[%s0 + $0x1d8] sm:$0xff]
    %v97 = vld [vmem:[%s0 + $0x1e0] sm:$0xff]
    %v98 = vld [vmem:[%s0 + $0x1e8] sm:$0xff]
    %v99 = vld [vmem:[%s0 + $0x1f0] sm:$0xff]
    %v100 = vld [vmem:[%s0 + $0x1f8] sm:$0xff]
    %v101 = vld [vmem:[%s1] sm:$0xff]
    %v102 = vld [vmem:[%s1 + $0x8] sm:$0xff]
    %v103 = vld [vmem:[%s1 + $0x10] sm:$0xff]
    %v104 = vld [vmem:[%s1 + $0x18] sm:$0xff]
    %v105 = vld [vmem:[%s1 + $0x20] sm:$0xff]
    %v106 = vld [vmem:[%s1 + $0x28] sm:$0xff]
    %v107 = vld [vmem:[%s1 + $0x30] sm:$0xff]
    %v108 = vld [vmem:[%s1 + $0x38] sm:$0xff]
    %v109 = vld [vmem:[%s1 + $0x40] sm:$0xff]
    %v110 = vld [vmem:[%s1 + $0x48] sm:$0xff]
    %v111 = vld [vmem:[%s1 + $0x50] sm:$0xff]
    %v112 = vld [vmem:[%s1 + $0x58] sm:$0xff]
    %v113 = vld [vmem:[%s1 + $0x60] sm:$0xff]
    %v114 = vld [vmem:[%s1 + $0x68] sm:$0xff]
    %v115 = vld [vmem:[%s1 + $0x70] sm:$0xff]
    %v116 = vld [vmem:[%s1 + $0x78] sm:$0xff]
    %v117 = vld [vmem:[%s1 + $0x80] sm:$0xff]
    %v118 = vld [vmem:[%s1 + $0x88] sm:$0xff]
    %v119 = vld [vmem:[%s1 + $0x90] sm:$0xff]
    %v120 = vld [vmem:[%s1 + $0x98] sm:$0xff]
    %v121 = vld [vmem:[%s1 + $0xa0] sm:$0xff]
    %v122 = vld [vmem:[%s1 + $0xa8] sm:$0xff]
    %v123 = vld [vmem:[%s1 + $0xb0] sm:$0xff]
    %v124 = vld [vmem:[%s1 + $0xb8] sm:$0xff]
    %v125 = vld [vmem:[%s1 + $0xc0] sm:$0xff]
    %v126 = vld [vmem:[%s1 + $0xc8] sm:$0xff]
    %v127 = vld [vmem:[%s1 + $0xd0] sm:$0xff]
    %v128 = vld [vmem:[%s1 + $0xd8] sm:$0xff]
    %v129 = vld [vmem:[%s1 + $0xe0] sm:$0xff]
    %v130 = vld [vmem:[%s1 + $0xe8] sm:$0xff]
    %v131 = vld [vmem:[%s1 + $0xf0] sm:$0xff]
    %v132 = vld [vmem:[%s1 + $0xf8] sm:$0xff]
    %v133 = vld [vmem:[%s1 + $0x100] sm:$0xff]
    %v134 = vld [vmem:[%s1 + $0x108] sm:$0xff]
    %v135 = vld [vmem:[%s1 + $0x110] sm:$0xff]
    %v136 = vld [vmem:[%s1 + $0x118] sm:$0xff]
    %v137 = vld [vmem:[%s1 + $0x120] sm:$0xff]
    %v138 = vld [vmem:[%s1 + $0x128] sm:$0xff]
    %v139 = vld [vmem:[%s1 + $0x130] sm:$0xff]
    %v140 = vld [vmem:[%s1 + $0x138] sm:$0xff]
    %v141 = vld [vmem:[%s1 + $0x140] sm:$0xff]
    %v142 = vld [vmem:[%s1 + $0x148] sm:$0xff]
    %v143 = vld [vmem:[%s1 + $0x150] sm:$0xff]
    %v144 = vld [vmem:[%s1 + $0x158] sm:$0xff]
    %v145 = vld [vmem:[%s1 + $0x160] sm:$0xff]
    %v146 = vld [vmem:[%s1 + $0x168] sm:$0xff]
    %v147 = vld [vmem:[%s1 + $0x170] sm:$0xff]
    %v148 = vld [vmem:[%s1 + $0x178] sm:$0xff]
    %v149 = vld [vmem:[%s1 + $0x180] sm:$0xff]
    %v150 = vld [vmem:[%s1 + $0x188] sm:$0xff]
    %v151 = vld [vmem:[%s1 + $0x190] sm:$0xff]
    %v152 = vld [vmem:[%s1 + $0x198] sm:$0xff]
    %v153 = vld [vmem:[%s1 + $0x1a0] sm:$0xff]
    %v154 = vld [vmem:[%s1 + $0x1a8] sm:$0xff]
    %v155 = vld [vmem:[%s1 + $0x1b0] sm:$0xff]
    %v156 = vld [vmem:[%s1 + $0x1b8] sm:$0xff]
    %v157 = vld [vmem:[%s1 + $0x1c0] sm:$0xff]
    %v158 = vld [vmem:[%s1 + $0x1c8] sm:$0xff]
    %v159 = vld [vmem:[%s1 + $0x1d0] sm:$0xff]
    %v160 = vld [vmem:[%s1 + $0x1d8] sm:$0xff]
    %v161 = vld [vmem:[%s1 + $0x1e0] sm:$0xff]
    %v162 = vld [vmem:[%s1 + $0x1e8] sm:$0xff]
    %v163 = vld [vmem:[%s1 + $0x1f0] sm:$0xff]
    %v164 = vld [vmem:[%s1 + $0x1f8] sm:$0xff]
    %v165 = vld [vmem:[%s2] sm:$0xff]
    %v166 = vld [vmem:[%s2 + $0x8] sm:$0xff]
    %v167 = vld [vmem:[%s2 + $0x10] sm:$0xff]
    %v168 = vld [vmem:[%s2 + $0x18] sm:$0xff]
    %v169 = vld [vmem:[%s2 + $0x20] sm:$0xff]
    %v170 = vld [vmem:[%s2 + $0x28] sm:$0xff]
    %v171 = vld [vmem:[%s2 + $0x30] sm:$0xff]
    %v172 = vld [vmem:[%s2 + $0x38] sm:$0xff]
    %v173 = vld [vmem:[%s2 + $0x40] sm:$0xff]
    %v174 = vld [vmem:[%s2 + $0x48] sm:$0xff]
    %v175 = vld [vmem:[%s2 + $0x50] sm:$0xff]
    %v176 = vld [vmem:[%s2 + $0x58] sm:$0xff]
    %v177 = vld [vmem:[%s2 + $0x60] sm:$0xff]
    %v178 = vld [vmem:[%s2 + $0x68] sm:$0xff]
    %v179 = vld [vmem:[%s2 + $0x70] sm:$0xff]
    %v180 = vld [vmem:[%s2 + $0x78] sm:$0xff]
    %v181 = vld [vmem:[%s2 + $0x80] sm:$0xff]
    %v182 = vld [vmem:[%s2 + $0x88] sm:$0xff]
    %v183 = vld [vmem:[%s2 + $0x90] sm:$0xff]
    %v184 = vld [vmem:[%s2 + $0x98] sm:$0xff]
    %v185 = vld [vmem:[%s2 + $0xa0] sm:$0xff]
    %v186 = vld [vmem:[%s2 + $0xa8] sm:$0xff]
    %v187 = vld [vmem:[%s2 + $0xb0] sm:$0xff]
    %v188 = vld [vmem:[%s2 + $0xb8] sm:$0xff]
    %v189 = vld [vmem:[%s2 + $0xc0] sm:$0xff]
    %v190 = vld [vmem:[%s2 + $0xc8] sm:$0xff]
    %v191 = vld [vmem:[%s2 + $0xd0] sm:$0xff]
    %v192 = vld [vmem:[%s2 + $0xd8] sm:$0xff]
    %v193 = vld [vmem:[%s2 + $0xe0] sm:$0xff]
    %v194 = vld [vmem:[%s2 + $0xe8] sm:$0xff]
    %v195 = vld [vmem:[%s2 + $0xf0] sm:$0xff]
    %v196 = vld [vmem:[%s2 + $0xf8] sm:$0xff]
    %v197 = vld [vmem:[%s2 + $0x100] sm:$0xff]
    %v198 = vld [vmem:[%s2 + $0x108] sm:$0xff]
    %v199 = vld [vmem:[%s2 + $0x110] sm:$0xff]
    %v200 = vld [vmem:[%s2 + $0x118] sm:$0xff]
    %v201 = vld [vmem:[%s2 + $0x120] sm:$0xff]
    %v202 = vld [vmem:[%s2 + $0x128] sm:$0xff]
    %v203 = vld [vmem:[%s2 + $0x130] sm:$0xff]
    %v204 = vld [vmem:[%s2 + $0x138] sm:$0xff]
    %v205 = vld [vmem:[%s2 + $0x140] sm:$0xff]
    %v206 = vld [vmem:[%s2 + $0x148] sm:$0xff]
    %v207 = vld [vmem:[%s2 + $0x150] sm:$0xff]
    %v208 = vld [vmem:[%s2 + $0x158] sm:$0xff]
    %v209 = vld [vmem:[%s2 + $0x160] sm:$0xff]
    %v210 = vld [vmem:[%s2 + $0x168] sm:$0xff]
    %v211 = vld [vmem:[%s2 + $0x170] sm:$0xff]
    %v212 = vld [vmem:[%s2 + $0x178] sm:$0xff]
    %v213 = vld [vmem:[%s2 + $0x180] sm:$0xff]
    %v214 = vld [vmem:[%s2 + $0x188] sm:$0xff]
    %v215 = vld [vmem:[%s2 + $0x190] sm:$0xff]
    %v216 = vld [vmem:[%s2 + $0x198] sm:$0xff]
    %v217 = vld [vmem:[%s2 + $0x1a0] sm:$0xff]
    %v218 = vld [vmem:[%s2 + $0x1a8] sm:$0xff]
    %v219 = vld [vmem:[%s2 + $0x1b0] sm:$0xff]
    %v220 = vld [vmem:[%s2 + $0x1b8] sm:$0xff]
    %v221 = vld [vmem:[%s2 + $0x1c0] sm:$0xff]
    %v222 = vld [vmem:[%s2 + $0x1c8] sm:$0xff]
    %v223 = vld [vmem:[%s2 + $0x1d0] sm:$0xff]
    %v224 = vld [vmem:[%s2 + $0x1d8] sm:$0xff]
    %v225 = vld [vmem:[%s2 + $0x1e0] sm:$0xff]
    %v226 = vld [vmem:[%s2 + $0x1e8] sm:$0xff]
    %v227 = vld [vmem:[%s2 + $0x1f0] sm:$0xff]
    %v228 = vld [vmem:[%s2 + $0x1f8] sm:$0xff]
    %v229 = vld [vmem:[%s3] sm:$0xf]
    %v230 = vld [vmem:[%s4] sm:$0x3]
    %v231 = vlaneseq
    %v232 = vand.u32 %v231, 127
    %233 = vset.pattern.permute.xlu0 0
    %234 = vperm.xlu0 %233, %v165
    %v235 = vpop.permute.xlu0 %234
    %236 = vset.pattern.permute.xlu0 0
    %237 = vperm.xlu0 %236, %v166
    %v238 = vpop.permute.xlu0 %237
    %239 = vset.pattern.permute.xlu0 0
    %240 = vperm.xlu0 %239, %v167
    %v241 = vpop.permute.xlu0 %240
    %242 = vset.pattern.permute.xlu0 0
    %243 = vperm.xlu0 %242, %v168
    %v244 = vpop.permute.xlu0 %243
    %245 = vset.pattern.permute.xlu0 0
    %246 = vperm.xlu0 %245, %v169
    %v247 = vpop.permute.xlu0 %246
    %248 = vset.pattern.permute.xlu0 0
    %249 = vperm.xlu0 %248, %v170
    %v250 = vpop.permute.xlu0 %249
    %251 = vset.pattern.permute.xlu0 0
    %252 = vperm.xlu0 %251, %v171
    %v253 = vpop.permute.xlu0 %252
    %254 = vset.pattern.permute.xlu0 0
    %255 = vperm.xlu0 %254, %v172
    %v256 = vpop.permute.xlu0 %255
    %257 = vset.pattern.permute.xlu0 0
    %258 = vperm.xlu0 %257, %v173
    %v259 = vpop.permute.xlu0 %258
    %260 = vset.pattern.permute.xlu0 0
    %261 = vperm.xlu0 %260, %v174
    %v262 = vpop.permute.xlu0 %261
    %263 = vset.pattern.permute.xlu0 0
    %264 = vperm.xlu0 %263, %v175
    %v265 = vpop.permute.xlu0 %264
    %266 = vset.pattern.permute.xlu0 0
    %267 = vperm.xlu0 %266, %v176
    %v268 = vpop.permute.xlu0 %267
    %269 = vset.pattern.permute.xlu0 0
    %270 = vperm.xlu0 %269, %v177
    %v271 = vpop.permute.xlu0 %270
    %272 = vset.pattern.permute.xlu0 0
    %273 = vperm.xlu0 %272, %v178
    %v274 = vpop.permute.xlu0 %273
    %275 = vset.pattern.permute.xlu0 0
    %276 = vperm.xlu0 %275, %v179
    %v277 = vpop.permute.xlu0 %276
    %278 = vset.pattern.permute.xlu0 0
    %279 = vperm.xlu0 %278, %v180
    %v280 = vpop.permute.xlu0 %279
    %281 = vset.pattern.permute.xlu0 0
    %282 = vperm.xlu0 %281, %v181
    %v283 = vpop.permute.xlu0 %282
    %284 = vset.pattern.permute.xlu0 0
    %285 = vperm.xlu0 %284, %v182
    %v286 = vpop.permute.xlu0 %285
    %287 = vset.pattern.permute.xlu0 0
    %288 = vperm.xlu0 %287, %v183
    %v289 = vpop.permute.xlu0 %288
    %290 = vset.pattern.permute.xlu0 0
    %291 = vperm.xlu0 %290, %v184
    %v292 = vpop.permute.xlu0 %291
    %293 = vset.pattern.permute.xlu0 0
    %294 = vperm.xlu0 %293, %v185
    %v295 = vpop.permute.xlu0 %294
    %296 = vset.pattern.permute.xlu0 0
    %297 = vperm.xlu0 %296, %v186
    %v298 = vpop.permute.xlu0 %297
    %299 = vset.pattern.permute.xlu0 0
    %300 = vperm.xlu0 %299, %v187
    %v301 = vpop.permute.xlu0 %300
    %302 = vset.pattern.permute.xlu0 0
    %303 = vperm.xlu0 %302, %v188
    %v304 = vpop.permute.xlu0 %303
    %305 = vset.pattern.permute.xlu0 0
    %306 = vperm.xlu0 %305, %v189
    %v307 = vpop.permute.xlu0 %306
    %308 = vset.pattern.permute.xlu0 0
    %309 = vperm.xlu0 %308, %v190
    %v310 = vpop.permute.xlu0 %309
    %311 = vset.pattern.permute.xlu0 0
    %312 = vperm.xlu0 %311, %v191
    %v313 = vpop.permute.xlu0 %312
    %314 = vset.pattern.permute.xlu0 0
    %315 = vperm.xlu0 %314, %v192
    %v316 = vpop.permute.xlu0 %315
    %317 = vset.pattern.permute.xlu0 0
    %318 = vperm.xlu0 %317, %v193
    %v319 = vpop.permute.xlu0 %318
    %320 = vset.pattern.permute.xlu0 0
    %321 = vperm.xlu0 %320, %v194
    %v322 = vpop.permute.xlu0 %321
    %323 = vset.pattern.permute.xlu0 0
    %324 = vperm.xlu0 %323, %v195
    %v325 = vpop.permute.xlu0 %324
    %326 = vset.pattern.permute.xlu0 0
    %327 = vperm.xlu0 %326, %v196
    %v328 = vpop.permute.xlu0 %327
    %329 = vset.pattern.permute.xlu0 0
    %330 = vperm.xlu0 %329, %v197
    %v331 = vpop.permute.xlu0 %330
    %332 = vset.pattern.permute.xlu0 0
    %333 = vperm.xlu0 %332, %v198
    %v334 = vpop.permute.xlu0 %333
    %335 = vset.pattern.permute.xlu0 0
    %336 = vperm.xlu0 %335, %v199
    %v337 = vpop.permute.xlu0 %336
    %338 = vset.pattern.permute.xlu0 0
    %339 = vperm.xlu0 %338, %v200
    %v340 = vpop.permute.xlu0 %339
    %341 = vset.pattern.permute.xlu0 0
    %342 = vperm.xlu0 %341, %v201
    %v343 = vpop.permute.xlu0 %342
    %344 = vset.pattern.permute.xlu0 0
    %345 = vperm.xlu0 %344, %v202
    %v346 = vpop.permute.xlu0 %345
    %347 = vset.pattern.permute.xlu0 0
    %348 = vperm.xlu0 %347, %v203
    %v349 = vpop.permute.xlu0 %348
    %350 = vset.pattern.permute.xlu0 0
    %351 = vperm.xlu0 %350, %v204
    %v352 = vpop.permute.xlu0 %351
    %353 = vset.pattern.permute.xlu0 0
    %354 = vperm.xlu0 %353, %v205
    %v355 = vpop.permute.xlu0 %354
    %356 = vset.pattern.permute.xlu0 0
    %357 = vperm.xlu0 %356, %v206
    %v358 = vpop.permute.xlu0 %357
    %359 = vset.pattern.permute.xlu0 0
    %360 = vperm.xlu0 %359, %v207
    %v361 = vpop.permute.xlu0 %360
    %362 = vset.pattern.permute.xlu0 0
    %363 = vperm.xlu0 %362, %v208
    %v364 = vpop.permute.xlu0 %363
    %365 = vset.pattern.permute.xlu0 0
    %366 = vperm.xlu0 %365, %v209
    %v367 = vpop.permute.xlu0 %366
    %368 = vset.pattern.permute.xlu0 0
    %369 = vperm.xlu0 %368, %v210
    %v370 = vpop.permute.xlu0 %369
    %371 = vset.pattern.permute.xlu0 0
    %372 = vperm.xlu0 %371, %v211
    %v373 = vpop.permute.xlu0 %372
    %374 = vset.pattern.permute.xlu0 0
    %375 = vperm.xlu0 %374, %v212
    %v376 = vpop.permute.xlu0 %375
    %377 = vset.pattern.permute.xlu0 0
    %378 = vperm.xlu0 %377, %v213
    %v379 = vpop.permute.xlu0 %378
    %380 = vset.pattern.permute.xlu0 0
    %381 = vperm.xlu0 %380, %v214
    %v382 = vpop.permute.xlu0 %381
    %383 = vset.pattern.permute.xlu0 0
    %384 = vperm.xlu0 %383, %v215
    %v385 = vpop.permute.xlu0 %384
    %386 = vset.pattern.permute.xlu0 0
    %387 = vperm.xlu0 %386, %v216
    %v388 = vpop.permute.xlu0 %387
    %389 = vset.pattern.permute.xlu0 0
    %390 = vperm.xlu0 %389, %v217
    %v391 = vpop.permute.xlu0 %390
    %392 = vset.pattern.permute.xlu0 0
    %393 = vperm.xlu0 %392, %v218
    %v394 = vpop.permute.xlu0 %393
    %395 = vset.pattern.permute.xlu0 0
    %396 = vperm.xlu0 %395, %v219
    %v397 = vpop.permute.xlu0 %396
    %398 = vset.pattern.permute.xlu0 0
    %399 = vperm.xlu0 %398, %v220
    %v400 = vpop.permute.xlu0 %399
    %401 = vset.pattern.permute.xlu0 0
    %402 = vperm.xlu0 %401, %v221
    %v403 = vpop.permute.xlu0 %402
    %404 = vset.pattern.permute.xlu0 0
    %405 = vperm.xlu0 %404, %v222
    %v406 = vpop.permute.xlu0 %405
    %407 = vset.pattern.permute.xlu0 0
    %408 = vperm.xlu0 %407, %v223
    %v409 = vpop.permute.xlu0 %408
    %410 = vset.pattern.permute.xlu0 0
    %411 = vperm.xlu0 %410, %v224
    %v412 = vpop.permute.xlu0 %411
    %413 = vset.pattern.permute.xlu0 0
    %414 = vperm.xlu0 %413, %v225
    %v415 = vpop.permute.xlu0 %414
    %416 = vset.pattern.permute.xlu0 0
    %417 = vperm.xlu0 %416, %v226
    %v418 = vpop.permute.xlu0 %417
    %419 = vset.pattern.permute.xlu0 0
    %420 = vperm.xlu0 %419, %v227
    %v421 = vpop.permute.xlu0 %420
    %422 = vset.pattern.permute.xlu0 0
    %423 = vperm.xlu0 %422, %v228
    %v424 = vpop.permute.xlu0 %423
    %vm425 = vcmp.eq.s32.totalorder %v232, %v235
    %vm426 = vcmp.eq.s32.totalorder %v232, %v238
    %vm427 = vcmp.eq.s32.totalorder %v232, %v241
    %vm428 = vcmp.eq.s32.totalorder %v232, %v244
    %vm429 = vcmp.eq.s32.totalorder %v232, %v247
    %vm430 = vcmp.eq.s32.totalorder %v232, %v250
    %vm431 = vcmp.eq.s32.totalorder %v232, %v253
    %vm432 = vcmp.eq.s32.totalorder %v232, %v256
    %vm433 = vcmp.eq.s32.totalorder %v232, %v259
    %vm434 = vcmp.eq.s32.totalorder %v232, %v262
    %vm435 = vcmp.eq.s32.totalorder %v232, %v265
    %vm436 = vcmp.eq.s32.totalorder %v232, %v268
    %vm437 = vcmp.eq.s32.totalorder %v232, %v271
    %vm438 = vcmp.eq.s32.totalorder %v232, %v274
    %vm439 = vcmp.eq.s32.totalorder %v232, %v277
    %vm440 = vcmp.eq.s32.totalorder %v232, %v280
    %vm441 = vcmp.eq.s32.totalorder %v232, %v283
    %vm442 = vcmp.eq.s32.totalorder %v232, %v286
    %vm443 = vcmp.eq.s32.totalorder %v232, %v289
    %vm444 = vcmp.eq.s32.totalorder %v232, %v292
    %vm445 = vcmp.eq.s32.totalorder %v232, %v295
    %vm446 = vcmp.eq.s32.totalorder %v232, %v298
    %vm447 = vcmp.eq.s32.totalorder %v232, %v301
    %vm448 = vcmp.eq.s32.totalorder %v232, %v304
    %vm449 = vcmp.eq.s32.totalorder %v232, %v307
    %vm450 = vcmp.eq.s32.totalorder %v232, %v310
    %vm451 = vcmp.eq.s32.totalorder %v232, %v313
    %vm452 = vcmp.eq.s32.totalorder %v232, %v316
    %vm453 = vcmp.eq.s32.totalorder %v232, %v319
    %vm454 = vcmp.eq.s32.totalorder %v232, %v322
    %vm455 = vcmp.eq.s32.totalorder %v232, %v325
    %vm456 = vcmp.eq.s32.totalorder %v232, %v328
    %vm457 = vcmp.eq.s32.totalorder %v232, %v331
    %vm458 = vcmp.eq.s32.totalorder %v232, %v334
    %vm459 = vcmp.eq.s32.totalorder %v232, %v337
    %vm460 = vcmp.eq.s32.totalorder %v232, %v340
    %vm461 = vcmp.eq.s32.totalorder %v232, %v343
    %vm462 = vcmp.eq.s32.totalorder %v232, %v346
    %vm463 = vcmp.eq.s32.totalorder %v232, %v349
    %vm464 = vcmp.eq.s32.totalorder %v232, %v352
    %vm465 = vcmp.eq.s32.totalorder %v232, %v355
    %vm466 = vcmp.eq.s32.totalorder %v232, %v358
    %vm467 = vcmp.eq.s32.totalorder %v232, %v361
    %vm468 = vcmp.eq.s32.totalorder %v232, %v364
    %vm469 = vcmp.eq.s32.totalorder %v232, %v367
    %vm470 = vcmp.eq.s32.totalorder %v232, %v370
    %vm471 = vcmp.eq.s32.totalorder %v232, %v373
    %vm472 = vcmp.eq.s32.totalorder %v232, %v376
    %vm473 = vcmp.eq.s32.totalorder %v232, %v379
    %vm474 = vcmp.eq.s32.totalorder %v232, %v382
    %vm475 = vcmp.eq.s32.totalorder %v232, %v385
    %vm476 = vcmp.eq.s32.totalorder %v232, %v388
    %vm477 = vcmp.eq.s32.totalorder %v232, %v391
    %vm478 = vcmp.eq.s32.totalorder %v232, %v394
    %vm479 = vcmp.eq.s32.totalorder %v232, %v397
    %vm480 = vcmp.eq.s32.totalorder %v232, %v400
    %vm481 = vcmp.eq.s32.totalorder %v232, %v403
    %vm482 = vcmp.eq.s32.totalorder %v232, %v406
    %vm483 = vcmp.eq.s32.totalorder %v232, %v409
    %vm484 = vcmp.eq.s32.totalorder %v232, %v412
    %vm485 = vcmp.eq.s32.totalorder %v232, %v415
    %vm486 = vcmp.eq.s32.totalorder %v232, %v418
    %vm487 = vcmp.eq.s32.totalorder %v232, %v421
    %vm488 = vcmp.eq.s32.totalorder %v232, %v424
    %v489 = vsel %vm425, 1, 0
    %v490 = vsel %vm426, 1, 0
    %v491 = vsel %vm427, 1, 0
    %v492 = vsel %vm428, 1, 0
    %v493 = vsel %vm429, 1, 0
    %v494 = vsel %vm430, 1, 0
    %v495 = vsel %vm431, 1, 0
    %v496 = vsel %vm432, 1, 0
    %v497 = vsel %vm433, 1, 0
    %v498 = vsel %vm434, 1, 0
    %v499 = vsel %vm435, 1, 0
    %v500 = vsel %vm436, 1, 0
    %v501 = vsel %vm437, 1, 0
    %v502 = vsel %vm438, 1, 0
    %v503 = vsel %vm439, 1, 0
    %v504 = vsel %vm440, 1, 0
    %v505 = vsel %vm441, 1, 0
    %v506 = vsel %vm442, 1, 0
    %v507 = vsel %vm443, 1, 0
    %v508 = vsel %vm444, 1, 0
    %v509 = vsel %vm445, 1, 0
    %v510 = vsel %vm446, 1, 0
    %v511 = vsel %vm447, 1, 0
    %v512 = vsel %vm448, 1, 0
    %v513 = vsel %vm449, 1, 0
    %v514 = vsel %vm450, 1, 0
    %v515 = vsel %vm451, 1, 0
    %v516 = vsel %vm452, 1, 0
    %v517 = vsel %vm453, 1, 0
    %v518 = vsel %vm454, 1, 0
    %v519 = vsel %vm455, 1, 0
    %v520 = vsel %vm456, 1, 0
    %v521 = vsel %vm457, 1, 0
    %v522 = vsel %vm458, 1, 0
    %v523 = vsel %vm459, 1, 0
    %v524 = vsel %vm460, 1, 0
    %v525 = vsel %vm461, 1, 0
    %v526 = vsel %vm462, 1, 0
    %v527 = vsel %vm463, 1, 0
    %v528 = vsel %vm464, 1, 0
    %v529 = vsel %vm465, 1, 0
    %v530 = vsel %vm466, 1, 0
    %v531 = vsel %vm467, 1, 0
    %v532 = vsel %vm468, 1, 0
    %v533 = vsel %vm469, 1, 0
    %v534 = vsel %vm470, 1, 0
    %v535 = vsel %vm471, 1, 0
    %v536 = vsel %vm472, 1, 0
    %v537 = vsel %vm473, 1, 0
    %v538 = vsel %vm474, 1, 0
    %v539 = vsel %vm475, 1, 0
    %v540 = vsel %vm476, 1, 0
    %v541 = vsel %vm477, 1, 0
    %v542 = vsel %vm478, 1, 0
    %v543 = vsel %vm479, 1, 0
    %v544 = vsel %vm480, 1, 0
    %v545 = vsel %vm481, 1, 0
    %v546 = vsel %vm482, 1, 0
    %v547 = vsel %vm483, 1, 0
    %v548 = vsel %vm484, 1, 0
    %v549 = vsel %vm485, 1, 0
    %v550 = vsel %vm486, 1, 0
    %v551 = vsel %vm487, 1, 0
    %v552 = vsel %vm488, 1, 0
    %v553 = vcvt.s32.f32 %v489
    %v554 = vcvt.s32.f32 %v490
    %v555 = vcvt.s32.f32 %v491
    %v556 = vcvt.s32.f32 %v492
    %v557 = vcvt.s32.f32 %v493
    %v558 = vcvt.s32.f32 %v494
    %v559 = vcvt.s32.f32 %v495
    %v560 = vcvt.s32.f32 %v496
    %v561 = vcvt.s32.f32 %v497
    %v562 = vcvt.s32.f32 %v498
    %v563 = vcvt.s32.f32 %v499
    %v564 = vcvt.s32.f32 %v500
    %v565 = vcvt.s32.f32 %v501
    %v566 = vcvt.s32.f32 %v502
    %v567 = vcvt.s32.f32 %v503
    %v568 = vcvt.s32.f32 %v504
    %v569 = vcvt.s32.f32 %v505
    %v570 = vcvt.s32.f32 %v506
    %v571 = vcvt.s32.f32 %v507
    %v572 = vcvt.s32.f32 %v508
    %v573 = vcvt.s32.f32 %v509
    %v574 = vcvt.s32.f32 %v510
    %v575 = vcvt.s32.f32 %v511
    %v576 = vcvt.s32.f32 %v512
    %v577 = vcvt.s32.f32 %v513
    %v578 = vcvt.s32.f32 %v514
    %v579 = vcvt.s32.f32 %v515
    %v580 = vcvt.s32.f32 %v516
    %v581 = vcvt.s32.f32 %v517
    %v582 = vcvt.s32.f32 %v518
    %v583 = vcvt.s32.f32 %v519
    %v584 = vcvt.s32.f32 %v520
    %v585 = vcvt.s32.f32 %v521
    %v586 = vcvt.s32.f32 %v522
    %v587 = vcvt.s32.f32 %v523
    %v588 = vcvt.s32.f32 %v524
    %v589 = vcvt.s32.f32 %v525
    %v590 = vcvt.s32.f32 %v526
    %v591 = vcvt.s32.f32 %v527
    %v592 = vcvt.s32.f32 %v528
    %v593 = vcvt.s32.f32 %v529
    %v594 = vcvt.s32.f32 %v530
    %v595 = vcvt.s32.f32 %v531
    %v596 = vcvt.s32.f32 %v532
    %v597 = vcvt.s32.f32 %v533
    %v598 = vcvt.s32.f32 %v534
    %v599 = vcvt.s32.f32 %v535
    %v600 = vcvt.s32.f32 %v536
    %v601 = vcvt.s32.f32 %v537
    %v602 = vcvt.s32.f32 %v538
    %v603 = vcvt.s32.f32 %v539
    %v604 = vcvt.s32.f32 %v540
    %v605 = vcvt.s32.f32 %v541
    %v606 = vcvt.s32.f32 %v542
    %v607 = vcvt.s32.f32 %v543
    %v608 = vcvt.s32.f32 %v544
    %v609 = vcvt.s32.f32 %v545
    %v610 = vcvt.s32.f32 %v546
    %v611 = vcvt.s32.f32 %v547
    %v612 = vcvt.s32.f32 %v548
    %v613 = vcvt.s32.f32 %v549
    %v614 = vcvt.s32.f32 %v550
    %v615 = vcvt.s32.f32 %v551
    %v616 = vcvt.s32.f32 %v552
    %v617 = vlaneseq
    %v618 = vshrl.u32 %v617, 7
    %v619 = vlaneseq
    %v620 = vshrl.u32 %v619, 7
    %v621 = vsub.s32 0, %v620
    %v622 = vrot.slane %v229, %v621
    %v623 = vlaneseq
    %v624 = vshrl.u32 %v623, 7
    %v625 = vsub.s32 1, %v624
    %v626 = vrot.slane %v229, %v625
    %v627 = vlaneseq
    %v628 = vshrl.u32 %v627, 7
    %v629 = vsub.s32 2, %v628
    %v630 = vrot.slane %v229, %v629
    %v631 = vlaneseq
    %v632 = vshrl.u32 %v631, 7
    %v633 = vsub.s32 3, %v632
    %v634 = vrot.slane %v229, %v633
    %vm635 = vcmp.eq.s32.totalorder %v618, %v622
    %vm636 = vcmp.eq.s32.totalorder %v618, %v626
    %vm637 = vcmp.eq.s32.totalorder %v618, %v630
    %vm638 = vcmp.eq.s32.totalorder %v618, %v634
    %v639 = vsel %vm635, 1, 0
    %v640 = vsel %vm636, 1, 0
    %v641 = vsel %vm637, 1, 0
    %v642 = vsel %vm638, 1, 0
    %v643 = vcvt.s32.f32 %v639
    %v644 = vcvt.s32.f32 %v640
    %v645 = vcvt.s32.f32 %v641
    %v646 = vcvt.s32.f32 %v642
    %v647 = vld [vmem:[%s5] sm:$0xff]
    %v648 = vld [vmem:[%s5 + $0x8] sm:$0xff]
    %v649 = vld [vmem:[%s5 + $0x10] sm:$0xff]
    %v650 = vld [vmem:[%s6] sm:$0x1]
    %v652 = vlaneseq
    %v653 = vshrl.u32 %v652, 7
    %v654 = vsub.s32 0, %v653
    %v655 = vrot.slane %v650, %v654
    %vm657 = vcmask 195584
    %v659 = vsel %vm657, %v37, 0
    %v662 = vsel %vm657, %v38, 0
    %v665 = vsel %vm657, %v39, 0
    %v668 = vsel %vm657, %v40, 0
    %v671 = vsel %vm657, %v41, 0
    %v674 = vsel %vm657, %v42, 0
    %v677 = vsel %vm657, %v43, 0
    %v680 = vsel %vm657, %v44, 0
    %v683 = vsel %vm657, %v45, 0
    %v686 = vsel %vm657, %v46, 0
    %v689 = vsel %vm657, %v47, 0
    %v692 = vsel %vm657, %v48, 0
    %v695 = vsel %vm657, %v49, 0
    %v698 = vsel %vm657, %v50, 0
    %v701 = vsel %vm657, %v51, 0
    %v704 = vsel %vm657, %v52, 0
    %v707 = vsel %vm657, %v53, 0
    %v710 = vsel %vm657, %v54, 0
    %v713 = vsel %vm657, %v55, 0
    %v716 = vsel %vm657, %v56, 0
    %v719 = vsel %vm657, %v57, 0
    %v722 = vsel %vm657, %v58, 0
    %v725 = vsel %vm657, %v59, 0
    %v728 = vsel %vm657, %v60, 0
    %v731 = vsel %vm657, %v61, 0
    %v734 = vsel %vm657, %v62, 0
    %v737 = vsel %vm657, %v63, 0
    %v740 = vsel %vm657, %v64, 0
    %v743 = vsel %vm657, %v65, 0
    %v746 = vsel %vm657, %v66, 0
    %v749 = vsel %vm657, %v67, 0
    %v752 = vsel %vm657, %v68, 0
    %v755 = vsel %vm657, %v69, 0
    %v758 = vsel %vm657, %v70, 0
    %v761 = vsel %vm657, %v71, 0
    %v764 = vsel %vm657, %v72, 0
    %v767 = vsel %vm657, %v73, 0
    %v770 = vsel %vm657, %v74, 0
    %v773 = vsel %vm657, %v75, 0
    %v776 = vsel %vm657, %v76, 0
    %v779 = vsel %vm657, %v77, 0
    %v782 = vsel %vm657, %v78, 0
    %v785 = vsel %vm657, %v79, 0
    %v788 = vsel %vm657, %v80, 0
    %v791 = vsel %vm657, %v81, 0
    %v794 = vsel %vm657, %v82, 0
    %v797 = vsel %vm657, %v83, 0
    %v800 = vsel %vm657, %v84, 0
    %v803 = vsel %vm657, %v85, 0
    %v806 = vsel %vm657, %v86, 0
    %v809 = vsel %vm657, %v87, 0
    %v812 = vsel %vm657, %v88, 0
    %v815 = vsel %vm657, %v89, 0
    %v818 = vsel %vm657, %v90, 0
    %v821 = vsel %vm657, %v91, 0
    %v824 = vsel %vm657, %v92, 0
    %v827 = vsel %vm657, %v93, 0
    %v830 = vsel %vm657, %v94, 0
    %v833 = vsel %vm657, %v95, 0
    %v836 = vsel %vm657, %v96, 0
    %v839 = vsel %vm657, %v97, 0
    %v842 = vsel %vm657, %v98, 0
    %v845 = vsel %vm657, %v99, 0
    %v848 = vsel %vm657, %v100, 0
    %850 = vmatprep.subr.mxu0 0.0
    %851 = vmatpush1.msra.mxu0 0.0
    %852 = vmatprep.subr.mxu0 0.0
    %853 = vmatpush1.msra.mxu0 0.0
    %854 = vmatprep.subr.mxu0 0.0
    %855 = vmatpush1.msra.mxu0 0.0
    %856 = vmatprep.subr.mxu0 0.0
    %857 = vmatpush1.msra.mxu0 0.0
    %858 = vmatprep.subr.mxu0 0.0
    %859 = vmatpush1.msra.mxu0 0.0
    %860 = vmatprep.subr.mxu0 0.0
    %861 = vmatpush1.msra.mxu0 0.0
    %862 = vmatprep.subr.mxu0 0.0
    %863 = vmatpush1.msra.mxu0 0.0
    %864 = vmatprep.subr.mxu0 0.0
    %865 = vmatpush1.msra.mxu0 0.0
    %866 = vmatprep.subr.mxu0 0.0
    %867 = vmatpush1.msra.mxu0 0.0
    %868 = vmatprep.subr.mxu0 0.0
    %869 = vmatpush1.msra.mxu0 0.0
    %870 = vmatprep.subr.mxu0 0.0
    %871 = vmatpush1.msra.mxu0 0.0
    %872 = vmatprep.subr.mxu0 0.0
    %873 = vmatpush1.msra.mxu0 0.0
    %874 = vmatprep.subr.mxu0 0.0
    %875 = vmatpush1.msra.mxu0 0.0
    %876 = vmatprep.subr.mxu0 0.0
    %877 = vmatpush1.msra.mxu0 %v649
    %878 = vmatprep.subr.mxu0 0.0
    %879 = vmatpush1.msra.mxu0 %v648
    %880 = vmatprep.subr.mxu0 0.0
    %881 = vmatpush1.msra.mxu0 %v647
    %882 = vmatprep.subr.mxu0 0.0
    %883 = vmatpush2.msra.mxu0 0.0
    %884 = vmatprep.subr.mxu0 0.0
    %885 = vmatpush2.msra.mxu0 0.0
    %886 = vmatprep.subr.mxu0 0.0
    %887 = vmatpush2.msra.mxu0 0.0
    %888 = vmatprep.subr.mxu0 0.0
    %889 = vmatpush2.msra.mxu0 0.0
    %890 = vmatprep.subr.mxu0 0.0
    %891 = vmatpush2.msra.mxu0 0.0
    %892 = vmatprep.subr.mxu0 0.0
    %893 = vmatpush2.msra.mxu0 0.0
    %894 = vmatprep.subr.mxu0 0.0
    %895 = vmatpush2.msra.mxu0 0.0
    %896 = vmatprep.subr.mxu0 0.0
    %897 = vmatpush2.msra.mxu0 0.0
    %898 = vmatprep.subr.mxu0 0.0
    %899 = vmatpush2.msra.mxu0 0.0
    %900 = vmatprep.subr.mxu0 0.0
    %901 = vmatpush2.msra.mxu0 0.0
    %902 = vmatprep.subr.mxu0 0.0
    %903 = vmatpush2.msra.mxu0 0.0
    %904 = vmatprep.subr.mxu0 0.0
    %905 = vmatpush2.msra.mxu0 0.0
    %906 = vmatprep.subr.mxu0 0.0
    %907 = vmatpush2.msra.mxu0 0.0
    %908 = vmatprep.subr.mxu0 0.0
    %909 = vmatpush2.msra.mxu0 0.0
    %910 = vmatprep.subr.mxu0 0.0
    %911 = vmatpush2.msra.mxu0 0.0
    %912 = vmatprep.subr.mxu0 0.0
    %913 = vmatpush2.msra.mxu0 0.0
    %914 = vmatprep.mubr.f32.mxu0 0.0
    %915 = vmatmul.mubr.f32.gmra.mxu0 %v659
    %v916 = vpop.f32.mrf.mxu0
    %v917 = vadd.f32 %v655, %v916
    %v918 = vpop.f32.mrf.mxu0
    %919 = vmatprep.mubr.f32.mxu0 0.0
    %920 = vmatmul.mubr.f32.gmra.mxu0 %v662
    %v921 = vpop.f32.mrf.mxu0
    %v922 = vadd.f32 %v655, %v921
    %v923 = vpop.f32.mrf.mxu0
    %924 = vmatprep.mubr.f32.mxu0 0.0
    %925 = vmatmul.mubr.f32.gmra.mxu0 %v665
    %v926 = vpop.f32.mrf.mxu0
    %v927 = vadd.f32 %v655, %v926
    %v928 = vpop.f32.mrf.mxu0
    %929 = vmatprep.mubr.f32.mxu0 0.0
    %930 = vmatmul.mubr.f32.gmra.mxu0 %v668
    %v931 = vpop.f32.mrf.mxu0
    %v932 = vadd.f32 %v655, %v931
    %v933 = vpop.f32.mrf.mxu0
    %934 = vmatprep.mubr.f32.mxu0 0.0
    %935 = vmatmul.mubr.f32.gmra.mxu0 %v671
    %v936 = vpop.f32.mrf.mxu0
    %v937 = vadd.f32 %v655, %v936
    %v938 = vpop.f32.mrf.mxu0
    %939 = vmatprep.mubr.f32.mxu0 0.0
    %940 = vmatmul.mubr.f32.gmra.mxu0 %v674
    %v941 = vpop.f32.mrf.mxu0
    %v942 = vadd.f32 %v655, %v941
    %v943 = vpop.f32.mrf.mxu0
    %944 = vmatprep.mubr.f32.mxu0 0.0
    %945 = vmatmul.mubr.f32.gmra.mxu0 %v677
    %v946 = vpop.f32.mrf.mxu0
    %v947 = vadd.f32 %v655, %v946
    %v948 = vpop.f32.mrf.mxu0
    %949 = vmatprep.mubr.f32.mxu0 0.0
    %950 = vmatmul.mubr.f32.gmra.mxu0 %v680
    %v951 = vpop.f32.mrf.mxu0
    %v952 = vadd.f32 %v655, %v951
    %v953 = vpop.f32.mrf.mxu0
    %954 = vmatprep.mubr.f32.mxu0 0.0
    %955 = vmatmul.mubr.f32.gmra.mxu0 %v683
    %v956 = vpop.f32.mrf.mxu0
    %v957 = vadd.f32 %v655, %v956
    %v958 = vpop.f32.mrf.mxu0
    %959 = vmatprep.mubr.f32.mxu0 0.0
    %960 = vmatmul.mubr.f32.gmra.mxu0 %v686
    %v961 = vpop.f32.mrf.mxu0
    %v962 = vadd.f32 %v655, %v961
    %v963 = vpop.f32.mrf.mxu0
    %964 = vmatprep.mubr.f32.mxu0 0.0
    %965 = vmatmul.mubr.f32.gmra.mxu0 %v689
    %v966 = vpop.f32.mrf.mxu0
    %v967 = vadd.f32 %v655, %v966
    %v968 = vpop.f32.mrf.mxu0
    %969 = vmatprep.mubr.f32.mxu0 0.0
    %970 = vmatmul.mubr.f32.gmra.mxu0 %v692
    %v971 = vpop.f32.mrf.mxu0
    %v972 = vadd.f32 %v655, %v971
    %v973 = vpop.f32.mrf.mxu0
    %974 = vmatprep.mubr.f32.mxu0 0.0
    %975 = vmatmul.mubr.f32.gmra.mxu0 %v695
    %v976 = vpop.f32.mrf.mxu0
    %v977 = vadd.f32 %v655, %v976
    %v978 = vpop.f32.mrf.mxu0
    %979 = vmatprep.mubr.f32.mxu0 0.0
    %980 = vmatmul.mubr.f32.gmra.mxu0 %v698
    %v981 = vpop.f32.mrf.mxu0
    %v982 = vadd.f32 %v655, %v981
    %v983 = vpop.f32.mrf.mxu0
    %984 = vmatprep.mubr.f32.mxu0 0.0
    %985 = vmatmul.mubr.f32.gmra.mxu0 %v701
    %v986 = vpop.f32.mrf.mxu0
    %v987 = vadd.f32 %v655, %v986
    %v988 = vpop.f32.mrf.mxu0
    %989 = vmatprep.mubr.f32.mxu0 0.0
    %990 = vmatmul.mubr.f32.gmra.mxu0 %v704
    %v991 = vpop.f32.mrf.mxu0
    %v992 = vadd.f32 %v655, %v991
    %v993 = vpop.f32.mrf.mxu0
    %994 = vmatprep.mubr.f32.mxu0 0.0
    %995 = vmatmul.mubr.f32.gmra.mxu0 %v707
    %v996 = vpop.f32.mrf.mxu0
    %v997 = vadd.f32 %v655, %v996
    %v998 = vpop.f32.mrf.mxu0
    %999 = vmatprep.mubr.f32.mxu0 0.0
    %1000 = vmatmul.mubr.f32.gmra.mxu0 %v710
    %v1001 = vpop.f32.mrf.mxu0
    %v1002 = vadd.f32 %v655, %v1001
    %v1003 = vpop.f32.mrf.mxu0
    %1004 = vmatprep.mubr.f32.mxu0 0.0
    %1005 = vmatmul.mubr.f32.gmra.mxu0 %v713
    %v1006 = vpop.f32.mrf.mxu0
    %v1007 = vadd.f32 %v655, %v1006
    %v1008 = vpop.f32.mrf.mxu0
    %1009 = vmatprep.mubr.f32.mxu0 0.0
    %1010 = vmatmul.mubr.f32.gmra.mxu0 %v716
    %v1011 = vpop.f32.mrf.mxu0
    %v1012 = vadd.f32 %v655, %v1011
    %v1013 = vpop.f32.mrf.mxu0
    %1014 = vmatprep.mubr.f32.mxu0 0.0
    %1015 = vmatmul.mubr.f32.gmra.mxu0 %v719
    %v1016 = vpop.f32.mrf.mxu0
    %v1017 = vadd.f32 %v655, %v1016
    %v1018 = vpop.f32.mrf.mxu0
    %1019 = vmatprep.mubr.f32.mxu0 0.0
    %1020 = vmatmul.mubr.f32.gmra.mxu0 %v722
    %v1021 = vpop.f32.mrf.mxu0
    %v1022 = vadd.f32 %v655, %v1021
    %v1023 = vpop.f32.mrf.mxu0
    %1024 = vmatprep.mubr.f32.mxu0 0.0
    %1025 = vmatmul.mubr.f32.gmra.mxu0 %v725
    %v1026 = vpop.f32.mrf.mxu0
    %v1027 = vadd.f32 %v655, %v1026
    %v1028 = vpop.f32.mrf.mxu0
    %1029 = vmatprep.mubr.f32.mxu0 0.0
    %1030 = vmatmul.mubr.f32.gmra.mxu0 %v728
    %v1031 = vpop.f32.mrf.mxu0
    %v1032 = vadd.f32 %v655, %v1031
    %v1033 = vpop.f32.mrf.mxu0
    %1034 = vmatprep.mubr.f32.mxu0 0.0
    %1035 = vmatmul.mubr.f32.gmra.mxu0 %v731
    %v1036 = vpop.f32.mrf.mxu0
    %v1037 = vadd.f32 %v655, %v1036
    %v1038 = vpop.f32.mrf.mxu0
    %1039 = vmatprep.mubr.f32.mxu0 0.0
    %1040 = vmatmul.mubr.f32.gmra.mxu0 %v734
    %v1041 = vpop.f32.mrf.mxu0
    %v1042 = vadd.f32 %v655, %v1041
    %v1043 = vpop.f32.mrf.mxu0
    %1044 = vmatprep.mubr.f32.mxu0 0.0
    %1045 = vmatmul.mubr.f32.gmra.mxu0 %v737
    %v1046 = vpop.f32.mrf.mxu0
    %v1047 = vadd.f32 %v655, %v1046
    %v1048 = vpop.f32.mrf.mxu0
    %1049 = vmatprep.mubr.f32.mxu0 0.0
    %1050 = vmatmul.mubr.f32.gmra.mxu0 %v740
    %v1051 = vpop.f32.mrf.mxu0
    %v1052 = vadd.f32 %v655, %v1051
    %v1053 = vpop.f32.mrf.mxu0
    %1054 = vmatprep.mubr.f32.mxu0 0.0
    %1055 = vmatmul.mubr.f32.gmra.mxu0 %v743
    %v1056 = vpop.f32.mrf.mxu0
    %v1057 = vadd.f32 %v655, %v1056
    %v1058 = vpop.f32.mrf.mxu0
    %1059 = vmatprep.mubr.f32.mxu0 0.0
    %1060 = vmatmul.mubr.f32.gmra.mxu0 %v746
    %v1061 = vpop.f32.mrf.mxu0
    %v1062 = vadd.f32 %v655, %v1061
    %v1063 = vpop.f32.mrf.mxu0
    %1064 = vmatprep.mubr.f32.mxu0 0.0
    %1065 = vmatmul.mubr.f32.gmra.mxu0 %v749
    %v1066 = vpop.f32.mrf.mxu0
    %v1067 = vadd.f32 %v655, %v1066
    %v1068 = vpop.f32.mrf.mxu0
    %1069 = vmatprep.mubr.f32.mxu0 0.0
    %1070 = vmatmul.mubr.f32.gmra.mxu0 %v752
    %v1071 = vpop.f32.mrf.mxu0
    %v1072 = vadd.f32 %v655, %v1071
    %v1073 = vpop.f32.mrf.mxu0
    %1074 = vmatprep.mubr.f32.mxu0 0.0
    %1075 = vmatmul.mubr.f32.gmra.mxu0 %v755
    %v1076 = vpop.f32.mrf.mxu0
    %v1077 = vadd.f32 %v655, %v1076
    %v1078 = vpop.f32.mrf.mxu0
    %1079 = vmatprep.mubr.f32.mxu0 0.0
    %1080 = vmatmul.mubr.f32.gmra.mxu0 %v758
    %v1081 = vpop.f32.mrf.mxu0
    %v1082 = vadd.f32 %v655, %v1081
    %v1083 = vpop.f32.mrf.mxu0
    %1084 = vmatprep.mubr.f32.mxu0 0.0
    %1085 = vmatmul.mubr.f32.gmra.mxu0 %v761
    %v1086 = vpop.f32.mrf.mxu0
    %v1087 = vadd.f32 %v655, %v1086
    %v1088 = vpop.f32.mrf.mxu0
    %1089 = vmatprep.mubr.f32.mxu0 0.0
    %1090 = vmatmul.mubr.f32.gmra.mxu0 %v764
    %v1091 = vpop.f32.mrf.mxu0
    %v1092 = vadd.f32 %v655, %v1091
    %v1093 = vpop.f32.mrf.mxu0
    %1094 = vmatprep.mubr.f32.mxu0 0.0
    %1095 = vmatmul.mubr.f32.gmra.mxu0 %v767
    %v1096 = vpop.f32.mrf.mxu0
    %v1097 = vadd.f32 %v655, %v1096
    %v1098 = vpop.f32.mrf.mxu0
    %1099 = vmatprep.mubr.f32.mxu0 0.0
    %1100 = vmatmul.mubr.f32.gmra.mxu0 %v770
    %v1101 = vpop.f32.mrf.mxu0
    %v1102 = vadd.f32 %v655, %v1101
    %v1103 = vpop.f32.mrf.mxu0
    %1104 = vmatprep.mubr.f32.mxu0 0.0
    %1105 = vmatmul.mubr.f32.gmra.mxu0 %v773
    %v1106 = vpop.f32.mrf.mxu0
    %v1107 = vadd.f32 %v655, %v1106
    %v1108 = vpop.f32.mrf.mxu0
    %1109 = vmatprep.mubr.f32.mxu0 0.0
    %1110 = vmatmul.mubr.f32.gmra.mxu0 %v776
    %v1111 = vpop.f32.mrf.mxu0
    %v1112 = vadd.f32 %v655, %v1111
    %v1113 = vpop.f32.mrf.mxu0
    %1114 = vmatprep.mubr.f32.mxu0 0.0
    %1115 = vmatmul.mubr.f32.gmra.mxu0 %v779
    %v1116 = vpop.f32.mrf.mxu0
    %v1117 = vadd.f32 %v655, %v1116
    %v1118 = vpop.f32.mrf.mxu0
    %1119 = vmatprep.mubr.f32.mxu0 0.0
    %1120 = vmatmul.mubr.f32.gmra.mxu0 %v782
    %v1121 = vpop.f32.mrf.mxu0
    %v1122 = vadd.f32 %v655, %v1121
    %v1123 = vpop.f32.mrf.mxu0
    %1124 = vmatprep.mubr.f32.mxu0 0.0
    %1125 = vmatmul.mubr.f32.gmra.mxu0 %v785
    %v1126 = vpop.f32.mrf.mxu0
    %v1127 = vadd.f32 %v655, %v1126
    %v1128 = vpop.f32.mrf.mxu0
    %1129 = vmatprep.mubr.f32.mxu0 0.0
    %1130 = vmatmul.mubr.f32.gmra.mxu0 %v788
    %v1131 = vpop.f32.mrf.mxu0
    %v1132 = vadd.f32 %v655, %v1131
    %v1133 = vpop.f32.mrf.mxu0
    %1134 = vmatprep.mubr.f32.mxu0 0.0
    %1135 = vmatmul.mubr.f32.gmra.mxu0 %v791
    %v1136 = vpop.f32.mrf.mxu0
    %v1137 = vadd.f32 %v655, %v1136
    %v1138 = vpop.f32.mrf.mxu0
    %1139 = vmatprep.mubr.f32.mxu0 0.0
    %1140 = vmatmul.mubr.f32.gmra.mxu0 %v794
    %v1141 = vpop.f32.mrf.mxu0
    %v1142 = vadd.f32 %v655, %v1141
    %v1143 = vpop.f32.mrf.mxu0
    %1144 = vmatprep.mubr.f32.mxu0 0.0
    %1145 = vmatmul.mubr.f32.gmra.mxu0 %v797
    %v1146 = vpop.f32.mrf.mxu0
    %v1147 = vadd.f32 %v655, %v1146
    %v1148 = vpop.f32.mrf.mxu0
    %1149 = vmatprep.mubr.f32.mxu0 0.0
    %1150 = vmatmul.mubr.f32.gmra.mxu0 %v800
    %v1151 = vpop.f32.mrf.mxu0
    %v1152 = vadd.f32 %v655, %v1151
    %v1153 = vpop.f32.mrf.mxu0
    %1154 = vmatprep.mubr.f32.mxu0 0.0
    %1155 = vmatmul.mubr.f32.gmra.mxu0 %v803
    %v1156 = vpop.f32.mrf.mxu0
    %v1157 = vadd.f32 %v655, %v1156
    %v1158 = vpop.f32.mrf.mxu0
    %1159 = vmatprep.mubr.f32.mxu0 0.0
    %1160 = vmatmul.mubr.f32.gmra.mxu0 %v806
    %v1161 = vpop.f32.mrf.mxu0
    %v1162 = vadd.f32 %v655, %v1161
    %v1163 = vpop.f32.mrf.mxu0
    %1164 = vmatprep.mubr.f32.mxu0 0.0
    %1165 = vmatmul.mubr.f32.gmra.mxu0 %v809
    %v1166 = vpop.f32.mrf.mxu0
    %v1167 = vadd.f32 %v655, %v1166
    %v1168 = vpop.f32.mrf.mxu0
    %1169 = vmatprep.mubr.f32.mxu0 0.0
    %1170 = vmatmul.mubr.f32.gmra.mxu0 %v812
    %v1171 = vpop.f32.mrf.mxu0
    %v1172 = vadd.f32 %v655, %v1171
    %v1173 = vpop.f32.mrf.mxu0
    %1174 = vmatprep.mubr.f32.mxu0 0.0
    %1175 = vmatmul.mubr.f32.gmra.mxu0 %v815
    %v1176 = vpop.f32.mrf.mxu0
    %v1177 = vadd.f32 %v655, %v1176
    %v1178 = vpop.f32.mrf.mxu0
    %1179 = vmatprep.mubr.f32.mxu0 0.0
    %1180 = vmatmul.mubr.f32.gmra.mxu0 %v818
    %v1181 = vpop.f32.mrf.mxu0
    %v1182 = vadd.f32 %v655, %v1181
    %v1183 = vpop.f32.mrf.mxu0
    %1184 = vmatprep.mubr.f32.mxu0 0.0
    %1185 = vmatmul.mubr.f32.gmra.mxu0 %v821
    %v1186 = vpop.f32.mrf.mxu0
    %v1187 = vadd.f32 %v655, %v1186
    %v1188 = vpop.f32.mrf.mxu0
    %1189 = vmatprep.mubr.f32.mxu0 0.0
    %1190 = vmatmul.mubr.f32.gmra.mxu0 %v824
    %v1191 = vpop.f32.mrf.mxu0
    %v1192 = vadd.f32 %v655, %v1191
    %v1193 = vpop.f32.mrf.mxu0
    %1194 = vmatprep.mubr.f32.mxu0 0.0
    %1195 = vmatmul.mubr.f32.gmra.mxu0 %v827
    %v1196 = vpop.f32.mrf.mxu0
    %v1197 = vadd.f32 %v655, %v1196
    %v1198 = vpop.f32.mrf.mxu0
    %1199 = vmatprep.mubr.f32.mxu0 0.0
    %1200 = vmatmul.mubr.f32.gmra.mxu0 %v830
    %v1201 = vpop.f32.mrf.mxu0
    %v1202 = vadd.f32 %v655, %v1201
    %v1203 = vpop.f32.mrf.mxu0
    %1204 = vmatprep.mubr.f32.mxu0 0.0
    %1205 = vmatmul.mubr.f32.gmra.mxu0 %v833
    %v1206 = vpop.f32.mrf.mxu0
    %v1207 = vadd.f32 %v655, %v1206
    %v1208 = vpop.f32.mrf.mxu0
    %1209 = vmatprep.mubr.f32.mxu0 0.0
    %1210 = vmatmul.mubr.f32.gmra.mxu0 %v836
    %v1211 = vpop.f32.mrf.mxu0
    %v1212 = vadd.f32 %v655, %v1211
    %v1213 = vpop.f32.mrf.mxu0
    %1214 = vmatprep.mubr.f32.mxu0 0.0
    %1215 = vmatmul.mubr.f32.gmra.mxu0 %v839
    %v1216 = vpop.f32.mrf.mxu0
    %v1217 = vadd.f32 %v655, %v1216
    %v1218 = vpop.f32.mrf.mxu0
    %1219 = vmatprep.mubr.f32.mxu0 0.0
    %1220 = vmatmul.mubr.f32.gmra.mxu0 %v842
    %v1221 = vpop.f32.mrf.mxu0
    %v1222 = vadd.f32 %v655, %v1221
    %v1223 = vpop.f32.mrf.mxu0
    %1224 = vmatprep.mubr.f32.mxu0 0.0
    %1225 = vmatmul.mubr.f32.gmra.mxu0 %v845
    %v1226 = vpop.f32.mrf.mxu0
    %v1227 = vadd.f32 %v655, %v1226
    %v1228 = vpop.f32.mrf.mxu0
    %1229 = vmatprep.mubr.f32.mxu0 0.0
    %1230 = vmatmul.mubr.f32.gmra.mxu0 %v848
    %v1231 = vpop.f32.mrf.mxu0
    %v1232 = vadd.f32 %v655, %v1231
    %v1233 = vpop.f32.mrf.mxu0
    %1234 = vdwg.mxu0
    %v1235 = vxor.u32 %v917, 2147483648
    %v1236 = vxor.u32 %v922, 2147483648
    %v1237 = vxor.u32 %v927, 2147483648
    %v1238 = vxor.u32 %v932, 2147483648
    %v1239 = vxor.u32 %v937, 2147483648
    %v1240 = vxor.u32 %v942, 2147483648
    %v1241 = vxor.u32 %v947, 2147483648
    %v1242 = vxor.u32 %v952, 2147483648
    %v1243 = vxor.u32 %v957, 2147483648
    %v1244 = vxor.u32 %v962, 2147483648
    %v1245 = vxor.u32 %v967, 2147483648
    %v1246 = vxor.u32 %v972, 2147483648
    %v1247 = vxor.u32 %v977, 2147483648
    %v1248 = vxor.u32 %v982, 2147483648
    %v1249 = vxor.u32 %v987, 2147483648
    %v1250 = vxor.u32 %v992, 2147483648
    %v1251 = vxor.u32 %v997, 2147483648
    %v1252 = vxor.u32 %v1002, 2147483648
    %v1253 = vxor.u32 %v1007, 2147483648
    %v1254 = vxor.u32 %v1012, 2147483648
    %v1255 = vxor.u32 %v1017, 2147483648
    %v1256 = vxor.u32 %v1022, 2147483648
    %v1257 = vxor.u32 %v1027, 2147483648
    %v1258 = vxor.u32 %v1032, 2147483648
    %v1259 = vxor.u32 %v1037, 2147483648
    %v1260 = vxor.u32 %v1042, 2147483648
    %v1261 = vxor.u32 %v1047, 2147483648
    %v1262 = vxor.u32 %v1052, 2147483648
    %v1263 = vxor.u32 %v1057, 2147483648
    %v1264 = vxor.u32 %v1062, 2147483648
    %v1265 = vxor.u32 %v1067, 2147483648
    %v1266 = vxor.u32 %v1072, 2147483648
    %v1267 = vxor.u32 %v1077, 2147483648
    %v1268 = vxor.u32 %v1082, 2147483648
    %v1269 = vxor.u32 %v1087, 2147483648
    %v1270 = vxor.u32 %v1092, 2147483648
    %v1271 = vxor.u32 %v1097, 2147483648
    %v1272 = vxor.u32 %v1102, 2147483648
    %v1273 = vxor.u32 %v1107, 2147483648
    %v1274 = vxor.u32 %v1112, 2147483648
    %v1275 = vxor.u32 %v1117, 2147483648
    %v1276 = vxor.u32 %v1122, 2147483648
    %v1277 = vxor.u32 %v1127, 2147483648
    %v1278 = vxor.u32 %v1132, 2147483648
    %v1279 = vxor.u32 %v1137, 2147483648
    %v1280 = vxor.u32 %v1142, 2147483648
    %v1281 = vxor.u32 %v1147, 2147483648
    %v1282 = vxor.u32 %v1152, 2147483648
    %v1283 = vxor.u32 %v1157, 2147483648
    %v1284 = vxor.u32 %v1162, 2147483648
    %v1285 = vxor.u32 %v1167, 2147483648
    %v1286 = vxor.u32 %v1172, 2147483648
    %v1287 = vxor.u32 %v1177, 2147483648
    %v1288 = vxor.u32 %v1182, 2147483648
    %v1289 = vxor.u32 %v1187, 2147483648
    %v1290 = vxor.u32 %v1192, 2147483648
    %v1291 = vxor.u32 %v1197, 2147483648
    %v1292 = vxor.u32 %v1202, 2147483648
    %v1293 = vxor.u32 %v1207, 2147483648
    %v1294 = vxor.u32 %v1212, 2147483648
    %v1295 = vxor.u32 %v1217, 2147483648
    %v1296 = vxor.u32 %v1222, 2147483648
    %v1297 = vxor.u32 %v1227, 2147483648
    %v1298 = vxor.u32 %v1232, 2147483648
    %v1299 = vmul.f32 %v1235, 1.442695
    %v1300 = vpow.pop %v1299
    %v1301 = vmul.f32 %v1236, 1.442695
    %v1302 = vpow.pop %v1301
    %v1303 = vmul.f32 %v1237, 1.442695
    %v1304 = vpow.pop %v1303
    %v1305 = vmul.f32 %v1238, 1.442695
    %v1306 = vpow.pop %v1305
    %v1307 = vmul.f32 %v1239, 1.442695
    %v1308 = vpow.pop %v1307
    %v1309 = vmul.f32 %v1240, 1.442695
    %v1310 = vpow.pop %v1309
    %v1311 = vmul.f32 %v1241, 1.442695
    %v1312 = vpow.pop %v1311
    %v1313 = vmul.f32 %v1242, 1.442695
    %v1314 = vpow.pop %v1313
    %v1315 = vmul.f32 %v1243, 1.442695
    %v1316 = vpow.pop %v1315
    %v1317 = vmul.f32 %v1244, 1.442695
    %v1318 = vpow.pop %v1317
    %v1319 = vmul.f32 %v1245, 1.442695
    %v1320 = vpow.pop %v1319
    %v1321 = vmul.f32 %v1246, 1.442695
    %v1322 = vpow.pop %v1321
    %v1323 = vmul.f32 %v1247, 1.442695
    %v1324 = vpow.pop %v1323
    %v1325 = vmul.f32 %v1248, 1.442695
    %v1326 = vpow.pop %v1325
    %v1327 = vmul.f32 %v1249, 1.442695
    %v1328 = vpow.pop %v1327
    %v1329 = vmul.f32 %v1250, 1.442695
    %v1330 = vpow.pop %v1329
    %v1331 = vmul.f32 %v1251, 1.442695
    %v1332 = vpow.pop %v1331
    %v1333 = vmul.f32 %v1252, 1.442695
    %v1334 = vpow.pop %v1333
    %v1335 = vmul.f32 %v1253, 1.442695
    %v1336 = vpow.pop %v1335
    %v1337 = vmul.f32 %v1254, 1.442695
    %v1338 = vpow.pop %v1337
    %v1339 = vmul.f32 %v1255, 1.442695
    %v1340 = vpow.pop %v1339
    %v1341 = vmul.f32 %v1256, 1.442695
    %v1342 = vpow.pop %v1341
    %v1343 = vmul.f32 %v1257, 1.442695
    %v1344 = vpow.pop %v1343
    %v1345 = vmul.f32 %v1258, 1.442695
    %v1346 = vpow.pop %v1345
    %v1347 = vmul.f32 %v1259, 1.442695
    %v1348 = vpow.pop %v1347
    %v1349 = vmul.f32 %v1260, 1.442695
    %v1350 = vpow.pop %v1349
    %v1351 = vmul.f32 %v1261, 1.442695
    %v1352 = vpow.pop %v1351
    %v1353 = vmul.f32 %v1262, 1.442695
    %v1354 = vpow.pop %v1353
    %v1355 = vmul.f32 %v1263, 1.442695
    %v1356 = vpow.pop %v1355
    %v1357 = vmul.f32 %v1264, 1.442695
    %v1358 = vpow.pop %v1357
    %v1359 = vmul.f32 %v1265, 1.442695
    %v1360 = vpow.pop %v1359
    %v1361 = vmul.f32 %v1266, 1.442695
    %v1362 = vpow.pop %v1361
    %v1363 = vmul.f32 %v1267, 1.442695
    %v1364 = vpow.pop %v1363
    %v1365 = vmul.f32 %v1268, 1.442695
    %v1366 = vpow.pop %v1365
    %v1367 = vmul.f32 %v1269, 1.442695
    %v1368 = vpow.pop %v1367
    %v1369 = vmul.f32 %v1270, 1.442695
    %v1370 = vpow.pop %v1369
    %v1371 = vmul.f32 %v1271, 1.442695
    %v1372 = vpow.pop %v1371
    %v1373 = vmul.f32 %v1272, 1.442695
    %v1374 = vpow.pop %v1373
    %v1375 = vmul.f32 %v1273, 1.442695
    %v1376 = vpow.pop %v1375
    %v1377 = vmul.f32 %v1274, 1.442695
    %v1378 = vpow.pop %v1377
    %v1379 = vmul.f32 %v1275, 1.442695
    %v1380 = vpow.pop %v1379
    %v1381 = vmul.f32 %v1276, 1.442695
    %v1382 = vpow.pop %v1381
    %v1383 = vmul.f32 %v1277, 1.442695
    %v1384 = vpow.pop %v1383
    %v1385 = vmul.f32 %v1278, 1.442695
    %v1386 = vpow.pop %v1385
    %v1387 = vmul.f32 %v1279, 1.442695
    %v1388 = vpow.pop %v1387
    %v1389 = vmul.f32 %v1280, 1.442695
    %v1390 = vpow.pop %v1389
    %v1391 = vmul.f32 %v1281, 1.442695
    %v1392 = vpow.pop %v1391
    %v1393 = vmul.f32 %v1282, 1.442695
    %v1394 = vpow.pop %v1393
    %v1395 = vmul.f32 %v1283, 1.442695
    %v1396 = vpow.pop %v1395
    %v1397 = vmul.f32 %v1284, 1.442695
    %v1398 = vpow.pop %v1397
    %v1399 = vmul.f32 %v1285, 1.442695
    %v1400 = vpow.pop %v1399
    %v1401 = vmul.f32 %v1286, 1.442695
    %v1402 = vpow.pop %v1401
    %v1403 = vmul.f32 %v1287, 1.442695
    %v1404 = vpow.pop %v1403
    %v1405 = vmul.f32 %v1288, 1.442695
    %v1406 = vpow.pop %v1405
    %v1407 = vmul.f32 %v1289, 1.442695
    %v1408 = vpow.pop %v1407
    %v1409 = vmul.f32 %v1290, 1.442695
    %v1410 = vpow.pop %v1409
    %v1411 = vmul.f32 %v1291, 1.442695
    %v1412 = vpow.pop %v1411
    %v1413 = vmul.f32 %v1292, 1.442695
    %v1414 = vpow.pop %v1413
    %v1415 = vmul.f32 %v1293, 1.442695
    %v1416 = vpow.pop %v1415
    %v1417 = vmul.f32 %v1294, 1.442695
    %v1418 = vpow.pop %v1417
    %v1419 = vmul.f32 %v1295, 1.442695
    %v1420 = vpow.pop %v1419
    %v1421 = vmul.f32 %v1296, 1.442695
    %v1422 = vpow.pop %v1421
    %v1423 = vmul.f32 %v1297, 1.442695
    %v1424 = vpow.pop %v1423
    %v1425 = vmul.f32 %v1298, 1.442695
    %v1426 = vpow.pop %v1425
    %v1427 = vadd.f32 %v1300, 1.0
    %v1428 = vadd.f32 %v1302, 1.0
    %v1429 = vadd.f32 %v1304, 1.0
    %v1430 = vadd.f32 %v1306, 1.0
    %v1431 = vadd.f32 %v1308, 1.0
    %v1432 = vadd.f32 %v1310, 1.0
    %v1433 = vadd.f32 %v1312, 1.0
    %v1434 = vadd.f32 %v1314, 1.0
    %v1435 = vadd.f32 %v1316, 1.0
    %v1436 = vadd.f32 %v1318, 1.0
    %v1437 = vadd.f32 %v1320, 1.0
    %v1438 = vadd.f32 %v1322, 1.0
    %v1439 = vadd.f32 %v1324, 1.0
    %v1440 = vadd.f32 %v1326, 1.0
    %v1441 = vadd.f32 %v1328, 1.0
    %v1442 = vadd.f32 %v1330, 1.0
    %v1443 = vadd.f32 %v1332, 1.0
    %v1444 = vadd.f32 %v1334, 1.0
    %v1445 = vadd.f32 %v1336, 1.0
    %v1446 = vadd.f32 %v1338, 1.0
    %v1447 = vadd.f32 %v1340, 1.0
    %v1448 = vadd.f32 %v1342, 1.0
    %v1449 = vadd.f32 %v1344, 1.0
    %v1450 = vadd.f32 %v1346, 1.0
    %v1451 = vadd.f32 %v1348, 1.0
    %v1452 = vadd.f32 %v1350, 1.0
    %v1453 = vadd.f32 %v1352, 1.0
    %v1454 = vadd.f32 %v1354, 1.0
    %v1455 = vadd.f32 %v1356, 1.0
    %v1456 = vadd.f32 %v1358, 1.0
    %v1457 = vadd.f32 %v1360, 1.0
    %v1458 = vadd.f32 %v1362, 1.0
    %v1459 = vadd.f32 %v1364, 1.0
    %v1460 = vadd.f32 %v1366, 1.0
    %v1461 = vadd.f32 %v1368, 1.0
    %v1462 = vadd.f32 %v1370, 1.0
    %v1463 = vadd.f32 %v1372, 1.0
    %v1464 = vadd.f32 %v1374, 1.0
    %v1465 = vadd.f32 %v1376, 1.0
    %v1466 = vadd.f32 %v1378, 1.0
    %v1467 = vadd.f32 %v1380, 1.0
    %v1468 = vadd.f32 %v1382, 1.0
    %v1469 = vadd.f32 %v1384, 1.0
    %v1470 = vadd.f32 %v1386, 1.0
    %v1471 = vadd.f32 %v1388, 1.0
    %v1472 = vadd.f32 %v1390, 1.0
    %v1473 = vadd.f32 %v1392, 1.0
    %v1474 = vadd.f32 %v1394, 1.0
    %v1475 = vadd.f32 %v1396, 1.0
    %v1476 = vadd.f32 %v1398, 1.0
    %v1477 = vadd.f32 %v1400, 1.0
    %v1478 = vadd.f32 %v1402, 1.0
    %v1479 = vadd.f32 %v1404, 1.0
    %v1480 = vadd.f32 %v1406, 1.0
    %v1481 = vadd.f32 %v1408, 1.0
    %v1482 = vadd.f32 %v1410, 1.0
    %v1483 = vadd.f32 %v1412, 1.0
    %v1484 = vadd.f32 %v1414, 1.0
    %v1485 = vadd.f32 %v1416, 1.0
    %v1486 = vadd.f32 %v1418, 1.0
    %v1487 = vadd.f32 %v1420, 1.0
    %v1488 = vadd.f32 %v1422, 1.0
    %v1489 = vadd.f32 %v1424, 1.0
    %v1490 = vadd.f32 %v1426, 1.0
    %v1491 = vrcp.pop %v1427
    %v1492 = vmul.f32 1.0, %v1491
    %v1493 = vrcp.pop %v1428
    %v1494 = vmul.f32 1.0, %v1493
    %v1495 = vrcp.pop %v1429
    %v1496 = vmul.f32 1.0, %v1495
    %v1497 = vrcp.pop %v1430
    %v1498 = vmul.f32 1.0, %v1497
    %v1499 = vrcp.pop %v1431
    %v1500 = vmul.f32 1.0, %v1499
    %v1501 = vrcp.pop %v1432
    %v1502 = vmul.f32 1.0, %v1501
    %v1503 = vrcp.pop %v1433
    %v1504 = vmul.f32 1.0, %v1503
    %v1505 = vrcp.pop %v1434
    %v1506 = vmul.f32 1.0, %v1505
    %v1507 = vrcp.pop %v1435
    %v1508 = vmul.f32 1.0, %v1507
    %v1509 = vrcp.pop %v1436
    %v1510 = vmul.f32 1.0, %v1509
    %v1511 = vrcp.pop %v1437
    %v1512 = vmul.f32 1.0, %v1511
    %v1513 = vrcp.pop %v1438
    %v1514 = vmul.f32 1.0, %v1513
    %v1515 = vrcp.pop %v1439
    %v1516 = vmul.f32 1.0, %v1515
    %v1517 = vrcp.pop %v1440
    %v1518 = vmul.f32 1.0, %v1517
    %v1519 = vrcp.pop %v1441
    %v1520 = vmul.f32 1.0, %v1519
    %v1521 = vrcp.pop %v1442
    %v1522 = vmul.f32 1.0, %v1521
    %v1523 = vrcp.pop %v1443
    %v1524 = vmul.f32 1.0, %v1523
    %v1525 = vrcp.pop %v1444
    %v1526 = vmul.f32 1.0, %v1525
    %v1527 = vrcp.pop %v1445
    %v1528 = vmul.f32 1.0, %v1527
    %v1529 = vrcp.pop %v1446
    %v1530 = vmul.f32 1.0, %v1529
    %v1531 = vrcp.pop %v1447
    %v1532 = vmul.f32 1.0, %v1531
    %v1533 = vrcp.pop %v1448
    %v1534 = vmul.f32 1.0, %v1533
    %v1535 = vrcp.pop %v1449
    %v1536 = vmul.f32 1.0, %v1535
    %v1537 = vrcp.pop %v1450
    %v1538 = vmul.f32 1.0, %v1537
    %v1539 = vrcp.pop %v1451
    %v1540 = vmul.f32 1.0, %v1539
    %v1541 = vrcp.pop %v1452
    %v1542 = vmul.f32 1.0, %v1541
    %v1543 = vrcp.pop %v1453
    %v1544 = vmul.f32 1.0, %v1543
    %v1545 = vrcp.pop %v1454
    %v1546 = vmul.f32 1.0, %v1545
    %v1547 = vrcp.pop %v1455
    %v1548 = vmul.f32 1.0, %v1547
    %v1549 = vrcp.pop %v1456
    %v1550 = vmul.f32 1.0, %v1549
    %v1551 = vrcp.pop %v1457
    %v1552 = vmul.f32 1.0, %v1551
    %v1553 = vrcp.pop %v1458
    %v1554 = vmul.f32 1.0, %v1553
    %v1555 = vrcp.pop %v1459
    %v1556 = vmul.f32 1.0, %v1555
    %v1557 = vrcp.pop %v1460
    %v1558 = vmul.f32 1.0, %v1557
    %v1559 = vrcp.pop %v1461
    %v1560 = vmul.f32 1.0, %v1559
    %v1561 = vrcp.pop %v1462
    %v1562 = vmul.f32 1.0, %v1561
    %v1563 = vrcp.pop %v1463
    %v1564 = vmul.f32 1.0, %v1563
    %v1565 = vrcp.pop %v1464
    %v1566 = vmul.f32 1.0, %v1565
    %v1567 = vrcp.pop %v1465
    %v1568 = vmul.f32 1.0, %v1567
    %v1569 = vrcp.pop %v1466
    %v1570 = vmul.f32 1.0, %v1569
    %v1571 = vrcp.pop %v1467
    %v1572 = vmul.f32 1.0, %v1571
    %v1573 = vrcp.pop %v1468
    %v1574 = vmul.f32 1.0, %v1573
    %v1575 = vrcp.pop %v1469
    %v1576 = vmul.f32 1.0, %v1575
    %v1577 = vrcp.pop %v1470
    %v1578 = vmul.f32 1.0, %v1577
    %v1579 = vrcp.pop %v1471
    %v1580 = vmul.f32 1.0, %v1579
    %v1581 = vrcp.pop %v1472
    %v1582 = vmul.f32 1.0, %v1581
    %v1583 = vrcp.pop %v1473
    %v1584 = vmul.f32 1.0, %v1583
    %v1585 = vrcp.pop %v1474
    %v1586 = vmul.f32 1.0, %v1585
    %v1587 = vrcp.pop %v1475
    %v1588 = vmul.f32 1.0, %v1587
    %v1589 = vrcp.pop %v1476
    %v1590 = vmul.f32 1.0, %v1589
    %v1591 = vrcp.pop %v1477
    %v1592 = vmul.f32 1.0, %v1591
    %v1593 = vrcp.pop %v1478
    %v1594 = vmul.f32 1.0, %v1593
    %v1595 = vrcp.pop %v1479
    %v1596 = vmul.f32 1.0, %v1595
    %v1597 = vrcp.pop %v1480
    %v1598 = vmul.f32 1.0, %v1597
    %v1599 = vrcp.pop %v1481
    %v1600 = vmul.f32 1.0, %v1599
    %v1601 = vrcp.pop %v1482
    %v1602 = vmul.f32 1.0, %v1601
    %v1603 = vrcp.pop %v1483
    %v1604 = vmul.f32 1.0, %v1603
    %v1605 = vrcp.pop %v1484
    %v1606 = vmul.f32 1.0, %v1605
    %v1607 = vrcp.pop %v1485
    %v1608 = vmul.f32 1.0, %v1607
    %v1609 = vrcp.pop %v1486
    %v1610 = vmul.f32 1.0, %v1609
    %v1611 = vrcp.pop %v1487
    %v1612 = vmul.f32 1.0, %v1611
    %v1613 = vrcp.pop %v1488
    %v1614 = vmul.f32 1.0, %v1613
    %v1615 = vrcp.pop %v1489
    %v1616 = vmul.f32 1.0, %v1615
    %v1617 = vrcp.pop %v1490
    %v1618 = vmul.f32 1.0, %v1617
    %v1619 = vmul.f32 %v917, %v1492
    %v1620 = vmul.f32 %v922, %v1494
    %v1621 = vmul.f32 %v927, %v1496
    %v1622 = vmul.f32 %v932, %v1498
    %v1623 = vmul.f32 %v937, %v1500
    %v1624 = vmul.f32 %v942, %v1502
    %v1625 = vmul.f32 %v947, %v1504
    %v1626 = vmul.f32 %v952, %v1506
    %v1627 = vmul.f32 %v957, %v1508
    %v1628 = vmul.f32 %v962, %v1510
    %v1629 = vmul.f32 %v967, %v1512
    %v1630 = vmul.f32 %v972, %v1514
    %v1631 = vmul.f32 %v977, %v1516
    %v1632 = vmul.f32 %v982, %v1518
    %v1633 = vmul.f32 %v987, %v1520
    %v1634 = vmul.f32 %v992, %v1522
    %v1635 = vmul.f32 %v997, %v1524
    %v1636 = vmul.f32 %v1002, %v1526
    %v1637 = vmul.f32 %v1007, %v1528
    %v1638 = vmul.f32 %v1012, %v1530
    %v1639 = vmul.f32 %v1017, %v1532
    %v1640 = vmul.f32 %v1022, %v1534
    %v1641 = vmul.f32 %v1027, %v1536
    %v1642 = vmul.f32 %v1032, %v1538
    %v1643 = vmul.f32 %v1037, %v1540
    %v1644 = vmul.f32 %v1042, %v1542
    %v1645 = vmul.f32 %v1047, %v1544
    %v1646 = vmul.f32 %v1052, %v1546
    %v1647 = vmul.f32 %v1057, %v1548
    %v1648 = vmul.f32 %v1062, %v1550
    %v1649 = vmul.f32 %v1067, %v1552
    %v1650 = vmul.f32 %v1072, %v1554
    %v1651 = vmul.f32 %v1077, %v1556
    %v1652 = vmul.f32 %v1082, %v1558
    %v1653 = vmul.f32 %v1087, %v1560
    %v1654 = vmul.f32 %v1092, %v1562
    %v1655 = vmul.f32 %v1097, %v1564
    %v1656 = vmul.f32 %v1102, %v1566
    %v1657 = vmul.f32 %v1107, %v1568
    %v1658 = vmul.f32 %v1112, %v1570
    %v1659 = vmul.f32 %v1117, %v1572
    %v1660 = vmul.f32 %v1122, %v1574
    %v1661 = vmul.f32 %v1127, %v1576
    %v1662 = vmul.f32 %v1132, %v1578
    %v1663 = vmul.f32 %v1137, %v1580
    %v1664 = vmul.f32 %v1142, %v1582
    %v1665 = vmul.f32 %v1147, %v1584
    %v1666 = vmul.f32 %v1152, %v1586
    %v1667 = vmul.f32 %v1157, %v1588
    %v1668 = vmul.f32 %v1162, %v1590
    %v1669 = vmul.f32 %v1167, %v1592
    %v1670 = vmul.f32 %v1172, %v1594
    %v1671 = vmul.f32 %v1177, %v1596
    %v1672 = vmul.f32 %v1182, %v1598
    %v1673 = vmul.f32 %v1187, %v1600
    %v1674 = vmul.f32 %v1192, %v1602
    %v1675 = vmul.f32 %v1197, %v1604
    %v1676 = vmul.f32 %v1202, %v1606
    %v1677 = vmul.f32 %v1207, %v1608
    %v1678 = vmul.f32 %v1212, %v1610
    %v1679 = vmul.f32 %v1217, %v1612
    %v1680 = vmul.f32 %v1222, %v1614
    %v1681 = vmul.f32 %v1227, %v1616
    %v1682 = vmul.f32 %v1232, %v1618
    %v1683 = vld [vmem:[%s7] sm:$0x1]
    %v1685 = vlaneseq
    %v1686 = vshrl.u32 %v1685, 7
    %v1687 = vsub.s32 0, %v1686
    %v1688 = vrot.slane %v1683, %v1687
    %v1690 = vmul.f32 %v1619, %v1688
    %v1691 = vmul.f32 %v1620, %v1688
    %v1692 = vmul.f32 %v1621, %v1688
    %v1693 = vmul.f32 %v1622, %v1688
    %v1694 = vmul.f32 %v1623, %v1688
    %v1695 = vmul.f32 %v1624, %v1688
    %v1696 = vmul.f32 %v1625, %v1688
    %v1697 = vmul.f32 %v1626, %v1688
    %v1698 = vmul.f32 %v1627, %v1688
    %v1699 = vmul.f32 %v1628, %v1688
    %v1700 = vmul.f32 %v1629, %v1688
    %v1701 = vmul.f32 %v1630, %v1688
    %v1702 = vmul.f32 %v1631, %v1688
    %v1703 = vmul.f32 %v1632, %v1688
    %v1704 = vmul.f32 %v1633, %v1688
    %v1705 = vmul.f32 %v1634, %v1688
    %v1706 = vmul.f32 %v1635, %v1688
    %v1707 = vmul.f32 %v1636, %v1688
    %v1708 = vmul.f32 %v1637, %v1688
    %v1709 = vmul.f32 %v1638, %v1688
    %v1710 = vmul.f32 %v1639, %v1688
    %v1711 = vmul.f32 %v1640, %v1688
    %v1712 = vmul.f32 %v1641, %v1688
    %v1713 = vmul.f32 %v1642, %v1688
    %v1714 = vmul.f32 %v1643, %v1688
    %v1715 = vmul.f32 %v1644, %v1688
    %v1716 = vmul.f32 %v1645, %v1688
    %v1717 = vmul.f32 %v1646, %v1688
    %v1718 = vmul.f32 %v1647, %v1688
    %v1719 = vmul.f32 %v1648, %v1688
    %v1720 = vmul.f32 %v1649, %v1688
    %v1721 = vmul.f32 %v1650, %v1688
    %v1722 = vmul.f32 %v1651, %v1688
    %v1723 = vmul.f32 %v1652, %v1688
    %v1724 = vmul.f32 %v1653, %v1688
    %v1725 = vmul.f32 %v1654, %v1688
    %v1726 = vmul.f32 %v1655, %v1688
    %v1727 = vmul.f32 %v1656, %v1688
    %v1728 = vmul.f32 %v1657, %v1688
    %v1729 = vmul.f32 %v1658, %v1688
    %v1730 = vmul.f32 %v1659, %v1688
    %v1731 = vmul.f32 %v1660, %v1688
    %v1732 = vmul.f32 %v1661, %v1688
    %v1733 = vmul.f32 %v1662, %v1688
    %v1734 = vmul.f32 %v1663, %v1688
    %v1735 = vmul.f32 %v1664, %v1688
    %v1736 = vmul.f32 %v1665, %v1688
    %v1737 = vmul.f32 %v1666, %v1688
    %v1738 = vmul.f32 %v1667, %v1688
    %v1739 = vmul.f32 %v1668, %v1688
    %v1740 = vmul.f32 %v1669, %v1688
    %v1741 = vmul.f32 %v1670, %v1688
    %v1742 = vmul.f32 %v1671, %v1688
    %v1743 = vmul.f32 %v1672, %v1688
    %v1744 = vmul.f32 %v1673, %v1688
    %v1745 = vmul.f32 %v1674, %v1688
    %v1746 = vmul.f32 %v1675, %v1688
    %v1747 = vmul.f32 %v1676, %v1688
    %v1748 = vmul.f32 %v1677, %v1688
    %v1749 = vmul.f32 %v1678, %v1688
    %v1750 = vmul.f32 %v1679, %v1688
    %v1751 = vmul.f32 %v1680, %v1688
    %v1752 = vmul.f32 %v1681, %v1688
    %v1753 = vmul.f32 %v1682, %v1688
    %v1754 = vsel %vm657, %v1690, 0.0
    %1755 = vadd.xlane.f32.xlu0 %v1754
    %v1756 = vpop.xlane.xlu0 %1755
    %v1757 = vsel %vm657, %v1691, 0.0
    %1758 = vadd.xlane.f32.xlu0 %v1757
    %v1759 = vpop.xlane.xlu0 %1758
    %v1760 = vsel %vm657, %v1692, 0.0
    %1761 = vadd.xlane.f32.xlu0 %v1760
    %v1762 = vpop.xlane.xlu0 %1761
    %v1763 = vsel %vm657, %v1693, 0.0
    %1764 = vadd.xlane.f32.xlu0 %v1763
    %v1765 = vpop.xlane.xlu0 %1764
    %v1766 = vsel %vm657, %v1694, 0.0
    %1767 = vadd.xlane.f32.xlu0 %v1766
    %v1768 = vpop.xlane.xlu0 %1767
    %v1769 = vsel %vm657, %v1695, 0.0
    %1770 = vadd.xlane.f32.xlu0 %v1769
    %v1771 = vpop.xlane.xlu0 %1770
    %v1772 = vsel %vm657, %v1696, 0.0
    %1773 = vadd.xlane.f32.xlu0 %v1772
    %v1774 = vpop.xlane.xlu0 %1773
    %v1775 = vsel %vm657, %v1697, 0.0
    %1776 = vadd.xlane.f32.xlu0 %v1775
    %v1777 = vpop.xlane.xlu0 %1776
    %v1778 = vsel %vm657, %v1698, 0.0
    %1779 = vadd.xlane.f32.xlu0 %v1778
    %v1780 = vpop.xlane.xlu0 %1779
    %v1781 = vsel %vm657, %v1699, 0.0
    %1782 = vadd.xlane.f32.xlu0 %v1781
    %v1783 = vpop.xlane.xlu0 %1782
    %v1784 = vsel %vm657, %v1700, 0.0
    %1785 = vadd.xlane.f32.xlu0 %v1784
    %v1786 = vpop.xlane.xlu0 %1785
    %v1787 = vsel %vm657, %v1701, 0.0
    %1788 = vadd.xlane.f32.xlu0 %v1787
    %v1789 = vpop.xlane.xlu0 %1788
    %v1790 = vsel %vm657, %v1702, 0.0
    %1791 = vadd.xlane.f32.xlu0 %v1790
    %v1792 = vpop.xlane.xlu0 %1791
    %v1793 = vsel %vm657, %v1703, 0.0
    %1794 = vadd.xlane.f32.xlu0 %v1793
    %v1795 = vpop.xlane.xlu0 %1794
    %v1796 = vsel %vm657, %v1704, 0.0
    %1797 = vadd.xlane.f32.xlu0 %v1796
    %v1798 = vpop.xlane.xlu0 %1797
    %v1799 = vsel %vm657, %v1705, 0.0
    %1800 = vadd.xlane.f32.xlu0 %v1799
    %v1801 = vpop.xlane.xlu0 %1800
    %v1802 = vsel %vm657, %v1706, 0.0
    %1803 = vadd.xlane.f32.xlu0 %v1802
    %v1804 = vpop.xlane.xlu0 %1803
    %v1805 = vsel %vm657, %v1707, 0.0
    %1806 = vadd.xlane.f32.xlu0 %v1805
    %v1807 = vpop.xlane.xlu0 %1806
    %v1808 = vsel %vm657, %v1708, 0.0
    %1809 = vadd.xlane.f32.xlu0 %v1808
    %v1810 = vpop.xlane.xlu0 %1809
    %v1811 = vsel %vm657, %v1709, 0.0
    %1812 = vadd.xlane.f32.xlu0 %v1811
    %v1813 = vpop.xlane.xlu0 %1812
    %v1814 = vsel %vm657, %v1710, 0.0
    %1815 = vadd.xlane.f32.xlu0 %v1814
    %v1816 = vpop.xlane.xlu0 %1815
    %v1817 = vsel %vm657, %v1711, 0.0
    %1818 = vadd.xlane.f32.xlu0 %v1817
    %v1819 = vpop.xlane.xlu0 %1818
    %v1820 = vsel %vm657, %v1712, 0.0
    %1821 = vadd.xlane.f32.xlu0 %v1820
    %v1822 = vpop.xlane.xlu0 %1821
    %v1823 = vsel %vm657, %v1713, 0.0
    %1824 = vadd.xlane.f32.xlu0 %v1823
    %v1825 = vpop.xlane.xlu0 %1824
    %v1826 = vsel %vm657, %v1714, 0.0
    %1827 = vadd.xlane.f32.xlu0 %v1826
    %v1828 = vpop.xlane.xlu0 %1827
    %v1829 = vsel %vm657, %v1715, 0.0
    %1830 = vadd.xlane.f32.xlu0 %v1829
    %v1831 = vpop.xlane.xlu0 %1830
    %v1832 = vsel %vm657, %v1716, 0.0
    %1833 = vadd.xlane.f32.xlu0 %v1832
    %v1834 = vpop.xlane.xlu0 %1833
    %v1835 = vsel %vm657, %v1717, 0.0
    %1836 = vadd.xlane.f32.xlu0 %v1835
    %v1837 = vpop.xlane.xlu0 %1836
    %v1838 = vsel %vm657, %v1718, 0.0
    %1839 = vadd.xlane.f32.xlu0 %v1838
    %v1840 = vpop.xlane.xlu0 %1839
    %v1841 = vsel %vm657, %v1719, 0.0
    %1842 = vadd.xlane.f32.xlu0 %v1841
    %v1843 = vpop.xlane.xlu0 %1842
    %v1844 = vsel %vm657, %v1720, 0.0
    %1845 = vadd.xlane.f32.xlu0 %v1844
    %v1846 = vpop.xlane.xlu0 %1845
    %v1847 = vsel %vm657, %v1721, 0.0
    %1848 = vadd.xlane.f32.xlu0 %v1847
    %v1849 = vpop.xlane.xlu0 %1848
    %v1850 = vsel %vm657, %v1722, 0.0
    %1851 = vadd.xlane.f32.xlu0 %v1850
    %v1852 = vpop.xlane.xlu0 %1851
    %v1853 = vsel %vm657, %v1723, 0.0
    %1854 = vadd.xlane.f32.xlu0 %v1853
    %v1855 = vpop.xlane.xlu0 %1854
    %v1856 = vsel %vm657, %v1724, 0.0
    %1857 = vadd.xlane.f32.xlu0 %v1856
    %v1858 = vpop.xlane.xlu0 %1857
    %v1859 = vsel %vm657, %v1725, 0.0
    %1860 = vadd.xlane.f32.xlu0 %v1859
    %v1861 = vpop.xlane.xlu0 %1860
    %v1862 = vsel %vm657, %v1726, 0.0
    %1863 = vadd.xlane.f32.xlu0 %v1862
    %v1864 = vpop.xlane.xlu0 %1863
    %v1865 = vsel %vm657, %v1727, 0.0
    %1866 = vadd.xlane.f32.xlu0 %v1865
    %v1867 = vpop.xlane.xlu0 %1866
    %v1868 = vsel %vm657, %v1728, 0.0
    %1869 = vadd.xlane.f32.xlu0 %v1868
    %v1870 = vpop.xlane.xlu0 %1869
    %v1871 = vsel %vm657, %v1729, 0.0
    %1872 = vadd.xlane.f32.xlu0 %v1871
    %v1873 = vpop.xlane.xlu0 %1872
    %v1874 = vsel %vm657, %v1730, 0.0
    %1875 = vadd.xlane.f32.xlu0 %v1874
    %v1876 = vpop.xlane.xlu0 %1875
    %v1877 = vsel %vm657, %v1731, 0.0
    %1878 = vadd.xlane.f32.xlu0 %v1877
    %v1879 = vpop.xlane.xlu0 %1878
    %v1880 = vsel %vm657, %v1732, 0.0
    %1881 = vadd.xlane.f32.xlu0 %v1880
    %v1882 = vpop.xlane.xlu0 %1881
    %v1883 = vsel %vm657, %v1733, 0.0
    %1884 = vadd.xlane.f32.xlu0 %v1883
    %v1885 = vpop.xlane.xlu0 %1884
    %v1886 = vsel %vm657, %v1734, 0.0
    %1887 = vadd.xlane.f32.xlu0 %v1886
    %v1888 = vpop.xlane.xlu0 %1887
    %v1889 = vsel %vm657, %v1735, 0.0
    %1890 = vadd.xlane.f32.xlu0 %v1889
    %v1891 = vpop.xlane.xlu0 %1890
    %v1892 = vsel %vm657, %v1736, 0.0
    %1893 = vadd.xlane.f32.xlu0 %v1892
    %v1894 = vpop.xlane.xlu0 %1893
    %v1895 = vsel %vm657, %v1737, 0.0
    %1896 = vadd.xlane.f32.xlu0 %v1895
    %v1897 = vpop.xlane.xlu0 %1896
    %v1898 = vsel %vm657, %v1738, 0.0
    %1899 = vadd.xlane.f32.xlu0 %v1898
    %v1900 = vpop.xlane.xlu0 %1899
    %v1901 = vsel %vm657, %v1739, 0.0
    %1902 = vadd.xlane.f32.xlu0 %v1901
    %v1903 = vpop.xlane.xlu0 %1902
    %v1904 = vsel %vm657, %v1740, 0.0
    %1905 = vadd.xlane.f32.xlu0 %v1904
    %v1906 = vpop.xlane.xlu0 %1905
    %v1907 = vsel %vm657, %v1741, 0.0
    %1908 = vadd.xlane.f32.xlu0 %v1907
    %v1909 = vpop.xlane.xlu0 %1908
    %v1910 = vsel %vm657, %v1742, 0.0
    %1911 = vadd.xlane.f32.xlu0 %v1910
    %v1912 = vpop.xlane.xlu0 %1911
    %v1913 = vsel %vm657, %v1743, 0.0
    %1914 = vadd.xlane.f32.xlu0 %v1913
    %v1915 = vpop.xlane.xlu0 %1914
    %v1916 = vsel %vm657, %v1744, 0.0
    %1917 = vadd.xlane.f32.xlu0 %v1916
    %v1918 = vpop.xlane.xlu0 %1917
    %v1919 = vsel %vm657, %v1745, 0.0
    %1920 = vadd.xlane.f32.xlu0 %v1919
    %v1921 = vpop.xlane.xlu0 %1920
    %v1922 = vsel %vm657, %v1746, 0.0
    %1923 = vadd.xlane.f32.xlu0 %v1922
    %v1924 = vpop.xlane.xlu0 %1923
    %v1925 = vsel %vm657, %v1747, 0.0
    %1926 = vadd.xlane.f32.xlu0 %v1925
    %v1927 = vpop.xlane.xlu0 %1926
    %v1928 = vsel %vm657, %v1748, 0.0
    %1929 = vadd.xlane.f32.xlu0 %v1928
    %v1930 = vpop.xlane.xlu0 %1929
    %v1931 = vsel %vm657, %v1749, 0.0
    %1932 = vadd.xlane.f32.xlu0 %v1931
    %v1933 = vpop.xlane.xlu0 %1932
    %v1934 = vsel %vm657, %v1750, 0.0
    %1935 = vadd.xlane.f32.xlu0 %v1934
    %v1936 = vpop.xlane.xlu0 %1935
    %v1937 = vsel %vm657, %v1751, 0.0
    %1938 = vadd.xlane.f32.xlu0 %v1937
    %v1939 = vpop.xlane.xlu0 %1938
    %v1940 = vsel %vm657, %v1752, 0.0
    %1941 = vadd.xlane.f32.xlu0 %v1940
    %v1942 = vpop.xlane.xlu0 %1941
    %v1943 = vsel %vm657, %v1753, 0.0
    %1944 = vadd.xlane.f32.xlu0 %v1943
    %v1945 = vpop.xlane.xlu0 %1944
    %v1946 = vld [vmem:[#allocation2] sm:$0x1]
    %v1948 = vlaneseq
    %v1949 = vshrl.u32 %v1948, 7
    %v1950 = vsub.s32 0, %v1949
    %v1951 = vrot.slane %v1946, %v1950
    %v1953 = vadd.f32 %v1756, %v1951
    %v1954 = vadd.f32 %v1759, %v1951
    %v1955 = vadd.f32 %v1762, %v1951
    %v1956 = vadd.f32 %v1765, %v1951
    %v1957 = vadd.f32 %v1768, %v1951
    %v1958 = vadd.f32 %v1771, %v1951
    %v1959 = vadd.f32 %v1774, %v1951
    %v1960 = vadd.f32 %v1777, %v1951
    %v1961 = vadd.f32 %v1780, %v1951
    %v1962 = vadd.f32 %v1783, %v1951
    %v1963 = vadd.f32 %v1786, %v1951
    %v1964 = vadd.f32 %v1789, %v1951
    %v1965 = vadd.f32 %v1792, %v1951
    %v1966 = vadd.f32 %v1795, %v1951
    %v1967 = vadd.f32 %v1798, %v1951
    %v1968 = vadd.f32 %v1801, %v1951
    %v1969 = vadd.f32 %v1804, %v1951
    %v1970 = vadd.f32 %v1807, %v1951
    %v1971 = vadd.f32 %v1810, %v1951
    %v1972 = vadd.f32 %v1813, %v1951
    %v1973 = vadd.f32 %v1816, %v1951
    %v1974 = vadd.f32 %v1819, %v1951
    %v1975 = vadd.f32 %v1822, %v1951
    %v1976 = vadd.f32 %v1825, %v1951
    %v1977 = vadd.f32 %v1828, %v1951
    %v1978 = vadd.f32 %v1831, %v1951
    %v1979 = vadd.f32 %v1834, %v1951
    %v1980 = vadd.f32 %v1837, %v1951
    %v1981 = vadd.f32 %v1840, %v1951
    %v1982 = vadd.f32 %v1843, %v1951
    %v1983 = vadd.f32 %v1846, %v1951
    %v1984 = vadd.f32 %v1849, %v1951
    %v1985 = vadd.f32 %v1852, %v1951
    %v1986 = vadd.f32 %v1855, %v1951
    %v1987 = vadd.f32 %v1858, %v1951
    %v1988 = vadd.f32 %v1861, %v1951
    %v1989 = vadd.f32 %v1864, %v1951
    %v1990 = vadd.f32 %v1867, %v1951
    %v1991 = vadd.f32 %v1870, %v1951
    %v1992 = vadd.f32 %v1873, %v1951
    %v1993 = vadd.f32 %v1876, %v1951
    %v1994 = vadd.f32 %v1879, %v1951
    %v1995 = vadd.f32 %v1882, %v1951
    %v1996 = vadd.f32 %v1885, %v1951
    %v1997 = vadd.f32 %v1888, %v1951
    %v1998 = vadd.f32 %v1891, %v1951
    %v1999 = vadd.f32 %v1894, %v1951
    %v2000 = vadd.f32 %v1897, %v1951
    %v2001 = vadd.f32 %v1900, %v1951
    %v2002 = vadd.f32 %v1903, %v1951
    %v2003 = vadd.f32 %v1906, %v1951
    %v2004 = vadd.f32 %v1909, %v1951
    %v2005 = vadd.f32 %v1912, %v1951
    %v2006 = vadd.f32 %v1915, %v1951
    %v2007 = vadd.f32 %v1918, %v1951
    %v2008 = vadd.f32 %v1921, %v1951
    %v2009 = vadd.f32 %v1924, %v1951
    %v2010 = vadd.f32 %v1927, %v1951
    %v2011 = vadd.f32 %v1930, %v1951
    %v2012 = vadd.f32 %v1933, %v1951
    %v2013 = vadd.f32 %v1936, %v1951
    %v2014 = vadd.f32 %v1939, %v1951
    %v2015 = vadd.f32 %v1942, %v1951
    %v2016 = vadd.f32 %v1945, %v1951
    %2017 = vmatprep.subr.mxu0 0.0
    %2018 = vmatpush1.msra.mxu0 %v116
    %2019 = vmatprep.subr.mxu0 0.0
    %2020 = vmatpush1.msra.mxu0 %v115
    %2021 = vmatprep.subr.mxu0 0.0
    %2022 = vmatpush1.msra.mxu0 %v114
    %2023 = vmatprep.subr.mxu0 0.0
    %2024 = vmatpush1.msra.mxu0 %v113
    %2025 = vmatprep.subr.mxu0 0.0
    %2026 = vmatpush1.msra.mxu0 %v112
    %2027 = vmatprep.subr.mxu0 0.0
    %2028 = vmatpush1.msra.mxu0 %v111
    %2029 = vmatprep.subr.mxu0 0.0
    %2030 = vmatpush1.msra.mxu0 %v110
    %2031 = vmatprep.subr.mxu0 0.0
    %2032 = vmatpush1.msra.mxu0 %v109
    %2033 = vmatprep.subr.mxu0 0.0
    %2034 = vmatpush1.msra.mxu0 %v108
    %2035 = vmatprep.subr.mxu0 0.0
    %2036 = vmatpush1.msra.mxu0 %v107
    %2037 = vmatprep.subr.mxu0 0.0
    %2038 = vmatpush1.msra.mxu0 %v106
    %2039 = vmatprep.subr.mxu0 0.0
    %2040 = vmatpush1.msra.mxu0 %v105
    %2041 = vmatprep.subr.mxu0 0.0
    %2042 = vmatpush1.msra.mxu0 %v104
    %2043 = vmatprep.subr.mxu0 0.0
    %2044 = vmatpush1.msra.mxu0 %v103
    %2045 = vmatprep.subr.mxu0 0.0
    %2046 = vmatpush1.msra.mxu0 %v102
    %2047 = vmatprep.subr.mxu0 0.0
    %2048 = vmatpush1.msra.mxu0 %v101
    %2049 = vmatprep.subr.mxu0 0.0
    %2050 = vmatpush2.msra.mxu0 %v132
    %2051 = vmatprep.subr.mxu0 0.0
    %2052 = vmatpush2.msra.mxu0 %v131
    %2053 = vmatprep.subr.mxu0 0.0
    %2054 = vmatpush2.msra.mxu0 %v130
    %2055 = vmatprep.subr.mxu0 0.0
    %2056 = vmatpush2.msra.mxu0 %v129
    %2057 = vmatprep.subr.mxu0 0.0
    %2058 = vmatpush2.msra.mxu0 %v128
    %2059 = vmatprep.subr.mxu0 0.0
    %2060 = vmatpush2.msra.mxu0 %v127
    %2061 = vmatprep.subr.mxu0 0.0
    %2062 = vmatpush2.msra.mxu0 %v126
    %2063 = vmatprep.subr.mxu0 0.0
    %2064 = vmatpush2.msra.mxu0 %v125
    %2065 = vmatprep.subr.mxu0 0.0
    %2066 = vmatpush2.msra.mxu0 %v124
    %2067 = vmatprep.subr.mxu0 0.0
    %2068 = vmatpush2.msra.mxu0 %v123
    %2069 = vmatprep.subr.mxu0 0.0
    %2070 = vmatpush2.msra.mxu0 %v122
    %2071 = vmatprep.subr.mxu0 0.0
    %2072 = vmatpush2.msra.mxu0 %v121
    %2073 = vmatprep.subr.mxu0 0.0
    %2074 = vmatpush2.msra.mxu0 %v120
    %2075 = vmatprep.subr.mxu0 0.0
    %2076 = vmatpush2.msra.mxu0 %v119
    %2077 = vmatprep.subr.mxu0 0.0
    %2078 = vmatpush2.msra.mxu0 %v118
    %2079 = vmatprep.subr.mxu0 0.0
    %2080 = vmatpush2.msra.mxu0 %v117
    %2081 = vmatprep.mubr.f32.mxu0 %v644
    %2082 = vmatmul.mubr.f32.gmra.mxu0 %v643
    %v2083 = vpop.f32.mrf.mxu0
    %v2084 = vadd.f32 0.0, %v2083
    %v2085 = vpop.f32.mrf.mxu0
    %2086 = vdwg.mxu0
    %2087 = vmatprep.subr.mxu0 0.0
    %2088 = vmatpush1.msra.mxu0 %v148
    %2089 = vmatprep.subr.mxu0 0.0
    %2090 = vmatpush1.msra.mxu0 %v147
    %2091 = vmatprep.subr.mxu0 0.0
    %2092 = vmatpush1.msra.mxu0 %v146
    %2093 = vmatprep.subr.mxu0 0.0
    %2094 = vmatpush1.msra.mxu0 %v145
    %2095 = vmatprep.subr.mxu0 0.0
    %2096 = vmatpush1.msra.mxu0 %v144
    %2097 = vmatprep.subr.mxu0 0.0
    %2098 = vmatpush1.msra.mxu0 %v143
    %2099 = vmatprep.subr.mxu0 0.0
    %2100 = vmatpush1.msra.mxu0 %v142
    %2101 = vmatprep.subr.mxu0 0.0
    %2102 = vmatpush1.msra.mxu0 %v141
    %2103 = vmatprep.subr.mxu0 0.0
    %2104 = vmatpush1.msra.mxu0 %v140
    %2105 = vmatprep.subr.mxu0 0.0
    %2106 = vmatpush1.msra.mxu0 %v139
    %2107 = vmatprep.subr.mxu0 0.0
    %2108 = vmatpush1.msra.mxu0 %v138
    %2109 = vmatprep.subr.mxu0 0.0
    %2110 = vmatpush1.msra.mxu0 %v137
    %2111 = vmatprep.subr.mxu0 0.0
    %2112 = vmatpush1.msra.mxu0 %v136
    %2113 = vmatprep.subr.mxu0 0.0
    %2114 = vmatpush1.msra.mxu0 %v135
    %2115 = vmatprep.subr.mxu0 0.0
    %2116 = vmatpush1.msra.mxu0 %v134
    %2117 = vmatprep.subr.mxu0 0.0
    %2118 = vmatpush1.msra.mxu0 %v133
    %2119 = vmatprep.subr.mxu0 0.0
    %2120 = vmatpush2.msra.mxu0 %v164
    %2121 = vmatprep.subr.mxu0 0.0
    %2122 = vmatpush2.msra.mxu0 %v163
    %2123 = vmatprep.subr.mxu0 0.0
    %2124 = vmatpush2.msra.mxu0 %v162
    %2125 = vmatprep.subr.mxu0 0.0
    %2126 = vmatpush2.msra.mxu0 %v161
    %2127 = vmatprep.subr.mxu0 0.0
    %2128 = vmatpush2.msra.mxu0 %v160
    %2129 = vmatprep.subr.mxu0 0.0
    %2130 = vmatpush2.msra.mxu0 %v159
    %2131 = vmatprep.subr.mxu0 0.0
    %2132 = vmatpush2.msra.mxu0 %v158
    %2133 = vmatprep.subr.mxu0 0.0
    %2134 = vmatpush2.msra.mxu0 %v157
    %2135 = vmatprep.subr.mxu0 0.0
    %2136 = vmatpush2.msra.mxu0 %v156
    %2137 = vmatprep.subr.mxu0 0.0
    %2138 = vmatpush2.msra.mxu0 %v155
    %2139 = vmatprep.subr.mxu0 0.0
    %2140 = vmatpush2.msra.mxu0 %v154
    %2141 = vmatprep.subr.mxu0 0.0
    %2142 = vmatpush2.msra.mxu0 %v153
    %2143 = vmatprep.subr.mxu0 0.0
    %2144 = vmatpush2.msra.mxu0 %v152
    %2145 = vmatprep.subr.mxu0 0.0
    %2146 = vmatpush2.msra.mxu0 %v151
    %2147 = vmatprep.subr.mxu0 0.0
    %2148 = vmatpush2.msra.mxu0 %v150
    %2149 = vmatprep.subr.mxu0 0.0
    %2150 = vmatpush2.msra.mxu0 %v149
    %2151 = vmatprep.mubr.f32.mxu0 %v646
    %2152 = vmatmul.mubr.f32.gmra.mxu0 %v645
    %v2153 = vpop.f32.mrf.mxu0
    %v2154 = vadd.f32 %v2084, %v2153
    %v2155 = vpop.f32.mrf.mxu0
    %2156 = vdwg.mxu0
    %2158 = vset.pattern.permute.xlu0 0
    %2159 = vperm.xlu0 %2158, %v230
    %v2160 = vpop.permute.xlu0 %2159
    %v2162 = vmul.f32 %v2154, %v2160
    %vm2163 = vcmask 15360
    %v2165 = vsel %vm2163, %v553, 0
    %v2168 = vsel %vm2163, %v554, 0
    %v2171 = vsel %vm2163, %v555, 0
    %v2174 = vsel %vm2163, %v556, 0
    %v2177 = vsel %vm2163, %v557, 0
    %v2180 = vsel %vm2163, %v558, 0
    %v2183 = vsel %vm2163, %v559, 0
    %v2186 = vsel %vm2163, %v560, 0
    %v2189 = vsel %vm2163, %v561, 0
    %v2192 = vsel %vm2163, %v562, 0
    %v2195 = vsel %vm2163, %v563, 0
    %v2198 = vsel %vm2163, %v564, 0
    %v2201 = vsel %vm2163, %v565, 0
    %v2204 = vsel %vm2163, %v566, 0
    %v2207 = vsel %vm2163, %v567, 0
    %v2210 = vsel %vm2163, %v568, 0
    %v2213 = vsel %vm2163, %v569, 0
    %v2216 = vsel %vm2163, %v570, 0
    %v2219 = vsel %vm2163, %v571, 0
    %v2222 = vsel %vm2163, %v572, 0
    %v2225 = vsel %vm2163, %v573, 0
    %v2228 = vsel %vm2163, %v574, 0
    %v2231 = vsel %vm2163, %v575, 0
    %v2234 = vsel %vm2163, %v576, 0
    %v2237 = vsel %vm2163, %v577, 0
    %v2240 = vsel %vm2163, %v578, 0
    %v2243 = vsel %vm2163, %v579, 0
    %v2246 = vsel %vm2163, %v580, 0
    %v2249 = vsel %vm2163, %v581, 0
    %v2252 = vsel %vm2163, %v582, 0
    %v2255 = vsel %vm2163, %v583, 0
    %v2258 = vsel %vm2163, %v584, 0
    %v2261 = vsel %vm2163, %v585, 0
    %v2264 = vsel %vm2163, %v586, 0
    %v2267 = vsel %vm2163, %v587, 0
    %v2270 = vsel %vm2163, %v588, 0
    %v2273 = vsel %vm2163, %v589, 0
    %v2276 = vsel %vm2163, %v590, 0
    %v2279 = vsel %vm2163, %v591, 0
    %v2282 = vsel %vm2163, %v592, 0
    %v2285 = vsel %vm2163, %v593, 0
    %v2288 = vsel %vm2163, %v594, 0
    %v2291 = vsel %vm2163, %v595, 0
    %v2294 = vsel %vm2163, %v596, 0
    %v2297 = vsel %vm2163, %v597, 0
    %v2300 = vsel %vm2163, %v598, 0
    %v2303 = vsel %vm2163, %v599, 0
    %v2306 = vsel %vm2163, %v600, 0
    %v2309 = vsel %vm2163, %v601, 0
    %v2312 = vsel %vm2163, %v602, 0
    %v2315 = vsel %vm2163, %v603, 0
    %v2318 = vsel %vm2163, %v604, 0
    %v2321 = vsel %vm2163, %v605, 0
    %v2324 = vsel %vm2163, %v606, 0
    %v2327 = vsel %vm2163, %v607, 0
    %v2330 = vsel %vm2163, %v608, 0
    %v2333 = vsel %vm2163, %v609, 0
    %v2336 = vsel %vm2163, %v610, 0
    %v2339 = vsel %vm2163, %v611, 0
    %v2342 = vsel %vm2163, %v612, 0
    %v2345 = vsel %vm2163, %v613, 0
    %v2348 = vsel %vm2163, %v614, 0
    %v2351 = vsel %vm2163, %v615, 0
    %v2354 = vsel %vm2163, %v616, 0
    %vm2356 = vcmask 1041408
    %v2358 = vsel %vm2356, %v2162, 0
    %2360 = vmatprep.subr.mxu0 0.0
    %2361 = vmatpush1.msra.mxu0 0.0
    %2362 = vmatprep.subr.mxu0 0.0
    %2363 = vmatpush1.msra.mxu0 0.0
    %2364 = vmatprep.subr.mxu0 0.0
    %2365 = vmatpush1.msra.mxu0 0.0
    %2366 = vmatprep.subr.mxu0 0.0
    %2367 = vmatpush1.msra.mxu0 0.0
    %2368 = vmatprep.subr.mxu0 0.0
    %2369 = vmatpush1.msra.mxu0 0.0
    %2370 = vmatprep.subr.mxu0 0.0
    %2371 = vmatpush1.msra.mxu0 0.0
    %2372 = vmatprep.subr.mxu0 0.0
    %2373 = vmatpush1.msra.mxu0 0.0
    %2374 = vmatprep.subr.mxu0 0.0
    %2375 = vmatpush1.msra.mxu0 0.0
    %2376 = vmatprep.subr.mxu0 0.0
    %2377 = vmatpush1.msra.mxu0 0.0
    %2378 = vmatprep.subr.mxu0 0.0
    %2379 = vmatpush1.msra.mxu0 0.0
    %2380 = vmatprep.subr.mxu0 0.0
    %2381 = vmatpush1.msra.mxu0 0.0
    %2382 = vmatprep.subr.mxu0 0.0
    %2383 = vmatpush1.msra.mxu0 0.0
    %2384 = vmatprep.subr.mxu0 0.0
    %2385 = vmatpush1.msra.mxu0 0.0
    %2386 = vmatprep.subr.mxu0 0.0
    %2387 = vmatpush1.msra.mxu0 0.0
    %2388 = vmatprep.subr.mxu0 0.0
    %2389 = vmatpush1.msra.mxu0 0.0
    %2390 = vmatprep.subr.mxu0 0.0
    %2391 = vmatpush1.msra.mxu0 %v2358
    %2392 = vmatprep.subr.mxu0 0.0
    %2393 = vmatpush2.msra.mxu0 0.0
    %2394 = vmatprep.subr.mxu0 0.0
    %2395 = vmatpush2.msra.mxu0 0.0
    %2396 = vmatprep.subr.mxu0 0.0
    %2397 = vmatpush2.msra.mxu0 0.0
    %2398 = vmatprep.subr.mxu0 0.0
    %2399 = vmatpush2.msra.mxu0 0.0
    %2400 = vmatprep.subr.mxu0 0.0
    %2401 = vmatpush2.msra.mxu0 0.0
    %2402 = vmatprep.subr.mxu0 0.0
    %2403 = vmatpush2.msra.mxu0 0.0
    %2404 = vmatprep.subr.mxu0 0.0
    %2405 = vmatpush2.msra.mxu0 0.0
    %2406 = vmatprep.subr.mxu0 0.0
    %2407 = vmatpush2.msra.mxu0 0.0
    %2408 = vmatprep.subr.mxu0 0.0
    %2409 = vmatpush2.msra.mxu0 0.0
    %2410 = vmatprep.subr.mxu0 0.0
    %2411 = vmatpush2.msra.mxu0 0.0
    %2412 = vmatprep.subr.mxu0 0.0
    %2413 = vmatpush2.msra.mxu0 0.0
    %2414 = vmatprep.subr.mxu0 0.0
    %2415 = vmatpush2.msra.mxu0 0.0
    %2416 = vmatprep.subr.mxu0 0.0
    %2417 = vmatpush2.msra.mxu0 0.0
    %2418 = vmatprep.subr.mxu0 0.0
    %2419 = vmatpush2.msra.mxu0 0.0
    %2420 = vmatprep.subr.mxu0 0.0
    %2421 = vmatpush2.msra.mxu0 0.0
    %2422 = vmatprep.subr.mxu0 0.0
    %2423 = vmatpush2.msra.mxu0 0.0
    %2424 = vmatprep.mubr.f32.mxu0 0.0
    %2425 = vmatmul.mubr.f32.gmra.mxu0 %v2165
    %v2426 = vpop.f32.mrf.mxu0
    %v2427 = vadd.f32 0.0, %v2426
    %v2428 = vpop.f32.mrf.mxu0
    %2429 = vmatprep.mubr.f32.mxu0 0.0
    %2430 = vmatmul.mubr.f32.gmra.mxu0 %v2168
    %v2431 = vpop.f32.mrf.mxu0
    %v2432 = vadd.f32 0.0, %v2431
    %v2433 = vpop.f32.mrf.mxu0
    %2434 = vmatprep.mubr.f32.mxu0 0.0
    %2435 = vmatmul.mubr.f32.gmra.mxu0 %v2171
    %v2436 = vpop.f32.mrf.mxu0
    %v2437 = vadd.f32 0.0, %v2436
    %v2438 = vpop.f32.mrf.mxu0
    %2439 = vmatprep.mubr.f32.mxu0 0.0
    %2440 = vmatmul.mubr.f32.gmra.mxu0 %v2174
    %v2441 = vpop.f32.mrf.mxu0
    %v2442 = vadd.f32 0.0, %v2441
    %v2443 = vpop.f32.mrf.mxu0
    %2444 = vmatprep.mubr.f32.mxu0 0.0
    %2445 = vmatmul.mubr.f32.gmra.mxu0 %v2177
    %v2446 = vpop.f32.mrf.mxu0
    %v2447 = vadd.f32 0.0, %v2446
    %v2448 = vpop.f32.mrf.mxu0
    %2449 = vmatprep.mubr.f32.mxu0 0.0
    %2450 = vmatmul.mubr.f32.gmra.mxu0 %v2180
    %v2451 = vpop.f32.mrf.mxu0
    %v2452 = vadd.f32 0.0, %v2451
    %v2453 = vpop.f32.mrf.mxu0
    %2454 = vmatprep.mubr.f32.mxu0 0.0
    %2455 = vmatmul.mubr.f32.gmra.mxu0 %v2183
    %v2456 = vpop.f32.mrf.mxu0
    %v2457 = vadd.f32 0.0, %v2456
    %v2458 = vpop.f32.mrf.mxu0
    %2459 = vmatprep.mubr.f32.mxu0 0.0
    %2460 = vmatmul.mubr.f32.gmra.mxu0 %v2186
    %v2461 = vpop.f32.mrf.mxu0
    %v2462 = vadd.f32 0.0, %v2461
    %v2463 = vpop.f32.mrf.mxu0
    %2464 = vmatprep.mubr.f32.mxu0 0.0
    %2465 = vmatmul.mubr.f32.gmra.mxu0 %v2189
    %v2466 = vpop.f32.mrf.mxu0
    %v2467 = vadd.f32 0.0, %v2466
    %v2468 = vpop.f32.mrf.mxu0
    %2469 = vmatprep.mubr.f32.mxu0 0.0
    %2470 = vmatmul.mubr.f32.gmra.mxu0 %v2192
    %v2471 = vpop.f32.mrf.mxu0
    %v2472 = vadd.f32 0.0, %v2471
    %v2473 = vpop.f32.mrf.mxu0
    %2474 = vmatprep.mubr.f32.mxu0 0.0
    %2475 = vmatmul.mubr.f32.gmra.mxu0 %v2195
    %v2476 = vpop.f32.mrf.mxu0
    %v2477 = vadd.f32 0.0, %v2476
    %v2478 = vpop.f32.mrf.mxu0
    %2479 = vmatprep.mubr.f32.mxu0 0.0
    %2480 = vmatmul.mubr.f32.gmra.mxu0 %v2198
    %v2481 = vpop.f32.mrf.mxu0
    %v2482 = vadd.f32 0.0, %v2481
    %v2483 = vpop.f32.mrf.mxu0
    %2484 = vmatprep.mubr.f32.mxu0 0.0
    %2485 = vmatmul.mubr.f32.gmra.mxu0 %v2201
    %v2486 = vpop.f32.mrf.mxu0
    %v2487 = vadd.f32 0.0, %v2486
    %v2488 = vpop.f32.mrf.mxu0
    %2489 = vmatprep.mubr.f32.mxu0 0.0
    %2490 = vmatmul.mubr.f32.gmra.mxu0 %v2204
    %v2491 = vpop.f32.mrf.mxu0
    %v2492 = vadd.f32 0.0, %v2491
    %v2493 = vpop.f32.mrf.mxu0
    %2494 = vmatprep.mubr.f32.mxu0 0.0
    %2495 = vmatmul.mubr.f32.gmra.mxu0 %v2207
    %v2496 = vpop.f32.mrf.mxu0
    %v2497 = vadd.f32 0.0, %v2496
    %v2498 = vpop.f32.mrf.mxu0
    %2499 = vmatprep.mubr.f32.mxu0 0.0
    %2500 = vmatmul.mubr.f32.gmra.mxu0 %v2210
    %v2501 = vpop.f32.mrf.mxu0
    %v2502 = vadd.f32 0.0, %v2501
    %v2503 = vpop.f32.mrf.mxu0
    %2504 = vmatprep.mubr.f32.mxu0 0.0
    %2505 = vmatmul.mubr.f32.gmra.mxu0 %v2213
    %v2506 = vpop.f32.mrf.mxu0
    %v2507 = vadd.f32 0.0, %v2506
    %v2508 = vpop.f32.mrf.mxu0
    %2509 = vmatprep.mubr.f32.mxu0 0.0
    %2510 = vmatmul.mubr.f32.gmra.mxu0 %v2216
    %v2511 = vpop.f32.mrf.mxu0
    %v2512 = vadd.f32 0.0, %v2511
    %v2513 = vpop.f32.mrf.mxu0
    %2514 = vmatprep.mubr.f32.mxu0 0.0
    %2515 = vmatmul.mubr.f32.gmra.mxu0 %v2219
    %v2516 = vpop.f32.mrf.mxu0
    %v2517 = vadd.f32 0.0, %v2516
    %v2518 = vpop.f32.mrf.mxu0
    %2519 = vmatprep.mubr.f32.mxu0 0.0
    %2520 = vmatmul.mubr.f32.gmra.mxu0 %v2222
    %v2521 = vpop.f32.mrf.mxu0
    %v2522 = vadd.f32 0.0, %v2521
    %v2523 = vpop.f32.mrf.mxu0
    %2524 = vmatprep.mubr.f32.mxu0 0.0
    %2525 = vmatmul.mubr.f32.gmra.mxu0 %v2225
    %v2526 = vpop.f32.mrf.mxu0
    %v2527 = vadd.f32 0.0, %v2526
    %v2528 = vpop.f32.mrf.mxu0
    %2529 = vmatprep.mubr.f32.mxu0 0.0
    %2530 = vmatmul.mubr.f32.gmra.mxu0 %v2228
    %v2531 = vpop.f32.mrf.mxu0
    %v2532 = vadd.f32 0.0, %v2531
    %v2533 = vpop.f32.mrf.mxu0
    %2534 = vmatprep.mubr.f32.mxu0 0.0
    %2535 = vmatmul.mubr.f32.gmra.mxu0 %v2231
    %v2536 = vpop.f32.mrf.mxu0
    %v2537 = vadd.f32 0.0, %v2536
    %v2538 = vpop.f32.mrf.mxu0
    %2539 = vmatprep.mubr.f32.mxu0 0.0
    %2540 = vmatmul.mubr.f32.gmra.mxu0 %v2234
    %v2541 = vpop.f32.mrf.mxu0
    %v2542 = vadd.f32 0.0, %v2541
    %v2543 = vpop.f32.mrf.mxu0
    %2544 = vmatprep.mubr.f32.mxu0 0.0
    %2545 = vmatmul.mubr.f32.gmra.mxu0 %v2237
    %v2546 = vpop.f32.mrf.mxu0
    %v2547 = vadd.f32 0.0, %v2546
    %v2548 = vpop.f32.mrf.mxu0
    %2549 = vmatprep.mubr.f32.mxu0 0.0
    %2550 = vmatmul.mubr.f32.gmra.mxu0 %v2240
    %v2551 = vpop.f32.mrf.mxu0
    %v2552 = vadd.f32 0.0, %v2551
    %v2553 = vpop.f32.mrf.mxu0
    %2554 = vmatprep.mubr.f32.mxu0 0.0
    %2555 = vmatmul.mubr.f32.gmra.mxu0 %v2243
    %v2556 = vpop.f32.mrf.mxu0
    %v2557 = vadd.f32 0.0, %v2556
    %v2558 = vpop.f32.mrf.mxu0
    %2559 = vmatprep.mubr.f32.mxu0 0.0
    %2560 = vmatmul.mubr.f32.gmra.mxu0 %v2246
    %v2561 = vpop.f32.mrf.mxu0
    %v2562 = vadd.f32 0.0, %v2561
    %v2563 = vpop.f32.mrf.mxu0
    %2564 = vmatprep.mubr.f32.mxu0 0.0
    %2565 = vmatmul.mubr.f32.gmra.mxu0 %v2249
    %v2566 = vpop.f32.mrf.mxu0
    %v2567 = vadd.f32 0.0, %v2566
    %v2568 = vpop.f32.mrf.mxu0
    %2569 = vmatprep.mubr.f32.mxu0 0.0
    %2570 = vmatmul.mubr.f32.gmra.mxu0 %v2252
    %v2571 = vpop.f32.mrf.mxu0
    %v2572 = vadd.f32 0.0, %v2571
    %v2573 = vpop.f32.mrf.mxu0
    %2574 = vmatprep.mubr.f32.mxu0 0.0
    %2575 = vmatmul.mubr.f32.gmra.mxu0 %v2255
    %v2576 = vpop.f32.mrf.mxu0
    %v2577 = vadd.f32 0.0, %v2576
    %v2578 = vpop.f32.mrf.mxu0
    %2579 = vmatprep.mubr.f32.mxu0 0.0
    %2580 = vmatmul.mubr.f32.gmra.mxu0 %v2258
    %v2581 = vpop.f32.mrf.mxu0
    %v2582 = vadd.f32 0.0, %v2581
    %v2583 = vpop.f32.mrf.mxu0
    %2584 = vmatprep.mubr.f32.mxu0 0.0
    %2585 = vmatmul.mubr.f32.gmra.mxu0 %v2261
    %v2586 = vpop.f32.mrf.mxu0
    %v2587 = vadd.f32 0.0, %v2586
    %v2588 = vpop.f32.mrf.mxu0
    %2589 = vmatprep.mubr.f32.mxu0 0.0
    %2590 = vmatmul.mubr.f32.gmra.mxu0 %v2264
    %v2591 = vpop.f32.mrf.mxu0
    %v2592 = vadd.f32 0.0, %v2591
    %v2593 = vpop.f32.mrf.mxu0
    %2594 = vmatprep.mubr.f32.mxu0 0.0
    %2595 = vmatmul.mubr.f32.gmra.mxu0 %v2267
    %v2596 = vpop.f32.mrf.mxu0
    %v2597 = vadd.f32 0.0, %v2596
    %v2598 = vpop.f32.mrf.mxu0
    %2599 = vmatprep.mubr.f32.mxu0 0.0
    %2600 = vmatmul.mubr.f32.gmra.mxu0 %v2270
    %v2601 = vpop.f32.mrf.mxu0
    %v2602 = vadd.f32 0.0, %v2601
    %v2603 = vpop.f32.mrf.mxu0
    %2604 = vmatprep.mubr.f32.mxu0 0.0
    %2605 = vmatmul.mubr.f32.gmra.mxu0 %v2273
    %v2606 = vpop.f32.mrf.mxu0
    %v2607 = vadd.f32 0.0, %v2606
    %v2608 = vpop.f32.mrf.mxu0
    %2609 = vmatprep.mubr.f32.mxu0 0.0
    %2610 = vmatmul.mubr.f32.gmra.mxu0 %v2276
    %v2611 = vpop.f32.mrf.mxu0
    %v2612 = vadd.f32 0.0, %v2611
    %v2613 = vpop.f32.mrf.mxu0
    %2614 = vmatprep.mubr.f32.mxu0 0.0
    %2615 = vmatmul.mubr.f32.gmra.mxu0 %v2279
    %v2616 = vpop.f32.mrf.mxu0
    %v2617 = vadd.f32 0.0, %v2616
    %v2618 = vpop.f32.mrf.mxu0
    %2619 = vmatprep.mubr.f32.mxu0 0.0
    %2620 = vmatmul.mubr.f32.gmra.mxu0 %v2282
    %v2621 = vpop.f32.mrf.mxu0
    %v2622 = vadd.f32 0.0, %v2621
    %v2623 = vpop.f32.mrf.mxu0
    %2624 = vmatprep.mubr.f32.mxu0 0.0
    %2625 = vmatmul.mubr.f32.gmra.mxu0 %v2285
    %v2626 = vpop.f32.mrf.mxu0
    %v2627 = vadd.f32 0.0, %v2626
    %v2628 = vpop.f32.mrf.mxu0
    %2629 = vmatprep.mubr.f32.mxu0 0.0
    %2630 = vmatmul.mubr.f32.gmra.mxu0 %v2288
    %v2631 = vpop.f32.mrf.mxu0
    %v2632 = vadd.f32 0.0, %v2631
    %v2633 = vpop.f32.mrf.mxu0
    %2634 = vmatprep.mubr.f32.mxu0 0.0
    %2635 = vmatmul.mubr.f32.gmra.mxu0 %v2291
    %v2636 = vpop.f32.mrf.mxu0
    %v2637 = vadd.f32 0.0, %v2636
    %v2638 = vpop.f32.mrf.mxu0
    %2639 = vmatprep.mubr.f32.mxu0 0.0
    %2640 = vmatmul.mubr.f32.gmra.mxu0 %v2294
    %v2641 = vpop.f32.mrf.mxu0
    %v2642 = vadd.f32 0.0, %v2641
    %v2643 = vpop.f32.mrf.mxu0
    %2644 = vmatprep.mubr.f32.mxu0 0.0
    %2645 = vmatmul.mubr.f32.gmra.mxu0 %v2297
    %v2646 = vpop.f32.mrf.mxu0
    %v2647 = vadd.f32 0.0, %v2646
    %v2648 = vpop.f32.mrf.mxu0
    %2649 = vmatprep.mubr.f32.mxu0 0.0
    %2650 = vmatmul.mubr.f32.gmra.mxu0 %v2300
    %v2651 = vpop.f32.mrf.mxu0
    %v2652 = vadd.f32 0.0, %v2651
    %v2653 = vpop.f32.mrf.mxu0
    %2654 = vmatprep.mubr.f32.mxu0 0.0
    %2655 = vmatmul.mubr.f32.gmra.mxu0 %v2303
    %v2656 = vpop.f32.mrf.mxu0
    %v2657 = vadd.f32 0.0, %v2656
    %v2658 = vpop.f32.mrf.mxu0
    %2659 = vmatprep.mubr.f32.mxu0 0.0
    %2660 = vmatmul.mubr.f32.gmra.mxu0 %v2306
    %v2661 = vpop.f32.mrf.mxu0
    %v2662 = vadd.f32 0.0, %v2661
    %v2663 = vpop.f32.mrf.mxu0
    %2664 = vmatprep.mubr.f32.mxu0 0.0
    %2665 = vmatmul.mubr.f32.gmra.mxu0 %v2309
    %v2666 = vpop.f32.mrf.mxu0
    %v2667 = vadd.f32 0.0, %v2666
    %v2668 = vpop.f32.mrf.mxu0
    %2669 = vmatprep.mubr.f32.mxu0 0.0
    %2670 = vmatmul.mubr.f32.gmra.mxu0 %v2312
    %v2671 = vpop.f32.mrf.mxu0
    %v2672 = vadd.f32 0.0, %v2671
    %v2673 = vpop.f32.mrf.mxu0
    %2674 = vmatprep.mubr.f32.mxu0 0.0
    %2675 = vmatmul.mubr.f32.gmra.mxu0 %v2315
    %v2676 = vpop.f32.mrf.mxu0
    %v2677 = vadd.f32 0.0, %v2676
    %v2678 = vpop.f32.mrf.mxu0
    %2679 = vmatprep.mubr.f32.mxu0 0.0
    %2680 = vmatmul.mubr.f32.gmra.mxu0 %v2318
    %v2681 = vpop.f32.mrf.mxu0
    %v2682 = vadd.f32 0.0, %v2681
    %v2683 = vpop.f32.mrf.mxu0
    %2684 = vmatprep.mubr.f32.mxu0 0.0
    %2685 = vmatmul.mubr.f32.gmra.mxu0 %v2321
    %v2686 = vpop.f32.mrf.mxu0
    %v2687 = vadd.f32 0.0, %v2686
    %v2688 = vpop.f32.mrf.mxu0
    %2689 = vmatprep.mubr.f32.mxu0 0.0
    %2690 = vmatmul.mubr.f32.gmra.mxu0 %v2324
    %v2691 = vpop.f32.mrf.mxu0
    %v2692 = vadd.f32 0.0, %v2691
    %v2693 = vpop.f32.mrf.mxu0
    %2694 = vmatprep.mubr.f32.mxu0 0.0
    %2695 = vmatmul.mubr.f32.gmra.mxu0 %v2327
    %v2696 = vpop.f32.mrf.mxu0
    %v2697 = vadd.f32 0.0, %v2696
    %v2698 = vpop.f32.mrf.mxu0
    %2699 = vmatprep.mubr.f32.mxu0 0.0
    %2700 = vmatmul.mubr.f32.gmra.mxu0 %v2330
    %v2701 = vpop.f32.mrf.mxu0
    %v2702 = vadd.f32 0.0, %v2701
    %v2703 = vpop.f32.mrf.mxu0
    %2704 = vmatprep.mubr.f32.mxu0 0.0
    %2705 = vmatmul.mubr.f32.gmra.mxu0 %v2333
    %v2706 = vpop.f32.mrf.mxu0
    %v2707 = vadd.f32 0.0, %v2706
    %v2708 = vpop.f32.mrf.mxu0
    %2709 = vmatprep.mubr.f32.mxu0 0.0
    %2710 = vmatmul.mubr.f32.gmra.mxu0 %v2336
    %v2711 = vpop.f32.mrf.mxu0
    %v2712 = vadd.f32 0.0, %v2711
    %v2713 = vpop.f32.mrf.mxu0
    %2714 = vmatprep.mubr.f32.mxu0 0.0
    %2715 = vmatmul.mubr.f32.gmra.mxu0 %v2339
    %v2716 = vpop.f32.mrf.mxu0
    %v2717 = vadd.f32 0.0, %v2716
    %v2718 = vpop.f32.mrf.mxu0
    %2719 = vmatprep.mubr.f32.mxu0 0.0
    %2720 = vmatmul.mubr.f32.gmra.mxu0 %v2342
    %v2721 = vpop.f32.mrf.mxu0
    %v2722 = vadd.f32 0.0, %v2721
    %v2723 = vpop.f32.mrf.mxu0
    %2724 = vmatprep.mubr.f32.mxu0 0.0
    %2725 = vmatmul.mubr.f32.gmra.mxu0 %v2345
    %v2726 = vpop.f32.mrf.mxu0
    %v2727 = vadd.f32 0.0, %v2726
    %v2728 = vpop.f32.mrf.mxu0
    %2729 = vmatprep.mubr.f32.mxu0 0.0
    %2730 = vmatmul.mubr.f32.gmra.mxu0 %v2348
    %v2731 = vpop.f32.mrf.mxu0
    %v2732 = vadd.f32 0.0, %v2731
    %v2733 = vpop.f32.mrf.mxu0
    %2734 = vmatprep.mubr.f32.mxu0 0.0
    %2735 = vmatmul.mubr.f32.gmra.mxu0 %v2351
    %v2736 = vpop.f32.mrf.mxu0
    %v2737 = vadd.f32 0.0, %v2736
    %v2738 = vpop.f32.mrf.mxu0
    %2739 = vmatprep.mubr.f32.mxu0 0.0
    %2740 = vmatmul.mubr.f32.gmra.mxu0 %v2354
    %v2741 = vpop.f32.mrf.mxu0
    %v2742 = vadd.f32 0.0, %v2741
    %v2743 = vpop.f32.mrf.mxu0
    %2744 = vdwg.mxu0
    %v2745 = vsub.f32 %v101, %v2427
    %v2746 = vsub.f32 %v102, %v2432
    %v2747 = vsub.f32 %v103, %v2437
    %v2748 = vsub.f32 %v104, %v2442
    %v2749 = vsub.f32 %v105, %v2447
    %v2750 = vsub.f32 %v106, %v2452
    %v2751 = vsub.f32 %v107, %v2457
    %v2752 = vsub.f32 %v108, %v2462
    %v2753 = vsub.f32 %v109, %v2467
    %v2754 = vsub.f32 %v110, %v2472
    %v2755 = vsub.f32 %v111, %v2477
    %v2756 = vsub.f32 %v112, %v2482
    %v2757 = vsub.f32 %v113, %v2487
    %v2758 = vsub.f32 %v114, %v2492
    %v2759 = vsub.f32 %v115, %v2497
    %v2760 = vsub.f32 %v116, %v2502
    %v2761 = vsub.f32 %v117, %v2507
    %v2762 = vsub.f32 %v118, %v2512
    %v2763 = vsub.f32 %v119, %v2517
    %v2764 = vsub.f32 %v120, %v2522
    %v2765 = vsub.f32 %v121, %v2527
    %v2766 = vsub.f32 %v122, %v2532
    %v2767 = vsub.f32 %v123, %v2537
    %v2768 = vsub.f32 %v124, %v2542
    %v2769 = vsub.f32 %v125, %v2547
    %v2770 = vsub.f32 %v126, %v2552
    %v2771 = vsub.f32 %v127, %v2557
    %v2772 = vsub.f32 %v128, %v2562
    %v2773 = vsub.f32 %v129, %v2567
    %v2774 = vsub.f32 %v130, %v2572
    %v2775 = vsub.f32 %v131, %v2577
    %v2776 = vsub.f32 %v132, %v2582
    %v2777 = vsub.f32 %v133, %v2587
    %v2778 = vsub.f32 %v134, %v2592
    %v2779 = vsub.f32 %v135, %v2597
    %v2780 = vsub.f32 %v136, %v2602
    %v2781 = vsub.f32 %v137, %v2607
    %v2782 = vsub.f32 %v138, %v2612
    %v2783 = vsub.f32 %v139, %v2617
    %v2784 = vsub.f32 %v140, %v2622
    %v2785 = vsub.f32 %v141, %v2627
    %v2786 = vsub.f32 %v142, %v2632
    %v2787 = vsub.f32 %v143, %v2637
    %v2788 = vsub.f32 %v144, %v2642
    %v2789 = vsub.f32 %v145, %v2647
    %v2790 = vsub.f32 %v146, %v2652
    %v2791 = vsub.f32 %v147, %v2657
    %v2792 = vsub.f32 %v148, %v2662
    %v2793 = vsub.f32 %v149, %v2667
    %v2794 = vsub.f32 %v150, %v2672
    %v2795 = vsub.f32 %v151, %v2677
    %v2796 = vsub.f32 %v152, %v2682
    %v2797 = vsub.f32 %v153, %v2687
    %v2798 = vsub.f32 %v154, %v2692
    %v2799 = vsub.f32 %v155, %v2697
    %v2800 = vsub.f32 %v156, %v2702
    %v2801 = vsub.f32 %v157, %v2707
    %v2802 = vsub.f32 %v158, %v2712
    %v2803 = vsub.f32 %v159, %v2717
    %v2804 = vsub.f32 %v160, %v2722
    %v2805 = vsub.f32 %v161, %v2727
    %v2806 = vsub.f32 %v162, %v2732
    %v2807 = vsub.f32 %v163, %v2737
    %v2808 = vsub.f32 %v164, %v2742
    %v2809 = vmul.f32 %v2745, %v2745
    %v2810 = vmul.f32 %v2746, %v2746
    %v2811 = vmul.f32 %v2747, %v2747
    %v2812 = vmul.f32 %v2748, %v2748
    %v2813 = vmul.f32 %v2749, %v2749
    %v2814 = vmul.f32 %v2750, %v2750
    %v2815 = vmul.f32 %v2751, %v2751
    %v2816 = vmul.f32 %v2752, %v2752
    %v2817 = vmul.f32 %v2753, %v2753
    %v2818 = vmul.f32 %v2754, %v2754
    %v2819 = vmul.f32 %v2755, %v2755
    %v2820 = vmul.f32 %v2756, %v2756
    %v2821 = vmul.f32 %v2757, %v2757
    %v2822 = vmul.f32 %v2758, %v2758
    %v2823 = vmul.f32 %v2759, %v2759
    %v2824 = vmul.f32 %v2760, %v2760
    %v2825 = vmul.f32 %v2761, %v2761
    %v2826 = vmul.f32 %v2762, %v2762
    %v2827 = vmul.f32 %v2763, %v2763
    %v2828 = vmul.f32 %v2764, %v2764
    %v2829 = vmul.f32 %v2765, %v2765
    %v2830 = vmul.f32 %v2766, %v2766
    %v2831 = vmul.f32 %v2767, %v2767
    %v2832 = vmul.f32 %v2768, %v2768
    %v2833 = vmul.f32 %v2769, %v2769
    %v2834 = vmul.f32 %v2770, %v2770
    %v2835 = vmul.f32 %v2771, %v2771
    %v2836 = vmul.f32 %v2772, %v2772
    %v2837 = vmul.f32 %v2773, %v2773
    %v2838 = vmul.f32 %v2774, %v2774
    %v2839 = vmul.f32 %v2775, %v2775
    %v2840 = vmul.f32 %v2776, %v2776
    %v2841 = vmul.f32 %v2777, %v2777
    %v2842 = vmul.f32 %v2778, %v2778
    %v2843 = vmul.f32 %v2779, %v2779
    %v2844 = vmul.f32 %v2780, %v2780
    %v2845 = vmul.f32 %v2781, %v2781
    %v2846 = vmul.f32 %v2782, %v2782
    %v2847 = vmul.f32 %v2783, %v2783
    %v2848 = vmul.f32 %v2784, %v2784
    %v2849 = vmul.f32 %v2785, %v2785
    %v2850 = vmul.f32 %v2786, %v2786
    %v2851 = vmul.f32 %v2787, %v2787
    %v2852 = vmul.f32 %v2788, %v2788
    %v2853 = vmul.f32 %v2789, %v2789
    %v2854 = vmul.f32 %v2790, %v2790
    %v2855 = vmul.f32 %v2791, %v2791
    %v2856 = vmul.f32 %v2792, %v2792
    %v2857 = vmul.f32 %v2793, %v2793
    %v2858 = vmul.f32 %v2794, %v2794
    %v2859 = vmul.f32 %v2795, %v2795
    %v2860 = vmul.f32 %v2796, %v2796
    %v2861 = vmul.f32 %v2797, %v2797
    %v2862 = vmul.f32 %v2798, %v2798
    %v2863 = vmul.f32 %v2799, %v2799
    %v2864 = vmul.f32 %v2800, %v2800
    %v2865 = vmul.f32 %v2801, %v2801
    %v2866 = vmul.f32 %v2802, %v2802
    %v2867 = vmul.f32 %v2803, %v2803
    %v2868 = vmul.f32 %v2804, %v2804
    %v2869 = vmul.f32 %v2805, %v2805
    %v2870 = vmul.f32 %v2806, %v2806
    %v2871 = vmul.f32 %v2807, %v2807
    %v2872 = vmul.f32 %v2808, %v2808
    %vm2873 = vcmask 23552
    %v2874 = vsel %vm2873, %v2809, 0.0
    %2875 = vadd.xlane.f32.xlu0 %v2874
    %v2876 = vpop.xlane.xlu0 %2875
    %v2877 = vsel %vm2873, %v2810, 0.0
    %2878 = vadd.xlane.f32.xlu0 %v2877
    %v2879 = vpop.xlane.xlu0 %2878
    %v2880 = vsel %vm2873, %v2811, 0.0
    %2881 = vadd.xlane.f32.xlu0 %v2880
    %v2882 = vpop.xlane.xlu0 %2881
    %v2883 = vsel %vm2873, %v2812, 0.0
    %2884 = vadd.xlane.f32.xlu0 %v2883
    %v2885 = vpop.xlane.xlu0 %2884
    %v2886 = vsel %vm2873, %v2813, 0.0
    %2887 = vadd.xlane.f32.xlu0 %v2886
    %v2888 = vpop.xlane.xlu0 %2887
    %v2889 = vsel %vm2873, %v2814, 0.0
    %2890 = vadd.xlane.f32.xlu0 %v2889
    %v2891 = vpop.xlane.xlu0 %2890
    %v2892 = vsel %vm2873, %v2815, 0.0
    %2893 = vadd.xlane.f32.xlu0 %v2892
    %v2894 = vpop.xlane.xlu0 %2893
    %v2895 = vsel %vm2873, %v2816, 0.0
    %2896 = vadd.xlane.f32.xlu0 %v2895
    %v2897 = vpop.xlane.xlu0 %2896
    %v2898 = vsel %vm2873, %v2817, 0.0
    %2899 = vadd.xlane.f32.xlu0 %v2898
    %v2900 = vpop.xlane.xlu0 %2899
    %v2901 = vsel %vm2873, %v2818, 0.0
    %2902 = vadd.xlane.f32.xlu0 %v2901
    %v2903 = vpop.xlane.xlu0 %2902
    %v2904 = vsel %vm2873, %v2819, 0.0
    %2905 = vadd.xlane.f32.xlu0 %v2904
    %v2906 = vpop.xlane.xlu0 %2905
    %v2907 = vsel %vm2873, %v2820, 0.0
    %2908 = vadd.xlane.f32.xlu0 %v2907
    %v2909 = vpop.xlane.xlu0 %2908
    %v2910 = vsel %vm2873, %v2821, 0.0
    %2911 = vadd.xlane.f32.xlu0 %v2910
    %v2912 = vpop.xlane.xlu0 %2911
    %v2913 = vsel %vm2873, %v2822, 0.0
    %2914 = vadd.xlane.f32.xlu0 %v2913
    %v2915 = vpop.xlane.xlu0 %2914
    %v2916 = vsel %vm2873, %v2823, 0.0
    %2917 = vadd.xlane.f32.xlu0 %v2916
    %v2918 = vpop.xlane.xlu0 %2917
    %v2919 = vsel %vm2873, %v2824, 0.0
    %2920 = vadd.xlane.f32.xlu0 %v2919
    %v2921 = vpop.xlane.xlu0 %2920
    %v2922 = vsel %vm2873, %v2825, 0.0
    %2923 = vadd.xlane.f32.xlu0 %v2922
    %v2924 = vpop.xlane.xlu0 %2923
    %v2925 = vsel %vm2873, %v2826, 0.0
    %2926 = vadd.xlane.f32.xlu0 %v2925
    %v2927 = vpop.xlane.xlu0 %2926
    %v2928 = vsel %vm2873, %v2827, 0.0
    %2929 = vadd.xlane.f32.xlu0 %v2928
    %v2930 = vpop.xlane.xlu0 %2929
    %v2931 = vsel %vm2873, %v2828, 0.0
    %2932 = vadd.xlane.f32.xlu0 %v2931
    %v2933 = vpop.xlane.xlu0 %2932
    %v2934 = vsel %vm2873, %v2829, 0.0
    %2935 = vadd.xlane.f32.xlu0 %v2934
    %v2936 = vpop.xlane.xlu0 %2935
    %v2937 = vsel %vm2873, %v2830, 0.0
    %2938 = vadd.xlane.f32.xlu0 %v2937
    %v2939 = vpop.xlane.xlu0 %2938
    %v2940 = vsel %vm2873, %v2831, 0.0
    %2941 = vadd.xlane.f32.xlu0 %v2940
    %v2942 = vpop.xlane.xlu0 %2941
    %v2943 = vsel %vm2873, %v2832, 0.0
    %2944 = vadd.xlane.f32.xlu0 %v2943
    %v2945 = vpop.xlane.xlu0 %2944
    %v2946 = vsel %vm2873, %v2833, 0.0
    %2947 = vadd.xlane.f32.xlu0 %v2946
    %v2948 = vpop.xlane.xlu0 %2947
    %v2949 = vsel %vm2873, %v2834, 0.0
    %2950 = vadd.xlane.f32.xlu0 %v2949
    %v2951 = vpop.xlane.xlu0 %2950
    %v2952 = vsel %vm2873, %v2835, 0.0
    %2953 = vadd.xlane.f32.xlu0 %v2952
    %v2954 = vpop.xlane.xlu0 %2953
    %v2955 = vsel %vm2873, %v2836, 0.0
    %2956 = vadd.xlane.f32.xlu0 %v2955
    %v2957 = vpop.xlane.xlu0 %2956
    %v2958 = vsel %vm2873, %v2837, 0.0
    %2959 = vadd.xlane.f32.xlu0 %v2958
    %v2960 = vpop.xlane.xlu0 %2959
    %v2961 = vsel %vm2873, %v2838, 0.0
    %2962 = vadd.xlane.f32.xlu0 %v2961
    %v2963 = vpop.xlane.xlu0 %2962
    %v2964 = vsel %vm2873, %v2839, 0.0
    %2965 = vadd.xlane.f32.xlu0 %v2964
    %v2966 = vpop.xlane.xlu0 %2965
    %v2967 = vsel %vm2873, %v2840, 0.0
    %2968 = vadd.xlane.f32.xlu0 %v2967
    %v2969 = vpop.xlane.xlu0 %2968
    %v2970 = vsel %vm2873, %v2841, 0.0
    %2971 = vadd.xlane.f32.xlu0 %v2970
    %v2972 = vpop.xlane.xlu0 %2971
    %v2973 = vsel %vm2873, %v2842, 0.0
    %2974 = vadd.xlane.f32.xlu0 %v2973
    %v2975 = vpop.xlane.xlu0 %2974
    %v2976 = vsel %vm2873, %v2843, 0.0
    %2977 = vadd.xlane.f32.xlu0 %v2976
    %v2978 = vpop.xlane.xlu0 %2977
    %v2979 = vsel %vm2873, %v2844, 0.0
    %2980 = vadd.xlane.f32.xlu0 %v2979
    %v2981 = vpop.xlane.xlu0 %2980
    %v2982 = vsel %vm2873, %v2845, 0.0
    %2983 = vadd.xlane.f32.xlu0 %v2982
    %v2984 = vpop.xlane.xlu0 %2983
    %v2985 = vsel %vm2873, %v2846, 0.0
    %2986 = vadd.xlane.f32.xlu0 %v2985
    %v2987 = vpop.xlane.xlu0 %2986
    %v2988 = vsel %vm2873, %v2847, 0.0
    %2989 = vadd.xlane.f32.xlu0 %v2988
    %v2990 = vpop.xlane.xlu0 %2989
    %v2991 = vsel %vm2873, %v2848, 0.0
    %2992 = vadd.xlane.f32.xlu0 %v2991
    %v2993 = vpop.xlane.xlu0 %2992
    %v2994 = vsel %vm2873, %v2849, 0.0
    %2995 = vadd.xlane.f32.xlu0 %v2994
    %v2996 = vpop.xlane.xlu0 %2995
    %v2997 = vsel %vm2873, %v2850, 0.0
    %2998 = vadd.xlane.f32.xlu0 %v2997
    %v2999 = vpop.xlane.xlu0 %2998
    %v3000 = vsel %vm2873, %v2851, 0.0
    %3001 = vadd.xlane.f32.xlu0 %v3000
    %v3002 = vpop.xlane.xlu0 %3001
    %v3003 = vsel %vm2873, %v2852, 0.0
    %3004 = vadd.xlane.f32.xlu0 %v3003
    %v3005 = vpop.xlane.xlu0 %3004
    %v3006 = vsel %vm2873, %v2853, 0.0
    %3007 = vadd.xlane.f32.xlu0 %v3006
    %v3008 = vpop.xlane.xlu0 %3007
    %v3009 = vsel %vm2873, %v2854, 0.0
    %3010 = vadd.xlane.f32.xlu0 %v3009
    %v3011 = vpop.xlane.xlu0 %3010
    %v3012 = vsel %vm2873, %v2855, 0.0
    %3013 = vadd.xlane.f32.xlu0 %v3012
    %v3014 = vpop.xlane.xlu0 %3013
    %v3015 = vsel %vm2873, %v2856, 0.0
    %3016 = vadd.xlane.f32.xlu0 %v3015
    %v3017 = vpop.xlane.xlu0 %3016
    %v3018 = vsel %vm2873, %v2857, 0.0
    %3019 = vadd.xlane.f32.xlu0 %v3018
    %v3020 = vpop.xlane.xlu0 %3019
    %v3021 = vsel %vm2873, %v2858, 0.0
    %3022 = vadd.xlane.f32.xlu0 %v3021
    %v3023 = vpop.xlane.xlu0 %3022
    %v3024 = vsel %vm2873, %v2859, 0.0
    %3025 = vadd.xlane.f32.xlu0 %v3024
    %v3026 = vpop.xlane.xlu0 %3025
    %v3027 = vsel %vm2873, %v2860, 0.0
    %3028 = vadd.xlane.f32.xlu0 %v3027
    %v3029 = vpop.xlane.xlu0 %3028
    %v3030 = vsel %vm2873, %v2861, 0.0
    %3031 = vadd.xlane.f32.xlu0 %v3030
    %v3032 = vpop.xlane.xlu0 %3031
    %v3033 = vsel %vm2873, %v2862, 0.0
    %3034 = vadd.xlane.f32.xlu0 %v3033
    %v3035 = vpop.xlane.xlu0 %3034
    %v3036 = vsel %vm2873, %v2863, 0.0
    %3037 = vadd.xlane.f32.xlu0 %v3036
    %v3038 = vpop.xlane.xlu0 %3037
    %v3039 = vsel %vm2873, %v2864, 0.0
    %3040 = vadd.xlane.f32.xlu0 %v3039
    %v3041 = vpop.xlane.xlu0 %3040
    %v3042 = vsel %vm2873, %v2865, 0.0
    %3043 = vadd.xlane.f32.xlu0 %v3042
    %v3044 = vpop.xlane.xlu0 %3043
    %v3045 = vsel %vm2873, %v2866, 0.0
    %3046 = vadd.xlane.f32.xlu0 %v3045
    %v3047 = vpop.xlane.xlu0 %3046
    %v3048 = vsel %vm2873, %v2867, 0.0
    %3049 = vadd.xlane.f32.xlu0 %v3048
    %v3050 = vpop.xlane.xlu0 %3049
    %v3051 = vsel %vm2873, %v2868, 0.0
    %3052 = vadd.xlane.f32.xlu0 %v3051
    %v3053 = vpop.xlane.xlu0 %3052
    %v3054 = vsel %vm2873, %v2869, 0.0
    %3055 = vadd.xlane.f32.xlu0 %v3054
    %v3056 = vpop.xlane.xlu0 %3055
    %v3057 = vsel %vm2873, %v2870, 0.0
    %3058 = vadd.xlane.f32.xlu0 %v3057
    %v3059 = vpop.xlane.xlu0 %3058
    %v3060 = vsel %vm2873, %v2871, 0.0
    %3061 = vadd.xlane.f32.xlu0 %v3060
    %v3062 = vpop.xlane.xlu0 %3061
    %v3063 = vsel %vm2873, %v2872, 0.0
    %3064 = vadd.xlane.f32.xlu0 %v3063
    %v3065 = vpop.xlane.xlu0 %3064
    %v3066 = vrsqrt.pop %v2876
    %v3067 = vmul.f32 %v2876, %v3066
    %vm3068 = vcmp.eq.f32.partialorder %v2876, inf
    %v3069 = vsel %vm3068, %v2876, %v3067
    %vm3070 = vcmp.eq.f32.partialorder %v2876, 0.0
    %v3071 = vand.u32 %v2876, 2147483648
    %v3072 = vsel %vm3070, %v3071, %v3069
    %v3073 = vrsqrt.pop %v2879
    %v3074 = vmul.f32 %v2879, %v3073
    %vm3075 = vcmp.eq.f32.partialorder %v2879, inf
    %v3076 = vsel %vm3075, %v2879, %v3074
    %vm3077 = vcmp.eq.f32.partialorder %v2879, 0.0
    %v3078 = vand.u32 %v2879, 2147483648
    %v3079 = vsel %vm3077, %v3078, %v3076
    %v3080 = vrsqrt.pop %v2882
    %v3081 = vmul.f32 %v2882, %v3080
    %vm3082 = vcmp.eq.f32.partialorder %v2882, inf
    %v3083 = vsel %vm3082, %v2882, %v3081
    %vm3084 = vcmp.eq.f32.partialorder %v2882, 0.0
    %v3085 = vand.u32 %v2882, 2147483648
    %v3086 = vsel %vm3084, %v3085, %v3083
    %v3087 = vrsqrt.pop %v2885
    %v3088 = vmul.f32 %v2885, %v3087
    %vm3089 = vcmp.eq.f32.partialorder %v2885, inf
    %v3090 = vsel %vm3089, %v2885, %v3088
    %vm3091 = vcmp.eq.f32.partialorder %v2885, 0.0
    %v3092 = vand.u32 %v2885, 2147483648
    %v3093 = vsel %vm3091, %v3092, %v3090
    %v3094 = vrsqrt.pop %v2888
    %v3095 = vmul.f32 %v2888, %v3094
    %vm3096 = vcmp.eq.f32.partialorder %v2888, inf
    %v3097 = vsel %vm3096, %v2888, %v3095
    %vm3098 = vcmp.eq.f32.partialorder %v2888, 0.0
    %v3099 = vand.u32 %v2888, 2147483648
    %v3100 = vsel %vm3098, %v3099, %v3097
    %v3101 = vrsqrt.pop %v2891
    %v3102 = vmul.f32 %v2891, %v3101
    %vm3103 = vcmp.eq.f32.partialorder %v2891, inf
    %v3104 = vsel %vm3103, %v2891, %v3102
    %vm3105 = vcmp.eq.f32.partialorder %v2891, 0.0
    %v3106 = vand.u32 %v2891, 2147483648
    %v3107 = vsel %vm3105, %v3106, %v3104
    %v3108 = vrsqrt.pop %v2894
    %v3109 = vmul.f32 %v2894, %v3108
    %vm3110 = vcmp.eq.f32.partialorder %v2894, inf
    %v3111 = vsel %vm3110, %v2894, %v3109
    %vm3112 = vcmp.eq.f32.partialorder %v2894, 0.0
    %v3113 = vand.u32 %v2894, 2147483648
    %v3114 = vsel %vm3112, %v3113, %v3111
    %v3115 = vrsqrt.pop %v2897
    %v3116 = vmul.f32 %v2897, %v3115
    %vm3117 = vcmp.eq.f32.partialorder %v2897, inf
    %v3118 = vsel %vm3117, %v2897, %v3116
    %vm3119 = vcmp.eq.f32.partialorder %v2897, 0.0
    %v3120 = vand.u32 %v2897, 2147483648
    %v3121 = vsel %vm3119, %v3120, %v3118
    %v3122 = vrsqrt.pop %v2900
    %v3123 = vmul.f32 %v2900, %v3122
    %vm3124 = vcmp.eq.f32.partialorder %v2900, inf
    %v3125 = vsel %vm3124, %v2900, %v3123
    %vm3126 = vcmp.eq.f32.partialorder %v2900, 0.0
    %v3127 = vand.u32 %v2900, 2147483648
    %v3128 = vsel %vm3126, %v3127, %v3125
    %v3129 = vrsqrt.pop %v2903
    %v3130 = vmul.f32 %v2903, %v3129
    %vm3131 = vcmp.eq.f32.partialorder %v2903, inf
    %v3132 = vsel %vm3131, %v2903, %v3130
    %vm3133 = vcmp.eq.f32.partialorder %v2903, 0.0
    %v3134 = vand.u32 %v2903, 2147483648
    %v3135 = vsel %vm3133, %v3134, %v3132
    %v3136 = vrsqrt.pop %v2906
    %v3137 = vmul.f32 %v2906, %v3136
    %vm3138 = vcmp.eq.f32.partialorder %v2906, inf
    %v3139 = vsel %vm3138, %v2906, %v3137
    %vm3140 = vcmp.eq.f32.partialorder %v2906, 0.0
    %v3141 = vand.u32 %v2906, 2147483648
    %v3142 = vsel %vm3140, %v3141, %v3139
    %v3143 = vrsqrt.pop %v2909
    %v3144 = vmul.f32 %v2909, %v3143
    %vm3145 = vcmp.eq.f32.partialorder %v2909, inf
    %v3146 = vsel %vm3145, %v2909, %v3144
    %vm3147 = vcmp.eq.f32.partialorder %v2909, 0.0
    %v3148 = vand.u32 %v2909, 2147483648
    %v3149 = vsel %vm3147, %v3148, %v3146
    %v3150 = vrsqrt.pop %v2912
    %v3151 = vmul.f32 %v2912, %v3150
    %vm3152 = vcmp.eq.f32.partialorder %v2912, inf
    %v3153 = vsel %vm3152, %v2912, %v3151
    %vm3154 = vcmp.eq.f32.partialorder %v2912, 0.0
    %v3155 = vand.u32 %v2912, 2147483648
    %v3156 = vsel %vm3154, %v3155, %v3153
    %v3157 = vrsqrt.pop %v2915
    %v3158 = vmul.f32 %v2915, %v3157
    %vm3159 = vcmp.eq.f32.partialorder %v2915, inf
    %v3160 = vsel %vm3159, %v2915, %v3158
    %vm3161 = vcmp.eq.f32.partialorder %v2915, 0.0
    %v3162 = vand.u32 %v2915, 2147483648
    %v3163 = vsel %vm3161, %v3162, %v3160
    %v3164 = vrsqrt.pop %v2918
    %v3165 = vmul.f32 %v2918, %v3164
    %vm3166 = vcmp.eq.f32.partialorder %v2918, inf
    %v3167 = vsel %vm3166, %v2918, %v3165
    %vm3168 = vcmp.eq.f32.partialorder %v2918, 0.0
    %v3169 = vand.u32 %v2918, 2147483648
    %v3170 = vsel %vm3168, %v3169, %v3167
    %v3171 = vrsqrt.pop %v2921
    %v3172 = vmul.f32 %v2921, %v3171
    %vm3173 = vcmp.eq.f32.partialorder %v2921, inf
    %v3174 = vsel %vm3173, %v2921, %v3172
    %vm3175 = vcmp.eq.f32.partialorder %v2921, 0.0
    %v3176 = vand.u32 %v2921, 2147483648
    %v3177 = vsel %vm3175, %v3176, %v3174
    %v3178 = vrsqrt.pop %v2924
    %v3179 = vmul.f32 %v2924, %v3178
    %vm3180 = vcmp.eq.f32.partialorder %v2924, inf
    %v3181 = vsel %vm3180, %v2924, %v3179
    %vm3182 = vcmp.eq.f32.partialorder %v2924, 0.0
    %v3183 = vand.u32 %v2924, 2147483648
    %v3184 = vsel %vm3182, %v3183, %v3181
    %v3185 = vrsqrt.pop %v2927
    %v3186 = vmul.f32 %v2927, %v3185
    %vm3187 = vcmp.eq.f32.partialorder %v2927, inf
    %v3188 = vsel %vm3187, %v2927, %v3186
    %vm3189 = vcmp.eq.f32.partialorder %v2927, 0.0
    %v3190 = vand.u32 %v2927, 2147483648
    %v3191 = vsel %vm3189, %v3190, %v3188
    %v3192 = vrsqrt.pop %v2930
    %v3193 = vmul.f32 %v2930, %v3192
    %vm3194 = vcmp.eq.f32.partialorder %v2930, inf
    %v3195 = vsel %vm3194, %v2930, %v3193
    %vm3196 = vcmp.eq.f32.partialorder %v2930, 0.0
    %v3197 = vand.u32 %v2930, 2147483648
    %v3198 = vsel %vm3196, %v3197, %v3195
    %v3199 = vrsqrt.pop %v2933
    %v3200 = vmul.f32 %v2933, %v3199
    %vm3201 = vcmp.eq.f32.partialorder %v2933, inf
    %v3202 = vsel %vm3201, %v2933, %v3200
    %vm3203 = vcmp.eq.f32.partialorder %v2933, 0.0
    %v3204 = vand.u32 %v2933, 2147483648
    %v3205 = vsel %vm3203, %v3204, %v3202
    %v3206 = vrsqrt.pop %v2936
    %v3207 = vmul.f32 %v2936, %v3206
    %vm3208 = vcmp.eq.f32.partialorder %v2936, inf
    %v3209 = vsel %vm3208, %v2936, %v3207
    %vm3210 = vcmp.eq.f32.partialorder %v2936, 0.0
    %v3211 = vand.u32 %v2936, 2147483648
    %v3212 = vsel %vm3210, %v3211, %v3209
    %v3213 = vrsqrt.pop %v2939
    %v3214 = vmul.f32 %v2939, %v3213
    %vm3215 = vcmp.eq.f32.partialorder %v2939, inf
    %v3216 = vsel %vm3215, %v2939, %v3214
    %vm3217 = vcmp.eq.f32.partialorder %v2939, 0.0
    %v3218 = vand.u32 %v2939, 2147483648
    %v3219 = vsel %vm3217, %v3218, %v3216
    %v3220 = vrsqrt.pop %v2942
    %v3221 = vmul.f32 %v2942, %v3220
    %vm3222 = vcmp.eq.f32.partialorder %v2942, inf
    %v3223 = vsel %vm3222, %v2942, %v3221
    %vm3224 = vcmp.eq.f32.partialorder %v2942, 0.0
    %v3225 = vand.u32 %v2942, 2147483648
    %v3226 = vsel %vm3224, %v3225, %v3223
    %v3227 = vrsqrt.pop %v2945
    %v3228 = vmul.f32 %v2945, %v3227
    %vm3229 = vcmp.eq.f32.partialorder %v2945, inf
    %v3230 = vsel %vm3229, %v2945, %v3228
    %vm3231 = vcmp.eq.f32.partialorder %v2945, 0.0
    %v3232 = vand.u32 %v2945, 2147483648
    %v3233 = vsel %vm3231, %v3232, %v3230
    %v3234 = vrsqrt.pop %v2948
    %v3235 = vmul.f32 %v2948, %v3234
    %vm3236 = vcmp.eq.f32.partialorder %v2948, inf
    %v3237 = vsel %vm3236, %v2948, %v3235
    %vm3238 = vcmp.eq.f32.partialorder %v2948, 0.0
    %v3239 = vand.u32 %v2948, 2147483648
    %v3240 = vsel %vm3238, %v3239, %v3237
    %v3241 = vrsqrt.pop %v2951
    %v3242 = vmul.f32 %v2951, %v3241
    %vm3243 = vcmp.eq.f32.partialorder %v2951, inf
    %v3244 = vsel %vm3243, %v2951, %v3242
    %vm3245 = vcmp.eq.f32.partialorder %v2951, 0.0
    %v3246 = vand.u32 %v2951, 2147483648
    %v3247 = vsel %vm3245, %v3246, %v3244
    %v3248 = vrsqrt.pop %v2954
    %v3249 = vmul.f32 %v2954, %v3248
    %vm3250 = vcmp.eq.f32.partialorder %v2954, inf
    %v3251 = vsel %vm3250, %v2954, %v3249
    %vm3252 = vcmp.eq.f32.partialorder %v2954, 0.0
    %v3253 = vand.u32 %v2954, 2147483648
    %v3254 = vsel %vm3252, %v3253, %v3251
    %v3255 = vrsqrt.pop %v2957
    %v3256 = vmul.f32 %v2957, %v3255
    %vm3257 = vcmp.eq.f32.partialorder %v2957, inf
    %v3258 = vsel %vm3257, %v2957, %v3256
    %vm3259 = vcmp.eq.f32.partialorder %v2957, 0.0
    %v3260 = vand.u32 %v2957, 2147483648
    %v3261 = vsel %vm3259, %v3260, %v3258
    %v3262 = vrsqrt.pop %v2960
    %v3263 = vmul.f32 %v2960, %v3262
    %vm3264 = vcmp.eq.f32.partialorder %v2960, inf
    %v3265 = vsel %vm3264, %v2960, %v3263
    %vm3266 = vcmp.eq.f32.partialorder %v2960, 0.0
    %v3267 = vand.u32 %v2960, 2147483648
    %v3268 = vsel %vm3266, %v3267, %v3265
    %v3269 = vrsqrt.pop %v2963
    %v3270 = vmul.f32 %v2963, %v3269
    %vm3271 = vcmp.eq.f32.partialorder %v2963, inf
    %v3272 = vsel %vm3271, %v2963, %v3270
    %vm3273 = vcmp.eq.f32.partialorder %v2963, 0.0
    %v3274 = vand.u32 %v2963, 2147483648
    %v3275 = vsel %vm3273, %v3274, %v3272
    %v3276 = vrsqrt.pop %v2966
    %v3277 = vmul.f32 %v2966, %v3276
    %vm3278 = vcmp.eq.f32.partialorder %v2966, inf
    %v3279 = vsel %vm3278, %v2966, %v3277
    %vm3280 = vcmp.eq.f32.partialorder %v2966, 0.0
    %v3281 = vand.u32 %v2966, 2147483648
    %v3282 = vsel %vm3280, %v3281, %v3279
    %v3283 = vrsqrt.pop %v2969
    %v3284 = vmul.f32 %v2969, %v3283
    %vm3285 = vcmp.eq.f32.partialorder %v2969, inf
    %v3286 = vsel %vm3285, %v2969, %v3284
    %vm3287 = vcmp.eq.f32.partialorder %v2969, 0.0
    %v3288 = vand.u32 %v2969, 2147483648
    %v3289 = vsel %vm3287, %v3288, %v3286
    %v3290 = vrsqrt.pop %v2972
    %v3291 = vmul.f32 %v2972, %v3290
    %vm3292 = vcmp.eq.f32.partialorder %v2972, inf
    %v3293 = vsel %vm3292, %v2972, %v3291
    %vm3294 = vcmp.eq.f32.partialorder %v2972, 0.0
    %v3295 = vand.u32 %v2972, 2147483648
    %v3296 = vsel %vm3294, %v3295, %v3293
    %v3297 = vrsqrt.pop %v2975
    %v3298 = vmul.f32 %v2975, %v3297
    %vm3299 = vcmp.eq.f32.partialorder %v2975, inf
    %v3300 = vsel %vm3299, %v2975, %v3298
    %vm3301 = vcmp.eq.f32.partialorder %v2975, 0.0
    %v3302 = vand.u32 %v2975, 2147483648
    %v3303 = vsel %vm3301, %v3302, %v3300
    %v3304 = vrsqrt.pop %v2978
    %v3305 = vmul.f32 %v2978, %v3304
    %vm3306 = vcmp.eq.f32.partialorder %v2978, inf
    %v3307 = vsel %vm3306, %v2978, %v3305
    %vm3308 = vcmp.eq.f32.partialorder %v2978, 0.0
    %v3309 = vand.u32 %v2978, 2147483648
    %v3310 = vsel %vm3308, %v3309, %v3307
    %v3311 = vrsqrt.pop %v2981
    %v3312 = vmul.f32 %v2981, %v3311
    %vm3313 = vcmp.eq.f32.partialorder %v2981, inf
    %v3314 = vsel %vm3313, %v2981, %v3312
    %vm3315 = vcmp.eq.f32.partialorder %v2981, 0.0
    %v3316 = vand.u32 %v2981, 2147483648
    %v3317 = vsel %vm3315, %v3316, %v3314
    %v3318 = vrsqrt.pop %v2984
    %v3319 = vmul.f32 %v2984, %v3318
    %vm3320 = vcmp.eq.f32.partialorder %v2984, inf
    %v3321 = vsel %vm3320, %v2984, %v3319
    %vm3322 = vcmp.eq.f32.partialorder %v2984, 0.0
    %v3323 = vand.u32 %v2984, 2147483648
    %v3324 = vsel %vm3322, %v3323, %v3321
    %v3325 = vrsqrt.pop %v2987
    %v3326 = vmul.f32 %v2987, %v3325
    %vm3327 = vcmp.eq.f32.partialorder %v2987, inf
    %v3328 = vsel %vm3327, %v2987, %v3326
    %vm3329 = vcmp.eq.f32.partialorder %v2987, 0.0
    %v3330 = vand.u32 %v2987, 2147483648
    %v3331 = vsel %vm3329, %v3330, %v3328
    %v3332 = vrsqrt.pop %v2990
    %v3333 = vmul.f32 %v2990, %v3332
    %vm3334 = vcmp.eq.f32.partialorder %v2990, inf
    %v3335 = vsel %vm3334, %v2990, %v3333
    %vm3336 = vcmp.eq.f32.partialorder %v2990, 0.0
    %v3337 = vand.u32 %v2990, 2147483648
    %v3338 = vsel %vm3336, %v3337, %v3335
    %v3339 = vrsqrt.pop %v2993
    %v3340 = vmul.f32 %v2993, %v3339
    %vm3341 = vcmp.eq.f32.partialorder %v2993, inf
    %v3342 = vsel %vm3341, %v2993, %v3340
    %vm3343 = vcmp.eq.f32.partialorder %v2993, 0.0
    %v3344 = vand.u32 %v2993, 2147483648
    %v3345 = vsel %vm3343, %v3344, %v3342
    %v3346 = vrsqrt.pop %v2996
    %v3347 = vmul.f32 %v2996, %v3346
    %vm3348 = vcmp.eq.f32.partialorder %v2996, inf
    %v3349 = vsel %vm3348, %v2996, %v3347
    %vm3350 = vcmp.eq.f32.partialorder %v2996, 0.0
    %v3351 = vand.u32 %v2996, 2147483648
    %v3352 = vsel %vm3350, %v3351, %v3349
    %v3353 = vrsqrt.pop %v2999
    %v3354 = vmul.f32 %v2999, %v3353
    %vm3355 = vcmp.eq.f32.partialorder %v2999, inf
    %v3356 = vsel %vm3355, %v2999, %v3354
    %vm3357 = vcmp.eq.f32.partialorder %v2999, 0.0
    %v3358 = vand.u32 %v2999, 2147483648
    %v3359 = vsel %vm3357, %v3358, %v3356
    %v3360 = vrsqrt.pop %v3002
    %v3361 = vmul.f32 %v3002, %v3360
    %vm3362 = vcmp.eq.f32.partialorder %v3002, inf
    %v3363 = vsel %vm3362, %v3002, %v3361
    %vm3364 = vcmp.eq.f32.partialorder %v3002, 0.0
    %v3365 = vand.u32 %v3002, 2147483648
    %v3366 = vsel %vm3364, %v3365, %v3363
    %v3367 = vrsqrt.pop %v3005
    %v3368 = vmul.f32 %v3005, %v3367
    %vm3369 = vcmp.eq.f32.partialorder %v3005, inf
    %v3370 = vsel %vm3369, %v3005, %v3368
    %vm3371 = vcmp.eq.f32.partialorder %v3005, 0.0
    %v3372 = vand.u32 %v3005, 2147483648
    %v3373 = vsel %vm3371, %v3372, %v3370
    %v3374 = vrsqrt.pop %v3008
    %v3375 = vmul.f32 %v3008, %v3374
    %vm3376 = vcmp.eq.f32.partialorder %v3008, inf
    %v3377 = vsel %vm3376, %v3008, %v3375
    %vm3378 = vcmp.eq.f32.partialorder %v3008, 0.0
    %v3379 = vand.u32 %v3008, 2147483648
    %v3380 = vsel %vm3378, %v3379, %v3377
    %v3381 = vrsqrt.pop %v3011
    %v3382 = vmul.f32 %v3011, %v3381
    %vm3383 = vcmp.eq.f32.partialorder %v3011, inf
    %v3384 = vsel %vm3383, %v3011, %v3382
    %vm3385 = vcmp.eq.f32.partialorder %v3011, 0.0
    %v3386 = vand.u32 %v3011, 2147483648
    %v3387 = vsel %vm3385, %v3386, %v3384
    %v3388 = vrsqrt.pop %v3014
    %v3389 = vmul.f32 %v3014, %v3388
    %vm3390 = vcmp.eq.f32.partialorder %v3014, inf
    %v3391 = vsel %vm3390, %v3014, %v3389
    %vm3392 = vcmp.eq.f32.partialorder %v3014, 0.0
    %v3393 = vand.u32 %v3014, 2147483648
    %v3394 = vsel %vm3392, %v3393, %v3391
    %v3395 = vrsqrt.pop %v3017
    %v3396 = vmul.f32 %v3017, %v3395
    %vm3397 = vcmp.eq.f32.partialorder %v3017, inf
    %v3398 = vsel %vm3397, %v3017, %v3396
    %vm3399 = vcmp.eq.f32.partialorder %v3017, 0.0
    %v3400 = vand.u32 %v3017, 2147483648
    %v3401 = vsel %vm3399, %v3400, %v3398
    %v3402 = vrsqrt.pop %v3020
    %v3403 = vmul.f32 %v3020, %v3402
    %vm3404 = vcmp.eq.f32.partialorder %v3020, inf
    %v3405 = vsel %vm3404, %v3020, %v3403
    %vm3406 = vcmp.eq.f32.partialorder %v3020, 0.0
    %v3407 = vand.u32 %v3020, 2147483648
    %v3408 = vsel %vm3406, %v3407, %v3405
    %v3409 = vrsqrt.pop %v3023
    %v3410 = vmul.f32 %v3023, %v3409
    %vm3411 = vcmp.eq.f32.partialorder %v3023, inf
    %v3412 = vsel %vm3411, %v3023, %v3410
    %vm3413 = vcmp.eq.f32.partialorder %v3023, 0.0
    %v3414 = vand.u32 %v3023, 2147483648
    %v3415 = vsel %vm3413, %v3414, %v3412
    %v3416 = vrsqrt.pop %v3026
    %v3417 = vmul.f32 %v3026, %v3416
    %vm3418 = vcmp.eq.f32.partialorder %v3026, inf
    %v3419 = vsel %vm3418, %v3026, %v3417
    %vm3420 = vcmp.eq.f32.partialorder %v3026, 0.0
    %v3421 = vand.u32 %v3026, 2147483648
    %v3422 = vsel %vm3420, %v3421, %v3419
    %v3423 = vrsqrt.pop %v3029
    %v3424 = vmul.f32 %v3029, %v3423
    %vm3425 = vcmp.eq.f32.partialorder %v3029, inf
    %v3426 = vsel %vm3425, %v3029, %v3424
    %vm3427 = vcmp.eq.f32.partialorder %v3029, 0.0
    %v3428 = vand.u32 %v3029, 2147483648
    %v3429 = vsel %vm3427, %v3428, %v3426
    %v3430 = vrsqrt.pop %v3032
    %v3431 = vmul.f32 %v3032, %v3430
    %vm3432 = vcmp.eq.f32.partialorder %v3032, inf
    %v3433 = vsel %vm3432, %v3032, %v3431
    %vm3434 = vcmp.eq.f32.partialorder %v3032, 0.0
    %v3435 = vand.u32 %v3032, 2147483648
    %v3436 = vsel %vm3434, %v3435, %v3433
    %v3437 = vrsqrt.pop %v3035
    %v3438 = vmul.f32 %v3035, %v3437
    %vm3439 = vcmp.eq.f32.partialorder %v3035, inf
    %v3440 = vsel %vm3439, %v3035, %v3438
    %vm3441 = vcmp.eq.f32.partialorder %v3035, 0.0
    %v3442 = vand.u32 %v3035, 2147483648
    %v3443 = vsel %vm3441, %v3442, %v3440
    %v3444 = vrsqrt.pop %v3038
    %v3445 = vmul.f32 %v3038, %v3444
    %vm3446 = vcmp.eq.f32.partialorder %v3038, inf
    %v3447 = vsel %vm3446, %v3038, %v3445
    %vm3448 = vcmp.eq.f32.partialorder %v3038, 0.0
    %v3449 = vand.u32 %v3038, 2147483648
    %v3450 = vsel %vm3448, %v3449, %v3447
    %v3451 = vrsqrt.pop %v3041
    %v3452 = vmul.f32 %v3041, %v3451
    %vm3453 = vcmp.eq.f32.partialorder %v3041, inf
    %v3454 = vsel %vm3453, %v3041, %v3452
    %vm3455 = vcmp.eq.f32.partialorder %v3041, 0.0
    %v3456 = vand.u32 %v3041, 2147483648
    %v3457 = vsel %vm3455, %v3456, %v3454
    %v3458 = vrsqrt.pop %v3044
    %v3459 = vmul.f32 %v3044, %v3458
    %vm3460 = vcmp.eq.f32.partialorder %v3044, inf
    %v3461 = vsel %vm3460, %v3044, %v3459
    %vm3462 = vcmp.eq.f32.partialorder %v3044, 0.0
    %v3463 = vand.u32 %v3044, 2147483648
    %v3464 = vsel %vm3462, %v3463, %v3461
    %v3465 = vrsqrt.pop %v3047
    %v3466 = vmul.f32 %v3047, %v3465
    %vm3467 = vcmp.eq.f32.partialorder %v3047, inf
    %v3468 = vsel %vm3467, %v3047, %v3466
    %vm3469 = vcmp.eq.f32.partialorder %v3047, 0.0
    %v3470 = vand.u32 %v3047, 2147483648
    %v3471 = vsel %vm3469, %v3470, %v3468
    %v3472 = vrsqrt.pop %v3050
    %v3473 = vmul.f32 %v3050, %v3472
    %vm3474 = vcmp.eq.f32.partialorder %v3050, inf
    %v3475 = vsel %vm3474, %v3050, %v3473
    %vm3476 = vcmp.eq.f32.partialorder %v3050, 0.0
    %v3477 = vand.u32 %v3050, 2147483648
    %v3478 = vsel %vm3476, %v3477, %v3475
    %v3479 = vrsqrt.pop %v3053
    %v3480 = vmul.f32 %v3053, %v3479
    %vm3481 = vcmp.eq.f32.partialorder %v3053, inf
    %v3482 = vsel %vm3481, %v3053, %v3480
    %vm3483 = vcmp.eq.f32.partialorder %v3053, 0.0
    %v3484 = vand.u32 %v3053, 2147483648
    %v3485 = vsel %vm3483, %v3484, %v3482
    %v3486 = vrsqrt.pop %v3056
    %v3487 = vmul.f32 %v3056, %v3486
    %vm3488 = vcmp.eq.f32.partialorder %v3056, inf
    %v3489 = vsel %vm3488, %v3056, %v3487
    %vm3490 = vcmp.eq.f32.partialorder %v3056, 0.0
    %v3491 = vand.u32 %v3056, 2147483648
    %v3492 = vsel %vm3490, %v3491, %v3489
    %v3493 = vrsqrt.pop %v3059
    %v3494 = vmul.f32 %v3059, %v3493
    %vm3495 = vcmp.eq.f32.partialorder %v3059, inf
    %v3496 = vsel %vm3495, %v3059, %v3494
    %vm3497 = vcmp.eq.f32.partialorder %v3059, 0.0
    %v3498 = vand.u32 %v3059, 2147483648
    %v3499 = vsel %vm3497, %v3498, %v3496
    %v3500 = vrsqrt.pop %v3062
    %v3501 = vmul.f32 %v3062, %v3500
    %vm3502 = vcmp.eq.f32.partialorder %v3062, inf
    %v3503 = vsel %vm3502, %v3062, %v3501
    %vm3504 = vcmp.eq.f32.partialorder %v3062, 0.0
    %v3505 = vand.u32 %v3062, 2147483648
    %v3506 = vsel %vm3504, %v3505, %v3503
    %v3507 = vrsqrt.pop %v3065
    %v3508 = vmul.f32 %v3065, %v3507
    %vm3509 = vcmp.eq.f32.partialorder %v3065, inf
    %v3510 = vsel %vm3509, %v3065, %v3508
    %vm3511 = vcmp.eq.f32.partialorder %v3065, 0.0
    %v3512 = vand.u32 %v3065, 2147483648
    %v3513 = vsel %vm3511, %v3512, %v3510
    %v3514 = vmax.f32 %v3072, 1e-12
    %v3515 = vmax.f32 %v3079, 1e-12
    %v3516 = vmax.f32 %v3086, 1e-12
    %v3517 = vmax.f32 %v3093, 1e-12
    %v3518 = vmax.f32 %v3100, 1e-12
    %v3519 = vmax.f32 %v3107, 1e-12
    %v3520 = vmax.f32 %v3114, 1e-12
    %v3521 = vmax.f32 %v3121, 1e-12
    %v3522 = vmax.f32 %v3128, 1e-12
    %v3523 = vmax.f32 %v3135, 1e-12
    %v3524 = vmax.f32 %v3142, 1e-12
    %v3525 = vmax.f32 %v3149, 1e-12
    %v3526 = vmax.f32 %v3156, 1e-12
    %v3527 = vmax.f32 %v3163, 1e-12
    %v3528 = vmax.f32 %v3170, 1e-12
    %v3529 = vmax.f32 %v3177, 1e-12
    %v3530 = vmax.f32 %v3184, 1e-12
    %v3531 = vmax.f32 %v3191, 1e-12
    %v3532 = vmax.f32 %v3198, 1e-12
    %v3533 = vmax.f32 %v3205, 1e-12
    %v3534 = vmax.f32 %v3212, 1e-12
    %v3535 = vmax.f32 %v3219, 1e-12
    %v3536 = vmax.f32 %v3226, 1e-12
    %v3537 = vmax.f32 %v3233, 1e-12
    %v3538 = vmax.f32 %v3240, 1e-12
    %v3539 = vmax.f32 %v3247, 1e-12
    %v3540 = vmax.f32 %v3254, 1e-12
    %v3541 = vmax.f32 %v3261, 1e-12
    %v3542 = vmax.f32 %v3268, 1e-12
    %v3543 = vmax.f32 %v3275, 1e-12
    %v3544 = vmax.f32 %v3282, 1e-12
    %v3545 = vmax.f32 %v3289, 1e-12
    %v3546 = vmax.f32 %v3296, 1e-12
    %v3547 = vmax.f32 %v3303, 1e-12
    %v3548 = vmax.f32 %v3310, 1e-12
    %v3549 = vmax.f32 %v3317, 1e-12
    %v3550 = vmax.f32 %v3324, 1e-12
    %v3551 = vmax.f32 %v3331, 1e-12
    %v3552 = vmax.f32 %v3338, 1e-12
    %v3553 = vmax.f32 %v3345, 1e-12
    %v3554 = vmax.f32 %v3352, 1e-12
    %v3555 = vmax.f32 %v3359, 1e-12
    %v3556 = vmax.f32 %v3366, 1e-12
    %v3557 = vmax.f32 %v3373, 1e-12
    %v3558 = vmax.f32 %v3380, 1e-12
    %v3559 = vmax.f32 %v3387, 1e-12
    %v3560 = vmax.f32 %v3394, 1e-12
    %v3561 = vmax.f32 %v3401, 1e-12
    %v3562 = vmax.f32 %v3408, 1e-12
    %v3563 = vmax.f32 %v3415, 1e-12
    %v3564 = vmax.f32 %v3422, 1e-12
    %v3565 = vmax.f32 %v3429, 1e-12
    %v3566 = vmax.f32 %v3436, 1e-12
    %v3567 = vmax.f32 %v3443, 1e-12
    %v3568 = vmax.f32 %v3450, 1e-12
    %v3569 = vmax.f32 %v3457, 1e-12
    %v3570 = vmax.f32 %v3464, 1e-12
    %v3571 = vmax.f32 %v3471, 1e-12
    %v3572 = vmax.f32 %v3478, 1e-12
    %v3573 = vmax.f32 %v3485, 1e-12
    %v3574 = vmax.f32 %v3492, 1e-12
    %v3575 = vmax.f32 %v3499, 1e-12
    %v3576 = vmax.f32 %v3506, 1e-12
    %v3577 = vmax.f32 %v3513, 1e-12
    %v3578 = vrcp.pop %v3514
    %v3579 = vmul.f32 %v2745, %v3578
    %v3580 = vrcp.pop %v3515
    %v3581 = vmul.f32 %v2746, %v3580
    %v3582 = vrcp.pop %v3516
    %v3583 = vmul.f32 %v2747, %v3582
    %v3584 = vrcp.pop %v3517
    %v3585 = vmul.f32 %v2748, %v3584
    %v3586 = vrcp.pop %v3518
    %v3587 = vmul.f32 %v2749, %v3586
    %v3588 = vrcp.pop %v3519
    %v3589 = vmul.f32 %v2750, %v3588
    %v3590 = vrcp.pop %v3520
    %v3591 = vmul.f32 %v2751, %v3590
    %v3592 = vrcp.pop %v3521
    %v3593 = vmul.f32 %v2752, %v3592
    %v3594 = vrcp.pop %v3522
    %v3595 = vmul.f32 %v2753, %v3594
    %v3596 = vrcp.pop %v3523
    %v3597 = vmul.f32 %v2754, %v3596
    %v3598 = vrcp.pop %v3524
    %v3599 = vmul.f32 %v2755, %v3598
    %v3600 = vrcp.pop %v3525
    %v3601 = vmul.f32 %v2756, %v3600
    %v3602 = vrcp.pop %v3526
    %v3603 = vmul.f32 %v2757, %v3602
    %v3604 = vrcp.pop %v3527
    %v3605 = vmul.f32 %v2758, %v3604
    %v3606 = vrcp.pop %v3528
    %v3607 = vmul.f32 %v2759, %v3606
    %v3608 = vrcp.pop %v3529
    %v3609 = vmul.f32 %v2760, %v3608
    %v3610 = vrcp.pop %v3530
    %v3611 = vmul.f32 %v2761, %v3610
    %v3612 = vrcp.pop %v3531
    %v3613 = vmul.f32 %v2762, %v3612
    %v3614 = vrcp.pop %v3532
    %v3615 = vmul.f32 %v2763, %v3614
    %v3616 = vrcp.pop %v3533
    %v3617 = vmul.f32 %v2764, %v3616
    %v3618 = vrcp.pop %v3534
    %v3619 = vmul.f32 %v2765, %v3618
    %v3620 = vrcp.pop %v3535
    %v3621 = vmul.f32 %v2766, %v3620
    %v3622 = vrcp.pop %v3536
    %v3623 = vmul.f32 %v2767, %v3622
    %v3624 = vrcp.pop %v3537
    %v3625 = vmul.f32 %v2768, %v3624
    %v3626 = vrcp.pop %v3538
    %v3627 = vmul.f32 %v2769, %v3626
    %v3628 = vrcp.pop %v3539
    %v3629 = vmul.f32 %v2770, %v3628
    %v3630 = vrcp.pop %v3540
    %v3631 = vmul.f32 %v2771, %v3630
    %v3632 = vrcp.pop %v3541
    %v3633 = vmul.f32 %v2772, %v3632
    %v3634 = vrcp.pop %v3542
    %v3635 = vmul.f32 %v2773, %v3634
    %v3636 = vrcp.pop %v3543
    %v3637 = vmul.f32 %v2774, %v3636
    %v3638 = vrcp.pop %v3544
    %v3639 = vmul.f32 %v2775, %v3638
    %v3640 = vrcp.pop %v3545
    %v3641 = vmul.f32 %v2776, %v3640
    %v3642 = vrcp.pop %v3546
    %v3643 = vmul.f32 %v2777, %v3642
    %v3644 = vrcp.pop %v3547
    %v3645 = vmul.f32 %v2778, %v3644
    %v3646 = vrcp.pop %v3548
    %v3647 = vmul.f32 %v2779, %v3646
    %v3648 = vrcp.pop %v3549
    %v3649 = vmul.f32 %v2780, %v3648
    %v3650 = vrcp.pop %v3550
    %v3651 = vmul.f32 %v2781, %v3650
    %v3652 = vrcp.pop %v3551
    %v3653 = vmul.f32 %v2782, %v3652
    %v3654 = vrcp.pop %v3552
    %v3655 = vmul.f32 %v2783, %v3654
    %v3656 = vrcp.pop %v3553
    %v3657 = vmul.f32 %v2784, %v3656
    %v3658 = vrcp.pop %v3554
    %v3659 = vmul.f32 %v2785, %v3658
    %v3660 = vrcp.pop %v3555
    %v3661 = vmul.f32 %v2786, %v3660
    %v3662 = vrcp.pop %v3556
    %v3663 = vmul.f32 %v2787, %v3662
    %v3664 = vrcp.pop %v3557
    %v3665 = vmul.f32 %v2788, %v3664
    %v3666 = vrcp.pop %v3558
    %v3667 = vmul.f32 %v2789, %v3666
    %v3668 = vrcp.pop %v3559
    %v3669 = vmul.f32 %v2790, %v3668
    %v3670 = vrcp.pop %v3560
    %v3671 = vmul.f32 %v2791, %v3670
    %v3672 = vrcp.pop %v3561
    %v3673 = vmul.f32 %v2792, %v3672
    %v3674 = vrcp.pop %v3562
    %v3675 = vmul.f32 %v2793, %v3674
    %v3676 = vrcp.pop %v3563
    %v3677 = vmul.f32 %v2794, %v3676
    %v3678 = vrcp.pop %v3564
    %v3679 = vmul.f32 %v2795, %v3678
    %v3680 = vrcp.pop %v3565
    %v3681 = vmul.f32 %v2796, %v3680
    %v3682 = vrcp.pop %v3566
    %v3683 = vmul.f32 %v2797, %v3682
    %v3684 = vrcp.pop %v3567
    %v3685 = vmul.f32 %v2798, %v3684
    %v3686 = vrcp.pop %v3568
    %v3687 = vmul.f32 %v2799, %v3686
    %v3688 = vrcp.pop %v3569
    %v3689 = vmul.f32 %v2800, %v3688
    %v3690 = vrcp.pop %v3570
    %v3691 = vmul.f32 %v2801, %v3690
    %v3692 = vrcp.pop %v3571
    %v3693 = vmul.f32 %v2802, %v3692
    %v3694 = vrcp.pop %v3572
    %v3695 = vmul.f32 %v2803, %v3694
    %v3696 = vrcp.pop %v3573
    %v3697 = vmul.f32 %v2804, %v3696
    %v3698 = vrcp.pop %v3574
    %v3699 = vmul.f32 %v2805, %v3698
    %v3700 = vrcp.pop %v3575
    %v3701 = vmul.f32 %v2806, %v3700
    %v3702 = vrcp.pop %v3576
    %v3703 = vmul.f32 %v2807, %v3702
    %v3704 = vrcp.pop %v3577
    %v3705 = vmul.f32 %v2808, %v3704
    %3707 = vset.pattern.permute.xlu0 0
    %3708 = vperm.xlu0 %3707, %v2745
    %v3709 = vpop.permute.xlu0 %3708
    %3712 = vset.pattern.permute.xlu0 0
    %3713 = vperm.xlu0 %3712, %v2746
    %v3714 = vpop.permute.xlu0 %3713
    %3717 = vset.pattern.permute.xlu0 0
    %3718 = vperm.xlu0 %3717, %v2747
    %v3719 = vpop.permute.xlu0 %3718
    %3722 = vset.pattern.permute.xlu0 0
    %3723 = vperm.xlu0 %3722, %v2748
    %v3724 = vpop.permute.xlu0 %3723
    %3727 = vset.pattern.permute.xlu0 0
    %3728 = vperm.xlu0 %3727, %v2749
    %v3729 = vpop.permute.xlu0 %3728
    %3732 = vset.pattern.permute.xlu0 0
    %3733 = vperm.xlu0 %3732, %v2750
    %v3734 = vpop.permute.xlu0 %3733
    %3737 = vset.pattern.permute.xlu0 0
    %3738 = vperm.xlu0 %3737, %v2751
    %v3739 = vpop.permute.xlu0 %3738
    %3742 = vset.pattern.permute.xlu0 0
    %3743 = vperm.xlu0 %3742, %v2752
    %v3744 = vpop.permute.xlu0 %3743
    %3747 = vset.pattern.permute.xlu0 0
    %3748 = vperm.xlu0 %3747, %v2753
    %v3749 = vpop.permute.xlu0 %3748
    %3752 = vset.pattern.permute.xlu0 0
    %3753 = vperm.xlu0 %3752, %v2754
    %v3754 = vpop.permute.xlu0 %3753
    %3757 = vset.pattern.permute.xlu0 0
    %3758 = vperm.xlu0 %3757, %v2755
    %v3759 = vpop.permute.xlu0 %3758
    %3762 = vset.pattern.permute.xlu0 0
    %3763 = vperm.xlu0 %3762, %v2756
    %v3764 = vpop.permute.xlu0 %3763
    %3767 = vset.pattern.permute.xlu0 0
    %3768 = vperm.xlu0 %3767, %v2757
    %v3769 = vpop.permute.xlu0 %3768
    %3772 = vset.pattern.permute.xlu0 0
    %3773 = vperm.xlu0 %3772, %v2758
    %v3774 = vpop.permute.xlu0 %3773
    %3777 = vset.pattern.permute.xlu0 0
    %3778 = vperm.xlu0 %3777, %v2759
    %v3779 = vpop.permute.xlu0 %3778
    %3782 = vset.pattern.permute.xlu0 0
    %3783 = vperm.xlu0 %3782, %v2760
    %v3784 = vpop.permute.xlu0 %3783
    %3787 = vset.pattern.permute.xlu0 0
    %3788 = vperm.xlu0 %3787, %v2761
    %v3789 = vpop.permute.xlu0 %3788
    %3792 = vset.pattern.permute.xlu0 0
    %3793 = vperm.xlu0 %3792, %v2762
    %v3794 = vpop.permute.xlu0 %3793
    %3797 = vset.pattern.permute.xlu0 0
    %3798 = vperm.xlu0 %3797, %v2763
    %v3799 = vpop.permute.xlu0 %3798
    %3802 = vset.pattern.permute.xlu0 0
    %3803 = vperm.xlu0 %3802, %v2764
    %v3804 = vpop.permute.xlu0 %3803
    %3807 = vset.pattern.permute.xlu0 0
    %3808 = vperm.xlu0 %3807, %v2765
    %v3809 = vpop.permute.xlu0 %3808
    %3812 = vset.pattern.permute.xlu0 0
    %3813 = vperm.xlu0 %3812, %v2766
    %v3814 = vpop.permute.xlu0 %3813
    %3817 = vset.pattern.permute.xlu0 0
    %3818 = vperm.xlu0 %3817, %v2767
    %v3819 = vpop.permute.xlu0 %3818
    %3822 = vset.pattern.permute.xlu0 0
    %3823 = vperm.xlu0 %3822, %v2768
    %v3824 = vpop.permute.xlu0 %3823
    %3827 = vset.pattern.permute.xlu0 0
    %3828 = vperm.xlu0 %3827, %v2769
    %v3829 = vpop.permute.xlu0 %3828
    %3832 = vset.pattern.permute.xlu0 0
    %3833 = vperm.xlu0 %3832, %v2770
    %v3834 = vpop.permute.xlu0 %3833
    %3837 = vset.pattern.permute.xlu0 0
    %3838 = vperm.xlu0 %3837, %v2771
    %v3839 = vpop.permute.xlu0 %3838
    %3842 = vset.pattern.permute.xlu0 0
    %3843 = vperm.xlu0 %3842, %v2772
    %v3844 = vpop.permute.xlu0 %3843
    %3847 = vset.pattern.permute.xlu0 0
    %3848 = vperm.xlu0 %3847, %v2773
    %v3849 = vpop.permute.xlu0 %3848
    %3852 = vset.pattern.permute.xlu0 0
    %3853 = vperm.xlu0 %3852, %v2774
    %v3854 = vpop.permute.xlu0 %3853
    %3857 = vset.pattern.permute.xlu0 0
    %3858 = vperm.xlu0 %3857, %v2775
    %v3859 = vpop.permute.xlu0 %3858
    %3862 = vset.pattern.permute.xlu0 0
    %3863 = vperm.xlu0 %3862, %v2776
    %v3864 = vpop.permute.xlu0 %3863
    %3867 = vset.pattern.permute.xlu0 0
    %3868 = vperm.xlu0 %3867, %v2777
    %v3869 = vpop.permute.xlu0 %3868
    %3872 = vset.pattern.permute.xlu0 0
    %3873 = vperm.xlu0 %3872, %v2778
    %v3874 = vpop.permute.xlu0 %3873
    %3877 = vset.pattern.permute.xlu0 0
    %3878 = vperm.xlu0 %3877, %v2779
    %v3879 = vpop.permute.xlu0 %3878
    %3882 = vset.pattern.permute.xlu0 0
    %3883 = vperm.xlu0 %3882, %v2780
    %v3884 = vpop.permute.xlu0 %3883
    %3887 = vset.pattern.permute.xlu0 0
    %3888 = vperm.xlu0 %3887, %v2781
    %v3889 = vpop.permute.xlu0 %3888
    %3892 = vset.pattern.permute.xlu0 0
    %3893 = vperm.xlu0 %3892, %v2782
    %v3894 = vpop.permute.xlu0 %3893
    %3897 = vset.pattern.permute.xlu0 0
    %3898 = vperm.xlu0 %3897, %v2783
    %v3899 = vpop.permute.xlu0 %3898
    %3902 = vset.pattern.permute.xlu0 0
    %3903 = vperm.xlu0 %3902, %v2784
    %v3904 = vpop.permute.xlu0 %3903
    %3907 = vset.pattern.permute.xlu0 0
    %3908 = vperm.xlu0 %3907, %v2785
    %v3909 = vpop.permute.xlu0 %3908
    %3912 = vset.pattern.permute.xlu0 0
    %3913 = vperm.xlu0 %3912, %v2786
    %v3914 = vpop.permute.xlu0 %3913
    %3917 = vset.pattern.permute.xlu0 0
    %3918 = vperm.xlu0 %3917, %v2787
    %v3919 = vpop.permute.xlu0 %3918
    %3922 = vset.pattern.permute.xlu0 0
    %3923 = vperm.xlu0 %3922, %v2788
    %v3924 = vpop.permute.xlu0 %3923
    %3927 = vset.pattern.permute.xlu0 0
    %3928 = vperm.xlu0 %3927, %v2789
    %v3929 = vpop.permute.xlu0 %3928
    %3932 = vset.pattern.permute.xlu0 0
    %3933 = vperm.xlu0 %3932, %v2790
    %v3934 = vpop.permute.xlu0 %3933
    %3937 = vset.pattern.permute.xlu0 0
    %3938 = vperm.xlu0 %3937, %v2791
    %v3939 = vpop.permute.xlu0 %3938
    %3942 = vset.pattern.permute.xlu0 0
    %3943 = vperm.xlu0 %3942, %v2792
    %v3944 = vpop.permute.xlu0 %3943
    %3947 = vset.pattern.permute.xlu0 0
    %3948 = vperm.xlu0 %3947, %v2793
    %v3949 = vpop.permute.xlu0 %3948
    %3952 = vset.pattern.permute.xlu0 0
    %3953 = vperm.xlu0 %3952, %v2794
    %v3954 = vpop.permute.xlu0 %3953
    %3957 = vset.pattern.permute.xlu0 0
    %3958 = vperm.xlu0 %3957, %v2795
    %v3959 = vpop.permute.xlu0 %3958
    %3962 = vset.pattern.permute.xlu0 0
    %3963 = vperm.xlu0 %3962, %v2796
    %v3964 = vpop.permute.xlu0 %3963
    %3967 = vset.pattern.permute.xlu0 0
    %3968 = vperm.xlu0 %3967, %v2797
    %v3969 = vpop.permute.xlu0 %3968
    %3972 = vset.pattern.permute.xlu0 0
    %3973 = vperm.xlu0 %3972, %v2798
    %v3974 = vpop.permute.xlu0 %3973
    %3977 = vset.pattern.permute.xlu0 0
    %3978 = vperm.xlu0 %3977, %v2799
    %v3979 = vpop.permute.xlu0 %3978
    %3982 = vset.pattern.permute.xlu0 0
    %3983 = vperm.xlu0 %3982, %v2800
    %v3984 = vpop.permute.xlu0 %3983
    %3987 = vset.pattern.permute.xlu0 0
    %3988 = vperm.xlu0 %3987, %v2801
    %v3989 = vpop.permute.xlu0 %3988
    %3992 = vset.pattern.permute.xlu0 0
    %3993 = vperm.xlu0 %3992, %v2802
    %v3994 = vpop.permute.xlu0 %3993
    %3997 = vset.pattern.permute.xlu0 0
    %3998 = vperm.xlu0 %3997, %v2803
    %v3999 = vpop.permute.xlu0 %3998
    %4002 = vset.pattern.permute.xlu0 0
    %4003 = vperm.xlu0 %4002, %v2804
    %v4004 = vpop.permute.xlu0 %4003
    %4007 = vset.pattern.permute.xlu0 0
    %4008 = vperm.xlu0 %4007, %v2805
    %v4009 = vpop.permute.xlu0 %4008
    %4012 = vset.pattern.permute.xlu0 0
    %4013 = vperm.xlu0 %4012, %v2806
    %v4014 = vpop.permute.xlu0 %4013
    %4017 = vset.pattern.permute.xlu0 0
    %4018 = vperm.xlu0 %4017, %v2807
    %v4019 = vpop.permute.xlu0 %4018
    %4022 = vset.pattern.permute.xlu0 0
    %4023 = vperm.xlu0 %4022, %v2808
    %v4024 = vpop.permute.xlu0 %4023
    %v4026 = vmul.f32 %v2745, %v3709
    %v4027 = vmul.f32 %v2746, %v3714
    %v4028 = vmul.f32 %v2747, %v3719
    %v4029 = vmul.f32 %v2748, %v3724
    %v4030 = vmul.f32 %v2749, %v3729
    %v4031 = vmul.f32 %v2750, %v3734
    %v4032 = vmul.f32 %v2751, %v3739
    %v4033 = vmul.f32 %v2752, %v3744
    %v4034 = vmul.f32 %v2753, %v3749
    %v4035 = vmul.f32 %v2754, %v3754
    %v4036 = vmul.f32 %v2755, %v3759
    %v4037 = vmul.f32 %v2756, %v3764
    %v4038 = vmul.f32 %v2757, %v3769
    %v4039 = vmul.f32 %v2758, %v3774
    %v4040 = vmul.f32 %v2759, %v3779
    %v4041 = vmul.f32 %v2760, %v3784
    %v4042 = vmul.f32 %v2761, %v3789
    %v4043 = vmul.f32 %v2762, %v3794
    %v4044 = vmul.f32 %v2763, %v3799
    %v4045 = vmul.f32 %v2764, %v3804
    %v4046 = vmul.f32 %v2765, %v3809
    %v4047 = vmul.f32 %v2766, %v3814
    %v4048 = vmul.f32 %v2767, %v3819
    %v4049 = vmul.f32 %v2768, %v3824
    %v4050 = vmul.f32 %v2769, %v3829
    %v4051 = vmul.f32 %v2770, %v3834
    %v4052 = vmul.f32 %v2771, %v3839
    %v4053 = vmul.f32 %v2772, %v3844
    %v4054 = vmul.f32 %v2773, %v3849
    %v4055 = vmul.f32 %v2774, %v3854
    %v4056 = vmul.f32 %v2775, %v3859
    %v4057 = vmul.f32 %v2776, %v3864
    %v4058 = vmul.f32 %v2777, %v3869
    %v4059 = vmul.f32 %v2778, %v3874
    %v4060 = vmul.f32 %v2779, %v3879
    %v4061 = vmul.f32 %v2780, %v3884
    %v4062 = vmul.f32 %v2781, %v3889
    %v4063 = vmul.f32 %v2782, %v3894
    %v4064 = vmul.f32 %v2783, %v3899
    %v4065 = vmul.f32 %v2784, %v3904
    %v4066 = vmul.f32 %v2785, %v3909
    %v4067 = vmul.f32 %v2786, %v3914
    %v4068 = vmul.f32 %v2787, %v3919
    %v4069 = vmul.f32 %v2788, %v3924
    %v4070 = vmul.f32 %v2789, %v3929
    %v4071 = vmul.f32 %v2790, %v3934
    %v4072 = vmul.f32 %v2791, %v3939
    %v4073 = vmul.f32 %v2792, %v3944
    %v4074 = vmul.f32 %v2793, %v3949
    %v4075 = vmul.f32 %v2794, %v3954
    %v4076 = vmul.f32 %v2795, %v3959
    %v4077 = vmul.f32 %v2796, %v3964
    %v4078 = vmul.f32 %v2797, %v3969
    %v4079 = vmul.f32 %v2798, %v3974
    %v4080 = vmul.f32 %v2799, %v3979
    %v4081 = vmul.f32 %v2800, %v3984
    %v4082 = vmul.f32 %v2801, %v3989
    %v4083 = vmul.f32 %v2802, %v3994
    %v4084 = vmul.f32 %v2803, %v3999
    %v4085 = vmul.f32 %v2804, %v4004
    %v4086 = vmul.f32 %v2805, %v4009
    %v4087 = vmul.f32 %v2806, %v4014
    %v4088 = vmul.f32 %v2807, %v4019
    %v4089 = vmul.f32 %v2808, %v4024
    %4090 = vset.pattern.permute.xlu0 1
    %4091 = vperm.xlu0 %4090, %v2745
    %v4092 = vpop.permute.xlu0 %4091
    %4094 = vset.pattern.permute.xlu0 1
    %4095 = vperm.xlu0 %4094, %v2746
    %v4096 = vpop.permute.xlu0 %4095
    %4098 = vset.pattern.permute.xlu0 1
    %4099 = vperm.xlu0 %4098, %v2747
    %v4100 = vpop.permute.xlu0 %4099
    %4102 = vset.pattern.permute.xlu0 1
    %4103 = vperm.xlu0 %4102, %v2748
    %v4104 = vpop.permute.xlu0 %4103
    %4106 = vset.pattern.permute.xlu0 1
    %4107 = vperm.xlu0 %4106, %v2749
    %v4108 = vpop.permute.xlu0 %4107
    %4110 = vset.pattern.permute.xlu0 1
    %4111 = vperm.xlu0 %4110, %v2750
    %v4112 = vpop.permute.xlu0 %4111
    %4114 = vset.pattern.permute.xlu0 1
    %4115 = vperm.xlu0 %4114, %v2751
    %v4116 = vpop.permute.xlu0 %4115
    %4118 = vset.pattern.permute.xlu0 1
    %4119 = vperm.xlu0 %4118, %v2752
    %v4120 = vpop.permute.xlu0 %4119
    %4122 = vset.pattern.permute.xlu0 1
    %4123 = vperm.xlu0 %4122, %v2753
    %v4124 = vpop.permute.xlu0 %4123
    %4126 = vset.pattern.permute.xlu0 1
    %4127 = vperm.xlu0 %4126, %v2754
    %v4128 = vpop.permute.xlu0 %4127
    %4130 = vset.pattern.permute.xlu0 1
    %4131 = vperm.xlu0 %4130, %v2755
    %v4132 = vpop.permute.xlu0 %4131
    %4134 = vset.pattern.permute.xlu0 1
    %4135 = vperm.xlu0 %4134, %v2756
    %v4136 = vpop.permute.xlu0 %4135
    %4138 = vset.pattern.permute.xlu0 1
    %4139 = vperm.xlu0 %4138, %v2757
    %v4140 = vpop.permute.xlu0 %4139
    %4142 = vset.pattern.permute.xlu0 1
    %4143 = vperm.xlu0 %4142, %v2758
    %v4144 = vpop.permute.xlu0 %4143
    %4146 = vset.pattern.permute.xlu0 1
    %4147 = vperm.xlu0 %4146, %v2759
    %v4148 = vpop.permute.xlu0 %4147
    %4150 = vset.pattern.permute.xlu0 1
    %4151 = vperm.xlu0 %4150, %v2760
    %v4152 = vpop.permute.xlu0 %4151
    %4154 = vset.pattern.permute.xlu0 1
    %4155 = vperm.xlu0 %4154, %v2761
    %v4156 = vpop.permute.xlu0 %4155
    %4158 = vset.pattern.permute.xlu0 1
    %4159 = vperm.xlu0 %4158, %v2762
    %v4160 = vpop.permute.xlu0 %4159
    %4162 = vset.pattern.permute.xlu0 1
    %4163 = vperm.xlu0 %4162, %v2763
    %v4164 = vpop.permute.xlu0 %4163
    %4166 = vset.pattern.permute.xlu0 1
    %4167 = vperm.xlu0 %4166, %v2764
    %v4168 = vpop.permute.xlu0 %4167
    %4170 = vset.pattern.permute.xlu0 1
    %4171 = vperm.xlu0 %4170, %v2765
    %v4172 = vpop.permute.xlu0 %4171
    %4174 = vset.pattern.permute.xlu0 1
    %4175 = vperm.xlu0 %4174, %v2766
    %v4176 = vpop.permute.xlu0 %4175
    %4178 = vset.pattern.permute.xlu0 1
    %4179 = vperm.xlu0 %4178, %v2767
    %v4180 = vpop.permute.xlu0 %4179
    %4182 = vset.pattern.permute.xlu0 1
    %4183 = vperm.xlu0 %4182, %v2768
    %v4184 = vpop.permute.xlu0 %4183
    %4186 = vset.pattern.permute.xlu0 1
    %4187 = vperm.xlu0 %4186, %v2769
    %v4188 = vpop.permute.xlu0 %4187
    %4190 = vset.pattern.permute.xlu0 1
    %4191 = vperm.xlu0 %4190, %v2770
    %v4192 = vpop.permute.xlu0 %4191
    %4194 = vset.pattern.permute.xlu0 1
    %4195 = vperm.xlu0 %4194, %v2771
    %v4196 = vpop.permute.xlu0 %4195
    %4198 = vset.pattern.permute.xlu0 1
    %4199 = vperm.xlu0 %4198, %v2772
    %v4200 = vpop.permute.xlu0 %4199
    %4202 = vset.pattern.permute.xlu0 1
    %4203 = vperm.xlu0 %4202, %v2773
    %v4204 = vpop.permute.xlu0 %4203
    %4206 = vset.pattern.permute.xlu0 1
    %4207 = vperm.xlu0 %4206, %v2774
    %v4208 = vpop.permute.xlu0 %4207
    %4210 = vset.pattern.permute.xlu0 1
    %4211 = vperm.xlu0 %4210, %v2775
    %v4212 = vpop.permute.xlu0 %4211
    %4214 = vset.pattern.permute.xlu0 1
    %4215 = vperm.xlu0 %4214, %v2776
    %v4216 = vpop.permute.xlu0 %4215
    %4218 = vset.pattern.permute.xlu0 1
    %4219 = vperm.xlu0 %4218, %v2777
    %v4220 = vpop.permute.xlu0 %4219
    %4222 = vset.pattern.permute.xlu0 1
    %4223 = vperm.xlu0 %4222, %v2778
    %v4224 = vpop.permute.xlu0 %4223
    %4226 = vset.pattern.permute.xlu0 1
    %4227 = vperm.xlu0 %4226, %v2779
    %v4228 = vpop.permute.xlu0 %4227
    %4230 = vset.pattern.permute.xlu0 1
    %4231 = vperm.xlu0 %4230, %v2780
    %v4232 = vpop.permute.xlu0 %4231
    %4234 = vset.pattern.permute.xlu0 1
    %4235 = vperm.xlu0 %4234, %v2781
    %v4236 = vpop.permute.xlu0 %4235
    %4238 = vset.pattern.permute.xlu0 1
    %4239 = vperm.xlu0 %4238, %v2782
    %v4240 = vpop.permute.xlu0 %4239
    %4242 = vset.pattern.permute.xlu0 1
    %4243 = vperm.xlu0 %4242, %v2783
    %v4244 = vpop.permute.xlu0 %4243
    %4246 = vset.pattern.permute.xlu0 1
    %4247 = vperm.xlu0 %4246, %v2784
    %v4248 = vpop.permute.xlu0 %4247
    %4250 = vset.pattern.permute.xlu0 1
    %4251 = vperm.xlu0 %4250, %v2785
    %v4252 = vpop.permute.xlu0 %4251
    %4254 = vset.pattern.permute.xlu0 1
    %4255 = vperm.xlu0 %4254, %v2786
    %v4256 = vpop.permute.xlu0 %4255
    %4258 = vset.pattern.permute.xlu0 1
    %4259 = vperm.xlu0 %4258, %v2787
    %v4260 = vpop.permute.xlu0 %4259
    %4262 = vset.pattern.permute.xlu0 1
    %4263 = vperm.xlu0 %4262, %v2788
    %v4264 = vpop.permute.xlu0 %4263
    %4266 = vset.pattern.permute.xlu0 1
    %4267 = vperm.xlu0 %4266, %v2789
    %v4268 = vpop.permute.xlu0 %4267
    %4270 = vset.pattern.permute.xlu0 1
    %4271 = vperm.xlu0 %4270, %v2790
    %v4272 = vpop.permute.xlu0 %4271
    %4274 = vset.pattern.permute.xlu0 1
    %4275 = vperm.xlu0 %4274, %v2791
    %v4276 = vpop.permute.xlu0 %4275
    %4278 = vset.pattern.permute.xlu0 1
    %4279 = vperm.xlu0 %4278, %v2792
    %v4280 = vpop.permute.xlu0 %4279
    %4282 = vset.pattern.permute.xlu0 1
    %4283 = vperm.xlu0 %4282, %v2793
    %v4284 = vpop.permute.xlu0 %4283
    %4286 = vset.pattern.permute.xlu0 1
    %4287 = vperm.xlu0 %4286, %v2794
    %v4288 = vpop.permute.xlu0 %4287
    %4290 = vset.pattern.permute.xlu0 1
    %4291 = vperm.xlu0 %4290, %v2795
    %v4292 = vpop.permute.xlu0 %4291
    %4294 = vset.pattern.permute.xlu0 1
    %4295 = vperm.xlu0 %4294, %v2796
    %v4296 = vpop.permute.xlu0 %4295
    %4298 = vset.pattern.permute.xlu0 1
    %4299 = vperm.xlu0 %4298, %v2797
    %v4300 = vpop.permute.xlu0 %4299
    %4302 = vset.pattern.permute.xlu0 1
    %4303 = vperm.xlu0 %4302, %v2798
    %v4304 = vpop.permute.xlu0 %4303
    %4306 = vset.pattern.permute.xlu0 1
    %4307 = vperm.xlu0 %4306, %v2799
    %v4308 = vpop.permute.xlu0 %4307
    %4310 = vset.pattern.permute.xlu0 1
    %4311 = vperm.xlu0 %4310, %v2800
    %v4312 = vpop.permute.xlu0 %4311
    %4314 = vset.pattern.permute.xlu0 1
    %4315 = vperm.xlu0 %4314, %v2801
    %v4316 = vpop.permute.xlu0 %4315
    %4318 = vset.pattern.permute.xlu0 1
    %4319 = vperm.xlu0 %4318, %v2802
    %v4320 = vpop.permute.xlu0 %4319
    %4322 = vset.pattern.permute.xlu0 1
    %4323 = vperm.xlu0 %4322, %v2803
    %v4324 = vpop.permute.xlu0 %4323
    %4326 = vset.pattern.permute.xlu0 1
    %4327 = vperm.xlu0 %4326, %v2804
    %v4328 = vpop.permute.xlu0 %4327
    %4330 = vset.pattern.permute.xlu0 1
    %4331 = vperm.xlu0 %4330, %v2805
    %v4332 = vpop.permute.xlu0 %4331
    %4334 = vset.pattern.permute.xlu0 1
    %4335 = vperm.xlu0 %4334, %v2806
    %v4336 = vpop.permute.xlu0 %4335
    %4338 = vset.pattern.permute.xlu0 1
    %4339 = vperm.xlu0 %4338, %v2807
    %v4340 = vpop.permute.xlu0 %4339
    %4342 = vset.pattern.permute.xlu0 1
    %4343 = vperm.xlu0 %4342, %v2808
    %v4344 = vpop.permute.xlu0 %4343
    %v4346 = vmul.f32 %v2745, %v4092
    %v4347 = vmul.f32 %v2746, %v4096
    %v4348 = vmul.f32 %v2747, %v4100
    %v4349 = vmul.f32 %v2748, %v4104
    %v4350 = vmul.f32 %v2749, %v4108
    %v4351 = vmul.f32 %v2750, %v4112
    %v4352 = vmul.f32 %v2751, %v4116
    %v4353 = vmul.f32 %v2752, %v4120
    %v4354 = vmul.f32 %v2753, %v4124
    %v4355 = vmul.f32 %v2754, %v4128
    %v4356 = vmul.f32 %v2755, %v4132
    %v4357 = vmul.f32 %v2756, %v4136
    %v4358 = vmul.f32 %v2757, %v4140
    %v4359 = vmul.f32 %v2758, %v4144
    %v4360 = vmul.f32 %v2759, %v4148
    %v4361 = vmul.f32 %v2760, %v4152
    %v4362 = vmul.f32 %v2761, %v4156
    %v4363 = vmul.f32 %v2762, %v4160
    %v4364 = vmul.f32 %v2763, %v4164
    %v4365 = vmul.f32 %v2764, %v4168
    %v4366 = vmul.f32 %v2765, %v4172
    %v4367 = vmul.f32 %v2766, %v4176
    %v4368 = vmul.f32 %v2767, %v4180
    %v4369 = vmul.f32 %v2768, %v4184
    %v4370 = vmul.f32 %v2769, %v4188
    %v4371 = vmul.f32 %v2770, %v4192
    %v4372 = vmul.f32 %v2771, %v4196
    %v4373 = vmul.f32 %v2772, %v4200
    %v4374 = vmul.f32 %v2773, %v4204
    %v4375 = vmul.f32 %v2774, %v4208
    %v4376 = vmul.f32 %v2775, %v4212
    %v4377 = vmul.f32 %v2776, %v4216
    %v4378 = vmul.f32 %v2777, %v4220
    %v4379 = vmul.f32 %v2778, %v4224
    %v4380 = vmul.f32 %v2779, %v4228
    %v4381 = vmul.f32 %v2780, %v4232
    %v4382 = vmul.f32 %v2781, %v4236
    %v4383 = vmul.f32 %v2782, %v4240
    %v4384 = vmul.f32 %v2783, %v4244
    %v4385 = vmul.f32 %v2784, %v4248
    %v4386 = vmul.f32 %v2785, %v4252
    %v4387 = vmul.f32 %v2786, %v4256
    %v4388 = vmul.f32 %v2787, %v4260
    %v4389 = vmul.f32 %v2788, %v4264
    %v4390 = vmul.f32 %v2789, %v4268
    %v4391 = vmul.f32 %v2790, %v4272
    %v4392 = vmul.f32 %v2791, %v4276
    %v4393 = vmul.f32 %v2792, %v4280
    %v4394 = vmul.f32 %v2793, %v4284
    %v4395 = vmul.f32 %v2794, %v4288
    %v4396 = vmul.f32 %v2795, %v4292
    %v4397 = vmul.f32 %v2796, %v4296
    %v4398 = vmul.f32 %v2797, %v4300
    %v4399 = vmul.f32 %v2798, %v4304
    %v4400 = vmul.f32 %v2799, %v4308
    %v4401 = vmul.f32 %v2800, %v4312
    %v4402 = vmul.f32 %v2801, %v4316
    %v4403 = vmul.f32 %v2802, %v4320
    %v4404 = vmul.f32 %v2803, %v4324
    %v4405 = vmul.f32 %v2804, %v4328
    %v4406 = vmul.f32 %v2805, %v4332
    %v4407 = vmul.f32 %v2806, %v4336
    %v4408 = vmul.f32 %v2807, %v4340
    %v4409 = vmul.f32 %v2808, %v4344
    %4410 = vset.pattern.permute.xlu0 2
    %4411 = vperm.xlu0 %4410, %v2745
    %v4412 = vpop.permute.xlu0 %4411
    %4414 = vset.pattern.permute.xlu0 2
    %4415 = vperm.xlu0 %4414, %v2746
    %v4416 = vpop.permute.xlu0 %4415
    %4418 = vset.pattern.permute.xlu0 2
    %4419 = vperm.xlu0 %4418, %v2747
    %v4420 = vpop.permute.xlu0 %4419
    %4422 = vset.pattern.permute.xlu0 2
    %4423 = vperm.xlu0 %4422, %v2748
    %v4424 = vpop.permute.xlu0 %4423
    %4426 = vset.pattern.permute.xlu0 2
    %4427 = vperm.xlu0 %4426, %v2749
    %v4428 = vpop.permute.xlu0 %4427
    %4430 = vset.pattern.permute.xlu0 2
    %4431 = vperm.xlu0 %4430, %v2750
    %v4432 = vpop.permute.xlu0 %4431
    %4434 = vset.pattern.permute.xlu0 2
    %4435 = vperm.xlu0 %4434, %v2751
    %v4436 = vpop.permute.xlu0 %4435
    %4438 = vset.pattern.permute.xlu0 2
    %4439 = vperm.xlu0 %4438, %v2752
    %v4440 = vpop.permute.xlu0 %4439
    %4442 = vset.pattern.permute.xlu0 2
    %4443 = vperm.xlu0 %4442, %v2753
    %v4444 = vpop.permute.xlu0 %4443
    %4446 = vset.pattern.permute.xlu0 2
    %4447 = vperm.xlu0 %4446, %v2754
    %v4448 = vpop.permute.xlu0 %4447
    %4450 = vset.pattern.permute.xlu0 2
    %4451 = vperm.xlu0 %4450, %v2755
    %v4452 = vpop.permute.xlu0 %4451
    %4454 = vset.pattern.permute.xlu0 2
    %4455 = vperm.xlu0 %4454, %v2756
    %v4456 = vpop.permute.xlu0 %4455
    %4458 = vset.pattern.permute.xlu0 2
    %4459 = vperm.xlu0 %4458, %v2757
    %v4460 = vpop.permute.xlu0 %4459
    %4462 = vset.pattern.permute.xlu0 2
    %4463 = vperm.xlu0 %4462, %v2758
    %v4464 = vpop.permute.xlu0 %4463
    %4466 = vset.pattern.permute.xlu0 2
    %4467 = vperm.xlu0 %4466, %v2759
    %v4468 = vpop.permute.xlu0 %4467
    %4470 = vset.pattern.permute.xlu0 2
    %4471 = vperm.xlu0 %4470, %v2760
    %v4472 = vpop.permute.xlu0 %4471
    %4474 = vset.pattern.permute.xlu0 2
    %4475 = vperm.xlu0 %4474, %v2761
    %v4476 = vpop.permute.xlu0 %4475
    %4478 = vset.pattern.permute.xlu0 2
    %4479 = vperm.xlu0 %4478, %v2762
    %v4480 = vpop.permute.xlu0 %4479
    %4482 = vset.pattern.permute.xlu0 2
    %4483 = vperm.xlu0 %4482, %v2763
    %v4484 = vpop.permute.xlu0 %4483
    %4486 = vset.pattern.permute.xlu0 2
    %4487 = vperm.xlu0 %4486, %v2764
    %v4488 = vpop.permute.xlu0 %4487
    %4490 = vset.pattern.permute.xlu0 2
    %4491 = vperm.xlu0 %4490, %v2765
    %v4492 = vpop.permute.xlu0 %4491
    %4494 = vset.pattern.permute.xlu0 2
    %4495 = vperm.xlu0 %4494, %v2766
    %v4496 = vpop.permute.xlu0 %4495
    %4498 = vset.pattern.permute.xlu0 2
    %4499 = vperm.xlu0 %4498, %v2767
    %v4500 = vpop.permute.xlu0 %4499
    %4502 = vset.pattern.permute.xlu0 2
    %4503 = vperm.xlu0 %4502, %v2768
    %v4504 = vpop.permute.xlu0 %4503
    %4506 = vset.pattern.permute.xlu0 2
    %4507 = vperm.xlu0 %4506, %v2769
    %v4508 = vpop.permute.xlu0 %4507
    %4510 = vset.pattern.permute.xlu0 2
    %4511 = vperm.xlu0 %4510, %v2770
    %v4512 = vpop.permute.xlu0 %4511
    %4514 = vset.pattern.permute.xlu0 2
    %4515 = vperm.xlu0 %4514, %v2771
    %v4516 = vpop.permute.xlu0 %4515
    %4518 = vset.pattern.permute.xlu0 2
    %4519 = vperm.xlu0 %4518, %v2772
    %v4520 = vpop.permute.xlu0 %4519
    %4522 = vset.pattern.permute.xlu0 2
    %4523 = vperm.xlu0 %4522, %v2773
    %v4524 = vpop.permute.xlu0 %4523
    %4526 = vset.pattern.permute.xlu0 2
    %4527 = vperm.xlu0 %4526, %v2774
    %v4528 = vpop.permute.xlu0 %4527
    %4530 = vset.pattern.permute.xlu0 2
    %4531 = vperm.xlu0 %4530, %v2775
    %v4532 = vpop.permute.xlu0 %4531
    %4534 = vset.pattern.permute.xlu0 2
    %4535 = vperm.xlu0 %4534, %v2776
    %v4536 = vpop.permute.xlu0 %4535
    %4538 = vset.pattern.permute.xlu0 2
    %4539 = vperm.xlu0 %4538, %v2777
    %v4540 = vpop.permute.xlu0 %4539
    %4542 = vset.pattern.permute.xlu0 2
    %4543 = vperm.xlu0 %4542, %v2778
    %v4544 = vpop.permute.xlu0 %4543
    %4546 = vset.pattern.permute.xlu0 2
    %4547 = vperm.xlu0 %4546, %v2779
    %v4548 = vpop.permute.xlu0 %4547
    %4550 = vset.pattern.permute.xlu0 2
    %4551 = vperm.xlu0 %4550, %v2780
    %v4552 = vpop.permute.xlu0 %4551
    %4554 = vset.pattern.permute.xlu0 2
    %4555 = vperm.xlu0 %4554, %v2781
    %v4556 = vpop.permute.xlu0 %4555
    %4558 = vset.pattern.permute.xlu0 2
    %4559 = vperm.xlu0 %4558, %v2782
    %v4560 = vpop.permute.xlu0 %4559
    %4562 = vset.pattern.permute.xlu0 2
    %4563 = vperm.xlu0 %4562, %v2783
    %v4564 = vpop.permute.xlu0 %4563
    %4566 = vset.pattern.permute.xlu0 2
    %4567 = vperm.xlu0 %4566, %v2784
    %v4568 = vpop.permute.xlu0 %4567
    %4570 = vset.pattern.permute.xlu0 2
    %4571 = vperm.xlu0 %4570, %v2785
    %v4572 = vpop.permute.xlu0 %4571
    %4574 = vset.pattern.permute.xlu0 2
    %4575 = vperm.xlu0 %4574, %v2786
    %v4576 = vpop.permute.xlu0 %4575
    %4578 = vset.pattern.permute.xlu0 2
    %4579 = vperm.xlu0 %4578, %v2787
    %v4580 = vpop.permute.xlu0 %4579
    %4582 = vset.pattern.permute.xlu0 2
    %4583 = vperm.xlu0 %4582, %v2788
    %v4584 = vpop.permute.xlu0 %4583
    %4586 = vset.pattern.permute.xlu0 2
    %4587 = vperm.xlu0 %4586, %v2789
    %v4588 = vpop.permute.xlu0 %4587
    %4590 = vset.pattern.permute.xlu0 2
    %4591 = vperm.xlu0 %4590, %v2790
    %v4592 = vpop.permute.xlu0 %4591
    %4594 = vset.pattern.permute.xlu0 2
    %4595 = vperm.xlu0 %4594, %v2791
    %v4596 = vpop.permute.xlu0 %4595
    %4598 = vset.pattern.permute.xlu0 2
    %4599 = vperm.xlu0 %4598, %v2792
    %v4600 = vpop.permute.xlu0 %4599
    %4602 = vset.pattern.permute.xlu0 2
    %4603 = vperm.xlu0 %4602, %v2793
    %v4604 = vpop.permute.xlu0 %4603
    %4606 = vset.pattern.permute.xlu0 2
    %4607 = vperm.xlu0 %4606, %v2794
    %v4608 = vpop.permute.xlu0 %4607
    %4610 = vset.pattern.permute.xlu0 2
    %4611 = vperm.xlu0 %4610, %v2795
    %v4612 = vpop.permute.xlu0 %4611
    %4614 = vset.pattern.permute.xlu0 2
    %4615 = vperm.xlu0 %4614, %v2796
    %v4616 = vpop.permute.xlu0 %4615
    %4618 = vset.pattern.permute.xlu0 2
    %4619 = vperm.xlu0 %4618, %v2797
    %v4620 = vpop.permute.xlu0 %4619
    %4622 = vset.pattern.permute.xlu0 2
    %4623 = vperm.xlu0 %4622, %v2798
    %v4624 = vpop.permute.xlu0 %4623
    %4626 = vset.pattern.permute.xlu0 2
    %4627 = vperm.xlu0 %4626, %v2799
    %v4628 = vpop.permute.xlu0 %4627
    %4630 = vset.pattern.permute.xlu0 2
    %4631 = vperm.xlu0 %4630, %v2800
    %v4632 = vpop.permute.xlu0 %4631
    %4634 = vset.pattern.permute.xlu0 2
    %4635 = vperm.xlu0 %4634, %v2801
    %v4636 = vpop.permute.xlu0 %4635
    %4638 = vset.pattern.permute.xlu0 2
    %4639 = vperm.xlu0 %4638, %v2802
    %v4640 = vpop.permute.xlu0 %4639
    %4642 = vset.pattern.permute.xlu0 2
    %4643 = vperm.xlu0 %4642, %v2803
    %v4644 = vpop.permute.xlu0 %4643
    %4646 = vset.pattern.permute.xlu0 2
    %4647 = vperm.xlu0 %4646, %v2804
    %v4648 = vpop.permute.xlu0 %4647
    %4650 = vset.pattern.permute.xlu0 2
    %4651 = vperm.xlu0 %4650, %v2805
    %v4652 = vpop.permute.xlu0 %4651
    %4654 = vset.pattern.permute.xlu0 2
    %4655 = vperm.xlu0 %4654, %v2806
    %v4656 = vpop.permute.xlu0 %4655
    %4658 = vset.pattern.permute.xlu0 2
    %4659 = vperm.xlu0 %4658, %v2807
    %v4660 = vpop.permute.xlu0 %4659
    %4662 = vset.pattern.permute.xlu0 2
    %4663 = vperm.xlu0 %4662, %v2808
    %v4664 = vpop.permute.xlu0 %4663
    %v4666 = vmul.f32 %v2745, %v4412
    %v4667 = vmul.f32 %v2746, %v4416
    %v4668 = vmul.f32 %v2747, %v4420
    %v4669 = vmul.f32 %v2748, %v4424
    %v4670 = vmul.f32 %v2749, %v4428
    %v4671 = vmul.f32 %v2750, %v4432
    %v4672 = vmul.f32 %v2751, %v4436
    %v4673 = vmul.f32 %v2752, %v4440
    %v4674 = vmul.f32 %v2753, %v4444
    %v4675 = vmul.f32 %v2754, %v4448
    %v4676 = vmul.f32 %v2755, %v4452
    %v4677 = vmul.f32 %v2756, %v4456
    %v4678 = vmul.f32 %v2757, %v4460
    %v4679 = vmul.f32 %v2758, %v4464
    %v4680 = vmul.f32 %v2759, %v4468
    %v4681 = vmul.f32 %v2760, %v4472
    %v4682 = vmul.f32 %v2761, %v4476
    %v4683 = vmul.f32 %v2762, %v4480
    %v4684 = vmul.f32 %v2763, %v4484
    %v4685 = vmul.f32 %v2764, %v4488
    %v4686 = vmul.f32 %v2765, %v4492
    %v4687 = vmul.f32 %v2766, %v4496
    %v4688 = vmul.f32 %v2767, %v4500
    %v4689 = vmul.f32 %v2768, %v4504
    %v4690 = vmul.f32 %v2769, %v4508
    %v4691 = vmul.f32 %v2770, %v4512
    %v4692 = vmul.f32 %v2771, %v4516
    %v4693 = vmul.f32 %v2772, %v4520
    %v4694 = vmul.f32 %v2773, %v4524
    %v4695 = vmul.f32 %v2774, %v4528
    %v4696 = vmul.f32 %v2775, %v4532
    %v4697 = vmul.f32 %v2776, %v4536
    %v4698 = vmul.f32 %v2777, %v4540
    %v4699 = vmul.f32 %v2778, %v4544
    %v4700 = vmul.f32 %v2779, %v4548
    %v4701 = vmul.f32 %v2780, %v4552
    %v4702 = vmul.f32 %v2781, %v4556
    %v4703 = vmul.f32 %v2782, %v4560
    %v4704 = vmul.f32 %v2783, %v4564
    %v4705 = vmul.f32 %v2784, %v4568
    %v4706 = vmul.f32 %v2785, %v4572
    %v4707 = vmul.f32 %v2786, %v4576
    %v4708 = vmul.f32 %v2787, %v4580
    %v4709 = vmul.f32 %v2788, %v4584
    %v4710 = vmul.f32 %v2789, %v4588
    %v4711 = vmul.f32 %v2790, %v4592
    %v4712 = vmul.f32 %v2791, %v4596
    %v4713 = vmul.f32 %v2792, %v4600
    %v4714 = vmul.f32 %v2793, %v4604
    %v4715 = vmul.f32 %v2794, %v4608
    %v4716 = vmul.f32 %v2795, %v4612
    %v4717 = vmul.f32 %v2796, %v4616
    %v4718 = vmul.f32 %v2797, %v4620
    %v4719 = vmul.f32 %v2798, %v4624
    %v4720 = vmul.f32 %v2799, %v4628
    %v4721 = vmul.f32 %v2800, %v4632
    %v4722 = vmul.f32 %v2801, %v4636
    %v4723 = vmul.f32 %v2802, %v4640
    %v4724 = vmul.f32 %v2803, %v4644
    %v4725 = vmul.f32 %v2804, %v4648
    %v4726 = vmul.f32 %v2805, %v4652
    %v4727 = vmul.f32 %v2806, %v4656
    %v4728 = vmul.f32 %v2807, %v4660
    %v4729 = vmul.f32 %v2808, %v4664
    %4794 = vrot.lane.b32.xlu0 %v4346, 3
    %v4795 = vpop.permute.xlu0 %4794
    %4796 = vrot.lane.b32.xlu0 %v4347, 3
    %v4797 = vpop.permute.xlu0 %4796
    %4798 = vrot.lane.b32.xlu0 %v4348, 3
    %v4799 = vpop.permute.xlu0 %4798
    %4800 = vrot.lane.b32.xlu0 %v4349, 3
    %v4801 = vpop.permute.xlu0 %4800
    %4802 = vrot.lane.b32.xlu0 %v4350, 3
    %v4803 = vpop.permute.xlu0 %4802
    %4804 = vrot.lane.b32.xlu0 %v4351, 3
    %v4805 = vpop.permute.xlu0 %4804
    %4806 = vrot.lane.b32.xlu0 %v4352, 3
    %v4807 = vpop.permute.xlu0 %4806
    %4808 = vrot.lane.b32.xlu0 %v4353, 3
    %v4809 = vpop.permute.xlu0 %4808
    %4810 = vrot.lane.b32.xlu0 %v4354, 3
    %v4811 = vpop.permute.xlu0 %4810
    %4812 = vrot.lane.b32.xlu0 %v4355, 3
    %v4813 = vpop.permute.xlu0 %4812
    %4814 = vrot.lane.b32.xlu0 %v4356, 3
    %v4815 = vpop.permute.xlu0 %4814
    %4816 = vrot.lane.b32.xlu0 %v4357, 3
    %v4817 = vpop.permute.xlu0 %4816
    %4818 = vrot.lane.b32.xlu0 %v4358, 3
    %v4819 = vpop.permute.xlu0 %4818
    %4820 = vrot.lane.b32.xlu0 %v4359, 3
    %v4821 = vpop.permute.xlu0 %4820
    %4822 = vrot.lane.b32.xlu0 %v4360, 3
    %v4823 = vpop.permute.xlu0 %4822
    %4824 = vrot.lane.b32.xlu0 %v4361, 3
    %v4825 = vpop.permute.xlu0 %4824
    %4826 = vrot.lane.b32.xlu0 %v4362, 3
    %v4827 = vpop.permute.xlu0 %4826
    %4828 = vrot.lane.b32.xlu0 %v4363, 3
    %v4829 = vpop.permute.xlu0 %4828
    %4830 = vrot.lane.b32.xlu0 %v4364, 3
    %v4831 = vpop.permute.xlu0 %4830
    %4832 = vrot.lane.b32.xlu0 %v4365, 3
    %v4833 = vpop.permute.xlu0 %4832
    %4834 = vrot.lane.b32.xlu0 %v4366, 3
    %v4835 = vpop.permute.xlu0 %4834
    %4836 = vrot.lane.b32.xlu0 %v4367, 3
    %v4837 = vpop.permute.xlu0 %4836
    %4838 = vrot.lane.b32.xlu0 %v4368, 3
    %v4839 = vpop.permute.xlu0 %4838
    %4840 = vrot.lane.b32.xlu0 %v4369, 3
    %v4841 = vpop.permute.xlu0 %4840
    %4842 = vrot.lane.b32.xlu0 %v4370, 3
    %v4843 = vpop.permute.xlu0 %4842
    %4844 = vrot.lane.b32.xlu0 %v4371, 3
    %v4845 = vpop.permute.xlu0 %4844
    %4846 = vrot.lane.b32.xlu0 %v4372, 3
    %v4847 = vpop.permute.xlu0 %4846
    %4848 = vrot.lane.b32.xlu0 %v4373, 3
    %v4849 = vpop.permute.xlu0 %4848
    %4850 = vrot.lane.b32.xlu0 %v4374, 3
    %v4851 = vpop.permute.xlu0 %4850
    %4852 = vrot.lane.b32.xlu0 %v4375, 3
    %v4853 = vpop.permute.xlu0 %4852
    %4854 = vrot.lane.b32.xlu0 %v4376, 3
    %v4855 = vpop.permute.xlu0 %4854
    %4856 = vrot.lane.b32.xlu0 %v4377, 3
    %v4857 = vpop.permute.xlu0 %4856
    %4858 = vrot.lane.b32.xlu0 %v4378, 3
    %v4859 = vpop.permute.xlu0 %4858
    %4860 = vrot.lane.b32.xlu0 %v4379, 3
    %v4861 = vpop.permute.xlu0 %4860
    %4862 = vrot.lane.b32.xlu0 %v4380, 3
    %v4863 = vpop.permute.xlu0 %4862
    %4864 = vrot.lane.b32.xlu0 %v4381, 3
    %v4865 = vpop.permute.xlu0 %4864
    %4866 = vrot.lane.b32.xlu0 %v4382, 3
    %v4867 = vpop.permute.xlu0 %4866
    %4868 = vrot.lane.b32.xlu0 %v4383, 3
    %v4869 = vpop.permute.xlu0 %4868
    %4870 = vrot.lane.b32.xlu0 %v4384, 3
    %v4871 = vpop.permute.xlu0 %4870
    %4872 = vrot.lane.b32.xlu0 %v4385, 3
    %v4873 = vpop.permute.xlu0 %4872
    %4874 = vrot.lane.b32.xlu0 %v4386, 3
    %v4875 = vpop.permute.xlu0 %4874
    %4876 = vrot.lane.b32.xlu0 %v4387, 3
    %v4877 = vpop.permute.xlu0 %4876
    %4878 = vrot.lane.b32.xlu0 %v4388, 3
    %v4879 = vpop.permute.xlu0 %4878
    %4880 = vrot.lane.b32.xlu0 %v4389, 3
    %v4881 = vpop.permute.xlu0 %4880
    %4882 = vrot.lane.b32.xlu0 %v4390, 3
    %v4883 = vpop.permute.xlu0 %4882
    %4884 = vrot.lane.b32.xlu0 %v4391, 3
    %v4885 = vpop.permute.xlu0 %4884
    %4886 = vrot.lane.b32.xlu0 %v4392, 3
    %v4887 = vpop.permute.xlu0 %4886
    %4888 = vrot.lane.b32.xlu0 %v4393, 3
    %v4889 = vpop.permute.xlu0 %4888
    %4890 = vrot.lane.b32.xlu0 %v4394, 3
    %v4891 = vpop.permute.xlu0 %4890
    %4892 = vrot.lane.b32.xlu0 %v4395, 3
    %v4893 = vpop.permute.xlu0 %4892
    %4894 = vrot.lane.b32.xlu0 %v4396, 3
    %v4895 = vpop.permute.xlu0 %4894
    %4896 = vrot.lane.b32.xlu0 %v4397, 3
    %v4897 = vpop.permute.xlu0 %4896
    %4898 = vrot.lane.b32.xlu0 %v4398, 3
    %v4899 = vpop.permute.xlu0 %4898
    %4900 = vrot.lane.b32.xlu0 %v4399, 3
    %v4901 = vpop.permute.xlu0 %4900
    %4902 = vrot.lane.b32.xlu0 %v4400, 3
    %v4903 = vpop.permute.xlu0 %4902
    %4904 = vrot.lane.b32.xlu0 %v4401, 3
    %v4905 = vpop.permute.xlu0 %4904
    %4906 = vrot.lane.b32.xlu0 %v4402, 3
    %v4907 = vpop.permute.xlu0 %4906
    %4908 = vrot.lane.b32.xlu0 %v4403, 3
    %v4909 = vpop.permute.xlu0 %4908
    %4910 = vrot.lane.b32.xlu0 %v4404, 3
    %v4911 = vpop.permute.xlu0 %4910
    %4912 = vrot.lane.b32.xlu0 %v4405, 3
    %v4913 = vpop.permute.xlu0 %4912
    %4914 = vrot.lane.b32.xlu0 %v4406, 3
    %v4915 = vpop.permute.xlu0 %4914
    %4916 = vrot.lane.b32.xlu0 %v4407, 3
    %v4917 = vpop.permute.xlu0 %4916
    %4918 = vrot.lane.b32.xlu0 %v4408, 3
    %v4919 = vpop.permute.xlu0 %4918
    %4920 = vrot.lane.b32.xlu0 %v4409, 3
    %v4921 = vpop.permute.xlu0 %4920
    %5050 = vrot.lane.b32.xlu0 %v4666, 6
    %v5051 = vpop.permute.xlu0 %5050
    %5052 = vrot.lane.b32.xlu0 %v4667, 6
    %v5053 = vpop.permute.xlu0 %5052
    %5054 = vrot.lane.b32.xlu0 %v4668, 6
    %v5055 = vpop.permute.xlu0 %5054
    %5056 = vrot.lane.b32.xlu0 %v4669, 6
    %v5057 = vpop.permute.xlu0 %5056
    %5058 = vrot.lane.b32.xlu0 %v4670, 6
    %v5059 = vpop.permute.xlu0 %5058
    %5060 = vrot.lane.b32.xlu0 %v4671, 6
    %v5061 = vpop.permute.xlu0 %5060
    %5062 = vrot.lane.b32.xlu0 %v4672, 6
    %v5063 = vpop.permute.xlu0 %5062
    %5064 = vrot.lane.b32.xlu0 %v4673, 6
    %v5065 = vpop.permute.xlu0 %5064
    %5066 = vrot.lane.b32.xlu0 %v4674, 6
    %v5067 = vpop.permute.xlu0 %5066
    %5068 = vrot.lane.b32.xlu0 %v4675, 6
    %v5069 = vpop.permute.xlu0 %5068
    %5070 = vrot.lane.b32.xlu0 %v4676, 6
    %v5071 = vpop.permute.xlu0 %5070
    %5072 = vrot.lane.b32.xlu0 %v4677, 6
    %v5073 = vpop.permute.xlu0 %5072
    %5074 = vrot.lane.b32.xlu0 %v4678, 6
    %v5075 = vpop.permute.xlu0 %5074
    %5076 = vrot.lane.b32.xlu0 %v4679, 6
    %v5077 = vpop.permute.xlu0 %5076
    %5078 = vrot.lane.b32.xlu0 %v4680, 6
    %v5079 = vpop.permute.xlu0 %5078
    %5080 = vrot.lane.b32.xlu0 %v4681, 6
    %v5081 = vpop.permute.xlu0 %5080
    %5082 = vrot.lane.b32.xlu0 %v4682, 6
    %v5083 = vpop.permute.xlu0 %5082
    %5084 = vrot.lane.b32.xlu0 %v4683, 6
    %v5085 = vpop.permute.xlu0 %5084
    %5086 = vrot.lane.b32.xlu0 %v4684, 6
    %v5087 = vpop.permute.xlu0 %5086
    %5088 = vrot.lane.b32.xlu0 %v4685, 6
    %v5089 = vpop.permute.xlu0 %5088
    %5090 = vrot.lane.b32.xlu0 %v4686, 6
    %v5091 = vpop.permute.xlu0 %5090
    %5092 = vrot.lane.b32.xlu0 %v4687, 6
    %v5093 = vpop.permute.xlu0 %5092
    %5094 = vrot.lane.b32.xlu0 %v4688, 6
    %v5095 = vpop.permute.xlu0 %5094
    %5096 = vrot.lane.b32.xlu0 %v4689, 6
    %v5097 = vpop.permute.xlu0 %5096
    %5098 = vrot.lane.b32.xlu0 %v4690, 6
    %v5099 = vpop.permute.xlu0 %5098
    %5100 = vrot.lane.b32.xlu0 %v4691, 6
    %v5101 = vpop.permute.xlu0 %5100
    %5102 = vrot.lane.b32.xlu0 %v4692, 6
    %v5103 = vpop.permute.xlu0 %5102
    %5104 = vrot.lane.b32.xlu0 %v4693, 6
    %v5105 = vpop.permute.xlu0 %5104
    %5106 = vrot.lane.b32.xlu0 %v4694, 6
    %v5107 = vpop.permute.xlu0 %5106
    %5108 = vrot.lane.b32.xlu0 %v4695, 6
    %v5109 = vpop.permute.xlu0 %5108
    %5110 = vrot.lane.b32.xlu0 %v4696, 6
    %v5111 = vpop.permute.xlu0 %5110
    %5112 = vrot.lane.b32.xlu0 %v4697, 6
    %v5113 = vpop.permute.xlu0 %5112
    %5114 = vrot.lane.b32.xlu0 %v4698, 6
    %v5115 = vpop.permute.xlu0 %5114
    %5116 = vrot.lane.b32.xlu0 %v4699, 6
    %v5117 = vpop.permute.xlu0 %5116
    %5118 = vrot.lane.b32.xlu0 %v4700, 6
    %v5119 = vpop.permute.xlu0 %5118
    %5120 = vrot.lane.b32.xlu0 %v4701, 6
    %v5121 = vpop.permute.xlu0 %5120
    %5122 = vrot.lane.b32.xlu0 %v4702, 6
    %v5123 = vpop.permute.xlu0 %5122
    %5124 = vrot.lane.b32.xlu0 %v4703, 6
    %v5125 = vpop.permute.xlu0 %5124
    %5126 = vrot.lane.b32.xlu0 %v4704, 6
    %v5127 = vpop.permute.xlu0 %5126
    %5128 = vrot.lane.b32.xlu0 %v4705, 6
    %v5129 = vpop.permute.xlu0 %5128
    %5130 = vrot.lane.b32.xlu0 %v4706, 6
    %v5131 = vpop.permute.xlu0 %5130
    %5132 = vrot.lane.b32.xlu0 %v4707, 6
    %v5133 = vpop.permute.xlu0 %5132
    %5134 = vrot.lane.b32.xlu0 %v4708, 6
    %v5135 = vpop.permute.xlu0 %5134
    %5136 = vrot.lane.b32.xlu0 %v4709, 6
    %v5137 = vpop.permute.xlu0 %5136
    %5138 = vrot.lane.b32.xlu0 %v4710, 6
    %v5139 = vpop.permute.xlu0 %5138
    %5140 = vrot.lane.b32.xlu0 %v4711, 6
    %v5141 = vpop.permute.xlu0 %5140
    %5142 = vrot.lane.b32.xlu0 %v4712, 6
    %v5143 = vpop.permute.xlu0 %5142
    %5144 = vrot.lane.b32.xlu0 %v4713, 6
    %v5145 = vpop.permute.xlu0 %5144
    %5146 = vrot.lane.b32.xlu0 %v4714, 6
    %v5147 = vpop.permute.xlu0 %5146
    %5148 = vrot.lane.b32.xlu0 %v4715, 6
    %v5149 = vpop.permute.xlu0 %5148
    %5150 = vrot.lane.b32.xlu0 %v4716, 6
    %v5151 = vpop.permute.xlu0 %5150
    %5152 = vrot.lane.b32.xlu0 %v4717, 6
    %v5153 = vpop.permute.xlu0 %5152
    %5154 = vrot.lane.b32.xlu0 %v4718, 6
    %v5155 = vpop.permute.xlu0 %5154
    %5156 = vrot.lane.b32.xlu0 %v4719, 6
    %v5157 = vpop.permute.xlu0 %5156
    %5158 = vrot.lane.b32.xlu0 %v4720, 6
    %v5159 = vpop.permute.xlu0 %5158
    %5160 = vrot.lane.b32.xlu0 %v4721, 6
    %v5161 = vpop.permute.xlu0 %5160
    %5162 = vrot.lane.b32.xlu0 %v4722, 6
    %v5163 = vpop.permute.xlu0 %5162
    %5164 = vrot.lane.b32.xlu0 %v4723, 6
    %v5165 = vpop.permute.xlu0 %5164
    %5166 = vrot.lane.b32.xlu0 %v4724, 6
    %v5167 = vpop.permute.xlu0 %5166
    %5168 = vrot.lane.b32.xlu0 %v4725, 6
    %v5169 = vpop.permute.xlu0 %5168
    %5170 = vrot.lane.b32.xlu0 %v4726, 6
    %v5171 = vpop.permute.xlu0 %5170
    %5172 = vrot.lane.b32.xlu0 %v4727, 6
    %v5173 = vpop.permute.xlu0 %5172
    %5174 = vrot.lane.b32.xlu0 %v4728, 6
    %v5175 = vpop.permute.xlu0 %5174
    %5176 = vrot.lane.b32.xlu0 %v4729, 6
    %v5177 = vpop.permute.xlu0 %5176
    %v5242 = vsel %vm2873, %v4026, %v4795
    %v5243 = vsel %vm2873, %v4027, %v4797
    %v5244 = vsel %vm2873, %v4028, %v4799
    %v5245 = vsel %vm2873, %v4029, %v4801
    %v5246 = vsel %vm2873, %v4030, %v4803
    %v5247 = vsel %vm2873, %v4031, %v4805
    %v5248 = vsel %vm2873, %v4032, %v4807
    %v5249 = vsel %vm2873, %v4033, %v4809
    %v5250 = vsel %vm2873, %v4034, %v4811
    %v5251 = vsel %vm2873, %v4035, %v4813
    %v5252 = vsel %vm2873, %v4036, %v4815
    %v5253 = vsel %vm2873, %v4037, %v4817
    %v5254 = vsel %vm2873, %v4038, %v4819
    %v5255 = vsel %vm2873, %v4039, %v4821
    %v5256 = vsel %vm2873, %v4040, %v4823
    %v5257 = vsel %vm2873, %v4041, %v4825
    %v5258 = vsel %vm2873, %v4042, %v4827
    %v5259 = vsel %vm2873, %v4043, %v4829
    %v5260 = vsel %vm2873, %v4044, %v4831
    %v5261 = vsel %vm2873, %v4045, %v4833
    %v5262 = vsel %vm2873, %v4046, %v4835
    %v5263 = vsel %vm2873, %v4047, %v4837
    %v5264 = vsel %vm2873, %v4048, %v4839
    %v5265 = vsel %vm2873, %v4049, %v4841
    %v5266 = vsel %vm2873, %v4050, %v4843
    %v5267 = vsel %vm2873, %v4051, %v4845
    %v5268 = vsel %vm2873, %v4052, %v4847
    %v5269 = vsel %vm2873, %v4053, %v4849
    %v5270 = vsel %vm2873, %v4054, %v4851
    %v5271 = vsel %vm2873, %v4055, %v4853
    %v5272 = vsel %vm2873, %v4056, %v4855
    %v5273 = vsel %vm2873, %v4057, %v4857
    %v5274 = vsel %vm2873, %v4058, %v4859
    %v5275 = vsel %vm2873, %v4059, %v4861
    %v5276 = vsel %vm2873, %v4060, %v4863
    %v5277 = vsel %vm2873, %v4061, %v4865
    %v5278 = vsel %vm2873, %v4062, %v4867
    %v5279 = vsel %vm2873, %v4063, %v4869
    %v5280 = vsel %vm2873, %v4064, %v4871
    %v5281 = vsel %vm2873, %v4065, %v4873
    %v5282 = vsel %vm2873, %v4066, %v4875
    %v5283 = vsel %vm2873, %v4067, %v4877
    %v5284 = vsel %vm2873, %v4068, %v4879
    %v5285 = vsel %vm2873, %v4069, %v4881
    %v5286 = vsel %vm2873, %v4070, %v4883
    %v5287 = vsel %vm2873, %v4071, %v4885
    %v5288 = vsel %vm2873, %v4072, %v4887
    %v5289 = vsel %vm2873, %v4073, %v4889
    %v5290 = vsel %vm2873, %v4074, %v4891
    %v5291 = vsel %vm2873, %v4075, %v4893
    %v5292 = vsel %vm2873, %v4076, %v4895
    %v5293 = vsel %vm2873, %v4077, %v4897
    %v5294 = vsel %vm2873, %v4078, %v4899
    %v5295 = vsel %vm2873, %v4079, %v4901
    %v5296 = vsel %vm2873, %v4080, %v4903
    %v5297 = vsel %vm2873, %v4081, %v4905
    %v5298 = vsel %vm2873, %v4082, %v4907
    %v5299 = vsel %vm2873, %v4083, %v4909
    %v5300 = vsel %vm2873, %v4084, %v4911
    %v5301 = vsel %vm2873, %v4085, %v4913
    %v5302 = vsel %vm2873, %v4086, %v4915
    %v5303 = vsel %vm2873, %v4087, %v4917
    %v5304 = vsel %vm2873, %v4088, %v4919
    %v5305 = vsel %vm2873, %v4089, %v4921
    %vm5306 = vcmask 48128
    %v5307 = vsel %vm5306, %v5242, %v5051
    %v5308 = vsel %vm5306, %v5243, %v5053
    %v5309 = vsel %vm5306, %v5244, %v5055
    %v5310 = vsel %vm5306, %v5245, %v5057
    %v5311 = vsel %vm5306, %v5246, %v5059
    %v5312 = vsel %vm5306, %v5247, %v5061
    %v5313 = vsel %vm5306, %v5248, %v5063
    %v5314 = vsel %vm5306, %v5249, %v5065
    %v5315 = vsel %vm5306, %v5250, %v5067
    %v5316 = vsel %vm5306, %v5251, %v5069
    %v5317 = vsel %vm5306, %v5252, %v5071
    %v5318 = vsel %vm5306, %v5253, %v5073
    %v5319 = vsel %vm5306, %v5254, %v5075
    %v5320 = vsel %vm5306, %v5255, %v5077
    %v5321 = vsel %vm5306, %v5256, %v5079
    %v5322 = vsel %vm5306, %v5257, %v5081
    %v5323 = vsel %vm5306, %v5258, %v5083
    %v5324 = vsel %vm5306, %v5259, %v5085
    %v5325 = vsel %vm5306, %v5260, %v5087
    %v5326 = vsel %vm5306, %v5261, %v5089
    %v5327 = vsel %vm5306, %v5262, %v5091
    %v5328 = vsel %vm5306, %v5263, %v5093
    %v5329 = vsel %vm5306, %v5264, %v5095
    %v5330 = vsel %vm5306, %v5265, %v5097
    %v5331 = vsel %vm5306, %v5266, %v5099
    %v5332 = vsel %vm5306, %v5267, %v5101
    %v5333 = vsel %vm5306, %v5268, %v5103
    %v5334 = vsel %vm5306, %v5269, %v5105
    %v5335 = vsel %vm5306, %v5270, %v5107
    %v5336 = vsel %vm5306, %v5271, %v5109
    %v5337 = vsel %vm5306, %v5272, %v5111
    %v5338 = vsel %vm5306, %v5273, %v5113
    %v5339 = vsel %vm5306, %v5274, %v5115
    %v5340 = vsel %vm5306, %v5275, %v5117
    %v5341 = vsel %vm5306, %v5276, %v5119
    %v5342 = vsel %vm5306, %v5277, %v5121
    %v5343 = vsel %vm5306, %v5278, %v5123
    %v5344 = vsel %vm5306, %v5279, %v5125
    %v5345 = vsel %vm5306, %v5280, %v5127
    %v5346 = vsel %vm5306, %v5281, %v5129
    %v5347 = vsel %vm5306, %v5282, %v5131
    %v5348 = vsel %vm5306, %v5283, %v5133
    %v5349 = vsel %vm5306, %v5284, %v5135
    %v5350 = vsel %vm5306, %v5285, %v5137
    %v5351 = vsel %vm5306, %v5286, %v5139
    %v5352 = vsel %vm5306, %v5287, %v5141
    %v5353 = vsel %vm5306, %v5288, %v5143
    %v5354 = vsel %vm5306, %v5289, %v5145
    %v5355 = vsel %vm5306, %v5290, %v5147
    %v5356 = vsel %vm5306, %v5291, %v5149
    %v5357 = vsel %vm5306, %v5292, %v5151
    %v5358 = vsel %vm5306, %v5293, %v5153
    %v5359 = vsel %vm5306, %v5294, %v5155
    %v5360 = vsel %vm5306, %v5295, %v5157
    %v5361 = vsel %vm5306, %v5296, %v5159
    %v5362 = vsel %vm5306, %v5297, %v5161
    %v5363 = vsel %vm5306, %v5298, %v5163
    %v5364 = vsel %vm5306, %v5299, %v5165
    %v5365 = vsel %vm5306, %v5300, %v5167
    %v5366 = vsel %vm5306, %v5301, %v5169
    %v5367 = vsel %vm5306, %v5302, %v5171
    %v5368 = vsel %vm5306, %v5303, %v5173
    %v5369 = vsel %vm5306, %v5304, %v5175
    %v5370 = vsel %vm5306, %v5305, %v5177
    %5372 = vset.pattern.permute.xlu0 0
    %5373 = vperm.xlu0 %5372, %v1953
    %v5374 = vpop.permute.xlu0 %5373
    %5377 = vset.pattern.permute.xlu0 0
    %5378 = vperm.xlu0 %5377, %v1954
    %v5379 = vpop.permute.xlu0 %5378
    %5382 = vset.pattern.permute.xlu0 0
    %5383 = vperm.xlu0 %5382, %v1955
    %v5384 = vpop.permute.xlu0 %5383
    %5387 = vset.pattern.permute.xlu0 0
    %5388 = vperm.xlu0 %5387, %v1956
    %v5389 = vpop.permute.xlu0 %5388
    %5392 = vset.pattern.permute.xlu0 0
    %5393 = vperm.xlu0 %5392, %v1957
    %v5394 = vpop.permute.xlu0 %5393
    %5397 = vset.pattern.permute.xlu0 0
    %5398 = vperm.xlu0 %5397, %v1958
    %v5399 = vpop.permute.xlu0 %5398
    %5402 = vset.pattern.permute.xlu0 0
    %5403 = vperm.xlu0 %5402, %v1959
    %v5404 = vpop.permute.xlu0 %5403
    %5407 = vset.pattern.permute.xlu0 0
    %5408 = vperm.xlu0 %5407, %v1960
    %v5409 = vpop.permute.xlu0 %5408
    %5412 = vset.pattern.permute.xlu0 0
    %5413 = vperm.xlu0 %5412, %v1961
    %v5414 = vpop.permute.xlu0 %5413
    %5417 = vset.pattern.permute.xlu0 0
    %5418 = vperm.xlu0 %5417, %v1962
    %v5419 = vpop.permute.xlu0 %5418
    %5422 = vset.pattern.permute.xlu0 0
    %5423 = vperm.xlu0 %5422, %v1963
    %v5424 = vpop.permute.xlu0 %5423
    %5427 = vset.pattern.permute.xlu0 0
    %5428 = vperm.xlu0 %5427, %v1964
    %v5429 = vpop.permute.xlu0 %5428
    %5432 = vset.pattern.permute.xlu0 0
    %5433 = vperm.xlu0 %5432, %v1965
    %v5434 = vpop.permute.xlu0 %5433
    %5437 = vset.pattern.permute.xlu0 0
    %5438 = vperm.xlu0 %5437, %v1966
    %v5439 = vpop.permute.xlu0 %5438
    %5442 = vset.pattern.permute.xlu0 0
    %5443 = vperm.xlu0 %5442, %v1967
    %v5444 = vpop.permute.xlu0 %5443
    %5447 = vset.pattern.permute.xlu0 0
    %5448 = vperm.xlu0 %5447, %v1968
    %v5449 = vpop.permute.xlu0 %5448
    %5452 = vset.pattern.permute.xlu0 0
    %5453 = vperm.xlu0 %5452, %v1969
    %v5454 = vpop.permute.xlu0 %5453
    %5457 = vset.pattern.permute.xlu0 0
    %5458 = vperm.xlu0 %5457, %v1970
    %v5459 = vpop.permute.xlu0 %5458
    %5462 = vset.pattern.permute.xlu0 0
    %5463 = vperm.xlu0 %5462, %v1971
    %v5464 = vpop.permute.xlu0 %5463
    %5467 = vset.pattern.permute.xlu0 0
    %5468 = vperm.xlu0 %5467, %v1972
    %v5469 = vpop.permute.xlu0 %5468
    %5472 = vset.pattern.permute.xlu0 0
    %5473 = vperm.xlu0 %5472, %v1973
    %v5474 = vpop.permute.xlu0 %5473
    %5477 = vset.pattern.permute.xlu0 0
    %5478 = vperm.xlu0 %5477, %v1974
    %v5479 = vpop.permute.xlu0 %5478
    %5482 = vset.pattern.permute.xlu0 0
    %5483 = vperm.xlu0 %5482, %v1975
    %v5484 = vpop.permute.xlu0 %5483
    %5487 = vset.pattern.permute.xlu0 0
    %5488 = vperm.xlu0 %5487, %v1976
    %v5489 = vpop.permute.xlu0 %5488
    %5492 = vset.pattern.permute.xlu0 0
    %5493 = vperm.xlu0 %5492, %v1977
    %v5494 = vpop.permute.xlu0 %5493
    %5497 = vset.pattern.permute.xlu0 0
    %5498 = vperm.xlu0 %5497, %v1978
    %v5499 = vpop.permute.xlu0 %5498
    %5502 = vset.pattern.permute.xlu0 0
    %5503 = vperm.xlu0 %5502, %v1979
    %v5504 = vpop.permute.xlu0 %5503
    %5507 = vset.pattern.permute.xlu0 0
    %5508 = vperm.xlu0 %5507, %v1980
    %v5509 = vpop.permute.xlu0 %5508
    %5512 = vset.pattern.permute.xlu0 0
    %5513 = vperm.xlu0 %5512, %v1981
    %v5514 = vpop.permute.xlu0 %5513
    %5517 = vset.pattern.permute.xlu0 0
    %5518 = vperm.xlu0 %5517, %v1982
    %v5519 = vpop.permute.xlu0 %5518
    %5522 = vset.pattern.permute.xlu0 0
    %5523 = vperm.xlu0 %5522, %v1983
    %v5524 = vpop.permute.xlu0 %5523
    %5527 = vset.pattern.permute.xlu0 0
    %5528 = vperm.xlu0 %5527, %v1984
    %v5529 = vpop.permute.xlu0 %5528
    %5532 = vset.pattern.permute.xlu0 0
    %5533 = vperm.xlu0 %5532, %v1985
    %v5534 = vpop.permute.xlu0 %5533
    %5537 = vset.pattern.permute.xlu0 0
    %5538 = vperm.xlu0 %5537, %v1986
    %v5539 = vpop.permute.xlu0 %5538
    %5542 = vset.pattern.permute.xlu0 0
    %5543 = vperm.xlu0 %5542, %v1987
    %v5544 = vpop.permute.xlu0 %5543
    %5547 = vset.pattern.permute.xlu0 0
    %5548 = vperm.xlu0 %5547, %v1988
    %v5549 = vpop.permute.xlu0 %5548
    %5552 = vset.pattern.permute.xlu0 0
    %5553 = vperm.xlu0 %5552, %v1989
    %v5554 = vpop.permute.xlu0 %5553
    %5557 = vset.pattern.permute.xlu0 0
    %5558 = vperm.xlu0 %5557, %v1990
    %v5559 = vpop.permute.xlu0 %5558
    %5562 = vset.pattern.permute.xlu0 0
    %5563 = vperm.xlu0 %5562, %v1991
    %v5564 = vpop.permute.xlu0 %5563
    %5567 = vset.pattern.permute.xlu0 0
    %5568 = vperm.xlu0 %5567, %v1992
    %v5569 = vpop.permute.xlu0 %5568
    %5572 = vset.pattern.permute.xlu0 0
    %5573 = vperm.xlu0 %5572, %v1993
    %v5574 = vpop.permute.xlu0 %5573
    %5577 = vset.pattern.permute.xlu0 0
    %5578 = vperm.xlu0 %5577, %v1994
    %v5579 = vpop.permute.xlu0 %5578
    %5582 = vset.pattern.permute.xlu0 0
    %5583 = vperm.xlu0 %5582, %v1995
    %v5584 = vpop.permute.xlu0 %5583
    %5587 = vset.pattern.permute.xlu0 0
    %5588 = vperm.xlu0 %5587, %v1996
    %v5589 = vpop.permute.xlu0 %5588
    %5592 = vset.pattern.permute.xlu0 0
    %5593 = vperm.xlu0 %5592, %v1997
    %v5594 = vpop.permute.xlu0 %5593
    %5597 = vset.pattern.permute.xlu0 0
    %5598 = vperm.xlu0 %5597, %v1998
    %v5599 = vpop.permute.xlu0 %5598
    %5602 = vset.pattern.permute.xlu0 0
    %5603 = vperm.xlu0 %5602, %v1999
    %v5604 = vpop.permute.xlu0 %5603
    %5607 = vset.pattern.permute.xlu0 0
    %5608 = vperm.xlu0 %5607, %v2000
    %v5609 = vpop.permute.xlu0 %5608
    %5612 = vset.pattern.permute.xlu0 0
    %5613 = vperm.xlu0 %5612, %v2001
    %v5614 = vpop.permute.xlu0 %5613
    %5617 = vset.pattern.permute.xlu0 0
    %5618 = vperm.xlu0 %5617, %v2002
    %v5619 = vpop.permute.xlu0 %5618
    %5622 = vset.pattern.permute.xlu0 0
    %5623 = vperm.xlu0 %5622, %v2003
    %v5624 = vpop.permute.xlu0 %5623
    %5627 = vset.pattern.permute.xlu0 0
    %5628 = vperm.xlu0 %5627, %v2004
    %v5629 = vpop.permute.xlu0 %5628
    %5632 = vset.pattern.permute.xlu0 0
    %5633 = vperm.xlu0 %5632, %v2005
    %v5634 = vpop.permute.xlu0 %5633
    %5637 = vset.pattern.permute.xlu0 0
    %5638 = vperm.xlu0 %5637, %v2006
    %v5639 = vpop.permute.xlu0 %5638
    %5642 = vset.pattern.permute.xlu0 0
    %5643 = vperm.xlu0 %5642, %v2007
    %v5644 = vpop.permute.xlu0 %5643
    %5647 = vset.pattern.permute.xlu0 0
    %5648 = vperm.xlu0 %5647, %v2008
    %v5649 = vpop.permute.xlu0 %5648
    %5652 = vset.pattern.permute.xlu0 0
    %5653 = vperm.xlu0 %5652, %v2009
    %v5654 = vpop.permute.xlu0 %5653
    %5657 = vset.pattern.permute.xlu0 0
    %5658 = vperm.xlu0 %5657, %v2010
    %v5659 = vpop.permute.xlu0 %5658
    %5662 = vset.pattern.permute.xlu0 0
    %5663 = vperm.xlu0 %5662, %v2011
    %v5664 = vpop.permute.xlu0 %5663
    %5667 = vset.pattern.permute.xlu0 0
    %5668 = vperm.xlu0 %5667, %v2012
    %v5669 = vpop.permute.xlu0 %5668
    %5672 = vset.pattern.permute.xlu0 0
    %5673 = vperm.xlu0 %5672, %v2013
    %v5674 = vpop.permute.xlu0 %5673
    %5677 = vset.pattern.permute.xlu0 0
    %5678 = vperm.xlu0 %5677, %v2014
    %v5679 = vpop.permute.xlu0 %5678
    %5682 = vset.pattern.permute.xlu0 0
    %5683 = vperm.xlu0 %5682, %v2015
    %v5684 = vpop.permute.xlu0 %5683
    %5687 = vset.pattern.permute.xlu0 0
    %5688 = vperm.xlu0 %5687, %v2016
    %v5689 = vpop.permute.xlu0 %5688
    %v5691 = vmul.f32 %v5374, %v3579
    %v5692 = vmul.f32 %v5379, %v3581
    %v5693 = vmul.f32 %v5384, %v3583
    %v5694 = vmul.f32 %v5389, %v3585
    %v5695 = vmul.f32 %v5394, %v3587
    %v5696 = vmul.f32 %v5399, %v3589
    %v5697 = vmul.f32 %v5404, %v3591
    %v5698 = vmul.f32 %v5409, %v3593
    %v5699 = vmul.f32 %v5414, %v3595
    %v5700 = vmul.f32 %v5419, %v3597
    %v5701 = vmul.f32 %v5424, %v3599
    %v5702 = vmul.f32 %v5429, %v3601
    %v5703 = vmul.f32 %v5434, %v3603
    %v5704 = vmul.f32 %v5439, %v3605
    %v5705 = vmul.f32 %v5444, %v3607
    %v5706 = vmul.f32 %v5449, %v3609
    %v5707 = vmul.f32 %v5454, %v3611
    %v5708 = vmul.f32 %v5459, %v3613
    %v5709 = vmul.f32 %v5464, %v3615
    %v5710 = vmul.f32 %v5469, %v3617
    %v5711 = vmul.f32 %v5474, %v3619
    %v5712 = vmul.f32 %v5479, %v3621
    %v5713 = vmul.f32 %v5484, %v3623
    %v5714 = vmul.f32 %v5489, %v3625
    %v5715 = vmul.f32 %v5494, %v3627
    %v5716 = vmul.f32 %v5499, %v3629
    %v5717 = vmul.f32 %v5504, %v3631
    %v5718 = vmul.f32 %v5509, %v3633
    %v5719 = vmul.f32 %v5514, %v3635
    %v5720 = vmul.f32 %v5519, %v3637
    %v5721 = vmul.f32 %v5524, %v3639
    %v5722 = vmul.f32 %v5529, %v3641
    %v5723 = vmul.f32 %v5534, %v3643
    %v5724 = vmul.f32 %v5539, %v3645
    %v5725 = vmul.f32 %v5544, %v3647
    %v5726 = vmul.f32 %v5549, %v3649
    %v5727 = vmul.f32 %v5554, %v3651
    %v5728 = vmul.f32 %v5559, %v3653
    %v5729 = vmul.f32 %v5564, %v3655
    %v5730 = vmul.f32 %v5569, %v3657
    %v5731 = vmul.f32 %v5574, %v3659
    %v5732 = vmul.f32 %v5579, %v3661
    %v5733 = vmul.f32 %v5584, %v3663
    %v5734 = vmul.f32 %v5589, %v3665
    %v5735 = vmul.f32 %v5594, %v3667
    %v5736 = vmul.f32 %v5599, %v3669
    %v5737 = vmul.f32 %v5604, %v3671
    %v5738 = vmul.f32 %v5609, %v3673
    %v5739 = vmul.f32 %v5614, %v3675
    %v5740 = vmul.f32 %v5619, %v3677
    %v5741 = vmul.f32 %v5624, %v3679
    %v5742 = vmul.f32 %v5629, %v3681
    %v5743 = vmul.f32 %v5634, %v3683
    %v5744 = vmul.f32 %v5639, %v3685
    %v5745 = vmul.f32 %v5644, %v3687
    %v5746 = vmul.f32 %v5649, %v3689
    %v5747 = vmul.f32 %v5654, %v3691
    %v5748 = vmul.f32 %v5659, %v3693
    %v5749 = vmul.f32 %v5664, %v3695
    %v5750 = vmul.f32 %v5669, %v3697
    %v5751 = vmul.f32 %v5674, %v3699
    %v5752 = vmul.f32 %v5679, %v3701
    %v5753 = vmul.f32 %v5684, %v3703
    %v5754 = vmul.f32 %v5689, %v3705
    %5755 = vmatprep.subr.mxu0 0.0
    %5756 = vmatpush1.msra.mxu0 %v5706
    %5757 = vmatprep.subr.mxu0 0.0
    %5758 = vmatpush1.msra.mxu0 %v5705
    %5759 = vmatprep.subr.mxu0 0.0
    %5760 = vmatpush1.msra.mxu0 %v5704
    %5761 = vmatprep.subr.mxu0 0.0
    %5762 = vmatpush1.msra.mxu0 %v5703
    %5763 = vmatprep.subr.mxu0 0.0
    %5764 = vmatpush1.msra.mxu0 %v5702
    %5765 = vmatprep.subr.mxu0 0.0
    %5766 = vmatpush1.msra.mxu0 %v5701
    %5767 = vmatprep.subr.mxu0 0.0
    %5768 = vmatpush1.msra.mxu0 %v5700
    %5769 = vmatprep.subr.mxu0 0.0
    %5770 = vmatpush1.msra.mxu0 %v5699
    %5771 = vmatprep.subr.mxu0 0.0
    %5772 = vmatpush1.msra.mxu0 %v5698
    %5773 = vmatprep.subr.mxu0 0.0
    %5774 = vmatpush1.msra.mxu0 %v5697
    %5775 = vmatprep.subr.mxu0 0.0
    %5776 = vmatpush1.msra.mxu0 %v5696
    %5777 = vmatprep.subr.mxu0 0.0
    %5778 = vmatpush1.msra.mxu0 %v5695
    %5779 = vmatprep.subr.mxu0 0.0
    %5780 = vmatpush1.msra.mxu0 %v5694
    %5781 = vmatprep.subr.mxu0 0.0
    %5782 = vmatpush1.msra.mxu0 %v5693
    %5783 = vmatprep.subr.mxu0 0.0
    %5784 = vmatpush1.msra.mxu0 %v5692
    %5785 = vmatprep.subr.mxu0 0.0
    %5786 = vmatpush1.msra.mxu0 %v5691
    %5787 = vmatprep.subr.mxu0 0.0
    %5788 = vmatpush2.msra.mxu0 %v5722
    %5789 = vmatprep.subr.mxu0 0.0
    %5790 = vmatpush2.msra.mxu0 %v5721
    %5791 = vmatprep.subr.mxu0 0.0
    %5792 = vmatpush2.msra.mxu0 %v5720
    %5793 = vmatprep.subr.mxu0 0.0
    %5794 = vmatpush2.msra.mxu0 %v5719
    %5795 = vmatprep.subr.mxu0 0.0
    %5796 = vmatpush2.msra.mxu0 %v5718
    %5797 = vmatprep.subr.mxu0 0.0
    %5798 = vmatpush2.msra.mxu0 %v5717
    %5799 = vmatprep.subr.mxu0 0.0
    %5800 = vmatpush2.msra.mxu0 %v5716
    %5801 = vmatprep.subr.mxu0 0.0
    %5802 = vmatpush2.msra.mxu0 %v5715
    %5803 = vmatprep.subr.mxu0 0.0
    %5804 = vmatpush2.msra.mxu0 %v5714
    %5805 = vmatprep.subr.mxu0 0.0
    %5806 = vmatpush2.msra.mxu0 %v5713
    %5807 = vmatprep.subr.mxu0 0.0
    %5808 = vmatpush2.msra.mxu0 %v5712
    %5809 = vmatprep.subr.mxu0 0.0
    %5810 = vmatpush2.msra.mxu0 %v5711
    %5811 = vmatprep.subr.mxu0 0.0
    %5812 = vmatpush2.msra.mxu0 %v5710
    %5813 = vmatprep.subr.mxu0 0.0
    %5814 = vmatpush2.msra.mxu0 %v5709
    %5815 = vmatprep.subr.mxu0 0.0
    %5816 = vmatpush2.msra.mxu0 %v5708
    %5817 = vmatprep.subr.mxu0 0.0
    %5818 = vmatpush2.msra.mxu0 %v5707
    %5819 = vmatprep.mubr.f32.mxu0 %v644
    %5820 = vmatmul.mubr.f32.gmra.mxu0 %v643
    %v5821 = vpop.f32.mrf.mxu0
    %v5822 = vadd.f32 0.0, %v5821
    %v5823 = vpop.f32.mrf.mxu0
    %5824 = vdwg.mxu0
    %5825 = vmatprep.subr.mxu0 0.0
    %5826 = vmatpush1.msra.mxu0 %v5738
    %5827 = vmatprep.subr.mxu0 0.0
    %5828 = vmatpush1.msra.mxu0 %v5737
    %5829 = vmatprep.subr.mxu0 0.0
    %5830 = vmatpush1.msra.mxu0 %v5736
    %5831 = vmatprep.subr.mxu0 0.0
    %5832 = vmatpush1.msra.mxu0 %v5735
    %5833 = vmatprep.subr.mxu0 0.0
    %5834 = vmatpush1.msra.mxu0 %v5734
    %5835 = vmatprep.subr.mxu0 0.0
    %5836 = vmatpush1.msra.mxu0 %v5733
    %5837 = vmatprep.subr.mxu0 0.0
    %5838 = vmatpush1.msra.mxu0 %v5732
    %5839 = vmatprep.subr.mxu0 0.0
    %5840 = vmatpush1.msra.mxu0 %v5731
    %5841 = vmatprep.subr.mxu0 0.0
    %5842 = vmatpush1.msra.mxu0 %v5730
    %5843 = vmatprep.subr.mxu0 0.0
    %5844 = vmatpush1.msra.mxu0 %v5729
    %5845 = vmatprep.subr.mxu0 0.0
    %5846 = vmatpush1.msra.mxu0 %v5728
    %5847 = vmatprep.subr.mxu0 0.0
    %5848 = vmatpush1.msra.mxu0 %v5727
    %5849 = vmatprep.subr.mxu0 0.0
    %5850 = vmatpush1.msra.mxu0 %v5726
    %5851 = vmatprep.subr.mxu0 0.0
    %5852 = vmatpush1.msra.mxu0 %v5725
    %5853 = vmatprep.subr.mxu0 0.0
    %5854 = vmatpush1.msra.mxu0 %v5724
    %5855 = vmatprep.subr.mxu0 0.0
    %5856 = vmatpush1.msra.mxu0 %v5723
    %5857 = vmatprep.subr.mxu0 0.0
    %5858 = vmatpush2.msra.mxu0 %v5754
    %5859 = vmatprep.subr.mxu0 0.0
    %5860 = vmatpush2.msra.mxu0 %v5753
    %5861 = vmatprep.subr.mxu0 0.0
    %5862 = vmatpush2.msra.mxu0 %v5752
    %5863 = vmatprep.subr.mxu0 0.0
    %5864 = vmatpush2.msra.mxu0 %v5751
    %5865 = vmatprep.subr.mxu0 0.0
    %5866 = vmatpush2.msra.mxu0 %v5750
    %5867 = vmatprep.subr.mxu0 0.0
    %5868 = vmatpush2.msra.mxu0 %v5749
    %5869 = vmatprep.subr.mxu0 0.0
    %5870 = vmatpush2.msra.mxu0 %v5748
    %5871 = vmatprep.subr.mxu0 0.0
    %5872 = vmatpush2.msra.mxu0 %v5747
    %5873 = vmatprep.subr.mxu0 0.0
    %5874 = vmatpush2.msra.mxu0 %v5746
    %5875 = vmatprep.subr.mxu0 0.0
    %5876 = vmatpush2.msra.mxu0 %v5745
    %5877 = vmatprep.subr.mxu0 0.0
    %5878 = vmatpush2.msra.mxu0 %v5744
    %5879 = vmatprep.subr.mxu0 0.0
    %5880 = vmatpush2.msra.mxu0 %v5743
    %5881 = vmatprep.subr.mxu0 0.0
    %5882 = vmatpush2.msra.mxu0 %v5742
    %5883 = vmatprep.subr.mxu0 0.0
    %5884 = vmatpush2.msra.mxu0 %v5741
    %5885 = vmatprep.subr.mxu0 0.0
    %5886 = vmatpush2.msra.mxu0 %v5740
    %5887 = vmatprep.subr.mxu0 0.0
    %5888 = vmatpush2.msra.mxu0 %v5739
    %5889 = vmatprep.mubr.f32.mxu0 %v646
    %5890 = vmatmul.mubr.f32.gmra.mxu0 %v645
    %v5891 = vpop.f32.mrf.mxu0
    %v5892 = vadd.f32 %v5822, %v5891
    %v5893 = vpop.f32.mrf.mxu0
    %5894 = vdwg.mxu0
    %v5895 = vmul.f32 %v5892, %v2160
    %v5897 = vsel %vm2356, %v5895, 0
    %5899 = vmatprep.subr.mxu0 0.0
    %5900 = vmatpush1.msra.mxu0 0.0
    %5901 = vmatprep.subr.mxu0 0.0
    %5902 = vmatpush1.msra.mxu0 0.0
    %5903 = vmatprep.subr.mxu0 0.0
    %5904 = vmatpush1.msra.mxu0 0.0
    %5905 = vmatprep.subr.mxu0 0.0
    %5906 = vmatpush1.msra.mxu0 0.0
    %5907 = vmatprep.subr.mxu0 0.0
    %5908 = vmatpush1.msra.mxu0 0.0
    %5909 = vmatprep.subr.mxu0 0.0
    %5910 = vmatpush1.msra.mxu0 0.0
    %5911 = vmatprep.subr.mxu0 0.0
    %5912 = vmatpush1.msra.mxu0 0.0
    %5913 = vmatprep.subr.mxu0 0.0
    %5914 = vmatpush1.msra.mxu0 0.0
    %5915 = vmatprep.subr.mxu0 0.0
    %5916 = vmatpush1.msra.mxu0 0.0
    %5917 = vmatprep.subr.mxu0 0.0
    %5918 = vmatpush1.msra.mxu0 0.0
    %5919 = vmatprep.subr.mxu0 0.0
    %5920 = vmatpush1.msra.mxu0 0.0
    %5921 = vmatprep.subr.mxu0 0.0
    %5922 = vmatpush1.msra.mxu0 0.0
    %5923 = vmatprep.subr.mxu0 0.0
    %5924 = vmatpush1.msra.mxu0 0.0
    %5925 = vmatprep.subr.mxu0 0.0
    %5926 = vmatpush1.msra.mxu0 0.0
    %5927 = vmatprep.subr.mxu0 0.0
    %5928 = vmatpush1.msra.mxu0 0.0
    %5929 = vmatprep.subr.mxu0 0.0
    %5930 = vmatpush1.msra.mxu0 %v5897
    %5931 = vmatprep.subr.mxu0 0.0
    %5932 = vmatpush2.msra.mxu0 0.0
    %5933 = vmatprep.subr.mxu0 0.0
    %5934 = vmatpush2.msra.mxu0 0.0
    %5935 = vmatprep.subr.mxu0 0.0
    %5936 = vmatpush2.msra.mxu0 0.0
    %5937 = vmatprep.subr.mxu0 0.0
    %5938 = vmatpush2.msra.mxu0 0.0
    %5939 = vmatprep.subr.mxu0 0.0
    %5940 = vmatpush2.msra.mxu0 0.0
    %5941 = vmatprep.subr.mxu0 0.0
    %5942 = vmatpush2.msra.mxu0 0.0
    %5943 = vmatprep.subr.mxu0 0.0
    %5944 = vmatpush2.msra.mxu0 0.0
    %5945 = vmatprep.subr.mxu0 0.0
    %5946 = vmatpush2.msra.mxu0 0.0
    %5947 = vmatprep.subr.mxu0 0.0
    %5948 = vmatpush2.msra.mxu0 0.0
    %5949 = vmatprep.subr.mxu0 0.0
    %5950 = vmatpush2.msra.mxu0 0.0
    %5951 = vmatprep.subr.mxu0 0.0
    %5952 = vmatpush2.msra.mxu0 0.0
    %5953 = vmatprep.subr.mxu0 0.0
    %5954 = vmatpush2.msra.mxu0 0.0
    %5955 = vmatprep.subr.mxu0 0.0
    %5956 = vmatpush2.msra.mxu0 0.0
    %5957 = vmatprep.subr.mxu0 0.0
    %5958 = vmatpush2.msra.mxu0 0.0
    %5959 = vmatprep.subr.mxu0 0.0
    %5960 = vmatpush2.msra.mxu0 0.0
    %5961 = vmatprep.subr.mxu0 0.0
    %5962 = vmatpush2.msra.mxu0 0.0
    %5963 = vmatprep.mubr.f32.mxu0 0.0
    %5964 = vmatmul.mubr.f32.gmra.mxu0 %v2165
    %v5965 = vpop.f32.mrf.mxu0
    %v5966 = vadd.f32 0.0, %v5965
    %v5967 = vpop.f32.mrf.mxu0
    %5968 = vmatprep.mubr.f32.mxu0 0.0
    %5969 = vmatmul.mubr.f32.gmra.mxu0 %v2168
    %v5970 = vpop.f32.mrf.mxu0
    %v5971 = vadd.f32 0.0, %v5970
    %v5972 = vpop.f32.mrf.mxu0
    %5973 = vmatprep.mubr.f32.mxu0 0.0
    %5974 = vmatmul.mubr.f32.gmra.mxu0 %v2171
    %v5975 = vpop.f32.mrf.mxu0
    %v5976 = vadd.f32 0.0, %v5975
    %v5977 = vpop.f32.mrf.mxu0
    %5978 = vmatprep.mubr.f32.mxu0 0.0
    %5979 = vmatmul.mubr.f32.gmra.mxu0 %v2174
    %v5980 = vpop.f32.mrf.mxu0
    %v5981 = vadd.f32 0.0, %v5980
    %v5982 = vpop.f32.mrf.mxu0
    %5983 = vmatprep.mubr.f32.mxu0 0.0
    %5984 = vmatmul.mubr.f32.gmra.mxu0 %v2177
    %v5985 = vpop.f32.mrf.mxu0
    %v5986 = vadd.f32 0.0, %v5985
    %v5987 = vpop.f32.mrf.mxu0
    %5988 = vmatprep.mubr.f32.mxu0 0.0
    %5989 = vmatmul.mubr.f32.gmra.mxu0 %v2180
    %v5990 = vpop.f32.mrf.mxu0
    %v5991 = vadd.f32 0.0, %v5990
    %v5992 = vpop.f32.mrf.mxu0
    %5993 = vmatprep.mubr.f32.mxu0 0.0
    %5994 = vmatmul.mubr.f32.gmra.mxu0 %v2183
    %v5995 = vpop.f32.mrf.mxu0
    %v5996 = vadd.f32 0.0, %v5995
    %v5997 = vpop.f32.mrf.mxu0
    %5998 = vmatprep.mubr.f32.mxu0 0.0
    %5999 = vmatmul.mubr.f32.gmra.mxu0 %v2186
    %v6000 = vpop.f32.mrf.mxu0
    %v6001 = vadd.f32 0.0, %v6000
    %v6002 = vpop.f32.mrf.mxu0
    %6003 = vmatprep.mubr.f32.mxu0 0.0
    %6004 = vmatmul.mubr.f32.gmra.mxu0 %v2189
    %v6005 = vpop.f32.mrf.mxu0
    %v6006 = vadd.f32 0.0, %v6005
    %v6007 = vpop.f32.mrf.mxu0
    %6008 = vmatprep.mubr.f32.mxu0 0.0
    %6009 = vmatmul.mubr.f32.gmra.mxu0 %v2192
    %v6010 = vpop.f32.mrf.mxu0
    %v6011 = vadd.f32 0.0, %v6010
    %v6012 = vpop.f32.mrf.mxu0
    %6013 = vmatprep.mubr.f32.mxu0 0.0
    %6014 = vmatmul.mubr.f32.gmra.mxu0 %v2195
    %v6015 = vpop.f32.mrf.mxu0
    %v6016 = vadd.f32 0.0, %v6015
    %v6017 = vpop.f32.mrf.mxu0
    %6018 = vmatprep.mubr.f32.mxu0 0.0
    %6019 = vmatmul.mubr.f32.gmra.mxu0 %v2198
    %v6020 = vpop.f32.mrf.mxu0
    %v6021 = vadd.f32 0.0, %v6020
    %v6022 = vpop.f32.mrf.mxu0
    %6023 = vmatprep.mubr.f32.mxu0 0.0
    %6024 = vmatmul.mubr.f32.gmra.mxu0 %v2201
    %v6025 = vpop.f32.mrf.mxu0
    %v6026 = vadd.f32 0.0, %v6025
    %v6027 = vpop.f32.mrf.mxu0
    %6028 = vmatprep.mubr.f32.mxu0 0.0
    %6029 = vmatmul.mubr.f32.gmra.mxu0 %v2204
    %v6030 = vpop.f32.mrf.mxu0
    %v6031 = vadd.f32 0.0, %v6030
    %v6032 = vpop.f32.mrf.mxu0
    %6033 = vmatprep.mubr.f32.mxu0 0.0
    %6034 = vmatmul.mubr.f32.gmra.mxu0 %v2207
    %v6035 = vpop.f32.mrf.mxu0
    %v6036 = vadd.f32 0.0, %v6035
    %v6037 = vpop.f32.mrf.mxu0
    %6038 = vmatprep.mubr.f32.mxu0 0.0
    %6039 = vmatmul.mubr.f32.gmra.mxu0 %v2210
    %v6040 = vpop.f32.mrf.mxu0
    %v6041 = vadd.f32 0.0, %v6040
    %v6042 = vpop.f32.mrf.mxu0
    %6043 = vmatprep.mubr.f32.mxu0 0.0
    %6044 = vmatmul.mubr.f32.gmra.mxu0 %v2213
    %v6045 = vpop.f32.mrf.mxu0
    %v6046 = vadd.f32 0.0, %v6045
    %v6047 = vpop.f32.mrf.mxu0
    %6048 = vmatprep.mubr.f32.mxu0 0.0
    %6049 = vmatmul.mubr.f32.gmra.mxu0 %v2216
    %v6050 = vpop.f32.mrf.mxu0
    %v6051 = vadd.f32 0.0, %v6050
    %v6052 = vpop.f32.mrf.mxu0
    %6053 = vmatprep.mubr.f32.mxu0 0.0
    %6054 = vmatmul.mubr.f32.gmra.mxu0 %v2219
    %v6055 = vpop.f32.mrf.mxu0
    %v6056 = vadd.f32 0.0, %v6055
    %v6057 = vpop.f32.mrf.mxu0
    %6058 = vmatprep.mubr.f32.mxu0 0.0
    %6059 = vmatmul.mubr.f32.gmra.mxu0 %v2222
    %v6060 = vpop.f32.mrf.mxu0
    %v6061 = vadd.f32 0.0, %v6060
    %v6062 = vpop.f32.mrf.mxu0
    %6063 = vmatprep.mubr.f32.mxu0 0.0
    %6064 = vmatmul.mubr.f32.gmra.mxu0 %v2225
    %v6065 = vpop.f32.mrf.mxu0
    %v6066 = vadd.f32 0.0, %v6065
    %v6067 = vpop.f32.mrf.mxu0
    %6068 = vmatprep.mubr.f32.mxu0 0.0
    %6069 = vmatmul.mubr.f32.gmra.mxu0 %v2228
    %v6070 = vpop.f32.mrf.mxu0
    %v6071 = vadd.f32 0.0, %v6070
    %v6072 = vpop.f32.mrf.mxu0
    %6073 = vmatprep.mubr.f32.mxu0 0.0
    %6074 = vmatmul.mubr.f32.gmra.mxu0 %v2231
    %v6075 = vpop.f32.mrf.mxu0
    %v6076 = vadd.f32 0.0, %v6075
    %v6077 = vpop.f32.mrf.mxu0
    %6078 = vmatprep.mubr.f32.mxu0 0.0
    %6079 = vmatmul.mubr.f32.gmra.mxu0 %v2234
    %v6080 = vpop.f32.mrf.mxu0
    %v6081 = vadd.f32 0.0, %v6080
    %v6082 = vpop.f32.mrf.mxu0
    %6083 = vmatprep.mubr.f32.mxu0 0.0
    %6084 = vmatmul.mubr.f32.gmra.mxu0 %v2237
    %v6085 = vpop.f32.mrf.mxu0
    %v6086 = vadd.f32 0.0, %v6085
    %v6087 = vpop.f32.mrf.mxu0
    %6088 = vmatprep.mubr.f32.mxu0 0.0
    %6089 = vmatmul.mubr.f32.gmra.mxu0 %v2240
    %v6090 = vpop.f32.mrf.mxu0
    %v6091 = vadd.f32 0.0, %v6090
    %v6092 = vpop.f32.mrf.mxu0
    %6093 = vmatprep.mubr.f32.mxu0 0.0
    %6094 = vmatmul.mubr.f32.gmra.mxu0 %v2243
    %v6095 = vpop.f32.mrf.mxu0
    %v6096 = vadd.f32 0.0, %v6095
    %v6097 = vpop.f32.mrf.mxu0
    %6098 = vmatprep.mubr.f32.mxu0 0.0
    %6099 = vmatmul.mubr.f32.gmra.mxu0 %v2246
    %v6100 = vpop.f32.mrf.mxu0
    %v6101 = vadd.f32 0.0, %v6100
    %v6102 = vpop.f32.mrf.mxu0
    %6103 = vmatprep.mubr.f32.mxu0 0.0
    %6104 = vmatmul.mubr.f32.gmra.mxu0 %v2249
    %v6105 = vpop.f32.mrf.mxu0
    %v6106 = vadd.f32 0.0, %v6105
    %v6107 = vpop.f32.mrf.mxu0
    %6108 = vmatprep.mubr.f32.mxu0 0.0
    %6109 = vmatmul.mubr.f32.gmra.mxu0 %v2252
    %v6110 = vpop.f32.mrf.mxu0
    %v6111 = vadd.f32 0.0, %v6110
    %v6112 = vpop.f32.mrf.mxu0
    %6113 = vmatprep.mubr.f32.mxu0 0.0
    %6114 = vmatmul.mubr.f32.gmra.mxu0 %v2255
    %v6115 = vpop.f32.mrf.mxu0
    %v6116 = vadd.f32 0.0, %v6115
    %v6117 = vpop.f32.mrf.mxu0
    %6118 = vmatprep.mubr.f32.mxu0 0.0
    %6119 = vmatmul.mubr.f32.gmra.mxu0 %v2258
    %v6120 = vpop.f32.mrf.mxu0
    %v6121 = vadd.f32 0.0, %v6120
    %v6122 = vpop.f32.mrf.mxu0
    %6123 = vmatprep.mubr.f32.mxu0 0.0
    %6124 = vmatmul.mubr.f32.gmra.mxu0 %v2261
    %v6125 = vpop.f32.mrf.mxu0
    %v6126 = vadd.f32 0.0, %v6125
    %v6127 = vpop.f32.mrf.mxu0
    %6128 = vmatprep.mubr.f32.mxu0 0.0
    %6129 = vmatmul.mubr.f32.gmra.mxu0 %v2264
    %v6130 = vpop.f32.mrf.mxu0
    %v6131 = vadd.f32 0.0, %v6130
    %v6132 = vpop.f32.mrf.mxu0
    %6133 = vmatprep.mubr.f32.mxu0 0.0
    %6134 = vmatmul.mubr.f32.gmra.mxu0 %v2267
    %v6135 = vpop.f32.mrf.mxu0
    %v6136 = vadd.f32 0.0, %v6135
    %v6137 = vpop.f32.mrf.mxu0
    %6138 = vmatprep.mubr.f32.mxu0 0.0
    %6139 = vmatmul.mubr.f32.gmra.mxu0 %v2270
    %v6140 = vpop.f32.mrf.mxu0
    %v6141 = vadd.f32 0.0, %v6140
    %v6142 = vpop.f32.mrf.mxu0
    %6143 = vmatprep.mubr.f32.mxu0 0.0
    %6144 = vmatmul.mubr.f32.gmra.mxu0 %v2273
    %v6145 = vpop.f32.mrf.mxu0
    %v6146 = vadd.f32 0.0, %v6145
    %v6147 = vpop.f32.mrf.mxu0
    %6148 = vmatprep.mubr.f32.mxu0 0.0
    %6149 = vmatmul.mubr.f32.gmra.mxu0 %v2276
    %v6150 = vpop.f32.mrf.mxu0
    %v6151 = vadd.f32 0.0, %v6150
    %v6152 = vpop.f32.mrf.mxu0
    %6153 = vmatprep.mubr.f32.mxu0 0.0
    %6154 = vmatmul.mubr.f32.gmra.mxu0 %v2279
    %v6155 = vpop.f32.mrf.mxu0
    %v6156 = vadd.f32 0.0, %v6155
    %v6157 = vpop.f32.mrf.mxu0
    %6158 = vmatprep.mubr.f32.mxu0 0.0
    %6159 = vmatmul.mubr.f32.gmra.mxu0 %v2282
    %v6160 = vpop.f32.mrf.mxu0
    %v6161 = vadd.f32 0.0, %v6160
    %v6162 = vpop.f32.mrf.mxu0
    %6163 = vmatprep.mubr.f32.mxu0 0.0
    %6164 = vmatmul.mubr.f32.gmra.mxu0 %v2285
    %v6165 = vpop.f32.mrf.mxu0
    %v6166 = vadd.f32 0.0, %v6165
    %v6167 = vpop.f32.mrf.mxu0
    %6168 = vmatprep.mubr.f32.mxu0 0.0
    %6169 = vmatmul.mubr.f32.gmra.mxu0 %v2288
    %v6170 = vpop.f32.mrf.mxu0
    %v6171 = vadd.f32 0.0, %v6170
    %v6172 = vpop.f32.mrf.mxu0
    %6173 = vmatprep.mubr.f32.mxu0 0.0
    %6174 = vmatmul.mubr.f32.gmra.mxu0 %v2291
    %v6175 = vpop.f32.mrf.mxu0
    %v6176 = vadd.f32 0.0, %v6175
    %v6177 = vpop.f32.mrf.mxu0
    %6178 = vmatprep.mubr.f32.mxu0 0.0
    %6179 = vmatmul.mubr.f32.gmra.mxu0 %v2294
    %v6180 = vpop.f32.mrf.mxu0
    %v6181 = vadd.f32 0.0, %v6180
    %v6182 = vpop.f32.mrf.mxu0
    %6183 = vmatprep.mubr.f32.mxu0 0.0
    %6184 = vmatmul.mubr.f32.gmra.mxu0 %v2297
    %v6185 = vpop.f32.mrf.mxu0
    %v6186 = vadd.f32 0.0, %v6185
    %v6187 = vpop.f32.mrf.mxu0
    %6188 = vmatprep.mubr.f32.mxu0 0.0
    %6189 = vmatmul.mubr.f32.gmra.mxu0 %v2300
    %v6190 = vpop.f32.mrf.mxu0
    %v6191 = vadd.f32 0.0, %v6190
    %v6192 = vpop.f32.mrf.mxu0
    %6193 = vmatprep.mubr.f32.mxu0 0.0
    %6194 = vmatmul.mubr.f32.gmra.mxu0 %v2303
    %v6195 = vpop.f32.mrf.mxu0
    %v6196 = vadd.f32 0.0, %v6195
    %v6197 = vpop.f32.mrf.mxu0
    %6198 = vmatprep.mubr.f32.mxu0 0.0
    %6199 = vmatmul.mubr.f32.gmra.mxu0 %v2306
    %v6200 = vpop.f32.mrf.mxu0
    %v6201 = vadd.f32 0.0, %v6200
    %v6202 = vpop.f32.mrf.mxu0
    %6203 = vmatprep.mubr.f32.mxu0 0.0
    %6204 = vmatmul.mubr.f32.gmra.mxu0 %v2309
    %v6205 = vpop.f32.mrf.mxu0
    %v6206 = vadd.f32 0.0, %v6205
    %v6207 = vpop.f32.mrf.mxu0
    %6208 = vmatprep.mubr.f32.mxu0 0.0
    %6209 = vmatmul.mubr.f32.gmra.mxu0 %v2312
    %v6210 = vpop.f32.mrf.mxu0
    %v6211 = vadd.f32 0.0, %v6210
    %v6212 = vpop.f32.mrf.mxu0
    %6213 = vmatprep.mubr.f32.mxu0 0.0
    %6214 = vmatmul.mubr.f32.gmra.mxu0 %v2315
    %v6215 = vpop.f32.mrf.mxu0
    %v6216 = vadd.f32 0.0, %v6215
    %v6217 = vpop.f32.mrf.mxu0
    %6218 = vmatprep.mubr.f32.mxu0 0.0
    %6219 = vmatmul.mubr.f32.gmra.mxu0 %v2318
    %v6220 = vpop.f32.mrf.mxu0
    %v6221 = vadd.f32 0.0, %v6220
    %v6222 = vpop.f32.mrf.mxu0
    %6223 = vmatprep.mubr.f32.mxu0 0.0
    %6224 = vmatmul.mubr.f32.gmra.mxu0 %v2321
    %v6225 = vpop.f32.mrf.mxu0
    %v6226 = vadd.f32 0.0, %v6225
    %v6227 = vpop.f32.mrf.mxu0
    %6228 = vmatprep.mubr.f32.mxu0 0.0
    %6229 = vmatmul.mubr.f32.gmra.mxu0 %v2324
    %v6230 = vpop.f32.mrf.mxu0
    %v6231 = vadd.f32 0.0, %v6230
    %v6232 = vpop.f32.mrf.mxu0
    %6233 = vmatprep.mubr.f32.mxu0 0.0
    %6234 = vmatmul.mubr.f32.gmra.mxu0 %v2327
    %v6235 = vpop.f32.mrf.mxu0
    %v6236 = vadd.f32 0.0, %v6235
    %v6237 = vpop.f32.mrf.mxu0
    %6238 = vmatprep.mubr.f32.mxu0 0.0
    %6239 = vmatmul.mubr.f32.gmra.mxu0 %v2330
    %v6240 = vpop.f32.mrf.mxu0
    %v6241 = vadd.f32 0.0, %v6240
    %v6242 = vpop.f32.mrf.mxu0
    %6243 = vmatprep.mubr.f32.mxu0 0.0
    %6244 = vmatmul.mubr.f32.gmra.mxu0 %v2333
    %v6245 = vpop.f32.mrf.mxu0
    %v6246 = vadd.f32 0.0, %v6245
    %v6247 = vpop.f32.mrf.mxu0
    %6248 = vmatprep.mubr.f32.mxu0 0.0
    %6249 = vmatmul.mubr.f32.gmra.mxu0 %v2336
    %v6250 = vpop.f32.mrf.mxu0
    %v6251 = vadd.f32 0.0, %v6250
    %v6252 = vpop.f32.mrf.mxu0
    %6253 = vmatprep.mubr.f32.mxu0 0.0
    %6254 = vmatmul.mubr.f32.gmra.mxu0 %v2339
    %v6255 = vpop.f32.mrf.mxu0
    %v6256 = vadd.f32 0.0, %v6255
    %v6257 = vpop.f32.mrf.mxu0
    %6258 = vmatprep.mubr.f32.mxu0 0.0
    %6259 = vmatmul.mubr.f32.gmra.mxu0 %v2342
    %v6260 = vpop.f32.mrf.mxu0
    %v6261 = vadd.f32 0.0, %v6260
    %v6262 = vpop.f32.mrf.mxu0
    %6263 = vmatprep.mubr.f32.mxu0 0.0
    %6264 = vmatmul.mubr.f32.gmra.mxu0 %v2345
    %v6265 = vpop.f32.mrf.mxu0
    %v6266 = vadd.f32 0.0, %v6265
    %v6267 = vpop.f32.mrf.mxu0
    %6268 = vmatprep.mubr.f32.mxu0 0.0
    %6269 = vmatmul.mubr.f32.gmra.mxu0 %v2348
    %v6270 = vpop.f32.mrf.mxu0
    %v6271 = vadd.f32 0.0, %v6270
    %v6272 = vpop.f32.mrf.mxu0
    %6273 = vmatprep.mubr.f32.mxu0 0.0
    %6274 = vmatmul.mubr.f32.gmra.mxu0 %v2351
    %v6275 = vpop.f32.mrf.mxu0
    %v6276 = vadd.f32 0.0, %v6275
    %v6277 = vpop.f32.mrf.mxu0
    %6278 = vmatprep.mubr.f32.mxu0 0.0
    %6279 = vmatmul.mubr.f32.gmra.mxu0 %v2354
    %v6280 = vpop.f32.mrf.mxu0
    %v6281 = vadd.f32 0.0, %v6280
    %v6282 = vpop.f32.mrf.mxu0
    %6283 = vdwg.mxu0
    %v6284 = vsub.f32 %v5691, %v5966
    %v6285 = vsub.f32 %v5692, %v5971
    %v6286 = vsub.f32 %v5693, %v5976
    %v6287 = vsub.f32 %v5694, %v5981
    %v6288 = vsub.f32 %v5695, %v5986
    %v6289 = vsub.f32 %v5696, %v5991
    %v6290 = vsub.f32 %v5697, %v5996
    %v6291 = vsub.f32 %v5698, %v6001
    %v6292 = vsub.f32 %v5699, %v6006
    %v6293 = vsub.f32 %v5700, %v6011
    %v6294 = vsub.f32 %v5701, %v6016
    %v6295 = vsub.f32 %v5702, %v6021
    %v6296 = vsub.f32 %v5703, %v6026
    %v6297 = vsub.f32 %v5704, %v6031
    %v6298 = vsub.f32 %v5705, %v6036
    %v6299 = vsub.f32 %v5706, %v6041
    %v6300 = vsub.f32 %v5707, %v6046
    %v6301 = vsub.f32 %v5708, %v6051
    %v6302 = vsub.f32 %v5709, %v6056
    %v6303 = vsub.f32 %v5710, %v6061
    %v6304 = vsub.f32 %v5711, %v6066
    %v6305 = vsub.f32 %v5712, %v6071
    %v6306 = vsub.f32 %v5713, %v6076
    %v6307 = vsub.f32 %v5714, %v6081
    %v6308 = vsub.f32 %v5715, %v6086
    %v6309 = vsub.f32 %v5716, %v6091
    %v6310 = vsub.f32 %v5717, %v6096
    %v6311 = vsub.f32 %v5718, %v6101
    %v6312 = vsub.f32 %v5719, %v6106
    %v6313 = vsub.f32 %v5720, %v6111
    %v6314 = vsub.f32 %v5721, %v6116
    %v6315 = vsub.f32 %v5722, %v6121
    %v6316 = vsub.f32 %v5723, %v6126
    %v6317 = vsub.f32 %v5724, %v6131
    %v6318 = vsub.f32 %v5725, %v6136
    %v6319 = vsub.f32 %v5726, %v6141
    %v6320 = vsub.f32 %v5727, %v6146
    %v6321 = vsub.f32 %v5728, %v6151
    %v6322 = vsub.f32 %v5729, %v6156
    %v6323 = vsub.f32 %v5730, %v6161
    %v6324 = vsub.f32 %v5731, %v6166
    %v6325 = vsub.f32 %v5732, %v6171
    %v6326 = vsub.f32 %v5733, %v6176
    %v6327 = vsub.f32 %v5734, %v6181
    %v6328 = vsub.f32 %v5735, %v6186
    %v6329 = vsub.f32 %v5736, %v6191
    %v6330 = vsub.f32 %v5737, %v6196
    %v6331 = vsub.f32 %v5738, %v6201
    %v6332 = vsub.f32 %v5739, %v6206
    %v6333 = vsub.f32 %v5740, %v6211
    %v6334 = vsub.f32 %v5741, %v6216
    %v6335 = vsub.f32 %v5742, %v6221
    %v6336 = vsub.f32 %v5743, %v6226
    %v6337 = vsub.f32 %v5744, %v6231
    %v6338 = vsub.f32 %v5745, %v6236
    %v6339 = vsub.f32 %v5746, %v6241
    %v6340 = vsub.f32 %v5747, %v6246
    %v6341 = vsub.f32 %v5748, %v6251
    %v6342 = vsub.f32 %v5749, %v6256
    %v6343 = vsub.f32 %v5750, %v6261
    %v6344 = vsub.f32 %v5751, %v6266
    %v6345 = vsub.f32 %v5752, %v6271
    %v6346 = vsub.f32 %v5753, %v6276
    %v6347 = vsub.f32 %v5754, %v6281
    %v6348 = vmul.f32 %v6284, %v6284
    %v6349 = vmul.f32 %v6285, %v6285
    %v6350 = vmul.f32 %v6286, %v6286
    %v6351 = vmul.f32 %v6287, %v6287
    %v6352 = vmul.f32 %v6288, %v6288
    %v6353 = vmul.f32 %v6289, %v6289
    %v6354 = vmul.f32 %v6290, %v6290
    %v6355 = vmul.f32 %v6291, %v6291
    %v6356 = vmul.f32 %v6292, %v6292
    %v6357 = vmul.f32 %v6293, %v6293
    %v6358 = vmul.f32 %v6294, %v6294
    %v6359 = vmul.f32 %v6295, %v6295
    %v6360 = vmul.f32 %v6296, %v6296
    %v6361 = vmul.f32 %v6297, %v6297
    %v6362 = vmul.f32 %v6298, %v6298
    %v6363 = vmul.f32 %v6299, %v6299
    %v6364 = vmul.f32 %v6300, %v6300
    %v6365 = vmul.f32 %v6301, %v6301
    %v6366 = vmul.f32 %v6302, %v6302
    %v6367 = vmul.f32 %v6303, %v6303
    %v6368 = vmul.f32 %v6304, %v6304
    %v6369 = vmul.f32 %v6305, %v6305
    %v6370 = vmul.f32 %v6306, %v6306
    %v6371 = vmul.f32 %v6307, %v6307
    %v6372 = vmul.f32 %v6308, %v6308
    %v6373 = vmul.f32 %v6309, %v6309
    %v6374 = vmul.f32 %v6310, %v6310
    %v6375 = vmul.f32 %v6311, %v6311
    %v6376 = vmul.f32 %v6312, %v6312
    %v6377 = vmul.f32 %v6313, %v6313
    %v6378 = vmul.f32 %v6314, %v6314
    %v6379 = vmul.f32 %v6315, %v6315
    %v6380 = vmul.f32 %v6316, %v6316
    %v6381 = vmul.f32 %v6317, %v6317
    %v6382 = vmul.f32 %v6318, %v6318
    %v6383 = vmul.f32 %v6319, %v6319
    %v6384 = vmul.f32 %v6320, %v6320
    %v6385 = vmul.f32 %v6321, %v6321
    %v6386 = vmul.f32 %v6322, %v6322
    %v6387 = vmul.f32 %v6323, %v6323
    %v6388 = vmul.f32 %v6324, %v6324
    %v6389 = vmul.f32 %v6325, %v6325
    %v6390 = vmul.f32 %v6326, %v6326
    %v6391 = vmul.f32 %v6327, %v6327
    %v6392 = vmul.f32 %v6328, %v6328
    %v6393 = vmul.f32 %v6329, %v6329
    %v6394 = vmul.f32 %v6330, %v6330
    %v6395 = vmul.f32 %v6331, %v6331
    %v6396 = vmul.f32 %v6332, %v6332
    %v6397 = vmul.f32 %v6333, %v6333
    %v6398 = vmul.f32 %v6334, %v6334
    %v6399 = vmul.f32 %v6335, %v6335
    %v6400 = vmul.f32 %v6336, %v6336
    %v6401 = vmul.f32 %v6337, %v6337
    %v6402 = vmul.f32 %v6338, %v6338
    %v6403 = vmul.f32 %v6339, %v6339
    %v6404 = vmul.f32 %v6340, %v6340
    %v6405 = vmul.f32 %v6341, %v6341
    %v6406 = vmul.f32 %v6342, %v6342
    %v6407 = vmul.f32 %v6343, %v6343
    %v6408 = vmul.f32 %v6344, %v6344
    %v6409 = vmul.f32 %v6345, %v6345
    %v6410 = vmul.f32 %v6346, %v6346
    %v6411 = vmul.f32 %v6347, %v6347
    %v6412 = vsel %vm2873, %v6348, 0.0
    %6413 = vadd.xlane.f32.xlu0 %v6412
    %v6414 = vpop.xlane.xlu0 %6413
    %v6415 = vsel %vm2873, %v6349, 0.0
    %6416 = vadd.xlane.f32.xlu0 %v6415
    %v6417 = vpop.xlane.xlu0 %6416
    %v6418 = vsel %vm2873, %v6350, 0.0
    %6419 = vadd.xlane.f32.xlu0 %v6418
    %v6420 = vpop.xlane.xlu0 %6419
    %v6421 = vsel %vm2873, %v6351, 0.0
    %6422 = vadd.xlane.f32.xlu0 %v6421
    %v6423 = vpop.xlane.xlu0 %6422
    %v6424 = vsel %vm2873, %v6352, 0.0
    %6425 = vadd.xlane.f32.xlu0 %v6424
    %v6426 = vpop.xlane.xlu0 %6425
    %v6427 = vsel %vm2873, %v6353, 0.0
    %6428 = vadd.xlane.f32.xlu0 %v6427
    %v6429 = vpop.xlane.xlu0 %6428
    %v6430 = vsel %vm2873, %v6354, 0.0
    %6431 = vadd.xlane.f32.xlu0 %v6430
    %v6432 = vpop.xlane.xlu0 %6431
    %v6433 = vsel %vm2873, %v6355, 0.0
    %6434 = vadd.xlane.f32.xlu0 %v6433
    %v6435 = vpop.xlane.xlu0 %6434
    %v6436 = vsel %vm2873, %v6356, 0.0
    %6437 = vadd.xlane.f32.xlu0 %v6436
    %v6438 = vpop.xlane.xlu0 %6437
    %v6439 = vsel %vm2873, %v6357, 0.0
    %6440 = vadd.xlane.f32.xlu0 %v6439
    %v6441 = vpop.xlane.xlu0 %6440
    %v6442 = vsel %vm2873, %v6358, 0.0
    %6443 = vadd.xlane.f32.xlu0 %v6442
    %v6444 = vpop.xlane.xlu0 %6443
    %v6445 = vsel %vm2873, %v6359, 0.0
    %6446 = vadd.xlane.f32.xlu0 %v6445
    %v6447 = vpop.xlane.xlu0 %6446
    %v6448 = vsel %vm2873, %v6360, 0.0
    %6449 = vadd.xlane.f32.xlu0 %v6448
    %v6450 = vpop.xlane.xlu0 %6449
    %v6451 = vsel %vm2873, %v6361, 0.0
    %6452 = vadd.xlane.f32.xlu0 %v6451
    %v6453 = vpop.xlane.xlu0 %6452
    %v6454 = vsel %vm2873, %v6362, 0.0
    %6455 = vadd.xlane.f32.xlu0 %v6454
    %v6456 = vpop.xlane.xlu0 %6455
    %v6457 = vsel %vm2873, %v6363, 0.0
    %6458 = vadd.xlane.f32.xlu0 %v6457
    %v6459 = vpop.xlane.xlu0 %6458
    %v6460 = vsel %vm2873, %v6364, 0.0
    %6461 = vadd.xlane.f32.xlu0 %v6460
    %v6462 = vpop.xlane.xlu0 %6461
    %v6463 = vsel %vm2873, %v6365, 0.0
    %6464 = vadd.xlane.f32.xlu0 %v6463
    %v6465 = vpop.xlane.xlu0 %6464
    %v6466 = vsel %vm2873, %v6366, 0.0
    %6467 = vadd.xlane.f32.xlu0 %v6466
    %v6468 = vpop.xlane.xlu0 %6467
    %v6469 = vsel %vm2873, %v6367, 0.0
    %6470 = vadd.xlane.f32.xlu0 %v6469
    %v6471 = vpop.xlane.xlu0 %6470
    %v6472 = vsel %vm2873, %v6368, 0.0
    %6473 = vadd.xlane.f32.xlu0 %v6472
    %v6474 = vpop.xlane.xlu0 %6473
    %v6475 = vsel %vm2873, %v6369, 0.0
    %6476 = vadd.xlane.f32.xlu0 %v6475
    %v6477 = vpop.xlane.xlu0 %6476
    %v6478 = vsel %vm2873, %v6370, 0.0
    %6479 = vadd.xlane.f32.xlu0 %v6478
    %v6480 = vpop.xlane.xlu0 %6479
    %v6481 = vsel %vm2873, %v6371, 0.0
    %6482 = vadd.xlane.f32.xlu0 %v6481
    %v6483 = vpop.xlane.xlu0 %6482
    %v6484 = vsel %vm2873, %v6372, 0.0
    %6485 = vadd.xlane.f32.xlu0 %v6484
    %v6486 = vpop.xlane.xlu0 %6485
    %v6487 = vsel %vm2873, %v6373, 0.0
    %6488 = vadd.xlane.f32.xlu0 %v6487
    %v6489 = vpop.xlane.xlu0 %6488
    %v6490 = vsel %vm2873, %v6374, 0.0
    %6491 = vadd.xlane.f32.xlu0 %v6490
    %v6492 = vpop.xlane.xlu0 %6491
    %v6493 = vsel %vm2873, %v6375, 0.0
    %6494 = vadd.xlane.f32.xlu0 %v6493
    %v6495 = vpop.xlane.xlu0 %6494
    %v6496 = vsel %vm2873, %v6376, 0.0
    %6497 = vadd.xlane.f32.xlu0 %v6496
    %v6498 = vpop.xlane.xlu0 %6497
    %v6499 = vsel %vm2873, %v6377, 0.0
    %6500 = vadd.xlane.f32.xlu0 %v6499
    %v6501 = vpop.xlane.xlu0 %6500
    %v6502 = vsel %vm2873, %v6378, 0.0
    %6503 = vadd.xlane.f32.xlu0 %v6502
    %v6504 = vpop.xlane.xlu0 %6503
    %v6505 = vsel %vm2873, %v6379, 0.0
    %6506 = vadd.xlane.f32.xlu0 %v6505
    %v6507 = vpop.xlane.xlu0 %6506
    %v6508 = vsel %vm2873, %v6380, 0.0
    %6509 = vadd.xlane.f32.xlu0 %v6508
    %v6510 = vpop.xlane.xlu0 %6509
    %v6511 = vsel %vm2873, %v6381, 0.0
    %6512 = vadd.xlane.f32.xlu0 %v6511
    %v6513 = vpop.xlane.xlu0 %6512
    %v6514 = vsel %vm2873, %v6382, 0.0
    %6515 = vadd.xlane.f32.xlu0 %v6514
    %v6516 = vpop.xlane.xlu0 %6515
    %v6517 = vsel %vm2873, %v6383, 0.0
    %6518 = vadd.xlane.f32.xlu0 %v6517
    %v6519 = vpop.xlane.xlu0 %6518
    %v6520 = vsel %vm2873, %v6384, 0.0
    %6521 = vadd.xlane.f32.xlu0 %v6520
    %v6522 = vpop.xlane.xlu0 %6521
    %v6523 = vsel %vm2873, %v6385, 0.0
    %6524 = vadd.xlane.f32.xlu0 %v6523
    %v6525 = vpop.xlane.xlu0 %6524
    %v6526 = vsel %vm2873, %v6386, 0.0
    %6527 = vadd.xlane.f32.xlu0 %v6526
    %v6528 = vpop.xlane.xlu0 %6527
    %v6529 = vsel %vm2873, %v6387, 0.0
    %6530 = vadd.xlane.f32.xlu0 %v6529
    %v6531 = vpop.xlane.xlu0 %6530
    %v6532 = vsel %vm2873, %v6388, 0.0
    %6533 = vadd.xlane.f32.xlu0 %v6532
    %v6534 = vpop.xlane.xlu0 %6533
    %v6535 = vsel %vm2873, %v6389, 0.0
    %6536 = vadd.xlane.f32.xlu0 %v6535
    %v6537 = vpop.xlane.xlu0 %6536
    %v6538 = vsel %vm2873, %v6390, 0.0
    %6539 = vadd.xlane.f32.xlu0 %v6538
    %v6540 = vpop.xlane.xlu0 %6539
    %v6541 = vsel %vm2873, %v6391, 0.0
    %6542 = vadd.xlane.f32.xlu0 %v6541
    %v6543 = vpop.xlane.xlu0 %6542
    %v6544 = vsel %vm2873, %v6392, 0.0
    %6545 = vadd.xlane.f32.xlu0 %v6544
    %v6546 = vpop.xlane.xlu0 %6545
    %v6547 = vsel %vm2873, %v6393, 0.0
    %6548 = vadd.xlane.f32.xlu0 %v6547
    %v6549 = vpop.xlane.xlu0 %6548
    %v6550 = vsel %vm2873, %v6394, 0.0
    %6551 = vadd.xlane.f32.xlu0 %v6550
    %v6552 = vpop.xlane.xlu0 %6551
    %v6553 = vsel %vm2873, %v6395, 0.0
    %6554 = vadd.xlane.f32.xlu0 %v6553
    %v6555 = vpop.xlane.xlu0 %6554
    %v6556 = vsel %vm2873, %v6396, 0.0
    %6557 = vadd.xlane.f32.xlu0 %v6556
    %v6558 = vpop.xlane.xlu0 %6557
    %v6559 = vsel %vm2873, %v6397, 0.0
    %6560 = vadd.xlane.f32.xlu0 %v6559
    %v6561 = vpop.xlane.xlu0 %6560
    %v6562 = vsel %vm2873, %v6398, 0.0
    %6563 = vadd.xlane.f32.xlu0 %v6562
    %v6564 = vpop.xlane.xlu0 %6563
    %v6565 = vsel %vm2873, %v6399, 0.0
    %6566 = vadd.xlane.f32.xlu0 %v6565
    %v6567 = vpop.xlane.xlu0 %6566
    %v6568 = vsel %vm2873, %v6400, 0.0
    %6569 = vadd.xlane.f32.xlu0 %v6568
    %v6570 = vpop.xlane.xlu0 %6569
    %v6571 = vsel %vm2873, %v6401, 0.0
    %6572 = vadd.xlane.f32.xlu0 %v6571
    %v6573 = vpop.xlane.xlu0 %6572
    %v6574 = vsel %vm2873, %v6402, 0.0
    %6575 = vadd.xlane.f32.xlu0 %v6574
    %v6576 = vpop.xlane.xlu0 %6575
    %v6577 = vsel %vm2873, %v6403, 0.0
    %6578 = vadd.xlane.f32.xlu0 %v6577
    %v6579 = vpop.xlane.xlu0 %6578
    %v6580 = vsel %vm2873, %v6404, 0.0
    %6581 = vadd.xlane.f32.xlu0 %v6580
    %v6582 = vpop.xlane.xlu0 %6581
    %v6583 = vsel %vm2873, %v6405, 0.0
    %6584 = vadd.xlane.f32.xlu0 %v6583
    %v6585 = vpop.xlane.xlu0 %6584
    %v6586 = vsel %vm2873, %v6406, 0.0
    %6587 = vadd.xlane.f32.xlu0 %v6586
    %v6588 = vpop.xlane.xlu0 %6587
    %v6589 = vsel %vm2873, %v6407, 0.0
    %6590 = vadd.xlane.f32.xlu0 %v6589
    %v6591 = vpop.xlane.xlu0 %6590
    %v6592 = vsel %vm2873, %v6408, 0.0
    %6593 = vadd.xlane.f32.xlu0 %v6592
    %v6594 = vpop.xlane.xlu0 %6593
    %v6595 = vsel %vm2873, %v6409, 0.0
    %6596 = vadd.xlane.f32.xlu0 %v6595
    %v6597 = vpop.xlane.xlu0 %6596
    %v6598 = vsel %vm2873, %v6410, 0.0
    %6599 = vadd.xlane.f32.xlu0 %v6598
    %v6600 = vpop.xlane.xlu0 %6599
    %v6601 = vsel %vm2873, %v6411, 0.0
    %6602 = vadd.xlane.f32.xlu0 %v6601
    %v6603 = vpop.xlane.xlu0 %6602
    %v6604 = vrsqrt.pop %v6414
    %v6605 = vmul.f32 %v6414, %v6604
    %vm6606 = vcmp.eq.f32.partialorder %v6414, inf
    %v6607 = vsel %vm6606, %v6414, %v6605
    %vm6608 = vcmp.eq.f32.partialorder %v6414, 0.0
    %v6609 = vand.u32 %v6414, 2147483648
    %v6610 = vsel %vm6608, %v6609, %v6607
    %v6611 = vrsqrt.pop %v6417
    %v6612 = vmul.f32 %v6417, %v6611
    %vm6613 = vcmp.eq.f32.partialorder %v6417, inf
    %v6614 = vsel %vm6613, %v6417, %v6612
    %vm6615 = vcmp.eq.f32.partialorder %v6417, 0.0
    %v6616 = vand.u32 %v6417, 2147483648
    %v6617 = vsel %vm6615, %v6616, %v6614
    %v6618 = vrsqrt.pop %v6420
    %v6619 = vmul.f32 %v6420, %v6618
    %vm6620 = vcmp.eq.f32.partialorder %v6420, inf
    %v6621 = vsel %vm6620, %v6420, %v6619
    %vm6622 = vcmp.eq.f32.partialorder %v6420, 0.0
    %v6623 = vand.u32 %v6420, 2147483648
    %v6624 = vsel %vm6622, %v6623, %v6621
    %v6625 = vrsqrt.pop %v6423
    %v6626 = vmul.f32 %v6423, %v6625
    %vm6627 = vcmp.eq.f32.partialorder %v6423, inf
    %v6628 = vsel %vm6627, %v6423, %v6626
    %vm6629 = vcmp.eq.f32.partialorder %v6423, 0.0
    %v6630 = vand.u32 %v6423, 2147483648
    %v6631 = vsel %vm6629, %v6630, %v6628
    %v6632 = vrsqrt.pop %v6426
    %v6633 = vmul.f32 %v6426, %v6632
    %vm6634 = vcmp.eq.f32.partialorder %v6426, inf
    %v6635 = vsel %vm6634, %v6426, %v6633
    %vm6636 = vcmp.eq.f32.partialorder %v6426, 0.0
    %v6637 = vand.u32 %v6426, 2147483648
    %v6638 = vsel %vm6636, %v6637, %v6635
    %v6639 = vrsqrt.pop %v6429
    %v6640 = vmul.f32 %v6429, %v6639
    %vm6641 = vcmp.eq.f32.partialorder %v6429, inf
    %v6642 = vsel %vm6641, %v6429, %v6640
    %vm6643 = vcmp.eq.f32.partialorder %v6429, 0.0
    %v6644 = vand.u32 %v6429, 2147483648
    %v6645 = vsel %vm6643, %v6644, %v6642
    %v6646 = vrsqrt.pop %v6432
    %v6647 = vmul.f32 %v6432, %v6646
    %vm6648 = vcmp.eq.f32.partialorder %v6432, inf
    %v6649 = vsel %vm6648, %v6432, %v6647
    %vm6650 = vcmp.eq.f32.partialorder %v6432, 0.0
    %v6651 = vand.u32 %v6432, 2147483648
    %v6652 = vsel %vm6650, %v6651, %v6649
    %v6653 = vrsqrt.pop %v6435
    %v6654 = vmul.f32 %v6435, %v6653
    %vm6655 = vcmp.eq.f32.partialorder %v6435, inf
    %v6656 = vsel %vm6655, %v6435, %v6654
    %vm6657 = vcmp.eq.f32.partialorder %v6435, 0.0
    %v6658 = vand.u32 %v6435, 2147483648
    %v6659 = vsel %vm6657, %v6658, %v6656
    %v6660 = vrsqrt.pop %v6438
    %v6661 = vmul.f32 %v6438, %v6660
    %vm6662 = vcmp.eq.f32.partialorder %v6438, inf
    %v6663 = vsel %vm6662, %v6438, %v6661
    %vm6664 = vcmp.eq.f32.partialorder %v6438, 0.0
    %v6665 = vand.u32 %v6438, 2147483648
    %v6666 = vsel %vm6664, %v6665, %v6663
    %v6667 = vrsqrt.pop %v6441
    %v6668 = vmul.f32 %v6441, %v6667
    %vm6669 = vcmp.eq.f32.partialorder %v6441, inf
    %v6670 = vsel %vm6669, %v6441, %v6668
    %vm6671 = vcmp.eq.f32.partialorder %v6441, 0.0
    %v6672 = vand.u32 %v6441, 2147483648
    %v6673 = vsel %vm6671, %v6672, %v6670
    %v6674 = vrsqrt.pop %v6444
    %v6675 = vmul.f32 %v6444, %v6674
    %vm6676 = vcmp.eq.f32.partialorder %v6444, inf
    %v6677 = vsel %vm6676, %v6444, %v6675
    %vm6678 = vcmp.eq.f32.partialorder %v6444, 0.0
    %v6679 = vand.u32 %v6444, 2147483648
    %v6680 = vsel %vm6678, %v6679, %v6677
    %v6681 = vrsqrt.pop %v6447
    %v6682 = vmul.f32 %v6447, %v6681
    %vm6683 = vcmp.eq.f32.partialorder %v6447, inf
    %v6684 = vsel %vm6683, %v6447, %v6682
    %vm6685 = vcmp.eq.f32.partialorder %v6447, 0.0
    %v6686 = vand.u32 %v6447, 2147483648
    %v6687 = vsel %vm6685, %v6686, %v6684
    %v6688 = vrsqrt.pop %v6450
    %v6689 = vmul.f32 %v6450, %v6688
    %vm6690 = vcmp.eq.f32.partialorder %v6450, inf
    %v6691 = vsel %vm6690, %v6450, %v6689
    %vm6692 = vcmp.eq.f32.partialorder %v6450, 0.0
    %v6693 = vand.u32 %v6450, 2147483648
    %v6694 = vsel %vm6692, %v6693, %v6691
    %v6695 = vrsqrt.pop %v6453
    %v6696 = vmul.f32 %v6453, %v6695
    %vm6697 = vcmp.eq.f32.partialorder %v6453, inf
    %v6698 = vsel %vm6697, %v6453, %v6696
    %vm6699 = vcmp.eq.f32.partialorder %v6453, 0.0
    %v6700 = vand.u32 %v6453, 2147483648
    %v6701 = vsel %vm6699, %v6700, %v6698
    %v6702 = vrsqrt.pop %v6456
    %v6703 = vmul.f32 %v6456, %v6702
    %vm6704 = vcmp.eq.f32.partialorder %v6456, inf
    %v6705 = vsel %vm6704, %v6456, %v6703
    %vm6706 = vcmp.eq.f32.partialorder %v6456, 0.0
    %v6707 = vand.u32 %v6456, 2147483648
    %v6708 = vsel %vm6706, %v6707, %v6705
    %v6709 = vrsqrt.pop %v6459
    %v6710 = vmul.f32 %v6459, %v6709
    %vm6711 = vcmp.eq.f32.partialorder %v6459, inf
    %v6712 = vsel %vm6711, %v6459, %v6710
    %vm6713 = vcmp.eq.f32.partialorder %v6459, 0.0
    %v6714 = vand.u32 %v6459, 2147483648
    %v6715 = vsel %vm6713, %v6714, %v6712
    %v6716 = vrsqrt.pop %v6462
    %v6717 = vmul.f32 %v6462, %v6716
    %vm6718 = vcmp.eq.f32.partialorder %v6462, inf
    %v6719 = vsel %vm6718, %v6462, %v6717
    %vm6720 = vcmp.eq.f32.partialorder %v6462, 0.0
    %v6721 = vand.u32 %v6462, 2147483648
    %v6722 = vsel %vm6720, %v6721, %v6719
    %v6723 = vrsqrt.pop %v6465
    %v6724 = vmul.f32 %v6465, %v6723
    %vm6725 = vcmp.eq.f32.partialorder %v6465, inf
    %v6726 = vsel %vm6725, %v6465, %v6724
    %vm6727 = vcmp.eq.f32.partialorder %v6465, 0.0
    %v6728 = vand.u32 %v6465, 2147483648
    %v6729 = vsel %vm6727, %v6728, %v6726
    %v6730 = vrsqrt.pop %v6468
    %v6731 = vmul.f32 %v6468, %v6730
    %vm6732 = vcmp.eq.f32.partialorder %v6468, inf
    %v6733 = vsel %vm6732, %v6468, %v6731
    %vm6734 = vcmp.eq.f32.partialorder %v6468, 0.0
    %v6735 = vand.u32 %v6468, 2147483648
    %v6736 = vsel %vm6734, %v6735, %v6733
    %v6737 = vrsqrt.pop %v6471
    %v6738 = vmul.f32 %v6471, %v6737
    %vm6739 = vcmp.eq.f32.partialorder %v6471, inf
    %v6740 = vsel %vm6739, %v6471, %v6738
    %vm6741 = vcmp.eq.f32.partialorder %v6471, 0.0
    %v6742 = vand.u32 %v6471, 2147483648
    %v6743 = vsel %vm6741, %v6742, %v6740
    %v6744 = vrsqrt.pop %v6474
    %v6745 = vmul.f32 %v6474, %v6744
    %vm6746 = vcmp.eq.f32.partialorder %v6474, inf
    %v6747 = vsel %vm6746, %v6474, %v6745
    %vm6748 = vcmp.eq.f32.partialorder %v6474, 0.0
    %v6749 = vand.u32 %v6474, 2147483648
    %v6750 = vsel %vm6748, %v6749, %v6747
    %v6751 = vrsqrt.pop %v6477
    %v6752 = vmul.f32 %v6477, %v6751
    %vm6753 = vcmp.eq.f32.partialorder %v6477, inf
    %v6754 = vsel %vm6753, %v6477, %v6752
    %vm6755 = vcmp.eq.f32.partialorder %v6477, 0.0
    %v6756 = vand.u32 %v6477, 2147483648
    %v6757 = vsel %vm6755, %v6756, %v6754
    %v6758 = vrsqrt.pop %v6480
    %v6759 = vmul.f32 %v6480, %v6758
    %vm6760 = vcmp.eq.f32.partialorder %v6480, inf
    %v6761 = vsel %vm6760, %v6480, %v6759
    %vm6762 = vcmp.eq.f32.partialorder %v6480, 0.0
    %v6763 = vand.u32 %v6480, 2147483648
    %v6764 = vsel %vm6762, %v6763, %v6761
    %v6765 = vrsqrt.pop %v6483
    %v6766 = vmul.f32 %v6483, %v6765
    %vm6767 = vcmp.eq.f32.partialorder %v6483, inf
    %v6768 = vsel %vm6767, %v6483, %v6766
    %vm6769 = vcmp.eq.f32.partialorder %v6483, 0.0
    %v6770 = vand.u32 %v6483, 2147483648
    %v6771 = vsel %vm6769, %v6770, %v6768
    %v6772 = vrsqrt.pop %v6486
    %v6773 = vmul.f32 %v6486, %v6772
    %vm6774 = vcmp.eq.f32.partialorder %v6486, inf
    %v6775 = vsel %vm6774, %v6486, %v6773
    %vm6776 = vcmp.eq.f32.partialorder %v6486, 0.0
    %v6777 = vand.u32 %v6486, 2147483648
    %v6778 = vsel %vm6776, %v6777, %v6775
    %v6779 = vrsqrt.pop %v6489
    %v6780 = vmul.f32 %v6489, %v6779
    %vm6781 = vcmp.eq.f32.partialorder %v6489, inf
    %v6782 = vsel %vm6781, %v6489, %v6780
    %vm6783 = vcmp.eq.f32.partialorder %v6489, 0.0
    %v6784 = vand.u32 %v6489, 2147483648
    %v6785 = vsel %vm6783, %v6784, %v6782
    %v6786 = vrsqrt.pop %v6492
    %v6787 = vmul.f32 %v6492, %v6786
    %vm6788 = vcmp.eq.f32.partialorder %v6492, inf
    %v6789 = vsel %vm6788, %v6492, %v6787
    %vm6790 = vcmp.eq.f32.partialorder %v6492, 0.0
    %v6791 = vand.u32 %v6492, 2147483648
    %v6792 = vsel %vm6790, %v6791, %v6789
    %v6793 = vrsqrt.pop %v6495
    %v6794 = vmul.f32 %v6495, %v6793
    %vm6795 = vcmp.eq.f32.partialorder %v6495, inf
    %v6796 = vsel %vm6795, %v6495, %v6794
    %vm6797 = vcmp.eq.f32.partialorder %v6495, 0.0
    %v6798 = vand.u32 %v6495, 2147483648
    %v6799 = vsel %vm6797, %v6798, %v6796
    %v6800 = vrsqrt.pop %v6498
    %v6801 = vmul.f32 %v6498, %v6800
    %vm6802 = vcmp.eq.f32.partialorder %v6498, inf
    %v6803 = vsel %vm6802, %v6498, %v6801
    %vm6804 = vcmp.eq.f32.partialorder %v6498, 0.0
    %v6805 = vand.u32 %v6498, 2147483648
    %v6806 = vsel %vm6804, %v6805, %v6803
    %v6807 = vrsqrt.pop %v6501
    %v6808 = vmul.f32 %v6501, %v6807
    %vm6809 = vcmp.eq.f32.partialorder %v6501, inf
    %v6810 = vsel %vm6809, %v6501, %v6808
    %vm6811 = vcmp.eq.f32.partialorder %v6501, 0.0
    %v6812 = vand.u32 %v6501, 2147483648
    %v6813 = vsel %vm6811, %v6812, %v6810
    %v6814 = vrsqrt.pop %v6504
    %v6815 = vmul.f32 %v6504, %v6814
    %vm6816 = vcmp.eq.f32.partialorder %v6504, inf
    %v6817 = vsel %vm6816, %v6504, %v6815
    %vm6818 = vcmp.eq.f32.partialorder %v6504, 0.0
    %v6819 = vand.u32 %v6504, 2147483648
    %v6820 = vsel %vm6818, %v6819, %v6817
    %v6821 = vrsqrt.pop %v6507
    %v6822 = vmul.f32 %v6507, %v6821
    %vm6823 = vcmp.eq.f32.partialorder %v6507, inf
    %v6824 = vsel %vm6823, %v6507, %v6822
    %vm6825 = vcmp.eq.f32.partialorder %v6507, 0.0
    %v6826 = vand.u32 %v6507, 2147483648
    %v6827 = vsel %vm6825, %v6826, %v6824
    %v6828 = vrsqrt.pop %v6510
    %v6829 = vmul.f32 %v6510, %v6828
    %vm6830 = vcmp.eq.f32.partialorder %v6510, inf
    %v6831 = vsel %vm6830, %v6510, %v6829
    %vm6832 = vcmp.eq.f32.partialorder %v6510, 0.0
    %v6833 = vand.u32 %v6510, 2147483648
    %v6834 = vsel %vm6832, %v6833, %v6831
    %v6835 = vrsqrt.pop %v6513
    %v6836 = vmul.f32 %v6513, %v6835
    %vm6837 = vcmp.eq.f32.partialorder %v6513, inf
    %v6838 = vsel %vm6837, %v6513, %v6836
    %vm6839 = vcmp.eq.f32.partialorder %v6513, 0.0
    %v6840 = vand.u32 %v6513, 2147483648
    %v6841 = vsel %vm6839, %v6840, %v6838
    %v6842 = vrsqrt.pop %v6516
    %v6843 = vmul.f32 %v6516, %v6842
    %vm6844 = vcmp.eq.f32.partialorder %v6516, inf
    %v6845 = vsel %vm6844, %v6516, %v6843
    %vm6846 = vcmp.eq.f32.partialorder %v6516, 0.0
    %v6847 = vand.u32 %v6516, 2147483648
    %v6848 = vsel %vm6846, %v6847, %v6845
    %v6849 = vrsqrt.pop %v6519
    %v6850 = vmul.f32 %v6519, %v6849
    %vm6851 = vcmp.eq.f32.partialorder %v6519, inf
    %v6852 = vsel %vm6851, %v6519, %v6850
    %vm6853 = vcmp.eq.f32.partialorder %v6519, 0.0
    %v6854 = vand.u32 %v6519, 2147483648
    %v6855 = vsel %vm6853, %v6854, %v6852
    %v6856 = vrsqrt.pop %v6522
    %v6857 = vmul.f32 %v6522, %v6856
    %vm6858 = vcmp.eq.f32.partialorder %v6522, inf
    %v6859 = vsel %vm6858, %v6522, %v6857
    %vm6860 = vcmp.eq.f32.partialorder %v6522, 0.0
    %v6861 = vand.u32 %v6522, 2147483648
    %v6862 = vsel %vm6860, %v6861, %v6859
    %v6863 = vrsqrt.pop %v6525
    %v6864 = vmul.f32 %v6525, %v6863
    %vm6865 = vcmp.eq.f32.partialorder %v6525, inf
    %v6866 = vsel %vm6865, %v6525, %v6864
    %vm6867 = vcmp.eq.f32.partialorder %v6525, 0.0
    %v6868 = vand.u32 %v6525, 2147483648
    %v6869 = vsel %vm6867, %v6868, %v6866
    %v6870 = vrsqrt.pop %v6528
    %v6871 = vmul.f32 %v6528, %v6870
    %vm6872 = vcmp.eq.f32.partialorder %v6528, inf
    %v6873 = vsel %vm6872, %v6528, %v6871
    %vm6874 = vcmp.eq.f32.partialorder %v6528, 0.0
    %v6875 = vand.u32 %v6528, 2147483648
    %v6876 = vsel %vm6874, %v6875, %v6873
    %v6877 = vrsqrt.pop %v6531
    %v6878 = vmul.f32 %v6531, %v6877
    %vm6879 = vcmp.eq.f32.partialorder %v6531, inf
    %v6880 = vsel %vm6879, %v6531, %v6878
    %vm6881 = vcmp.eq.f32.partialorder %v6531, 0.0
    %v6882 = vand.u32 %v6531, 2147483648
    %v6883 = vsel %vm6881, %v6882, %v6880
    %v6884 = vrsqrt.pop %v6534
    %v6885 = vmul.f32 %v6534, %v6884
    %vm6886 = vcmp.eq.f32.partialorder %v6534, inf
    %v6887 = vsel %vm6886, %v6534, %v6885
    %vm6888 = vcmp.eq.f32.partialorder %v6534, 0.0
    %v6889 = vand.u32 %v6534, 2147483648
    %v6890 = vsel %vm6888, %v6889, %v6887
    %v6891 = vrsqrt.pop %v6537
    %v6892 = vmul.f32 %v6537, %v6891
    %vm6893 = vcmp.eq.f32.partialorder %v6537, inf
    %v6894 = vsel %vm6893, %v6537, %v6892
    %vm6895 = vcmp.eq.f32.partialorder %v6537, 0.0
    %v6896 = vand.u32 %v6537, 2147483648
    %v6897 = vsel %vm6895, %v6896, %v6894
    %v6898 = vrsqrt.pop %v6540
    %v6899 = vmul.f32 %v6540, %v6898
    %vm6900 = vcmp.eq.f32.partialorder %v6540, inf
    %v6901 = vsel %vm6900, %v6540, %v6899
    %vm6902 = vcmp.eq.f32.partialorder %v6540, 0.0
    %v6903 = vand.u32 %v6540, 2147483648
    %v6904 = vsel %vm6902, %v6903, %v6901
    %v6905 = vrsqrt.pop %v6543
    %v6906 = vmul.f32 %v6543, %v6905
    %vm6907 = vcmp.eq.f32.partialorder %v6543, inf
    %v6908 = vsel %vm6907, %v6543, %v6906
    %vm6909 = vcmp.eq.f32.partialorder %v6543, 0.0
    %v6910 = vand.u32 %v6543, 2147483648
    %v6911 = vsel %vm6909, %v6910, %v6908
    %v6912 = vrsqrt.pop %v6546
    %v6913 = vmul.f32 %v6546, %v6912
    %vm6914 = vcmp.eq.f32.partialorder %v6546, inf
    %v6915 = vsel %vm6914, %v6546, %v6913
    %vm6916 = vcmp.eq.f32.partialorder %v6546, 0.0
    %v6917 = vand.u32 %v6546, 2147483648
    %v6918 = vsel %vm6916, %v6917, %v6915
    %v6919 = vrsqrt.pop %v6549
    %v6920 = vmul.f32 %v6549, %v6919
    %vm6921 = vcmp.eq.f32.partialorder %v6549, inf
    %v6922 = vsel %vm6921, %v6549, %v6920
    %vm6923 = vcmp.eq.f32.partialorder %v6549, 0.0
    %v6924 = vand.u32 %v6549, 2147483648
    %v6925 = vsel %vm6923, %v6924, %v6922
    %v6926 = vrsqrt.pop %v6552
    %v6927 = vmul.f32 %v6552, %v6926
    %vm6928 = vcmp.eq.f32.partialorder %v6552, inf
    %v6929 = vsel %vm6928, %v6552, %v6927
    %vm6930 = vcmp.eq.f32.partialorder %v6552, 0.0
    %v6931 = vand.u32 %v6552, 2147483648
    %v6932 = vsel %vm6930, %v6931, %v6929
    %v6933 = vrsqrt.pop %v6555
    %v6934 = vmul.f32 %v6555, %v6933
    %vm6935 = vcmp.eq.f32.partialorder %v6555, inf
    %v6936 = vsel %vm6935, %v6555, %v6934
    %vm6937 = vcmp.eq.f32.partialorder %v6555, 0.0
    %v6938 = vand.u32 %v6555, 2147483648
    %v6939 = vsel %vm6937, %v6938, %v6936
    %v6940 = vrsqrt.pop %v6558
    %v6941 = vmul.f32 %v6558, %v6940
    %vm6942 = vcmp.eq.f32.partialorder %v6558, inf
    %v6943 = vsel %vm6942, %v6558, %v6941
    %vm6944 = vcmp.eq.f32.partialorder %v6558, 0.0
    %v6945 = vand.u32 %v6558, 2147483648
    %v6946 = vsel %vm6944, %v6945, %v6943
    %v6947 = vrsqrt.pop %v6561
    %v6948 = vmul.f32 %v6561, %v6947
    %vm6949 = vcmp.eq.f32.partialorder %v6561, inf
    %v6950 = vsel %vm6949, %v6561, %v6948
    %vm6951 = vcmp.eq.f32.partialorder %v6561, 0.0
    %v6952 = vand.u32 %v6561, 2147483648
    %v6953 = vsel %vm6951, %v6952, %v6950
    %v6954 = vrsqrt.pop %v6564
    %v6955 = vmul.f32 %v6564, %v6954
    %vm6956 = vcmp.eq.f32.partialorder %v6564, inf
    %v6957 = vsel %vm6956, %v6564, %v6955
    %vm6958 = vcmp.eq.f32.partialorder %v6564, 0.0
    %v6959 = vand.u32 %v6564, 2147483648
    %v6960 = vsel %vm6958, %v6959, %v6957
    %v6961 = vrsqrt.pop %v6567
    %v6962 = vmul.f32 %v6567, %v6961
    %vm6963 = vcmp.eq.f32.partialorder %v6567, inf
    %v6964 = vsel %vm6963, %v6567, %v6962
    %vm6965 = vcmp.eq.f32.partialorder %v6567, 0.0
    %v6966 = vand.u32 %v6567, 2147483648
    %v6967 = vsel %vm6965, %v6966, %v6964
    %v6968 = vrsqrt.pop %v6570
    %v6969 = vmul.f32 %v6570, %v6968
    %vm6970 = vcmp.eq.f32.partialorder %v6570, inf
    %v6971 = vsel %vm6970, %v6570, %v6969
    %vm6972 = vcmp.eq.f32.partialorder %v6570, 0.0
    %v6973 = vand.u32 %v6570, 2147483648
    %v6974 = vsel %vm6972, %v6973, %v6971
    %v6975 = vrsqrt.pop %v6573
    %v6976 = vmul.f32 %v6573, %v6975
    %vm6977 = vcmp.eq.f32.partialorder %v6573, inf
    %v6978 = vsel %vm6977, %v6573, %v6976
    %vm6979 = vcmp.eq.f32.partialorder %v6573, 0.0
    %v6980 = vand.u32 %v6573, 2147483648
    %v6981 = vsel %vm6979, %v6980, %v6978
    %v6982 = vrsqrt.pop %v6576
    %v6983 = vmul.f32 %v6576, %v6982
    %vm6984 = vcmp.eq.f32.partialorder %v6576, inf
    %v6985 = vsel %vm6984, %v6576, %v6983
    %vm6986 = vcmp.eq.f32.partialorder %v6576, 0.0
    %v6987 = vand.u32 %v6576, 2147483648
    %v6988 = vsel %vm6986, %v6987, %v6985
    %v6989 = vrsqrt.pop %v6579
    %v6990 = vmul.f32 %v6579, %v6989
    %vm6991 = vcmp.eq.f32.partialorder %v6579, inf
    %v6992 = vsel %vm6991, %v6579, %v6990
    %vm6993 = vcmp.eq.f32.partialorder %v6579, 0.0
    %v6994 = vand.u32 %v6579, 2147483648
    %v6995 = vsel %vm6993, %v6994, %v6992
    %v6996 = vrsqrt.pop %v6582
    %v6997 = vmul.f32 %v6582, %v6996
    %vm6998 = vcmp.eq.f32.partialorder %v6582, inf
    %v6999 = vsel %vm6998, %v6582, %v6997
    %vm7000 = vcmp.eq.f32.partialorder %v6582, 0.0
    %v7001 = vand.u32 %v6582, 2147483648
    %v7002 = vsel %vm7000, %v7001, %v6999
    %v7003 = vrsqrt.pop %v6585
    %v7004 = vmul.f32 %v6585, %v7003
    %vm7005 = vcmp.eq.f32.partialorder %v6585, inf
    %v7006 = vsel %vm7005, %v6585, %v7004
    %vm7007 = vcmp.eq.f32.partialorder %v6585, 0.0
    %v7008 = vand.u32 %v6585, 2147483648
    %v7009 = vsel %vm7007, %v7008, %v7006
    %v7010 = vrsqrt.pop %v6588
    %v7011 = vmul.f32 %v6588, %v7010
    %vm7012 = vcmp.eq.f32.partialorder %v6588, inf
    %v7013 = vsel %vm7012, %v6588, %v7011
    %vm7014 = vcmp.eq.f32.partialorder %v6588, 0.0
    %v7015 = vand.u32 %v6588, 2147483648
    %v7016 = vsel %vm7014, %v7015, %v7013
    %v7017 = vrsqrt.pop %v6591
    %v7018 = vmul.f32 %v6591, %v7017
    %vm7019 = vcmp.eq.f32.partialorder %v6591, inf
    %v7020 = vsel %vm7019, %v6591, %v7018
    %vm7021 = vcmp.eq.f32.partialorder %v6591, 0.0
    %v7022 = vand.u32 %v6591, 2147483648
    %v7023 = vsel %vm7021, %v7022, %v7020
    %v7024 = vrsqrt.pop %v6594
    %v7025 = vmul.f32 %v6594, %v7024
    %vm7026 = vcmp.eq.f32.partialorder %v6594, inf
    %v7027 = vsel %vm7026, %v6594, %v7025
    %vm7028 = vcmp.eq.f32.partialorder %v6594, 0.0
    %v7029 = vand.u32 %v6594, 2147483648
    %v7030 = vsel %vm7028, %v7029, %v7027
    %v7031 = vrsqrt.pop %v6597
    %v7032 = vmul.f32 %v6597, %v7031
    %vm7033 = vcmp.eq.f32.partialorder %v6597, inf
    %v7034 = vsel %vm7033, %v6597, %v7032
    %vm7035 = vcmp.eq.f32.partialorder %v6597, 0.0
    %v7036 = vand.u32 %v6597, 2147483648
    %v7037 = vsel %vm7035, %v7036, %v7034
    %v7038 = vrsqrt.pop %v6600
    %v7039 = vmul.f32 %v6600, %v7038
    %vm7040 = vcmp.eq.f32.partialorder %v6600, inf
    %v7041 = vsel %vm7040, %v6600, %v7039
    %vm7042 = vcmp.eq.f32.partialorder %v6600, 0.0
    %v7043 = vand.u32 %v6600, 2147483648
    %v7044 = vsel %vm7042, %v7043, %v7041
    %v7045 = vrsqrt.pop %v6603
    %v7046 = vmul.f32 %v6603, %v7045
    %vm7047 = vcmp.eq.f32.partialorder %v6603, inf
    %v7048 = vsel %vm7047, %v6603, %v7046
    %vm7049 = vcmp.eq.f32.partialorder %v6603, 0.0
    %v7050 = vand.u32 %v6603, 2147483648
    %v7051 = vsel %vm7049, %v7050, %v7048
    %v7052 = vmax.f32 %v6610, 1e-12
    %v7053 = vmax.f32 %v6617, 1e-12
    %v7054 = vmax.f32 %v6624, 1e-12
    %v7055 = vmax.f32 %v6631, 1e-12
    %v7056 = vmax.f32 %v6638, 1e-12
    %v7057 = vmax.f32 %v6645, 1e-12
    %v7058 = vmax.f32 %v6652, 1e-12
    %v7059 = vmax.f32 %v6659, 1e-12
    %v7060 = vmax.f32 %v6666, 1e-12
    %v7061 = vmax.f32 %v6673, 1e-12
    %v7062 = vmax.f32 %v6680, 1e-12
    %v7063 = vmax.f32 %v6687, 1e-12
    %v7064 = vmax.f32 %v6694, 1e-12
    %v7065 = vmax.f32 %v6701, 1e-12
    %v7066 = vmax.f32 %v6708, 1e-12
    %v7067 = vmax.f32 %v6715, 1e-12
    %v7068 = vmax.f32 %v6722, 1e-12
    %v7069 = vmax.f32 %v6729, 1e-12
    %v7070 = vmax.f32 %v6736, 1e-12
    %v7071 = vmax.f32 %v6743, 1e-12
    %v7072 = vmax.f32 %v6750, 1e-12
    %v7073 = vmax.f32 %v6757, 1e-12
    %v7074 = vmax.f32 %v6764, 1e-12
    %v7075 = vmax.f32 %v6771, 1e-12
    %v7076 = vmax.f32 %v6778, 1e-12
    %v7077 = vmax.f32 %v6785, 1e-12
    %v7078 = vmax.f32 %v6792, 1e-12
    %v7079 = vmax.f32 %v6799, 1e-12
    %v7080 = vmax.f32 %v6806, 1e-12
    %v7081 = vmax.f32 %v6813, 1e-12
    %v7082 = vmax.f32 %v6820, 1e-12
    %v7083 = vmax.f32 %v6827, 1e-12
    %v7084 = vmax.f32 %v6834, 1e-12
    %v7085 = vmax.f32 %v6841, 1e-12
    %v7086 = vmax.f32 %v6848, 1e-12
    %v7087 = vmax.f32 %v6855, 1e-12
    %v7088 = vmax.f32 %v6862, 1e-12
    %v7089 = vmax.f32 %v6869, 1e-12
    %v7090 = vmax.f32 %v6876, 1e-12
    %v7091 = vmax.f32 %v6883, 1e-12
    %v7092 = vmax.f32 %v6890, 1e-12
    %v7093 = vmax.f32 %v6897, 1e-12
    %v7094 = vmax.f32 %v6904, 1e-12
    %v7095 = vmax.f32 %v6911, 1e-12
    %v7096 = vmax.f32 %v6918, 1e-12
    %v7097 = vmax.f32 %v6925, 1e-12
    %v7098 = vmax.f32 %v6932, 1e-12
    %v7099 = vmax.f32 %v6939, 1e-12
    %v7100 = vmax.f32 %v6946, 1e-12
    %v7101 = vmax.f32 %v6953, 1e-12
    %v7102 = vmax.f32 %v6960, 1e-12
    %v7103 = vmax.f32 %v6967, 1e-12
    %v7104 = vmax.f32 %v6974, 1e-12
    %v7105 = vmax.f32 %v6981, 1e-12
    %v7106 = vmax.f32 %v6988, 1e-12
    %v7107 = vmax.f32 %v6995, 1e-12
    %v7108 = vmax.f32 %v7002, 1e-12
    %v7109 = vmax.f32 %v7009, 1e-12
    %v7110 = vmax.f32 %v7016, 1e-12
    %v7111 = vmax.f32 %v7023, 1e-12
    %v7112 = vmax.f32 %v7030, 1e-12
    %v7113 = vmax.f32 %v7037, 1e-12
    %v7114 = vmax.f32 %v7044, 1e-12
    %v7115 = vmax.f32 %v7051, 1e-12
    %v7116 = vrcp.pop %v7052
    %v7117 = vmul.f32 %v6284, %v7116
    %v7118 = vrcp.pop %v7053
    %v7119 = vmul.f32 %v6285, %v7118
    %v7120 = vrcp.pop %v7054
    %v7121 = vmul.f32 %v6286, %v7120
    %v7122 = vrcp.pop %v7055
    %v7123 = vmul.f32 %v6287, %v7122
    %v7124 = vrcp.pop %v7056
    %v7125 = vmul.f32 %v6288, %v7124
    %v7126 = vrcp.pop %v7057
    %v7127 = vmul.f32 %v6289, %v7126
    %v7128 = vrcp.pop %v7058
    %v7129 = vmul.f32 %v6290, %v7128
    %v7130 = vrcp.pop %v7059
    %v7131 = vmul.f32 %v6291, %v7130
    %v7132 = vrcp.pop %v7060
    %v7133 = vmul.f32 %v6292, %v7132
    %v7134 = vrcp.pop %v7061
    %v7135 = vmul.f32 %v6293, %v7134
    %v7136 = vrcp.pop %v7062
    %v7137 = vmul.f32 %v6294, %v7136
    %v7138 = vrcp.pop %v7063
    %v7139 = vmul.f32 %v6295, %v7138
    %v7140 = vrcp.pop %v7064
    %v7141 = vmul.f32 %v6296, %v7140
    %v7142 = vrcp.pop %v7065
    %v7143 = vmul.f32 %v6297, %v7142
    %v7144 = vrcp.pop %v7066
    %v7145 = vmul.f32 %v6298, %v7144
    %v7146 = vrcp.pop %v7067
    %v7147 = vmul.f32 %v6299, %v7146
    %v7148 = vrcp.pop %v7068
    %v7149 = vmul.f32 %v6300, %v7148
    %v7150 = vrcp.pop %v7069
    %v7151 = vmul.f32 %v6301, %v7150
    %v7152 = vrcp.pop %v7070
    %v7153 = vmul.f32 %v6302, %v7152
    %v7154 = vrcp.pop %v7071
    %v7155 = vmul.f32 %v6303, %v7154
    %v7156 = vrcp.pop %v7072
    %v7157 = vmul.f32 %v6304, %v7156
    %v7158 = vrcp.pop %v7073
    %v7159 = vmul.f32 %v6305, %v7158
    %v7160 = vrcp.pop %v7074
    %v7161 = vmul.f32 %v6306, %v7160
    %v7162 = vrcp.pop %v7075
    %v7163 = vmul.f32 %v6307, %v7162
    %v7164 = vrcp.pop %v7076
    %v7165 = vmul.f32 %v6308, %v7164
    %v7166 = vrcp.pop %v7077
    %v7167 = vmul.f32 %v6309, %v7166
    %v7168 = vrcp.pop %v7078
    %v7169 = vmul.f32 %v6310, %v7168
    %v7170 = vrcp.pop %v7079
    %v7171 = vmul.f32 %v6311, %v7170
    %v7172 = vrcp.pop %v7080
    %v7173 = vmul.f32 %v6312, %v7172
    %v7174 = vrcp.pop %v7081
    %v7175 = vmul.f32 %v6313, %v7174
    %v7176 = vrcp.pop %v7082
    %v7177 = vmul.f32 %v6314, %v7176
    %v7178 = vrcp.pop %v7083
    %v7179 = vmul.f32 %v6315, %v7178
    %v7180 = vrcp.pop %v7084
    %v7181 = vmul.f32 %v6316, %v7180
    %v7182 = vrcp.pop %v7085
    %v7183 = vmul.f32 %v6317, %v7182
    %v7184 = vrcp.pop %v7086
    %v7185 = vmul.f32 %v6318, %v7184
    %v7186 = vrcp.pop %v7087
    %v7187 = vmul.f32 %v6319, %v7186
    %v7188 = vrcp.pop %v7088
    %v7189 = vmul.f32 %v6320, %v7188
    %v7190 = vrcp.pop %v7089
    %v7191 = vmul.f32 %v6321, %v7190
    %v7192 = vrcp.pop %v7090
    %v7193 = vmul.f32 %v6322, %v7192
    %v7194 = vrcp.pop %v7091
    %v7195 = vmul.f32 %v6323, %v7194
    %v7196 = vrcp.pop %v7092
    %v7197 = vmul.f32 %v6324, %v7196
    %v7198 = vrcp.pop %v7093
    %v7199 = vmul.f32 %v6325, %v7198
    %v7200 = vrcp.pop %v7094
    %v7201 = vmul.f32 %v6326, %v7200
    %v7202 = vrcp.pop %v7095
    %v7203 = vmul.f32 %v6327, %v7202
    %v7204 = vrcp.pop %v7096
    %v7205 = vmul.f32 %v6328, %v7204
    %v7206 = vrcp.pop %v7097
    %v7207 = vmul.f32 %v6329, %v7206
    %v7208 = vrcp.pop %v7098
    %v7209 = vmul.f32 %v6330, %v7208
    %v7210 = vrcp.pop %v7099
    %v7211 = vmul.f32 %v6331, %v7210
    %v7212 = vrcp.pop %v7100
    %v7213 = vmul.f32 %v6332, %v7212
    %v7214 = vrcp.pop %v7101
    %v7215 = vmul.f32 %v6333, %v7214
    %v7216 = vrcp.pop %v7102
    %v7217 = vmul.f32 %v6334, %v7216
    %v7218 = vrcp.pop %v7103
    %v7219 = vmul.f32 %v6335, %v7218
    %v7220 = vrcp.pop %v7104
    %v7221 = vmul.f32 %v6336, %v7220
    %v7222 = vrcp.pop %v7105
    %v7223 = vmul.f32 %v6337, %v7222
    %v7224 = vrcp.pop %v7106
    %v7225 = vmul.f32 %v6338, %v7224
    %v7226 = vrcp.pop %v7107
    %v7227 = vmul.f32 %v6339, %v7226
    %v7228 = vrcp.pop %v7108
    %v7229 = vmul.f32 %v6340, %v7228
    %v7230 = vrcp.pop %v7109
    %v7231 = vmul.f32 %v6341, %v7230
    %v7232 = vrcp.pop %v7110
    %v7233 = vmul.f32 %v6342, %v7232
    %v7234 = vrcp.pop %v7111
    %v7235 = vmul.f32 %v6343, %v7234
    %v7236 = vrcp.pop %v7112
    %v7237 = vmul.f32 %v6344, %v7236
    %v7238 = vrcp.pop %v7113
    %v7239 = vmul.f32 %v6345, %v7238
    %v7240 = vrcp.pop %v7114
    %v7241 = vmul.f32 %v6346, %v7240
    %v7242 = vrcp.pop %v7115
    %v7243 = vmul.f32 %v6347, %v7242
    %7245 = vset.pattern.permute.xlu0 0
    %7246 = vperm.xlu0 %7245, %v6284
    %v7247 = vpop.permute.xlu0 %7246
    %7250 = vset.pattern.permute.xlu0 0
    %7251 = vperm.xlu0 %7250, %v6285
    %v7252 = vpop.permute.xlu0 %7251
    %7255 = vset.pattern.permute.xlu0 0
    %7256 = vperm.xlu0 %7255, %v6286
    %v7257 = vpop.permute.xlu0 %7256
    %7260 = vset.pattern.permute.xlu0 0
    %7261 = vperm.xlu0 %7260, %v6287
    %v7262 = vpop.permute.xlu0 %7261
    %7265 = vset.pattern.permute.xlu0 0
    %7266 = vperm.xlu0 %7265, %v6288
    %v7267 = vpop.permute.xlu0 %7266
    %7270 = vset.pattern.permute.xlu0 0
    %7271 = vperm.xlu0 %7270, %v6289
    %v7272 = vpop.permute.xlu0 %7271
    %7275 = vset.pattern.permute.xlu0 0
    %7276 = vperm.xlu0 %7275, %v6290
    %v7277 = vpop.permute.xlu0 %7276
    %7280 = vset.pattern.permute.xlu0 0
    %7281 = vperm.xlu0 %7280, %v6291
    %v7282 = vpop.permute.xlu0 %7281
    %7285 = vset.pattern.permute.xlu0 0
    %7286 = vperm.xlu0 %7285, %v6292
    %v7287 = vpop.permute.xlu0 %7286
    %7290 = vset.pattern.permute.xlu0 0
    %7291 = vperm.xlu0 %7290, %v6293
    %v7292 = vpop.permute.xlu0 %7291
    %7295 = vset.pattern.permute.xlu0 0
    %7296 = vperm.xlu0 %7295, %v6294
    %v7297 = vpop.permute.xlu0 %7296
    %7300 = vset.pattern.permute.xlu0 0
    %7301 = vperm.xlu0 %7300, %v6295
    %v7302 = vpop.permute.xlu0 %7301
    %7305 = vset.pattern.permute.xlu0 0
    %7306 = vperm.xlu0 %7305, %v6296
    %v7307 = vpop.permute.xlu0 %7306
    %7310 = vset.pattern.permute.xlu0 0
    %7311 = vperm.xlu0 %7310, %v6297
    %v7312 = vpop.permute.xlu0 %7311
    %7315 = vset.pattern.permute.xlu0 0
    %7316 = vperm.xlu0 %7315, %v6298
    %v7317 = vpop.permute.xlu0 %7316
    %7320 = vset.pattern.permute.xlu0 0
    %7321 = vperm.xlu0 %7320, %v6299
    %v7322 = vpop.permute.xlu0 %7321
    %7325 = vset.pattern.permute.xlu0 0
    %7326 = vperm.xlu0 %7325, %v6300
    %v7327 = vpop.permute.xlu0 %7326
    %7330 = vset.pattern.permute.xlu0 0
    %7331 = vperm.xlu0 %7330, %v6301
    %v7332 = vpop.permute.xlu0 %7331
    %7335 = vset.pattern.permute.xlu0 0
    %7336 = vperm.xlu0 %7335, %v6302
    %v7337 = vpop.permute.xlu0 %7336
    %7340 = vset.pattern.permute.xlu0 0
    %7341 = vperm.xlu0 %7340, %v6303
    %v7342 = vpop.permute.xlu0 %7341
    %7345 = vset.pattern.permute.xlu0 0
    %7346 = vperm.xlu0 %7345, %v6304
    %v7347 = vpop.permute.xlu0 %7346
    %7350 = vset.pattern.permute.xlu0 0
    %7351 = vperm.xlu0 %7350, %v6305
    %v7352 = vpop.permute.xlu0 %7351
    %7355 = vset.pattern.permute.xlu0 0
    %7356 = vperm.xlu0 %7355, %v6306
    %v7357 = vpop.permute.xlu0 %7356
    %7360 = vset.pattern.permute.xlu0 0
    %7361 = vperm.xlu0 %7360, %v6307
    %v7362 = vpop.permute.xlu0 %7361
    %7365 = vset.pattern.permute.xlu0 0
    %7366 = vperm.xlu0 %7365, %v6308
    %v7367 = vpop.permute.xlu0 %7366
    %7370 = vset.pattern.permute.xlu0 0
    %7371 = vperm.xlu0 %7370, %v6309
    %v7372 = vpop.permute.xlu0 %7371
    %7375 = vset.pattern.permute.xlu0 0
    %7376 = vperm.xlu0 %7375, %v6310
    %v7377 = vpop.permute.xlu0 %7376
    %7380 = vset.pattern.permute.xlu0 0
    %7381 = vperm.xlu0 %7380, %v6311
    %v7382 = vpop.permute.xlu0 %7381
    %7385 = vset.pattern.permute.xlu0 0
    %7386 = vperm.xlu0 %7385, %v6312
    %v7387 = vpop.permute.xlu0 %7386
    %7390 = vset.pattern.permute.xlu0 0
    %7391 = vperm.xlu0 %7390, %v6313
    %v7392 = vpop.permute.xlu0 %7391
    %7395 = vset.pattern.permute.xlu0 0
    %7396 = vperm.xlu0 %7395, %v6314
    %v7397 = vpop.permute.xlu0 %7396
    %7400 = vset.pattern.permute.xlu0 0
    %7401 = vperm.xlu0 %7400, %v6315
    %v7402 = vpop.permute.xlu0 %7401
    %7405 = vset.pattern.permute.xlu0 0
    %7406 = vperm.xlu0 %7405, %v6316
    %v7407 = vpop.permute.xlu0 %7406
    %7410 = vset.pattern.permute.xlu0 0
    %7411 = vperm.xlu0 %7410, %v6317
    %v7412 = vpop.permute.xlu0 %7411
    %7415 = vset.pattern.permute.xlu0 0
    %7416 = vperm.xlu0 %7415, %v6318
    %v7417 = vpop.permute.xlu0 %7416
    %7420 = vset.pattern.permute.xlu0 0
    %7421 = vperm.xlu0 %7420, %v6319
    %v7422 = vpop.permute.xlu0 %7421
    %7425 = vset.pattern.permute.xlu0 0
    %7426 = vperm.xlu0 %7425, %v6320
    %v7427 = vpop.permute.xlu0 %7426
    %7430 = vset.pattern.permute.xlu0 0
    %7431 = vperm.xlu0 %7430, %v6321
    %v7432 = vpop.permute.xlu0 %7431
    %7435 = vset.pattern.permute.xlu0 0
    %7436 = vperm.xlu0 %7435, %v6322
    %v7437 = vpop.permute.xlu0 %7436
    %7440 = vset.pattern.permute.xlu0 0
    %7441 = vperm.xlu0 %7440, %v6323
    %v7442 = vpop.permute.xlu0 %7441
    %7445 = vset.pattern.permute.xlu0 0
    %7446 = vperm.xlu0 %7445, %v6324
    %v7447 = vpop.permute.xlu0 %7446
    %7450 = vset.pattern.permute.xlu0 0
    %7451 = vperm.xlu0 %7450, %v6325
    %v7452 = vpop.permute.xlu0 %7451
    %7455 = vset.pattern.permute.xlu0 0
    %7456 = vperm.xlu0 %7455, %v6326
    %v7457 = vpop.permute.xlu0 %7456
    %7460 = vset.pattern.permute.xlu0 0
    %7461 = vperm.xlu0 %7460, %v6327
    %v7462 = vpop.permute.xlu0 %7461
    %7465 = vset.pattern.permute.xlu0 0
    %7466 = vperm.xlu0 %7465, %v6328
    %v7467 = vpop.permute.xlu0 %7466
    %7470 = vset.pattern.permute.xlu0 0
    %7471 = vperm.xlu0 %7470, %v6329
    %v7472 = vpop.permute.xlu0 %7471
    %7475 = vset.pattern.permute.xlu0 0
    %7476 = vperm.xlu0 %7475, %v6330
    %v7477 = vpop.permute.xlu0 %7476
    %7480 = vset.pattern.permute.xlu0 0
    %7481 = vperm.xlu0 %7480, %v6331
    %v7482 = vpop.permute.xlu0 %7481
    %7485 = vset.pattern.permute.xlu0 0
    %7486 = vperm.xlu0 %7485, %v6332
    %v7487 = vpop.permute.xlu0 %7486
    %7490 = vset.pattern.permute.xlu0 0
    %7491 = vperm.xlu0 %7490, %v6333
    %v7492 = vpop.permute.xlu0 %7491
    %7495 = vset.pattern.permute.xlu0 0
    %7496 = vperm.xlu0 %7495, %v6334
    %v7497 = vpop.permute.xlu0 %7496
    %7500 = vset.pattern.permute.xlu0 0
    %7501 = vperm.xlu0 %7500, %v6335
    %v7502 = vpop.permute.xlu0 %7501
    %7505 = vset.pattern.permute.xlu0 0
    %7506 = vperm.xlu0 %7505, %v6336
    %v7507 = vpop.permute.xlu0 %7506
    %7510 = vset.pattern.permute.xlu0 0
    %7511 = vperm.xlu0 %7510, %v6337
    %v7512 = vpop.permute.xlu0 %7511
    %7515 = vset.pattern.permute.xlu0 0
    %7516 = vperm.xlu0 %7515, %v6338
    %v7517 = vpop.permute.xlu0 %7516
    %7520 = vset.pattern.permute.xlu0 0
    %7521 = vperm.xlu0 %7520, %v6339
    %v7522 = vpop.permute.xlu0 %7521
    %7525 = vset.pattern.permute.xlu0 0
    %7526 = vperm.xlu0 %7525, %v6340
    %v7527 = vpop.permute.xlu0 %7526
    %7530 = vset.pattern.permute.xlu0 0
    %7531 = vperm.xlu0 %7530, %v6341
    %v7532 = vpop.permute.xlu0 %7531
    %7535 = vset.pattern.permute.xlu0 0
    %7536 = vperm.xlu0 %7535, %v6342
    %v7537 = vpop.permute.xlu0 %7536
    %7540 = vset.pattern.permute.xlu0 0
    %7541 = vperm.xlu0 %7540, %v6343
    %v7542 = vpop.permute.xlu0 %7541
    %7545 = vset.pattern.permute.xlu0 0
    %7546 = vperm.xlu0 %7545, %v6344
    %v7547 = vpop.permute.xlu0 %7546
    %7550 = vset.pattern.permute.xlu0 0
    %7551 = vperm.xlu0 %7550, %v6345
    %v7552 = vpop.permute.xlu0 %7551
    %7555 = vset.pattern.permute.xlu0 0
    %7556 = vperm.xlu0 %7555, %v6346
    %v7557 = vpop.permute.xlu0 %7556
    %7560 = vset.pattern.permute.xlu0 0
    %7561 = vperm.xlu0 %7560, %v6347
    %v7562 = vpop.permute.xlu0 %7561
    %v7564 = vmul.f32 %v6284, %v7247
    %v7565 = vmul.f32 %v6285, %v7252
    %v7566 = vmul.f32 %v6286, %v7257
    %v7567 = vmul.f32 %v6287, %v7262
    %v7568 = vmul.f32 %v6288, %v7267
    %v7569 = vmul.f32 %v6289, %v7272
    %v7570 = vmul.f32 %v6290, %v7277
    %v7571 = vmul.f32 %v6291, %v7282
    %v7572 = vmul.f32 %v6292, %v7287
    %v7573 = vmul.f32 %v6293, %v7292
    %v7574 = vmul.f32 %v6294, %v7297
    %v7575 = vmul.f32 %v6295, %v7302
    %v7576 = vmul.f32 %v6296, %v7307
    %v7577 = vmul.f32 %v6297, %v7312
    %v7578 = vmul.f32 %v6298, %v7317
    %v7579 = vmul.f32 %v6299, %v7322
    %v7580 = vmul.f32 %v6300, %v7327
    %v7581 = vmul.f32 %v6301, %v7332
    %v7582 = vmul.f32 %v6302, %v7337
    %v7583 = vmul.f32 %v6303, %v7342
    %v7584 = vmul.f32 %v6304, %v7347
    %v7585 = vmul.f32 %v6305, %v7352
    %v7586 = vmul.f32 %v6306, %v7357
    %v7587 = vmul.f32 %v6307, %v7362
    %v7588 = vmul.f32 %v6308, %v7367
    %v7589 = vmul.f32 %v6309, %v7372
    %v7590 = vmul.f32 %v6310, %v7377
    %v7591 = vmul.f32 %v6311, %v7382
    %v7592 = vmul.f32 %v6312, %v7387
    %v7593 = vmul.f32 %v6313, %v7392
    %v7594 = vmul.f32 %v6314, %v7397
    %v7595 = vmul.f32 %v6315, %v7402
    %v7596 = vmul.f32 %v6316, %v7407
    %v7597 = vmul.f32 %v6317, %v7412
    %v7598 = vmul.f32 %v6318, %v7417
    %v7599 = vmul.f32 %v6319, %v7422
    %v7600 = vmul.f32 %v6320, %v7427
    %v7601 = vmul.f32 %v6321, %v7432
    %v7602 = vmul.f32 %v6322, %v7437
    %v7603 = vmul.f32 %v6323, %v7442
    %v7604 = vmul.f32 %v6324, %v7447
    %v7605 = vmul.f32 %v6325, %v7452
    %v7606 = vmul.f32 %v6326, %v7457
    %v7607 = vmul.f32 %v6327, %v7462
    %v7608 = vmul.f32 %v6328, %v7467
    %v7609 = vmul.f32 %v6329, %v7472
    %v7610 = vmul.f32 %v6330, %v7477
    %v7611 = vmul.f32 %v6331, %v7482
    %v7612 = vmul.f32 %v6332, %v7487
    %v7613 = vmul.f32 %v6333, %v7492
    %v7614 = vmul.f32 %v6334, %v7497
    %v7615 = vmul.f32 %v6335, %v7502
    %v7616 = vmul.f32 %v6336, %v7507
    %v7617 = vmul.f32 %v6337, %v7512
    %v7618 = vmul.f32 %v6338, %v7517
    %v7619 = vmul.f32 %v6339, %v7522
    %v7620 = vmul.f32 %v6340, %v7527
    %v7621 = vmul.f32 %v6341, %v7532
    %v7622 = vmul.f32 %v6342, %v7537
    %v7623 = vmul.f32 %v6343, %v7542
    %v7624 = vmul.f32 %v6344, %v7547
    %v7625 = vmul.f32 %v6345, %v7552
    %v7626 = vmul.f32 %v6346, %v7557
    %v7627 = vmul.f32 %v6347, %v7562
    %7628 = vset.pattern.permute.xlu0 1
    %7629 = vperm.xlu0 %7628, %v6284
    %v7630 = vpop.permute.xlu0 %7629
    %7632 = vset.pattern.permute.xlu0 1
    %7633 = vperm.xlu0 %7632, %v6285
    %v7634 = vpop.permute.xlu0 %7633
    %7636 = vset.pattern.permute.xlu0 1
    %7637 = vperm.xlu0 %7636, %v6286
    %v7638 = vpop.permute.xlu0 %7637
    %7640 = vset.pattern.permute.xlu0 1
    %7641 = vperm.xlu0 %7640, %v6287
    %v7642 = vpop.permute.xlu0 %7641
    %7644 = vset.pattern.permute.xlu0 1
    %7645 = vperm.xlu0 %7644, %v6288
    %v7646 = vpop.permute.xlu0 %7645
    %7648 = vset.pattern.permute.xlu0 1
    %7649 = vperm.xlu0 %7648, %v6289
    %v7650 = vpop.permute.xlu0 %7649
    %7652 = vset.pattern.permute.xlu0 1
    %7653 = vperm.xlu0 %7652, %v6290
    %v7654 = vpop.permute.xlu0 %7653
    %7656 = vset.pattern.permute.xlu0 1
    %7657 = vperm.xlu0 %7656, %v6291
    %v7658 = vpop.permute.xlu0 %7657
    %7660 = vset.pattern.permute.xlu0 1
    %7661 = vperm.xlu0 %7660, %v6292
    %v7662 = vpop.permute.xlu0 %7661
    %7664 = vset.pattern.permute.xlu0 1
    %7665 = vperm.xlu0 %7664, %v6293
    %v7666 = vpop.permute.xlu0 %7665
    %7668 = vset.pattern.permute.xlu0 1
    %7669 = vperm.xlu0 %7668, %v6294
    %v7670 = vpop.permute.xlu0 %7669
    %7672 = vset.pattern.permute.xlu0 1
    %7673 = vperm.xlu0 %7672, %v6295
    %v7674 = vpop.permute.xlu0 %7673
    %7676 = vset.pattern.permute.xlu0 1
    %7677 = vperm.xlu0 %7676, %v6296
    %v7678 = vpop.permute.xlu0 %7677
    %7680 = vset.pattern.permute.xlu0 1
    %7681 = vperm.xlu0 %7680, %v6297
    %v7682 = vpop.permute.xlu0 %7681
    %7684 = vset.pattern.permute.xlu0 1
    %7685 = vperm.xlu0 %7684, %v6298
    %v7686 = vpop.permute.xlu0 %7685
    %7688 = vset.pattern.permute.xlu0 1
    %7689 = vperm.xlu0 %7688, %v6299
    %v7690 = vpop.permute.xlu0 %7689
    %7692 = vset.pattern.permute.xlu0 1
    %7693 = vperm.xlu0 %7692, %v6300
    %v7694 = vpop.permute.xlu0 %7693
    %7696 = vset.pattern.permute.xlu0 1
    %7697 = vperm.xlu0 %7696, %v6301
    %v7698 = vpop.permute.xlu0 %7697
    %7700 = vset.pattern.permute.xlu0 1
    %7701 = vperm.xlu0 %7700, %v6302
    %v7702 = vpop.permute.xlu0 %7701
    %7704 = vset.pattern.permute.xlu0 1
    %7705 = vperm.xlu0 %7704, %v6303
    %v7706 = vpop.permute.xlu0 %7705
    %7708 = vset.pattern.permute.xlu0 1
    %7709 = vperm.xlu0 %7708, %v6304
    %v7710 = vpop.permute.xlu0 %7709
    %7712 = vset.pattern.permute.xlu0 1
    %7713 = vperm.xlu0 %7712, %v6305
    %v7714 = vpop.permute.xlu0 %7713
    %7716 = vset.pattern.permute.xlu0 1
    %7717 = vperm.xlu0 %7716, %v6306
    %v7718 = vpop.permute.xlu0 %7717
    %7720 = vset.pattern.permute.xlu0 1
    %7721 = vperm.xlu0 %7720, %v6307
    %v7722 = vpop.permute.xlu0 %7721
    %7724 = vset.pattern.permute.xlu0 1
    %7725 = vperm.xlu0 %7724, %v6308
    %v7726 = vpop.permute.xlu0 %7725
    %7728 = vset.pattern.permute.xlu0 1
    %7729 = vperm.xlu0 %7728, %v6309
    %v7730 = vpop.permute.xlu0 %7729
    %7732 = vset.pattern.permute.xlu0 1
    %7733 = vperm.xlu0 %7732, %v6310
    %v7734 = vpop.permute.xlu0 %7733
    %7736 = vset.pattern.permute.xlu0 1
    %7737 = vperm.xlu0 %7736, %v6311
    %v7738 = vpop.permute.xlu0 %7737
    %7740 = vset.pattern.permute.xlu0 1
    %7741 = vperm.xlu0 %7740, %v6312
    %v7742 = vpop.permute.xlu0 %7741
    %7744 = vset.pattern.permute.xlu0 1
    %7745 = vperm.xlu0 %7744, %v6313
    %v7746 = vpop.permute.xlu0 %7745
    %7748 = vset.pattern.permute.xlu0 1
    %7749 = vperm.xlu0 %7748, %v6314
    %v7750 = vpop.permute.xlu0 %7749
    %7752 = vset.pattern.permute.xlu0 1
    %7753 = vperm.xlu0 %7752, %v6315
    %v7754 = vpop.permute.xlu0 %7753
    %7756 = vset.pattern.permute.xlu0 1
    %7757 = vperm.xlu0 %7756, %v6316
    %v7758 = vpop.permute.xlu0 %7757
    %7760 = vset.pattern.permute.xlu0 1
    %7761 = vperm.xlu0 %7760, %v6317
    %v7762 = vpop.permute.xlu0 %7761
    %7764 = vset.pattern.permute.xlu0 1
    %7765 = vperm.xlu0 %7764, %v6318
    %v7766 = vpop.permute.xlu0 %7765
    %7768 = vset.pattern.permute.xlu0 1
    %7769 = vperm.xlu0 %7768, %v6319
    %v7770 = vpop.permute.xlu0 %7769
    %7772 = vset.pattern.permute.xlu0 1
    %7773 = vperm.xlu0 %7772, %v6320
    %v7774 = vpop.permute.xlu0 %7773
    %7776 = vset.pattern.permute.xlu0 1
    %7777 = vperm.xlu0 %7776, %v6321
    %v7778 = vpop.permute.xlu0 %7777
    %7780 = vset.pattern.permute.xlu0 1
    %7781 = vperm.xlu0 %7780, %v6322
    %v7782 = vpop.permute.xlu0 %7781
    %7784 = vset.pattern.permute.xlu0 1
    %7785 = vperm.xlu0 %7784, %v6323
    %v7786 = vpop.permute.xlu0 %7785
    %7788 = vset.pattern.permute.xlu0 1
    %7789 = vperm.xlu0 %7788, %v6324
    %v7790 = vpop.permute.xlu0 %7789
    %7792 = vset.pattern.permute.xlu0 1
    %7793 = vperm.xlu0 %7792, %v6325
    %v7794 = vpop.permute.xlu0 %7793
    %7796 = vset.pattern.permute.xlu0 1
    %7797 = vperm.xlu0 %7796, %v6326
    %v7798 = vpop.permute.xlu0 %7797
    %7800 = vset.pattern.permute.xlu0 1
    %7801 = vperm.xlu0 %7800, %v6327
    %v7802 = vpop.permute.xlu0 %7801
    %7804 = vset.pattern.permute.xlu0 1
    %7805 = vperm.xlu0 %7804, %v6328
    %v7806 = vpop.permute.xlu0 %7805
    %7808 = vset.pattern.permute.xlu0 1
    %7809 = vperm.xlu0 %7808, %v6329
    %v7810 = vpop.permute.xlu0 %7809
    %7812 = vset.pattern.permute.xlu0 1
    %7813 = vperm.xlu0 %7812, %v6330
    %v7814 = vpop.permute.xlu0 %7813
    %7816 = vset.pattern.permute.xlu0 1
    %7817 = vperm.xlu0 %7816, %v6331
    %v7818 = vpop.permute.xlu0 %7817
    %7820 = vset.pattern.permute.xlu0 1
    %7821 = vperm.xlu0 %7820, %v6332
    %v7822 = vpop.permute.xlu0 %7821
    %7824 = vset.pattern.permute.xlu0 1
    %7825 = vperm.xlu0 %7824, %v6333
    %v7826 = vpop.permute.xlu0 %7825
    %7828 = vset.pattern.permute.xlu0 1
    %7829 = vperm.xlu0 %7828, %v6334
    %v7830 = vpop.permute.xlu0 %7829
    %7832 = vset.pattern.permute.xlu0 1
    %7833 = vperm.xlu0 %7832, %v6335
    %v7834 = vpop.permute.xlu0 %7833
    %7836 = vset.pattern.permute.xlu0 1
    %7837 = vperm.xlu0 %7836, %v6336
    %v7838 = vpop.permute.xlu0 %7837
    %7840 = vset.pattern.permute.xlu0 1
    %7841 = vperm.xlu0 %7840, %v6337
    %v7842 = vpop.permute.xlu0 %7841
    %7844 = vset.pattern.permute.xlu0 1
    %7845 = vperm.xlu0 %7844, %v6338
    %v7846 = vpop.permute.xlu0 %7845
    %7848 = vset.pattern.permute.xlu0 1
    %7849 = vperm.xlu0 %7848, %v6339
    %v7850 = vpop.permute.xlu0 %7849
    %7852 = vset.pattern.permute.xlu0 1
    %7853 = vperm.xlu0 %7852, %v6340
    %v7854 = vpop.permute.xlu0 %7853
    %7856 = vset.pattern.permute.xlu0 1
    %7857 = vperm.xlu0 %7856, %v6341
    %v7858 = vpop.permute.xlu0 %7857
    %7860 = vset.pattern.permute.xlu0 1
    %7861 = vperm.xlu0 %7860, %v6342
    %v7862 = vpop.permute.xlu0 %7861
    %7864 = vset.pattern.permute.xlu0 1
    %7865 = vperm.xlu0 %7864, %v6343
    %v7866 = vpop.permute.xlu0 %7865
    %7868 = vset.pattern.permute.xlu0 1
    %7869 = vperm.xlu0 %7868, %v6344
    %v7870 = vpop.permute.xlu0 %7869
    %7872 = vset.pattern.permute.xlu0 1
    %7873 = vperm.xlu0 %7872, %v6345
    %v7874 = vpop.permute.xlu0 %7873
    %7876 = vset.pattern.permute.xlu0 1
    %7877 = vperm.xlu0 %7876, %v6346
    %v7878 = vpop.permute.xlu0 %7877
    %7880 = vset.pattern.permute.xlu0 1
    %7881 = vperm.xlu0 %7880, %v6347
    %v7882 = vpop.permute.xlu0 %7881
    %v7884 = vmul.f32 %v6284, %v7630
    %v7885 = vmul.f32 %v6285, %v7634
    %v7886 = vmul.f32 %v6286, %v7638
    %v7887 = vmul.f32 %v6287, %v7642
    %v7888 = vmul.f32 %v6288, %v7646
    %v7889 = vmul.f32 %v6289, %v7650
    %v7890 = vmul.f32 %v6290, %v7654
    %v7891 = vmul.f32 %v6291, %v7658
    %v7892 = vmul.f32 %v6292, %v7662
    %v7893 = vmul.f32 %v6293, %v7666
    %v7894 = vmul.f32 %v6294, %v7670
    %v7895 = vmul.f32 %v6295, %v7674
    %v7896 = vmul.f32 %v6296, %v7678
    %v7897 = vmul.f32 %v6297, %v7682
    %v7898 = vmul.f32 %v6298, %v7686
    %v7899 = vmul.f32 %v6299, %v7690
    %v7900 = vmul.f32 %v6300, %v7694
    %v7901 = vmul.f32 %v6301, %v7698
    %v7902 = vmul.f32 %v6302, %v7702
    %v7903 = vmul.f32 %v6303, %v7706
    %v7904 = vmul.f32 %v6304, %v7710
    %v7905 = vmul.f32 %v6305, %v7714
    %v7906 = vmul.f32 %v6306, %v7718
    %v7907 = vmul.f32 %v6307, %v7722
    %v7908 = vmul.f32 %v6308, %v7726
    %v7909 = vmul.f32 %v6309, %v7730
    %v7910 = vmul.f32 %v6310, %v7734
    %v7911 = vmul.f32 %v6311, %v7738
    %v7912 = vmul.f32 %v6312, %v7742
    %v7913 = vmul.f32 %v6313, %v7746
    %v7914 = vmul.f32 %v6314, %v7750
    %v7915 = vmul.f32 %v6315, %v7754
    %v7916 = vmul.f32 %v6316, %v7758
    %v7917 = vmul.f32 %v6317, %v7762
    %v7918 = vmul.f32 %v6318, %v7766
    %v7919 = vmul.f32 %v6319, %v7770
    %v7920 = vmul.f32 %v6320, %v7774
    %v7921 = vmul.f32 %v6321, %v7778
    %v7922 = vmul.f32 %v6322, %v7782
    %v7923 = vmul.f32 %v6323, %v7786
    %v7924 = vmul.f32 %v6324, %v7790
    %v7925 = vmul.f32 %v6325, %v7794
    %v7926 = vmul.f32 %v6326, %v7798
    %v7927 = vmul.f32 %v6327, %v7802
    %v7928 = vmul.f32 %v6328, %v7806
    %v7929 = vmul.f32 %v6329, %v7810
    %v7930 = vmul.f32 %v6330, %v7814
    %v7931 = vmul.f32 %v6331, %v7818
    %v7932 = vmul.f32 %v6332, %v7822
    %v7933 = vmul.f32 %v6333, %v7826
    %v7934 = vmul.f32 %v6334, %v7830
    %v7935 = vmul.f32 %v6335, %v7834
    %v7936 = vmul.f32 %v6336, %v7838
    %v7937 = vmul.f32 %v6337, %v7842
    %v7938 = vmul.f32 %v6338, %v7846
    %v7939 = vmul.f32 %v6339, %v7850
    %v7940 = vmul.f32 %v6340, %v7854
    %v7941 = vmul.f32 %v6341, %v7858
    %v7942 = vmul.f32 %v6342, %v7862
    %v7943 = vmul.f32 %v6343, %v7866
    %v7944 = vmul.f32 %v6344, %v7870
    %v7945 = vmul.f32 %v6345, %v7874
    %v7946 = vmul.f32 %v6346, %v7878
    %v7947 = vmul.f32 %v6347, %v7882
    %7948 = vset.pattern.permute.xlu0 2
    %7949 = vperm.xlu0 %7948, %v6284
    %v7950 = vpop.permute.xlu0 %7949
    %7952 = vset.pattern.permute.xlu0 2
    %7953 = vperm.xlu0 %7952, %v6285
    %v7954 = vpop.permute.xlu0 %7953
    %7956 = vset.pattern.permute.xlu0 2
    %7957 = vperm.xlu0 %7956, %v6286
    %v7958 = vpop.permute.xlu0 %7957
    %7960 = vset.pattern.permute.xlu0 2
    %7961 = vperm.xlu0 %7960, %v6287
    %v7962 = vpop.permute.xlu0 %7961
    %7964 = vset.pattern.permute.xlu0 2
    %7965 = vperm.xlu0 %7964, %v6288
    %v7966 = vpop.permute.xlu0 %7965
    %7968 = vset.pattern.permute.xlu0 2
    %7969 = vperm.xlu0 %7968, %v6289
    %v7970 = vpop.permute.xlu0 %7969
    %7972 = vset.pattern.permute.xlu0 2
    %7973 = vperm.xlu0 %7972, %v6290
    %v7974 = vpop.permute.xlu0 %7973
    %7976 = vset.pattern.permute.xlu0 2
    %7977 = vperm.xlu0 %7976, %v6291
    %v7978 = vpop.permute.xlu0 %7977
    %7980 = vset.pattern.permute.xlu0 2
    %7981 = vperm.xlu0 %7980, %v6292
    %v7982 = vpop.permute.xlu0 %7981
    %7984 = vset.pattern.permute.xlu0 2
    %7985 = vperm.xlu0 %7984, %v6293
    %v7986 = vpop.permute.xlu0 %7985
    %7988 = vset.pattern.permute.xlu0 2
    %7989 = vperm.xlu0 %7988, %v6294
    %v7990 = vpop.permute.xlu0 %7989
    %7992 = vset.pattern.permute.xlu0 2
    %7993 = vperm.xlu0 %7992, %v6295
    %v7994 = vpop.permute.xlu0 %7993
    %7996 = vset.pattern.permute.xlu0 2
    %7997 = vperm.xlu0 %7996, %v6296
    %v7998 = vpop.permute.xlu0 %7997
    %8000 = vset.pattern.permute.xlu0 2
    %8001 = vperm.xlu0 %8000, %v6297
    %v8002 = vpop.permute.xlu0 %8001
    %8004 = vset.pattern.permute.xlu0 2
    %8005 = vperm.xlu0 %8004, %v6298
    %v8006 = vpop.permute.xlu0 %8005
    %8008 = vset.pattern.permute.xlu0 2
    %8009 = vperm.xlu0 %8008, %v6299
    %v8010 = vpop.permute.xlu0 %8009
    %8012 = vset.pattern.permute.xlu0 2
    %8013 = vperm.xlu0 %8012, %v6300
    %v8014 = vpop.permute.xlu0 %8013
    %8016 = vset.pattern.permute.xlu0 2
    %8017 = vperm.xlu0 %8016, %v6301
    %v8018 = vpop.permute.xlu0 %8017
    %8020 = vset.pattern.permute.xlu0 2
    %8021 = vperm.xlu0 %8020, %v6302
    %v8022 = vpop.permute.xlu0 %8021
    %8024 = vset.pattern.permute.xlu0 2
    %8025 = vperm.xlu0 %8024, %v6303
    %v8026 = vpop.permute.xlu0 %8025
    %8028 = vset.pattern.permute.xlu0 2
    %8029 = vperm.xlu0 %8028, %v6304
    %v8030 = vpop.permute.xlu0 %8029
    %8032 = vset.pattern.permute.xlu0 2
    %8033 = vperm.xlu0 %8032, %v6305
    %v8034 = vpop.permute.xlu0 %8033
    %8036 = vset.pattern.permute.xlu0 2
    %8037 = vperm.xlu0 %8036, %v6306
    %v8038 = vpop.permute.xlu0 %8037
    %8040 = vset.pattern.permute.xlu0 2
    %8041 = vperm.xlu0 %8040, %v6307
    %v8042 = vpop.permute.xlu0 %8041
    %8044 = vset.pattern.permute.xlu0 2
    %8045 = vperm.xlu0 %8044, %v6308
    %v8046 = vpop.permute.xlu0 %8045
    %8048 = vset.pattern.permute.xlu0 2
    %8049 = vperm.xlu0 %8048, %v6309
    %v8050 = vpop.permute.xlu0 %8049
    %8052 = vset.pattern.permute.xlu0 2
    %8053 = vperm.xlu0 %8052, %v6310
    %v8054 = vpop.permute.xlu0 %8053
    %8056 = vset.pattern.permute.xlu0 2
    %8057 = vperm.xlu0 %8056, %v6311
    %v8058 = vpop.permute.xlu0 %8057
    %8060 = vset.pattern.permute.xlu0 2
    %8061 = vperm.xlu0 %8060, %v6312
    %v8062 = vpop.permute.xlu0 %8061
    %8064 = vset.pattern.permute.xlu0 2
    %8065 = vperm.xlu0 %8064, %v6313
    %v8066 = vpop.permute.xlu0 %8065
    %8068 = vset.pattern.permute.xlu0 2
    %8069 = vperm.xlu0 %8068, %v6314
    %v8070 = vpop.permute.xlu0 %8069
    %8072 = vset.pattern.permute.xlu0 2
    %8073 = vperm.xlu0 %8072, %v6315
    %v8074 = vpop.permute.xlu0 %8073
    %8076 = vset.pattern.permute.xlu0 2
    %8077 = vperm.xlu0 %8076, %v6316
    %v8078 = vpop.permute.xlu0 %8077
    %8080 = vset.pattern.permute.xlu0 2
    %8081 = vperm.xlu0 %8080, %v6317
    %v8082 = vpop.permute.xlu0 %8081
    %8084 = vset.pattern.permute.xlu0 2
    %8085 = vperm.xlu0 %8084, %v6318
    %v8086 = vpop.permute.xlu0 %8085
    %8088 = vset.pattern.permute.xlu0 2
    %8089 = vperm.xlu0 %8088, %v6319
    %v8090 = vpop.permute.xlu0 %8089
    %8092 = vset.pattern.permute.xlu0 2
    %8093 = vperm.xlu0 %8092, %v6320
    %v8094 = vpop.permute.xlu0 %8093
    %8096 = vset.pattern.permute.xlu0 2
    %8097 = vperm.xlu0 %8096, %v6321
    %v8098 = vpop.permute.xlu0 %8097
    %8100 = vset.pattern.permute.xlu0 2
    %8101 = vperm.xlu0 %8100, %v6322
    %v8102 = vpop.permute.xlu0 %8101
    %8104 = vset.pattern.permute.xlu0 2
    %8105 = vperm.xlu0 %8104, %v6323
    %v8106 = vpop.permute.xlu0 %8105
    %8108 = vset.pattern.permute.xlu0 2
    %8109 = vperm.xlu0 %8108, %v6324
    %v8110 = vpop.permute.xlu0 %8109
    %8112 = vset.pattern.permute.xlu0 2
    %8113 = vperm.xlu0 %8112, %v6325
    %v8114 = vpop.permute.xlu0 %8113
    %8116 = vset.pattern.permute.xlu0 2
    %8117 = vperm.xlu0 %8116, %v6326
    %v8118 = vpop.permute.xlu0 %8117
    %8120 = vset.pattern.permute.xlu0 2
    %8121 = vperm.xlu0 %8120, %v6327
    %v8122 = vpop.permute.xlu0 %8121
    %8124 = vset.pattern.permute.xlu0 2
    %8125 = vperm.xlu0 %8124, %v6328
    %v8126 = vpop.permute.xlu0 %8125
    %8128 = vset.pattern.permute.xlu0 2
    %8129 = vperm.xlu0 %8128, %v6329
    %v8130 = vpop.permute.xlu0 %8129
    %8132 = vset.pattern.permute.xlu0 2
    %8133 = vperm.xlu0 %8132, %v6330
    %v8134 = vpop.permute.xlu0 %8133
    %8136 = vset.pattern.permute.xlu0 2
    %8137 = vperm.xlu0 %8136, %v6331
    %v8138 = vpop.permute.xlu0 %8137
    %8140 = vset.pattern.permute.xlu0 2
    %8141 = vperm.xlu0 %8140, %v6332
    %v8142 = vpop.permute.xlu0 %8141
    %8144 = vset.pattern.permute.xlu0 2
    %8145 = vperm.xlu0 %8144, %v6333
    %v8146 = vpop.permute.xlu0 %8145
    %8148 = vset.pattern.permute.xlu0 2
    %8149 = vperm.xlu0 %8148, %v6334
    %v8150 = vpop.permute.xlu0 %8149
    %8152 = vset.pattern.permute.xlu0 2
    %8153 = vperm.xlu0 %8152, %v6335
    %v8154 = vpop.permute.xlu0 %8153
    %8156 = vset.pattern.permute.xlu0 2
    %8157 = vperm.xlu0 %8156, %v6336
    %v8158 = vpop.permute.xlu0 %8157
    %8160 = vset.pattern.permute.xlu0 2
    %8161 = vperm.xlu0 %8160, %v6337
    %v8162 = vpop.permute.xlu0 %8161
    %8164 = vset.pattern.permute.xlu0 2
    %8165 = vperm.xlu0 %8164, %v6338
    %v8166 = vpop.permute.xlu0 %8165
    %8168 = vset.pattern.permute.xlu0 2
    %8169 = vperm.xlu0 %8168, %v6339
    %v8170 = vpop.permute.xlu0 %8169
    %8172 = vset.pattern.permute.xlu0 2
    %8173 = vperm.xlu0 %8172, %v6340
    %v8174 = vpop.permute.xlu0 %8173
    %8176 = vset.pattern.permute.xlu0 2
    %8177 = vperm.xlu0 %8176, %v6341
    %v8178 = vpop.permute.xlu0 %8177
    %8180 = vset.pattern.permute.xlu0 2
    %8181 = vperm.xlu0 %8180, %v6342
    %v8182 = vpop.permute.xlu0 %8181
    %8184 = vset.pattern.permute.xlu0 2
    %8185 = vperm.xlu0 %8184, %v6343
    %v8186 = vpop.permute.xlu0 %8185
    %8188 = vset.pattern.permute.xlu0 2
    %8189 = vperm.xlu0 %8188, %v6344
    %v8190 = vpop.permute.xlu0 %8189
    %8192 = vset.pattern.permute.xlu0 2
    %8193 = vperm.xlu0 %8192, %v6345
    %v8194 = vpop.permute.xlu0 %8193
    %8196 = vset.pattern.permute.xlu0 2
    %8197 = vperm.xlu0 %8196, %v6346
    %v8198 = vpop.permute.xlu0 %8197
    %8200 = vset.pattern.permute.xlu0 2
    %8201 = vperm.xlu0 %8200, %v6347
    %v8202 = vpop.permute.xlu0 %8201
    %v8204 = vmul.f32 %v6284, %v7950
    %v8205 = vmul.f32 %v6285, %v7954
    %v8206 = vmul.f32 %v6286, %v7958
    %v8207 = vmul.f32 %v6287, %v7962
    %v8208 = vmul.f32 %v6288, %v7966
    %v8209 = vmul.f32 %v6289, %v7970
    %v8210 = vmul.f32 %v6290, %v7974
    %v8211 = vmul.f32 %v6291, %v7978
    %v8212 = vmul.f32 %v6292, %v7982
    %v8213 = vmul.f32 %v6293, %v7986
    %v8214 = vmul.f32 %v6294, %v7990
    %v8215 = vmul.f32 %v6295, %v7994
    %v8216 = vmul.f32 %v6296, %v7998
    %v8217 = vmul.f32 %v6297, %v8002
    %v8218 = vmul.f32 %v6298, %v8006
    %v8219 = vmul.f32 %v6299, %v8010
    %v8220 = vmul.f32 %v6300, %v8014
    %v8221 = vmul.f32 %v6301, %v8018
    %v8222 = vmul.f32 %v6302, %v8022
    %v8223 = vmul.f32 %v6303, %v8026
    %v8224 = vmul.f32 %v6304, %v8030
    %v8225 = vmul.f32 %v6305, %v8034
    %v8226 = vmul.f32 %v6306, %v8038
    %v8227 = vmul.f32 %v6307, %v8042
    %v8228 = vmul.f32 %v6308, %v8046
    %v8229 = vmul.f32 %v6309, %v8050
    %v8230 = vmul.f32 %v6310, %v8054
    %v8231 = vmul.f32 %v6311, %v8058
    %v8232 = vmul.f32 %v6312, %v8062
    %v8233 = vmul.f32 %v6313, %v8066
    %v8234 = vmul.f32 %v6314, %v8070
    %v8235 = vmul.f32 %v6315, %v8074
    %v8236 = vmul.f32 %v6316, %v8078
    %v8237 = vmul.f32 %v6317, %v8082
    %v8238 = vmul.f32 %v6318, %v8086
    %v8239 = vmul.f32 %v6319, %v8090
    %v8240 = vmul.f32 %v6320, %v8094
    %v8241 = vmul.f32 %v6321, %v8098
    %v8242 = vmul.f32 %v6322, %v8102
    %v8243 = vmul.f32 %v6323, %v8106
    %v8244 = vmul.f32 %v6324, %v8110
    %v8245 = vmul.f32 %v6325, %v8114
    %v8246 = vmul.f32 %v6326, %v8118
    %v8247 = vmul.f32 %v6327, %v8122
    %v8248 = vmul.f32 %v6328, %v8126
    %v8249 = vmul.f32 %v6329, %v8130
    %v8250 = vmul.f32 %v6330, %v8134
    %v8251 = vmul.f32 %v6331, %v8138
    %v8252 = vmul.f32 %v6332, %v8142
    %v8253 = vmul.f32 %v6333, %v8146
    %v8254 = vmul.f32 %v6334, %v8150
    %v8255 = vmul.f32 %v6335, %v8154
    %v8256 = vmul.f32 %v6336, %v8158
    %v8257 = vmul.f32 %v6337, %v8162
    %v8258 = vmul.f32 %v6338, %v8166
    %v8259 = vmul.f32 %v6339, %v8170
    %v8260 = vmul.f32 %v6340, %v8174
    %v8261 = vmul.f32 %v6341, %v8178
    %v8262 = vmul.f32 %v6342, %v8182
    %v8263 = vmul.f32 %v6343, %v8186
    %v8264 = vmul.f32 %v6344, %v8190
    %v8265 = vmul.f32 %v6345, %v8194
    %v8266 = vmul.f32 %v6346, %v8198
    %v8267 = vmul.f32 %v6347, %v8202
    %8332 = vrot.lane.b32.xlu0 %v7884, 3
    %v8333 = vpop.permute.xlu0 %8332
    %8334 = vrot.lane.b32.xlu0 %v7885, 3
    %v8335 = vpop.permute.xlu0 %8334
    %8336 = vrot.lane.b32.xlu0 %v7886, 3
    %v8337 = vpop.permute.xlu0 %8336
    %8338 = vrot.lane.b32.xlu0 %v7887, 3
    %v8339 = vpop.permute.xlu0 %8338
    %8340 = vrot.lane.b32.xlu0 %v7888, 3
    %v8341 = vpop.permute.xlu0 %8340
    %8342 = vrot.lane.b32.xlu0 %v7889, 3
    %v8343 = vpop.permute.xlu0 %8342
    %8344 = vrot.lane.b32.xlu0 %v7890, 3
    %v8345 = vpop.permute.xlu0 %8344
    %8346 = vrot.lane.b32.xlu0 %v7891, 3
    %v8347 = vpop.permute.xlu0 %8346
    %8348 = vrot.lane.b32.xlu0 %v7892, 3
    %v8349 = vpop.permute.xlu0 %8348
    %8350 = vrot.lane.b32.xlu0 %v7893, 3
    %v8351 = vpop.permute.xlu0 %8350
    %8352 = vrot.lane.b32.xlu0 %v7894, 3
    %v8353 = vpop.permute.xlu0 %8352
    %8354 = vrot.lane.b32.xlu0 %v7895, 3
    %v8355 = vpop.permute.xlu0 %8354
    %8356 = vrot.lane.b32.xlu0 %v7896, 3
    %v8357 = vpop.permute.xlu0 %8356
    %8358 = vrot.lane.b32.xlu0 %v7897, 3
    %v8359 = vpop.permute.xlu0 %8358
    %8360 = vrot.lane.b32.xlu0 %v7898, 3
    %v8361 = vpop.permute.xlu0 %8360
    %8362 = vrot.lane.b32.xlu0 %v7899, 3
    %v8363 = vpop.permute.xlu0 %8362
    %8364 = vrot.lane.b32.xlu0 %v7900, 3
    %v8365 = vpop.permute.xlu0 %8364
    %8366 = vrot.lane.b32.xlu0 %v7901, 3
    %v8367 = vpop.permute.xlu0 %8366
    %8368 = vrot.lane.b32.xlu0 %v7902, 3
    %v8369 = vpop.permute.xlu0 %8368
    %8370 = vrot.lane.b32.xlu0 %v7903, 3
    %v8371 = vpop.permute.xlu0 %8370
    %8372 = vrot.lane.b32.xlu0 %v7904, 3
    %v8373 = vpop.permute.xlu0 %8372
    %8374 = vrot.lane.b32.xlu0 %v7905, 3
    %v8375 = vpop.permute.xlu0 %8374
    %8376 = vrot.lane.b32.xlu0 %v7906, 3
    %v8377 = vpop.permute.xlu0 %8376
    %8378 = vrot.lane.b32.xlu0 %v7907, 3
    %v8379 = vpop.permute.xlu0 %8378
    %8380 = vrot.lane.b32.xlu0 %v7908, 3
    %v8381 = vpop.permute.xlu0 %8380
    %8382 = vrot.lane.b32.xlu0 %v7909, 3
    %v8383 = vpop.permute.xlu0 %8382
    %8384 = vrot.lane.b32.xlu0 %v7910, 3
    %v8385 = vpop.permute.xlu0 %8384
    %8386 = vrot.lane.b32.xlu0 %v7911, 3
    %v8387 = vpop.permute.xlu0 %8386
    %8388 = vrot.lane.b32.xlu0 %v7912, 3
    %v8389 = vpop.permute.xlu0 %8388
    %8390 = vrot.lane.b32.xlu0 %v7913, 3
    %v8391 = vpop.permute.xlu0 %8390
    %8392 = vrot.lane.b32.xlu0 %v7914, 3
    %v8393 = vpop.permute.xlu0 %8392
    %8394 = vrot.lane.b32.xlu0 %v7915, 3
    %v8395 = vpop.permute.xlu0 %8394
    %8396 = vrot.lane.b32.xlu0 %v7916, 3
    %v8397 = vpop.permute.xlu0 %8396
    %8398 = vrot.lane.b32.xlu0 %v7917, 3
    %v8399 = vpop.permute.xlu0 %8398
    %8400 = vrot.lane.b32.xlu0 %v7918, 3
    %v8401 = vpop.permute.xlu0 %8400
    %8402 = vrot.lane.b32.xlu0 %v7919, 3
    %v8403 = vpop.permute.xlu0 %8402
    %8404 = vrot.lane.b32.xlu0 %v7920, 3
    %v8405 = vpop.permute.xlu0 %8404
    %8406 = vrot.lane.b32.xlu0 %v7921, 3
    %v8407 = vpop.permute.xlu0 %8406
    %8408 = vrot.lane.b32.xlu0 %v7922, 3
    %v8409 = vpop.permute.xlu0 %8408
    %8410 = vrot.lane.b32.xlu0 %v7923, 3
    %v8411 = vpop.permute.xlu0 %8410
    %8412 = vrot.lane.b32.xlu0 %v7924, 3
    %v8413 = vpop.permute.xlu0 %8412
    %8414 = vrot.lane.b32.xlu0 %v7925, 3
    %v8415 = vpop.permute.xlu0 %8414
    %8416 = vrot.lane.b32.xlu0 %v7926, 3
    %v8417 = vpop.permute.xlu0 %8416
    %8418 = vrot.lane.b32.xlu0 %v7927, 3
    %v8419 = vpop.permute.xlu0 %8418
    %8420 = vrot.lane.b32.xlu0 %v7928, 3
    %v8421 = vpop.permute.xlu0 %8420
    %8422 = vrot.lane.b32.xlu0 %v7929, 3
    %v8423 = vpop.permute.xlu0 %8422
    %8424 = vrot.lane.b32.xlu0 %v7930, 3
    %v8425 = vpop.permute.xlu0 %8424
    %8426 = vrot.lane.b32.xlu0 %v7931, 3
    %v8427 = vpop.permute.xlu0 %8426
    %8428 = vrot.lane.b32.xlu0 %v7932, 3
    %v8429 = vpop.permute.xlu0 %8428
    %8430 = vrot.lane.b32.xlu0 %v7933, 3
    %v8431 = vpop.permute.xlu0 %8430
    %8432 = vrot.lane.b32.xlu0 %v7934, 3
    %v8433 = vpop.permute.xlu0 %8432
    %8434 = vrot.lane.b32.xlu0 %v7935, 3
    %v8435 = vpop.permute.xlu0 %8434
    %8436 = vrot.lane.b32.xlu0 %v7936, 3
    %v8437 = vpop.permute.xlu0 %8436
    %8438 = vrot.lane.b32.xlu0 %v7937, 3
    %v8439 = vpop.permute.xlu0 %8438
    %8440 = vrot.lane.b32.xlu0 %v7938, 3
    %v8441 = vpop.permute.xlu0 %8440
    %8442 = vrot.lane.b32.xlu0 %v7939, 3
    %v8443 = vpop.permute.xlu0 %8442
    %8444 = vrot.lane.b32.xlu0 %v7940, 3
    %v8445 = vpop.permute.xlu0 %8444
    %8446 = vrot.lane.b32.xlu0 %v7941, 3
    %v8447 = vpop.permute.xlu0 %8446
    %8448 = vrot.lane.b32.xlu0 %v7942, 3
    %v8449 = vpop.permute.xlu0 %8448
    %8450 = vrot.lane.b32.xlu0 %v7943, 3
    %v8451 = vpop.permute.xlu0 %8450
    %8452 = vrot.lane.b32.xlu0 %v7944, 3
    %v8453 = vpop.permute.xlu0 %8452
    %8454 = vrot.lane.b32.xlu0 %v7945, 3
    %v8455 = vpop.permute.xlu0 %8454
    %8456 = vrot.lane.b32.xlu0 %v7946, 3
    %v8457 = vpop.permute.xlu0 %8456
    %8458 = vrot.lane.b32.xlu0 %v7947, 3
    %v8459 = vpop.permute.xlu0 %8458
    %8588 = vrot.lane.b32.xlu0 %v8204, 6
    %v8589 = vpop.permute.xlu0 %8588
    %8590 = vrot.lane.b32.xlu0 %v8205, 6
    %v8591 = vpop.permute.xlu0 %8590
    %8592 = vrot.lane.b32.xlu0 %v8206, 6
    %v8593 = vpop.permute.xlu0 %8592
    %8594 = vrot.lane.b32.xlu0 %v8207, 6
    %v8595 = vpop.permute.xlu0 %8594
    %8596 = vrot.lane.b32.xlu0 %v8208, 6
    %v8597 = vpop.permute.xlu0 %8596
    %8598 = vrot.lane.b32.xlu0 %v8209, 6
    %v8599 = vpop.permute.xlu0 %8598
    %8600 = vrot.lane.b32.xlu0 %v8210, 6
    %v8601 = vpop.permute.xlu0 %8600
    %8602 = vrot.lane.b32.xlu0 %v8211, 6
    %v8603 = vpop.permute.xlu0 %8602
    %8604 = vrot.lane.b32.xlu0 %v8212, 6
    %v8605 = vpop.permute.xlu0 %8604
    %8606 = vrot.lane.b32.xlu0 %v8213, 6
    %v8607 = vpop.permute.xlu0 %8606
    %8608 = vrot.lane.b32.xlu0 %v8214, 6
    %v8609 = vpop.permute.xlu0 %8608
    %8610 = vrot.lane.b32.xlu0 %v8215, 6
    %v8611 = vpop.permute.xlu0 %8610
    %8612 = vrot.lane.b32.xlu0 %v8216, 6
    %v8613 = vpop.permute.xlu0 %8612
    %8614 = vrot.lane.b32.xlu0 %v8217, 6
    %v8615 = vpop.permute.xlu0 %8614
    %8616 = vrot.lane.b32.xlu0 %v8218, 6
    %v8617 = vpop.permute.xlu0 %8616
    %8618 = vrot.lane.b32.xlu0 %v8219, 6
    %v8619 = vpop.permute.xlu0 %8618
    %8620 = vrot.lane.b32.xlu0 %v8220, 6
    %v8621 = vpop.permute.xlu0 %8620
    %8622 = vrot.lane.b32.xlu0 %v8221, 6
    %v8623 = vpop.permute.xlu0 %8622
    %8624 = vrot.lane.b32.xlu0 %v8222, 6
    %v8625 = vpop.permute.xlu0 %8624
    %8626 = vrot.lane.b32.xlu0 %v8223, 6
    %v8627 = vpop.permute.xlu0 %8626
    %8628 = vrot.lane.b32.xlu0 %v8224, 6
    %v8629 = vpop.permute.xlu0 %8628
    %8630 = vrot.lane.b32.xlu0 %v8225, 6
    %v8631 = vpop.permute.xlu0 %8630
    %8632 = vrot.lane.b32.xlu0 %v8226, 6
    %v8633 = vpop.permute.xlu0 %8632
    %8634 = vrot.lane.b32.xlu0 %v8227, 6
    %v8635 = vpop.permute.xlu0 %8634
    %8636 = vrot.lane.b32.xlu0 %v8228, 6
    %v8637 = vpop.permute.xlu0 %8636
    %8638 = vrot.lane.b32.xlu0 %v8229, 6
    %v8639 = vpop.permute.xlu0 %8638
    %8640 = vrot.lane.b32.xlu0 %v8230, 6
    %v8641 = vpop.permute.xlu0 %8640
    %8642 = vrot.lane.b32.xlu0 %v8231, 6
    %v8643 = vpop.permute.xlu0 %8642
    %8644 = vrot.lane.b32.xlu0 %v8232, 6
    %v8645 = vpop.permute.xlu0 %8644
    %8646 = vrot.lane.b32.xlu0 %v8233, 6
    %v8647 = vpop.permute.xlu0 %8646
    %8648 = vrot.lane.b32.xlu0 %v8234, 6
    %v8649 = vpop.permute.xlu0 %8648
    %8650 = vrot.lane.b32.xlu0 %v8235, 6
    %v8651 = vpop.permute.xlu0 %8650
    %8652 = vrot.lane.b32.xlu0 %v8236, 6
    %v8653 = vpop.permute.xlu0 %8652
    %8654 = vrot.lane.b32.xlu0 %v8237, 6
    %v8655 = vpop.permute.xlu0 %8654
    %8656 = vrot.lane.b32.xlu0 %v8238, 6
    %v8657 = vpop.permute.xlu0 %8656
    %8658 = vrot.lane.b32.xlu0 %v8239, 6
    %v8659 = vpop.permute.xlu0 %8658
    %8660 = vrot.lane.b32.xlu0 %v8240, 6
    %v8661 = vpop.permute.xlu0 %8660
    %8662 = vrot.lane.b32.xlu0 %v8241, 6
    %v8663 = vpop.permute.xlu0 %8662
    %8664 = vrot.lane.b32.xlu0 %v8242, 6
    %v8665 = vpop.permute.xlu0 %8664
    %8666 = vrot.lane.b32.xlu0 %v8243, 6
    %v8667 = vpop.permute.xlu0 %8666
    %8668 = vrot.lane.b32.xlu0 %v8244, 6
    %v8669 = vpop.permute.xlu0 %8668
    %8670 = vrot.lane.b32.xlu0 %v8245, 6
    %v8671 = vpop.permute.xlu0 %8670
    %8672 = vrot.lane.b32.xlu0 %v8246, 6
    %v8673 = vpop.permute.xlu0 %8672
    %8674 = vrot.lane.b32.xlu0 %v8247, 6
    %v8675 = vpop.permute.xlu0 %8674
    %8676 = vrot.lane.b32.xlu0 %v8248, 6
    %v8677 = vpop.permute.xlu0 %8676
    %8678 = vrot.lane.b32.xlu0 %v8249, 6
    %v8679 = vpop.permute.xlu0 %8678
    %8680 = vrot.lane.b32.xlu0 %v8250, 6
    %v8681 = vpop.permute.xlu0 %8680
    %8682 = vrot.lane.b32.xlu0 %v8251, 6
    %v8683 = vpop.permute.xlu0 %8682
    %8684 = vrot.lane.b32.xlu0 %v8252, 6
    %v8685 = vpop.permute.xlu0 %8684
    %8686 = vrot.lane.b32.xlu0 %v8253, 6
    %v8687 = vpop.permute.xlu0 %8686
    %8688 = vrot.lane.b32.xlu0 %v8254, 6
    %v8689 = vpop.permute.xlu0 %8688
    %8690 = vrot.lane.b32.xlu0 %v8255, 6
    %v8691 = vpop.permute.xlu0 %8690
    %8692 = vrot.lane.b32.xlu0 %v8256, 6
    %v8693 = vpop.permute.xlu0 %8692
    %8694 = vrot.lane.b32.xlu0 %v8257, 6
    %v8695 = vpop.permute.xlu0 %8694
    %8696 = vrot.lane.b32.xlu0 %v8258, 6
    %v8697 = vpop.permute.xlu0 %8696
    %8698 = vrot.lane.b32.xlu0 %v8259, 6
    %v8699 = vpop.permute.xlu0 %8698
    %8700 = vrot.lane.b32.xlu0 %v8260, 6
    %v8701 = vpop.permute.xlu0 %8700
    %8702 = vrot.lane.b32.xlu0 %v8261, 6
    %v8703 = vpop.permute.xlu0 %8702
    %8704 = vrot.lane.b32.xlu0 %v8262, 6
    %v8705 = vpop.permute.xlu0 %8704
    %8706 = vrot.lane.b32.xlu0 %v8263, 6
    %v8707 = vpop.permute.xlu0 %8706
    %8708 = vrot.lane.b32.xlu0 %v8264, 6
    %v8709 = vpop.permute.xlu0 %8708
    %8710 = vrot.lane.b32.xlu0 %v8265, 6
    %v8711 = vpop.permute.xlu0 %8710
    %8712 = vrot.lane.b32.xlu0 %v8266, 6
    %v8713 = vpop.permute.xlu0 %8712
    %8714 = vrot.lane.b32.xlu0 %v8267, 6
    %v8715 = vpop.permute.xlu0 %8714
    %v8780 = vsel %vm2873, %v7564, %v8333
    %v8781 = vsel %vm2873, %v7565, %v8335
    %v8782 = vsel %vm2873, %v7566, %v8337
    %v8783 = vsel %vm2873, %v7567, %v8339
    %v8784 = vsel %vm2873, %v7568, %v8341
    %v8785 = vsel %vm2873, %v7569, %v8343
    %v8786 = vsel %vm2873, %v7570, %v8345
    %v8787 = vsel %vm2873, %v7571, %v8347
    %v8788 = vsel %vm2873, %v7572, %v8349
    %v8789 = vsel %vm2873, %v7573, %v8351
    %v8790 = vsel %vm2873, %v7574, %v8353
    %v8791 = vsel %vm2873, %v7575, %v8355
    %v8792 = vsel %vm2873, %v7576, %v8357
    %v8793 = vsel %vm2873, %v7577, %v8359
    %v8794 = vsel %vm2873, %v7578, %v8361
    %v8795 = vsel %vm2873, %v7579, %v8363
    %v8796 = vsel %vm2873, %v7580, %v8365
    %v8797 = vsel %vm2873, %v7581, %v8367
    %v8798 = vsel %vm2873, %v7582, %v8369
    %v8799 = vsel %vm2873, %v7583, %v8371
    %v8800 = vsel %vm2873, %v7584, %v8373
    %v8801 = vsel %vm2873, %v7585, %v8375
    %v8802 = vsel %vm2873, %v7586, %v8377
    %v8803 = vsel %vm2873, %v7587, %v8379
    %v8804 = vsel %vm2873, %v7588, %v8381
    %v8805 = vsel %vm2873, %v7589, %v8383
    %v8806 = vsel %vm2873, %v7590, %v8385
    %v8807 = vsel %vm2873, %v7591, %v8387
    %v8808 = vsel %vm2873, %v7592, %v8389
    %v8809 = vsel %vm2873, %v7593, %v8391
    %v8810 = vsel %vm2873, %v7594, %v8393
    %v8811 = vsel %vm2873, %v7595, %v8395
    %v8812 = vsel %vm2873, %v7596, %v8397
    %v8813 = vsel %vm2873, %v7597, %v8399
    %v8814 = vsel %vm2873, %v7598, %v8401
    %v8815 = vsel %vm2873, %v7599, %v8403
    %v8816 = vsel %vm2873, %v7600, %v8405
    %v8817 = vsel %vm2873, %v7601, %v8407
    %v8818 = vsel %vm2873, %v7602, %v8409
    %v8819 = vsel %vm2873, %v7603, %v8411
    %v8820 = vsel %vm2873, %v7604, %v8413
    %v8821 = vsel %vm2873, %v7605, %v8415
    %v8822 = vsel %vm2873, %v7606, %v8417
    %v8823 = vsel %vm2873, %v7607, %v8419
    %v8824 = vsel %vm2873, %v7608, %v8421
    %v8825 = vsel %vm2873, %v7609, %v8423
    %v8826 = vsel %vm2873, %v7610, %v8425
    %v8827 = vsel %vm2873, %v7611, %v8427
    %v8828 = vsel %vm2873, %v7612, %v8429
    %v8829 = vsel %vm2873, %v7613, %v8431
    %v8830 = vsel %vm2873, %v7614, %v8433
    %v8831 = vsel %vm2873, %v7615, %v8435
    %v8832 = vsel %vm2873, %v7616, %v8437
    %v8833 = vsel %vm2873, %v7617, %v8439
    %v8834 = vsel %vm2873, %v7618, %v8441
    %v8835 = vsel %vm2873, %v7619, %v8443
    %v8836 = vsel %vm2873, %v7620, %v8445
    %v8837 = vsel %vm2873, %v7621, %v8447
    %v8838 = vsel %vm2873, %v7622, %v8449
    %v8839 = vsel %vm2873, %v7623, %v8451
    %v8840 = vsel %vm2873, %v7624, %v8453
    %v8841 = vsel %vm2873, %v7625, %v8455
    %v8842 = vsel %vm2873, %v7626, %v8457
    %v8843 = vsel %vm2873, %v7627, %v8459
    %v8844 = vsel %vm5306, %v8780, %v8589
    %v8845 = vsel %vm5306, %v8781, %v8591
    %v8846 = vsel %vm5306, %v8782, %v8593
    %v8847 = vsel %vm5306, %v8783, %v8595
    %v8848 = vsel %vm5306, %v8784, %v8597
    %v8849 = vsel %vm5306, %v8785, %v8599
    %v8850 = vsel %vm5306, %v8786, %v8601
    %v8851 = vsel %vm5306, %v8787, %v8603
    %v8852 = vsel %vm5306, %v8788, %v8605
    %v8853 = vsel %vm5306, %v8789, %v8607
    %v8854 = vsel %vm5306, %v8790, %v8609
    %v8855 = vsel %vm5306, %v8791, %v8611
    %v8856 = vsel %vm5306, %v8792, %v8613
    %v8857 = vsel %vm5306, %v8793, %v8615
    %v8858 = vsel %vm5306, %v8794, %v8617
    %v8859 = vsel %vm5306, %v8795, %v8619
    %v8860 = vsel %vm5306, %v8796, %v8621
    %v8861 = vsel %vm5306, %v8797, %v8623
    %v8862 = vsel %vm5306, %v8798, %v8625
    %v8863 = vsel %vm5306, %v8799, %v8627
    %v8864 = vsel %vm5306, %v8800, %v8629
    %v8865 = vsel %vm5306, %v8801, %v8631
    %v8866 = vsel %vm5306, %v8802, %v8633
    %v8867 = vsel %vm5306, %v8803, %v8635
    %v8868 = vsel %vm5306, %v8804, %v8637
    %v8869 = vsel %vm5306, %v8805, %v8639
    %v8870 = vsel %vm5306, %v8806, %v8641
    %v8871 = vsel %vm5306, %v8807, %v8643
    %v8872 = vsel %vm5306, %v8808, %v8645
    %v8873 = vsel %vm5306, %v8809, %v8647
    %v8874 = vsel %vm5306, %v8810, %v8649
    %v8875 = vsel %vm5306, %v8811, %v8651
    %v8876 = vsel %vm5306, %v8812, %v8653
    %v8877 = vsel %vm5306, %v8813, %v8655
    %v8878 = vsel %vm5306, %v8814, %v8657
    %v8879 = vsel %vm5306, %v8815, %v8659
    %v8880 = vsel %vm5306, %v8816, %v8661
    %v8881 = vsel %vm5306, %v8817, %v8663
    %v8882 = vsel %vm5306, %v8818, %v8665
    %v8883 = vsel %vm5306, %v8819, %v8667
    %v8884 = vsel %vm5306, %v8820, %v8669
    %v8885 = vsel %vm5306, %v8821, %v8671
    %v8886 = vsel %vm5306, %v8822, %v8673
    %v8887 = vsel %vm5306, %v8823, %v8675
    %v8888 = vsel %vm5306, %v8824, %v8677
    %v8889 = vsel %vm5306, %v8825, %v8679
    %v8890 = vsel %vm5306, %v8826, %v8681
    %v8891 = vsel %vm5306, %v8827, %v8683
    %v8892 = vsel %vm5306, %v8828, %v8685
    %v8893 = vsel %vm5306, %v8829, %v8687
    %v8894 = vsel %vm5306, %v8830, %v8689
    %v8895 = vsel %vm5306, %v8831, %v8691
    %v8896 = vsel %vm5306, %v8832, %v8693
    %v8897 = vsel %vm5306, %v8833, %v8695
    %v8898 = vsel %vm5306, %v8834, %v8697
    %v8899 = vsel %vm5306, %v8835, %v8699
    %v8900 = vsel %vm5306, %v8836, %v8701
    %v8901 = vsel %vm5306, %v8837, %v8703
    %v8902 = vsel %vm5306, %v8838, %v8705
    %v8903 = vsel %vm5306, %v8839, %v8707
    %v8904 = vsel %vm5306, %v8840, %v8709
    %v8905 = vsel %vm5306, %v8841, %v8711
    %v8906 = vsel %vm5306, %v8842, %v8713
    %v8907 = vsel %vm5306, %v8843, %v8715
    %8972 = vrot.lane.b32.xlu0 %v8844, 9
    %v8973 = vpop.permute.xlu0 %8972
    %8974 = vrot.lane.b32.xlu0 %v8845, 9
    %v8975 = vpop.permute.xlu0 %8974
    %8976 = vrot.lane.b32.xlu0 %v8846, 9
    %v8977 = vpop.permute.xlu0 %8976
    %8978 = vrot.lane.b32.xlu0 %v8847, 9
    %v8979 = vpop.permute.xlu0 %8978
    %8980 = vrot.lane.b32.xlu0 %v8848, 9
    %v8981 = vpop.permute.xlu0 %8980
    %8982 = vrot.lane.b32.xlu0 %v8849, 9
    %v8983 = vpop.permute.xlu0 %8982
    %8984 = vrot.lane.b32.xlu0 %v8850, 9
    %v8985 = vpop.permute.xlu0 %8984
    %8986 = vrot.lane.b32.xlu0 %v8851, 9
    %v8987 = vpop.permute.xlu0 %8986
    %8988 = vrot.lane.b32.xlu0 %v8852, 9
    %v8989 = vpop.permute.xlu0 %8988
    %8990 = vrot.lane.b32.xlu0 %v8853, 9
    %v8991 = vpop.permute.xlu0 %8990
    %8992 = vrot.lane.b32.xlu0 %v8854, 9
    %v8993 = vpop.permute.xlu0 %8992
    %8994 = vrot.lane.b32.xlu0 %v8855, 9
    %v8995 = vpop.permute.xlu0 %8994
    %8996 = vrot.lane.b32.xlu0 %v8856, 9
    %v8997 = vpop.permute.xlu0 %8996
    %8998 = vrot.lane.b32.xlu0 %v8857, 9
    %v8999 = vpop.permute.xlu0 %8998
    %9000 = vrot.lane.b32.xlu0 %v8858, 9
    %v9001 = vpop.permute.xlu0 %9000
    %9002 = vrot.lane.b32.xlu0 %v8859, 9
    %v9003 = vpop.permute.xlu0 %9002
    %9004 = vrot.lane.b32.xlu0 %v8860, 9
    %v9005 = vpop.permute.xlu0 %9004
    %9006 = vrot.lane.b32.xlu0 %v8861, 9
    %v9007 = vpop.permute.xlu0 %9006
    %9008 = vrot.lane.b32.xlu0 %v8862, 9
    %v9009 = vpop.permute.xlu0 %9008
    %9010 = vrot.lane.b32.xlu0 %v8863, 9
    %v9011 = vpop.permute.xlu0 %9010
    %9012 = vrot.lane.b32.xlu0 %v8864, 9
    %v9013 = vpop.permute.xlu0 %9012
    %9014 = vrot.lane.b32.xlu0 %v8865, 9
    %v9015 = vpop.permute.xlu0 %9014
    %9016 = vrot.lane.b32.xlu0 %v8866, 9
    %v9017 = vpop.permute.xlu0 %9016
    %9018 = vrot.lane.b32.xlu0 %v8867, 9
    %v9019 = vpop.permute.xlu0 %9018
    %9020 = vrot.lane.b32.xlu0 %v8868, 9
    %v9021 = vpop.permute.xlu0 %9020
    %9022 = vrot.lane.b32.xlu0 %v8869, 9
    %v9023 = vpop.permute.xlu0 %9022
    %9024 = vrot.lane.b32.xlu0 %v8870, 9
    %v9025 = vpop.permute.xlu0 %9024
    %9026 = vrot.lane.b32.xlu0 %v8871, 9
    %v9027 = vpop.permute.xlu0 %9026
    %9028 = vrot.lane.b32.xlu0 %v8872, 9
    %v9029 = vpop.permute.xlu0 %9028
    %9030 = vrot.lane.b32.xlu0 %v8873, 9
    %v9031 = vpop.permute.xlu0 %9030
    %9032 = vrot.lane.b32.xlu0 %v8874, 9
    %v9033 = vpop.permute.xlu0 %9032
    %9034 = vrot.lane.b32.xlu0 %v8875, 9
    %v9035 = vpop.permute.xlu0 %9034
    %9036 = vrot.lane.b32.xlu0 %v8876, 9
    %v9037 = vpop.permute.xlu0 %9036
    %9038 = vrot.lane.b32.xlu0 %v8877, 9
    %v9039 = vpop.permute.xlu0 %9038
    %9040 = vrot.lane.b32.xlu0 %v8878, 9
    %v9041 = vpop.permute.xlu0 %9040
    %9042 = vrot.lane.b32.xlu0 %v8879, 9
    %v9043 = vpop.permute.xlu0 %9042
    %9044 = vrot.lane.b32.xlu0 %v8880, 9
    %v9045 = vpop.permute.xlu0 %9044
    %9046 = vrot.lane.b32.xlu0 %v8881, 9
    %v9047 = vpop.permute.xlu0 %9046
    %9048 = vrot.lane.b32.xlu0 %v8882, 9
    %v9049 = vpop.permute.xlu0 %9048
    %9050 = vrot.lane.b32.xlu0 %v8883, 9
    %v9051 = vpop.permute.xlu0 %9050
    %9052 = vrot.lane.b32.xlu0 %v8884, 9
    %v9053 = vpop.permute.xlu0 %9052
    %9054 = vrot.lane.b32.xlu0 %v8885, 9
    %v9055 = vpop.permute.xlu0 %9054
    %9056 = vrot.lane.b32.xlu0 %v8886, 9
    %v9057 = vpop.permute.xlu0 %9056
    %9058 = vrot.lane.b32.xlu0 %v8887, 9
    %v9059 = vpop.permute.xlu0 %9058
    %9060 = vrot.lane.b32.xlu0 %v8888, 9
    %v9061 = vpop.permute.xlu0 %9060
    %9062 = vrot.lane.b32.xlu0 %v8889, 9
    %v9063 = vpop.permute.xlu0 %9062
    %9064 = vrot.lane.b32.xlu0 %v8890, 9
    %v9065 = vpop.permute.xlu0 %9064
    %9066 = vrot.lane.b32.xlu0 %v8891, 9
    %v9067 = vpop.permute.xlu0 %9066
    %9068 = vrot.lane.b32.xlu0 %v8892, 9
    %v9069 = vpop.permute.xlu0 %9068
    %9070 = vrot.lane.b32.xlu0 %v8893, 9
    %v9071 = vpop.permute.xlu0 %9070
    %9072 = vrot.lane.b32.xlu0 %v8894, 9
    %v9073 = vpop.permute.xlu0 %9072
    %9074 = vrot.lane.b32.xlu0 %v8895, 9
    %v9075 = vpop.permute.xlu0 %9074
    %9076 = vrot.lane.b32.xlu0 %v8896, 9
    %v9077 = vpop.permute.xlu0 %9076
    %9078 = vrot.lane.b32.xlu0 %v8897, 9
    %v9079 = vpop.permute.xlu0 %9078
    %9080 = vrot.lane.b32.xlu0 %v8898, 9
    %v9081 = vpop.permute.xlu0 %9080
    %9082 = vrot.lane.b32.xlu0 %v8899, 9
    %v9083 = vpop.permute.xlu0 %9082
    %9084 = vrot.lane.b32.xlu0 %v8900, 9
    %v9085 = vpop.permute.xlu0 %9084
    %9086 = vrot.lane.b32.xlu0 %v8901, 9
    %v9087 = vpop.permute.xlu0 %9086
    %9088 = vrot.lane.b32.xlu0 %v8902, 9
    %v9089 = vpop.permute.xlu0 %9088
    %9090 = vrot.lane.b32.xlu0 %v8903, 9
    %v9091 = vpop.permute.xlu0 %9090
    %9092 = vrot.lane.b32.xlu0 %v8904, 9
    %v9093 = vpop.permute.xlu0 %9092
    %9094 = vrot.lane.b32.xlu0 %v8905, 9
    %v9095 = vpop.permute.xlu0 %9094
    %9096 = vrot.lane.b32.xlu0 %v8906, 9
    %v9097 = vpop.permute.xlu0 %9096
    %9098 = vrot.lane.b32.xlu0 %v8907, 9
    %v9099 = vpop.permute.xlu0 %9098
    %vm9164 = vcmask 72704
    %v9165 = vsel %vm9164, %v5307, %v8973
    %v9166 = vsel %vm9164, %v5308, %v8975
    %v9167 = vsel %vm9164, %v5309, %v8977
    %v9168 = vsel %vm9164, %v5310, %v8979
    %v9169 = vsel %vm9164, %v5311, %v8981
    %v9170 = vsel %vm9164, %v5312, %v8983
    %v9171 = vsel %vm9164, %v5313, %v8985
    %v9172 = vsel %vm9164, %v5314, %v8987
    %v9173 = vsel %vm9164, %v5315, %v8989
    %v9174 = vsel %vm9164, %v5316, %v8991
    %v9175 = vsel %vm9164, %v5317, %v8993
    %v9176 = vsel %vm9164, %v5318, %v8995
    %v9177 = vsel %vm9164, %v5319, %v8997
    %v9178 = vsel %vm9164, %v5320, %v8999
    %v9179 = vsel %vm9164, %v5321, %v9001
    %v9180 = vsel %vm9164, %v5322, %v9003
    %v9181 = vsel %vm9164, %v5323, %v9005
    %v9182 = vsel %vm9164, %v5324, %v9007
    %v9183 = vsel %vm9164, %v5325, %v9009
    %v9184 = vsel %vm9164, %v5326, %v9011
    %v9185 = vsel %vm9164, %v5327, %v9013
    %v9186 = vsel %vm9164, %v5328, %v9015
    %v9187 = vsel %vm9164, %v5329, %v9017
    %v9188 = vsel %vm9164, %v5330, %v9019
    %v9189 = vsel %vm9164, %v5331, %v9021
    %v9190 = vsel %vm9164, %v5332, %v9023
    %v9191 = vsel %vm9164, %v5333, %v9025
    %v9192 = vsel %vm9164, %v5334, %v9027
    %v9193 = vsel %vm9164, %v5335, %v9029
    %v9194 = vsel %vm9164, %v5336, %v9031
    %v9195 = vsel %vm9164, %v5337, %v9033
    %v9196 = vsel %vm9164, %v5338, %v9035
    %v9197 = vsel %vm9164, %v5339, %v9037
    %v9198 = vsel %vm9164, %v5340, %v9039
    %v9199 = vsel %vm9164, %v5341, %v9041
    %v9200 = vsel %vm9164, %v5342, %v9043
    %v9201 = vsel %vm9164, %v5343, %v9045
    %v9202 = vsel %vm9164, %v5344, %v9047
    %v9203 = vsel %vm9164, %v5345, %v9049
    %v9204 = vsel %vm9164, %v5346, %v9051
    %v9205 = vsel %vm9164, %v5347, %v9053
    %v9206 = vsel %vm9164, %v5348, %v9055
    %v9207 = vsel %vm9164, %v5349, %v9057
    %v9208 = vsel %vm9164, %v5350, %v9059
    %v9209 = vsel %vm9164, %v5351, %v9061
    %v9210 = vsel %vm9164, %v5352, %v9063
    %v9211 = vsel %vm9164, %v5353, %v9065
    %v9212 = vsel %vm9164, %v5354, %v9067
    %v9213 = vsel %vm9164, %v5355, %v9069
    %v9214 = vsel %vm9164, %v5356, %v9071
    %v9215 = vsel %vm9164, %v5357, %v9073
    %v9216 = vsel %vm9164, %v5358, %v9075
    %v9217 = vsel %vm9164, %v5359, %v9077
    %v9218 = vsel %vm9164, %v5360, %v9079
    %v9219 = vsel %vm9164, %v5361, %v9081
    %v9220 = vsel %vm9164, %v5362, %v9083
    %v9221 = vsel %vm9164, %v5363, %v9085
    %v9222 = vsel %vm9164, %v5364, %v9087
    %v9223 = vsel %vm9164, %v5365, %v9089
    %v9224 = vsel %vm9164, %v5366, %v9091
    %v9225 = vsel %vm9164, %v5367, %v9093
    %v9226 = vsel %vm9164, %v5368, %v9095
    %v9227 = vsel %vm9164, %v5369, %v9097
    %v9228 = vsel %vm9164, %v5370, %v9099
    %9229 = vmatprep.subr.mxu0 0.0
    %9230 = vmatpush1.msra.mxu0 %v9180
    %9231 = vmatprep.subr.mxu0 0.0
    %9232 = vmatpush1.msra.mxu0 %v9179
    %9233 = vmatprep.subr.mxu0 0.0
    %9234 = vmatpush1.msra.mxu0 %v9178
    %9235 = vmatprep.subr.mxu0 0.0
    %9236 = vmatpush1.msra.mxu0 %v9177
    %9237 = vmatprep.subr.mxu0 0.0
    %9238 = vmatpush1.msra.mxu0 %v9176
    %9239 = vmatprep.subr.mxu0 0.0
    %9240 = vmatpush1.msra.mxu0 %v9175
    %9241 = vmatprep.subr.mxu0 0.0
    %9242 = vmatpush1.msra.mxu0 %v9174
    %9243 = vmatprep.subr.mxu0 0.0
    %9244 = vmatpush1.msra.mxu0 %v9173
    %9245 = vmatprep.subr.mxu0 0.0
    %9246 = vmatpush1.msra.mxu0 %v9172
    %9247 = vmatprep.subr.mxu0 0.0
    %9248 = vmatpush1.msra.mxu0 %v9171
    %9249 = vmatprep.subr.mxu0 0.0
    %9250 = vmatpush1.msra.mxu0 %v9170
    %9251 = vmatprep.subr.mxu0 0.0
    %9252 = vmatpush1.msra.mxu0 %v9169
    %9253 = vmatprep.subr.mxu0 0.0
    %9254 = vmatpush1.msra.mxu0 %v9168
    %9255 = vmatprep.subr.mxu0 0.0
    %9256 = vmatpush1.msra.mxu0 %v9167
    %9257 = vmatprep.subr.mxu0 0.0
    %9258 = vmatpush1.msra.mxu0 %v9166
    %9259 = vmatprep.subr.mxu0 0.0
    %9260 = vmatpush1.msra.mxu0 %v9165
    %9261 = vmatprep.subr.mxu0 0.0
    %9262 = vmatpush2.msra.mxu0 %v9196
    %9263 = vmatprep.subr.mxu0 0.0
    %9264 = vmatpush2.msra.mxu0 %v9195
    %9265 = vmatprep.subr.mxu0 0.0
    %9266 = vmatpush2.msra.mxu0 %v9194
    %9267 = vmatprep.subr.mxu0 0.0
    %9268 = vmatpush2.msra.mxu0 %v9193
    %9269 = vmatprep.subr.mxu0 0.0
    %9270 = vmatpush2.msra.mxu0 %v9192
    %9271 = vmatprep.subr.mxu0 0.0
    %9272 = vmatpush2.msra.mxu0 %v9191
    %9273 = vmatprep.subr.mxu0 0.0
    %9274 = vmatpush2.msra.mxu0 %v9190
    %9275 = vmatprep.subr.mxu0 0.0
    %9276 = vmatpush2.msra.mxu0 %v9189
    %9277 = vmatprep.subr.mxu0 0.0
    %9278 = vmatpush2.msra.mxu0 %v9188
    %9279 = vmatprep.subr.mxu0 0.0
    %9280 = vmatpush2.msra.mxu0 %v9187
    %9281 = vmatprep.subr.mxu0 0.0
    %9282 = vmatpush2.msra.mxu0 %v9186
    %9283 = vmatprep.subr.mxu0 0.0
    %9284 = vmatpush2.msra.mxu0 %v9185
    %9285 = vmatprep.subr.mxu0 0.0
    %9286 = vmatpush2.msra.mxu0 %v9184
    %9287 = vmatprep.subr.mxu0 0.0
    %9288 = vmatpush2.msra.mxu0 %v9183
    %9289 = vmatprep.subr.mxu0 0.0
    %9290 = vmatpush2.msra.mxu0 %v9182
    %9291 = vmatprep.subr.mxu0 0.0
    %9292 = vmatpush2.msra.mxu0 %v9181
    %9293 = vmatprep.mubr.f32.mxu0 %v644
    %9294 = vmatmul.mubr.f32.gmra.mxu0 %v643
    %v9295 = vpop.f32.mrf.mxu0
    %v9296 = vadd.f32 0.0, %v9295
    %v9297 = vpop.f32.mrf.mxu0
    %9298 = vdwg.mxu0
    %9299 = vmatprep.subr.mxu0 0.0
    %9300 = vmatpush1.msra.mxu0 %v9212
    %9301 = vmatprep.subr.mxu0 0.0
    %9302 = vmatpush1.msra.mxu0 %v9211
    %9303 = vmatprep.subr.mxu0 0.0
    %9304 = vmatpush1.msra.mxu0 %v9210
    %9305 = vmatprep.subr.mxu0 0.0
    %9306 = vmatpush1.msra.mxu0 %v9209
    %9307 = vmatprep.subr.mxu0 0.0
    %9308 = vmatpush1.msra.mxu0 %v9208
    %9309 = vmatprep.subr.mxu0 0.0
    %9310 = vmatpush1.msra.mxu0 %v9207
    %9311 = vmatprep.subr.mxu0 0.0
    %9312 = vmatpush1.msra.mxu0 %v9206
    %9313 = vmatprep.subr.mxu0 0.0
    %9314 = vmatpush1.msra.mxu0 %v9205
    %9315 = vmatprep.subr.mxu0 0.0
    %9316 = vmatpush1.msra.mxu0 %v9204
    %9317 = vmatprep.subr.mxu0 0.0
    %9318 = vmatpush1.msra.mxu0 %v9203
    %9319 = vmatprep.subr.mxu0 0.0
    %9320 = vmatpush1.msra.mxu0 %v9202
    %9321 = vmatprep.subr.mxu0 0.0
    %9322 = vmatpush1.msra.mxu0 %v9201
    %9323 = vmatprep.subr.mxu0 0.0
    %9324 = vmatpush1.msra.mxu0 %v9200
    %9325 = vmatprep.subr.mxu0 0.0
    %9326 = vmatpush1.msra.mxu0 %v9199
    %9327 = vmatprep.subr.mxu0 0.0
    %9328 = vmatpush1.msra.mxu0 %v9198
    %9329 = vmatprep.subr.mxu0 0.0
    %9330 = vmatpush1.msra.mxu0 %v9197
    %9331 = vmatprep.subr.mxu0 0.0
    %9332 = vmatpush2.msra.mxu0 %v9228
    %9333 = vmatprep.subr.mxu0 0.0
    %9334 = vmatpush2.msra.mxu0 %v9227
    %9335 = vmatprep.subr.mxu0 0.0
    %9336 = vmatpush2.msra.mxu0 %v9226
    %9337 = vmatprep.subr.mxu0 0.0
    %9338 = vmatpush2.msra.mxu0 %v9225
    %9339 = vmatprep.subr.mxu0 0.0
    %9340 = vmatpush2.msra.mxu0 %v9224
    %9341 = vmatprep.subr.mxu0 0.0
    %9342 = vmatpush2.msra.mxu0 %v9223
    %9343 = vmatprep.subr.mxu0 0.0
    %9344 = vmatpush2.msra.mxu0 %v9222
    %9345 = vmatprep.subr.mxu0 0.0
    %9346 = vmatpush2.msra.mxu0 %v9221
    %9347 = vmatprep.subr.mxu0 0.0
    %9348 = vmatpush2.msra.mxu0 %v9220
    %9349 = vmatprep.subr.mxu0 0.0
    %9350 = vmatpush2.msra.mxu0 %v9219
    %9351 = vmatprep.subr.mxu0 0.0
    %9352 = vmatpush2.msra.mxu0 %v9218
    %9353 = vmatprep.subr.mxu0 0.0
    %9354 = vmatpush2.msra.mxu0 %v9217
    %9355 = vmatprep.subr.mxu0 0.0
    %9356 = vmatpush2.msra.mxu0 %v9216
    %9357 = vmatprep.subr.mxu0 0.0
    %9358 = vmatpush2.msra.mxu0 %v9215
    %9359 = vmatprep.subr.mxu0 0.0
    %9360 = vmatpush2.msra.mxu0 %v9214
    %9361 = vmatprep.subr.mxu0 0.0
    %9362 = vmatpush2.msra.mxu0 %v9213
    %9363 = vmatprep.mubr.f32.mxu0 %v646
    %9364 = vmatmul.mubr.f32.gmra.mxu0 %v645
    %v9365 = vpop.f32.mrf.mxu0
    %v9366 = vadd.f32 %v9296, %v9365
    %v9367 = vpop.f32.mrf.mxu0
    %9368 = vdwg.mxu0
    %v9369 = vmul.f32 %v9366, %v2160
    %vm9370 = vcmask 140288
    %9371 = vst.msk [vmem:[#allocation3] sm:$0x3] %vm9370, %v9369
    %9436 = vrot.lane.b32.xlu0 %v7117, 3
    %v9437 = vpop.permute.xlu0 %9436
    %9438 = vrot.lane.b32.xlu0 %v7119, 3
    %v9439 = vpop.permute.xlu0 %9438
    %9440 = vrot.lane.b32.xlu0 %v7121, 3
    %v9441 = vpop.permute.xlu0 %9440
    %9442 = vrot.lane.b32.xlu0 %v7123, 3
    %v9443 = vpop.permute.xlu0 %9442
    %9444 = vrot.lane.b32.xlu0 %v7125, 3
    %v9445 = vpop.permute.xlu0 %9444
    %9446 = vrot.lane.b32.xlu0 %v7127, 3
    %v9447 = vpop.permute.xlu0 %9446
    %9448 = vrot.lane.b32.xlu0 %v7129, 3
    %v9449 = vpop.permute.xlu0 %9448
    %9450 = vrot.lane.b32.xlu0 %v7131, 3
    %v9451 = vpop.permute.xlu0 %9450
    %9452 = vrot.lane.b32.xlu0 %v7133, 3
    %v9453 = vpop.permute.xlu0 %9452
    %9454 = vrot.lane.b32.xlu0 %v7135, 3
    %v9455 = vpop.permute.xlu0 %9454
    %9456 = vrot.lane.b32.xlu0 %v7137, 3
    %v9457 = vpop.permute.xlu0 %9456
    %9458 = vrot.lane.b32.xlu0 %v7139, 3
    %v9459 = vpop.permute.xlu0 %9458
    %9460 = vrot.lane.b32.xlu0 %v7141, 3
    %v9461 = vpop.permute.xlu0 %9460
    %9462 = vrot.lane.b32.xlu0 %v7143, 3
    %v9463 = vpop.permute.xlu0 %9462
    %9464 = vrot.lane.b32.xlu0 %v7145, 3
    %v9465 = vpop.permute.xlu0 %9464
    %9466 = vrot.lane.b32.xlu0 %v7147, 3
    %v9467 = vpop.permute.xlu0 %9466
    %9468 = vrot.lane.b32.xlu0 %v7149, 3
    %v9469 = vpop.permute.xlu0 %9468
    %9470 = vrot.lane.b32.xlu0 %v7151, 3
    %v9471 = vpop.permute.xlu0 %9470
    %9472 = vrot.lane.b32.xlu0 %v7153, 3
    %v9473 = vpop.permute.xlu0 %9472
    %9474 = vrot.lane.b32.xlu0 %v7155, 3
    %v9475 = vpop.permute.xlu0 %9474
    %9476 = vrot.lane.b32.xlu0 %v7157, 3
    %v9477 = vpop.permute.xlu0 %9476
    %9478 = vrot.lane.b32.xlu0 %v7159, 3
    %v9479 = vpop.permute.xlu0 %9478
    %9480 = vrot.lane.b32.xlu0 %v7161, 3
    %v9481 = vpop.permute.xlu0 %9480
    %9482 = vrot.lane.b32.xlu0 %v7163, 3
    %v9483 = vpop.permute.xlu0 %9482
    %9484 = vrot.lane.b32.xlu0 %v7165, 3
    %v9485 = vpop.permute.xlu0 %9484
    %9486 = vrot.lane.b32.xlu0 %v7167, 3
    %v9487 = vpop.permute.xlu0 %9486
    %9488 = vrot.lane.b32.xlu0 %v7169, 3
    %v9489 = vpop.permute.xlu0 %9488
    %9490 = vrot.lane.b32.xlu0 %v7171, 3
    %v9491 = vpop.permute.xlu0 %9490
    %9492 = vrot.lane.b32.xlu0 %v7173, 3
    %v9493 = vpop.permute.xlu0 %9492
    %9494 = vrot.lane.b32.xlu0 %v7175, 3
    %v9495 = vpop.permute.xlu0 %9494
    %9496 = vrot.lane.b32.xlu0 %v7177, 3
    %v9497 = vpop.permute.xlu0 %9496
    %9498 = vrot.lane.b32.xlu0 %v7179, 3
    %v9499 = vpop.permute.xlu0 %9498
    %9500 = vrot.lane.b32.xlu0 %v7181, 3
    %v9501 = vpop.permute.xlu0 %9500
    %9502 = vrot.lane.b32.xlu0 %v7183, 3
    %v9503 = vpop.permute.xlu0 %9502
    %9504 = vrot.lane.b32.xlu0 %v7185, 3
    %v9505 = vpop.permute.xlu0 %9504
    %9506 = vrot.lane.b32.xlu0 %v7187, 3
    %v9507 = vpop.permute.xlu0 %9506
    %9508 = vrot.lane.b32.xlu0 %v7189, 3
    %v9509 = vpop.permute.xlu0 %9508
    %9510 = vrot.lane.b32.xlu0 %v7191, 3
    %v9511 = vpop.permute.xlu0 %9510
    %9512 = vrot.lane.b32.xlu0 %v7193, 3
    %v9513 = vpop.permute.xlu0 %9512
    %9514 = vrot.lane.b32.xlu0 %v7195, 3
    %v9515 = vpop.permute.xlu0 %9514
    %9516 = vrot.lane.b32.xlu0 %v7197, 3
    %v9517 = vpop.permute.xlu0 %9516
    %9518 = vrot.lane.b32.xlu0 %v7199, 3
    %v9519 = vpop.permute.xlu0 %9518
    %9520 = vrot.lane.b32.xlu0 %v7201, 3
    %v9521 = vpop.permute.xlu0 %9520
    %9522 = vrot.lane.b32.xlu0 %v7203, 3
    %v9523 = vpop.permute.xlu0 %9522
    %9524 = vrot.lane.b32.xlu0 %v7205, 3
    %v9525 = vpop.permute.xlu0 %9524
    %9526 = vrot.lane.b32.xlu0 %v7207, 3
    %v9527 = vpop.permute.xlu0 %9526
    %9528 = vrot.lane.b32.xlu0 %v7209, 3
    %v9529 = vpop.permute.xlu0 %9528
    %9530 = vrot.lane.b32.xlu0 %v7211, 3
    %v9531 = vpop.permute.xlu0 %9530
    %9532 = vrot.lane.b32.xlu0 %v7213, 3
    %v9533 = vpop.permute.xlu0 %9532
    %9534 = vrot.lane.b32.xlu0 %v7215, 3
    %v9535 = vpop.permute.xlu0 %9534
    %9536 = vrot.lane.b32.xlu0 %v7217, 3
    %v9537 = vpop.permute.xlu0 %9536
    %9538 = vrot.lane.b32.xlu0 %v7219, 3
    %v9539 = vpop.permute.xlu0 %9538
    %9540 = vrot.lane.b32.xlu0 %v7221, 3
    %v9541 = vpop.permute.xlu0 %9540
    %9542 = vrot.lane.b32.xlu0 %v7223, 3
    %v9543 = vpop.permute.xlu0 %9542
    %9544 = vrot.lane.b32.xlu0 %v7225, 3
    %v9545 = vpop.permute.xlu0 %9544
    %9546 = vrot.lane.b32.xlu0 %v7227, 3
    %v9547 = vpop.permute.xlu0 %9546
    %9548 = vrot.lane.b32.xlu0 %v7229, 3
    %v9549 = vpop.permute.xlu0 %9548
    %9550 = vrot.lane.b32.xlu0 %v7231, 3
    %v9551 = vpop.permute.xlu0 %9550
    %9552 = vrot.lane.b32.xlu0 %v7233, 3
    %v9553 = vpop.permute.xlu0 %9552
    %9554 = vrot.lane.b32.xlu0 %v7235, 3
    %v9555 = vpop.permute.xlu0 %9554
    %9556 = vrot.lane.b32.xlu0 %v7237, 3
    %v9557 = vpop.permute.xlu0 %9556
    %9558 = vrot.lane.b32.xlu0 %v7239, 3
    %v9559 = vpop.permute.xlu0 %9558
    %9560 = vrot.lane.b32.xlu0 %v7241, 3
    %v9561 = vpop.permute.xlu0 %9560
    %9562 = vrot.lane.b32.xlu0 %v7243, 3
    %v9563 = vpop.permute.xlu0 %9562
    %v9628 = vsel %vm2873, %v3579, %v9437
    %v9629 = vsel %vm2873, %v3581, %v9439
    %v9630 = vsel %vm2873, %v3583, %v9441
    %v9631 = vsel %vm2873, %v3585, %v9443
    %v9632 = vsel %vm2873, %v3587, %v9445
    %v9633 = vsel %vm2873, %v3589, %v9447
    %v9634 = vsel %vm2873, %v3591, %v9449
    %v9635 = vsel %vm2873, %v3593, %v9451
    %v9636 = vsel %vm2873, %v3595, %v9453
    %v9637 = vsel %vm2873, %v3597, %v9455
    %v9638 = vsel %vm2873, %v3599, %v9457
    %v9639 = vsel %vm2873, %v3601, %v9459
    %v9640 = vsel %vm2873, %v3603, %v9461
    %v9641 = vsel %vm2873, %v3605, %v9463
    %v9642 = vsel %vm2873, %v3607, %v9465
    %v9643 = vsel %vm2873, %v3609, %v9467
    %v9644 = vsel %vm2873, %v3611, %v9469
    %v9645 = vsel %vm2873, %v3613, %v9471
    %v9646 = vsel %vm2873, %v3615, %v9473
    %v9647 = vsel %vm2873, %v3617, %v9475
    %v9648 = vsel %vm2873, %v3619, %v9477
    %v9649 = vsel %vm2873, %v3621, %v9479
    %v9650 = vsel %vm2873, %v3623, %v9481
    %v9651 = vsel %vm2873, %v3625, %v9483
    %v9652 = vsel %vm2873, %v3627, %v9485
    %v9653 = vsel %vm2873, %v3629, %v9487
    %v9654 = vsel %vm2873, %v3631, %v9489
    %v9655 = vsel %vm2873, %v3633, %v9491
    %v9656 = vsel %vm2873, %v3635, %v9493
    %v9657 = vsel %vm2873, %v3637, %v9495
    %v9658 = vsel %vm2873, %v3639, %v9497
    %v9659 = vsel %vm2873, %v3641, %v9499
    %v9660 = vsel %vm2873, %v3643, %v9501
    %v9661 = vsel %vm2873, %v3645, %v9503
    %v9662 = vsel %vm2873, %v3647, %v9505
    %v9663 = vsel %vm2873, %v3649, %v9507
    %v9664 = vsel %vm2873, %v3651, %v9509
    %v9665 = vsel %vm2873, %v3653, %v9511
    %v9666 = vsel %vm2873, %v3655, %v9513
    %v9667 = vsel %vm2873, %v3657, %v9515
    %v9668 = vsel %vm2873, %v3659, %v9517
    %v9669 = vsel %vm2873, %v3661, %v9519
    %v9670 = vsel %vm2873, %v3663, %v9521
    %v9671 = vsel %vm2873, %v3665, %v9523
    %v9672 = vsel %vm2873, %v3667, %v9525
    %v9673 = vsel %vm2873, %v3669, %v9527
    %v9674 = vsel %vm2873, %v3671, %v9529
    %v9675 = vsel %vm2873, %v3673, %v9531
    %v9676 = vsel %vm2873, %v3675, %v9533
    %v9677 = vsel %vm2873, %v3677, %v9535
    %v9678 = vsel %vm2873, %v3679, %v9537
    %v9679 = vsel %vm2873, %v3681, %v9539
    %v9680 = vsel %vm2873, %v3683, %v9541
    %v9681 = vsel %vm2873, %v3685, %v9543
    %v9682 = vsel %vm2873, %v3687, %v9545
    %v9683 = vsel %vm2873, %v3689, %v9547
    %v9684 = vsel %vm2873, %v3691, %v9549
    %v9685 = vsel %vm2873, %v3693, %v9551
    %v9686 = vsel %vm2873, %v3695, %v9553
    %v9687 = vsel %vm2873, %v3697, %v9555
    %v9688 = vsel %vm2873, %v3699, %v9557
    %v9689 = vsel %vm2873, %v3701, %v9559
    %v9690 = vsel %vm2873, %v3703, %v9561
    %v9691 = vsel %vm2873, %v3705, %v9563
    %9692 = vst.msk [vmem:[%s9] sm:$0xff] %vm5306, %v9628
    %9693 = vst.msk [vmem:[%s9 + $0x8] sm:$0xff] %vm5306, %v9629
    %9694 = vst.msk [vmem:[%s9 + $0x10] sm:$0xff] %vm5306, %v9630
    %9695 = vst.msk [vmem:[%s9 + $0x18] sm:$0xff] %vm5306, %v9631
    %9696 = vst.msk [vmem:[%s9 + $0x20] sm:$0xff] %vm5306, %v9632
    %9697 = vst.msk [vmem:[%s9 + $0x28] sm:$0xff] %vm5306, %v9633
    %9698 = vst.msk [vmem:[%s9 + $0x30] sm:$0xff] %vm5306, %v9634
    %9699 = vst.msk [vmem:[%s9 + $0x38] sm:$0xff] %vm5306, %v9635
    %9700 = vst.msk [vmem:[%s9 + $0x40] sm:$0xff] %vm5306, %v9636
    %9701 = vst.msk [vmem:[%s9 + $0x48] sm:$0xff] %vm5306, %v9637
    %9702 = vst.msk [vmem:[%s9 + $0x50] sm:$0xff] %vm5306, %v9638
    %9703 = vst.msk [vmem:[%s9 + $0x58] sm:$0xff] %vm5306, %v9639
    %9704 = vst.msk [vmem:[%s9 + $0x60] sm:$0xff] %vm5306, %v9640
    %9705 = vst.msk [vmem:[%s9 + $0x68] sm:$0xff] %vm5306, %v9641
    %9706 = vst.msk [vmem:[%s9 + $0x70] sm:$0xff] %vm5306, %v9642
    %9707 = vst.msk [vmem:[%s9 + $0x78] sm:$0xff] %vm5306, %v9643
    %9708 = vst.msk [vmem:[%s9 + $0x80] sm:$0xff] %vm5306, %v9644
    %9709 = vst.msk [vmem:[%s9 + $0x88] sm:$0xff] %vm5306, %v9645
    %9710 = vst.msk [vmem:[%s9 + $0x90] sm:$0xff] %vm5306, %v9646
    %9711 = vst.msk [vmem:[%s9 + $0x98] sm:$0xff] %vm5306, %v9647
    %9712 = vst.msk [vmem:[%s9 + $0xa0] sm:$0xff] %vm5306, %v9648
    %9713 = vst.msk [vmem:[%s9 + $0xa8] sm:$0xff] %vm5306, %v9649
    %9714 = vst.msk [vmem:[%s9 + $0xb0] sm:$0xff] %vm5306, %v9650
    %9715 = vst.msk [vmem:[%s9 + $0xb8] sm:$0xff] %vm5306, %v9651
    %9716 = vst.msk [vmem:[%s9 + $0xc0] sm:$0xff] %vm5306, %v9652
    %9717 = vst.msk [vmem:[%s9 + $0xc8] sm:$0xff] %vm5306, %v9653
    %9718 = vst.msk [vmem:[%s9 + $0xd0] sm:$0xff] %vm5306, %v9654
    %9719 = vst.msk [vmem:[%s9 + $0xd8] sm:$0xff] %vm5306, %v9655
    %9720 = vst.msk [vmem:[%s9 + $0xe0] sm:$0xff] %vm5306, %v9656
    %9721 = vst.msk [vmem:[%s9 + $0xe8] sm:$0xff] %vm5306, %v9657
    %9722 = vst.msk [vmem:[%s9 + $0xf0] sm:$0xff] %vm5306, %v9658
    %9723 = vst.msk [vmem:[%s9 + $0xf8] sm:$0xff] %vm5306, %v9659
    %9724 = vst.msk [vmem:[%s9 + $0x100] sm:$0xff] %vm5306, %v9660
    %9725 = vst.msk [vmem:[%s9 + $0x108] sm:$0xff] %vm5306, %v9661
    %9726 = vst.msk [vmem:[%s9 + $0x110] sm:$0xff] %vm5306, %v9662
    %9727 = vst.msk [vmem:[%s9 + $0x118] sm:$0xff] %vm5306, %v9663
    %9728 = vst.msk [vmem:[%s9 + $0x120] sm:$0xff] %vm5306, %v9664
    %9729 = vst.msk [vmem:[%s9 + $0x128] sm:$0xff] %vm5306, %v9665
    %9730 = vst.msk [vmem:[%s9 + $0x130] sm:$0xff] %vm5306, %v9666
    %9731 = vst.msk [vmem:[%s9 + $0x138] sm:$0xff] %vm5306, %v9667
    %9732 = vst.msk [vmem:[%s9 + $0x140] sm:$0xff] %vm5306, %v9668
    %9733 = vst.msk [vmem:[%s9 + $0x148] sm:$0xff] %vm5306, %v9669
    %9734 = vst.msk [vmem:[%s9 + $0x150] sm:$0xff] %vm5306, %v9670
    %9735 = vst.msk [vmem:[%s9 + $0x158] sm:$0xff] %vm5306, %v9671
    %9736 = vst.msk [vmem:[%s9 + $0x160] sm:$0xff] %vm5306, %v9672
    %9737 = vst.msk [vmem:[%s9 + $0x168] sm:$0xff] %vm5306, %v9673
    %9738 = vst.msk [vmem:[%s9 + $0x170] sm:$0xff] %vm5306, %v9674
    %9739 = vst.msk [vmem:[%s9 + $0x178] sm:$0xff] %vm5306, %v9675
    %9740 = vst.msk [vmem:[%s9 + $0x180] sm:$0xff] %vm5306, %v9676
    %9741 = vst.msk [vmem:[%s9 + $0x188] sm:$0xff] %vm5306, %v9677
    %9742 = vst.msk [vmem:[%s9 + $0x190] sm:$0xff] %vm5306, %v9678
    %9743 = vst.msk [vmem:[%s9 + $0x198] sm:$0xff] %vm5306, %v9679
    %9744 = vst.msk [vmem:[%s9 + $0x1a0] sm:$0xff] %vm5306, %v9680
    %9745 = vst.msk [vmem:[%s9 + $0x1a8] sm:$0xff] %vm5306, %v9681
    %9746 = vst.msk [vmem:[%s9 + $0x1b0] sm:$0xff] %vm5306, %v9682
    %9747 = vst.msk [vmem:[%s9 + $0x1b8] sm:$0xff] %vm5306, %v9683
    %9748 = vst.msk [vmem:[%s9 + $0x1c0] sm:$0xff] %vm5306, %v9684
    %9749 = vst.msk [vmem:[%s9 + $0x1c8] sm:$0xff] %vm5306, %v9685
    %9750 = vst.msk [vmem:[%s9 + $0x1d0] sm:$0xff] %vm5306, %v9686
    %9751 = vst.msk [vmem:[%s9 + $0x1d8] sm:$0xff] %vm5306, %v9687
    %9752 = vst.msk [vmem:[%s9 + $0x1e0] sm:$0xff] %vm5306, %v9688
    %9753 = vst.msk [vmem:[%s9 + $0x1e8] sm:$0xff] %vm5306, %v9689
    %9754 = vst.msk [vmem:[%s9 + $0x1f0] sm:$0xff] %vm5306, %v9690
    %9755 = vst.msk [vmem:[%s9 + $0x1f8] sm:$0xff] %vm5306, %v9691
    // Predicated region
    $region38: #{tpu_custom_call.1} parent=1 // pred_check
      _
    $region39: #{tpu_custom_call.1} parent=1 // pred_check_branch
      %9757 = sbr.rel (0) target = $region41
    $region40: #{tpu_custom_call.1} parent=1 // pred_region
      _
    $region41: #{tpu_custom_call.1} parent=1 // pred_fallthru
      _
    // Predicated region
    $region42: #{tpu_custom_call.1} parent=1 // pred_check
      _
    $region43: #{tpu_custom_call.1} parent=1 // pred_check_branch
      %9759 = sbr.rel (0) target = $region45
    $region44: #{tpu_custom_call.1} parent=1 // pred_region
      %s9761 = ssub.s32 32, 32
      %9762 = vsyncadd [#allocation4], %s9761
      %s9764 = sshll.u32 [#allocation3], 4
      %s9765 = int_to_ptr.vmem [resolvable:$true] %s9764
      %9767 = dma.vmem_to_hbm [thread:$0]  %s9765, 32, %s10, [#allocation4]
    $region45: #{tpu_custom_call.1} parent=1 // pred_fallthru
      _
    // Predicated region
    $region46: #{tpu_custom_call.1} parent=1 // pred_check
      _
    $region47: #{tpu_custom_call.1} parent=1 // pred_check_branch
      %9769 = sbr.rel (0) target = $region49
    $region48: #{tpu_custom_call.1} parent=1 // pred_region
      _
    $region49: #{tpu_custom_call.1} parent=1 // pred_fallthru
      _
    // Predicated region
    $region50: #{tpu_custom_call.1} parent=1 // pred_check
      _
    $region51: #{tpu_custom_call.1} parent=1 // pred_check_branch
      %9771 = sbr.rel (0) target = $region53
    $region52: #{tpu_custom_call.1} parent=1 // pred_region
      %9772 = dma.done [#allocation4], 32
    $region53: #{tpu_custom_call.1} parent=1 // pred_fallthru
      _
    %9773 = vsyncpa [#allocation4], 1

</llo_original>
